<compile_context>
chip_gen: v7x
topology: tpu7x:2x2x1
jax: 0.10.0
libtpu: 0.0.40
codegen_flags: <defaults>
</compile_context>

<pallas_src>
import functools

import jax
import jax.numpy as jnp
from jax.experimental import pallas as pl
from jax.experimental.pallas import tpu as pltpu


def _bn_relu_conv_bn_kernel(x_ref, w_ref, g1_ref, b1_ref, g2_ref, b2_ref,
                            o_ref, *, inv_m, eps):
    """Fused BN(train) -> ReLU -> 1x1 conv (matmul) -> BN(train).

    Shapes (no padding, block == full array):
      x_ref: (Cin, M)   f32      w_ref: (Cout, Cin) f32 (cast to bf16 here)
      g1/b1: (Cin, 1)   f32      g2/b2: (Cout, 1)   f32
      o_ref: (Cout, M)  f32
    """
    x = x_ref[...]                                         # (Cin, M) f32

    # ---- BatchNorm #1: one-pass per-channel batch stats over the lane (M)
    # axis (XLU reductions).  One-pass E[x^2]-mean^2 in f32 is fine here
    # (inputs are O(1)); switch to two-pass if real data is far from centered.
    s1 = jnp.sum(x, axis=1, keepdims=True)                 # (Cin, 1)
    s2 = jnp.sum(x * x, axis=1, keepdims=True)             # (Cin, 1)
    mean1 = s1 * inv_m
    var1 = s2 * inv_m - mean1 * mean1                      # biased var (training BN)
    scale1 = jax.lax.rsqrt(var1 + eps) * g1_ref[...]       # fold gamma into scale

    # ---- normalize + affine + ReLU ----
    xn = (x - mean1) * scale1 + b1_ref[...]
    xn = jnp.maximum(xn, 0.0)

    # ---- 1x1 conv as (Cout, Cin) @ (Cin, M) on the MXU ----
    # Weight arrives in f32 and is packed to bf16 here (VPU pack, ~0.2 us)
    # instead of via a separate wrapper XLA cast + HBM round trip.
    # bf16 inputs / f32 accumulation (single-pass MXU on v6e/v7x).
    y = jnp.dot(w_ref[...].astype(jnp.bfloat16),
                xn.astype(jnp.bfloat16),
                preferred_element_type=jnp.float32)        # (Cout, M) f32

    # ---- BatchNorm #2: one-pass, same form as BN1 ----
    t1 = jnp.sum(y, axis=1, keepdims=True)                 # (Cout, 1)
    t2 = jnp.sum(y * y, axis=1, keepdims=True)             # (Cout, 1)
    mean2 = t1 * inv_m
    var2 = t2 * inv_m - mean2 * mean2
    scale2 = jax.lax.rsqrt(var2 + eps) * g2_ref[...]

    o_ref[...] = (y - mean2) * scale2 + b2_ref[...]


def bn_relu_conv_bn(x_nchw, conv_w, gamma1, beta1, gamma2, beta2, eps=1e-5):
    """x_nchw: (N, Cin, H, W) f32; conv_w: (Cout, Cin, 1, 1) f32."""
    n, cin, h, w = x_nchw.shape
    cout = conv_w.shape[0]
    m = n * h * w

    # Channels-first 2-D view (Cin, M).  For N == 1 the transpose is degenerate
    # (free under jit).
    x2d = jnp.transpose(x_nchw, (1, 0, 2, 3)).reshape(cin, m)
    # Conv weight stays f32 here; the bf16 cast happens inside the kernel.
    w2d = conv_w.reshape(cout, cin)

    kernel = functools.partial(_bn_relu_conv_bn_kernel,
                               inv_m=float(1.0 / m), eps=float(eps))

    cost = pl.CostEstimate(
        flops=int(2 * cout * cin * m + 10 * (cin + cout) * m),
        transcendentals=int(cin + cout),                    # rsqrt per channel
        bytes_accessed=int(4 * (cin * m + cout * cin + cout * m
                                + 2 * cin + 2 * cout)),
    )

    out2d = pl.pallas_call(
        kernel,
        out_shape=jax.ShapeDtypeStruct((cout, m), jnp.float32),
        grid=(1,),
        in_specs=[
            pl.BlockSpec((cin, m), lambda i: (0, 0)),      # x   (Cin, M)  f32
            pl.BlockSpec((cout, cin), lambda i: (0, 0)),   # W   (Cout, Cin) f32
            pl.BlockSpec((cin, 1), lambda i: (0, 0)),      # gamma1
            pl.BlockSpec((cin, 1), lambda i: (0, 0)),      # beta1
            pl.BlockSpec((cout, 1), lambda i: (0, 0)),     # gamma2
            pl.BlockSpec((cout, 1), lambda i: (0, 0)),     # beta2
        ],
        out_specs=pl.BlockSpec((cout, m), lambda i: (0, 0)),
        compiler_params=pltpu.CompilerParams(
            dimension_semantics=("arbitrary",)),
        cost_estimate=cost,
    )(x2d, w2d,
      gamma1.reshape(cin, 1), beta1.reshape(cin, 1),
      gamma2.reshape(cout, 1), beta2.reshape(cout, 1))

    # (Cout, M) -> NCHW.  Free for N == 1.
    return jnp.transpose(out2d.reshape(cout, n, h, w), (1, 0, 2, 3))


def _reference(x_nchw, conv_w, gamma1, beta1, gamma2, beta2, eps=1e-5,
               conv_dtype=jnp.float32):
    """Pure-JAX training-mode forward.  conv_dtype=bfloat16 mimics the kernel's
    bf16 MXU inputs (with f32 accumulation) for a tight numerical check."""
    def bn(x, g, b):
        mean = jnp.mean(x, axis=(0, 2, 3), keepdims=True)
        var = jnp.var(x, axis=(0, 2, 3), keepdims=True)    # biased
        return (x - mean) * jax.lax.rsqrt(var + eps) * g[None, :, None, None] \
            + b[None, :, None, None]

    hrelu = jnp.maximum(bn(x_nchw, gamma1, beta1), 0.0)
    a = hrelu.astype(conv_dtype).astype(jnp.float32)
    wmat = conv_w[:, :, 0, 0].astype(conv_dtype).astype(jnp.float32)
    y = jnp.einsum("nchw,oc->nohw", a, wmat,
                   precision=jax.lax.Precision.HIGHEST)
    return bn(y, gamma2, beta2)


if __name__ == "__main__":
    key = jax.random.PRNGKey(0)
    k_x, k_w, k_g1, k_b1, k_g2, k_b2 = jax.random.split(key, 6)

    N, CIN, H, W, COUT = 1, 1056, 14, 14, 192
    x = jax.random.normal(k_x, (N, CIN, H, W), dtype=jnp.float32)

    # Deterministic synthetic parameters (shapes match the PyTorch module).
    conv_w = jax.random.normal(k_w, (COUT, CIN, 1, 1), dtype=jnp.float32) * 0.05
    gamma1 = 1.0 + 0.1 * jax.random.normal(k_g1, (CIN,), dtype=jnp.float32)
    beta1 = 0.1 * jax.random.normal(k_b1, (CIN,), dtype=jnp.float32)
    gamma2 = 1.0 + 0.1 * jax.random.normal(k_g2, (COUT,), dtype=jnp.float32)
    beta2 = 0.1 * jax.random.normal(k_b2, (COUT,), dtype=jnp.float32)

    fwd = jax.jit(bn_relu_conv_bn)
    out = jax.block_until_ready(fwd(x, conv_w, gamma1, beta1, gamma2, beta2))
    assert out.shape == (N, COUT, H, W), out.shape

    # Tight check against a reference whose conv inputs are bf16-rounded
    # (isolates BN / layout correctness from the intentional bf16 MXU cast).
    ref_bf16 = jax.block_until_ready(
        _reference(x, conv_w, gamma1, beta1, gamma2, beta2,
                   conv_dtype=jnp.bfloat16))
    if not jnp.allclose(out, ref_bf16, rtol=2e-3, atol=2e-3):
        max_err = float(jnp.max(jnp.abs(out - ref_bf16)))
        raise AssertionError(f"mismatch vs bf16-matched reference, "
                             f"max abs err = {max_err}")

    # Looser check against the exact f32 module semantics (the only deliberate
    # deviation is the bf16 MXU input cast, worth ~1e-2 max on BN-normalized
    # outputs at Cin=1056).
    ref_f32 = jax.block_until_ready(
        _reference(x, conv_w, gamma1, beta1, gamma2, beta2))
    if not jnp.allclose(out, ref_f32, rtol=2e-2, atol=2e-2):
        max_err = float(jnp.max(jnp.abs(out - ref_f32)))
        raise AssertionError(f"mismatch vs f32 reference, "
                             f"max abs err = {max_err}")

    print("KERNEL_OK")
</pallas_src>

<mosaic_0001>
module attributes {stable_mosaic.version = 11 : i64} {
  func.func @_bn_relu_conv_bn_kernel(%arg0: i32, %arg1: memref<1056x196xf32, #tpu.memory_space<vmem>>, %arg2: memref<192x1056xf32, #tpu.memory_space<vmem>>, %arg3: memref<1056x1xf32, #tpu.memory_space<vmem>>, %arg4: memref<1056x1xf32, #tpu.memory_space<vmem>>, %arg5: memref<192x1xf32, #tpu.memory_space<vmem>>, %arg6: memref<192x1xf32, #tpu.memory_space<vmem>>, %arg7: memref<192x196xf32, #tpu.memory_space<vmem>>) attributes {dimension_semantics = [#tpu.dimension_semantics<arbitrary>], iteration_bounds = array<i64: 1>, scalar_prefetch = 0 : i64, scratch_operands = 0 : i64, tpu.core_type = #tpu.core_type<tc>, window_params = [{pipeline_mode = #tpu.pipeline_mode<synchronous>, transform_indices = @transform_0, window_bounds = array<i64: 1056, 196>}, {pipeline_mode = #tpu.pipeline_mode<synchronous>, transform_indices = @transform_1, window_bounds = array<i64: 192, 1056>}, {pipeline_mode = #tpu.pipeline_mode<synchronous>, transform_indices = @transform_2, window_bounds = array<i64: 1056, 1>}, {pipeline_mode = #tpu.pipeline_mode<synchronous>, transform_indices = @transform_3, window_bounds = array<i64: 1056, 1>}, {pipeline_mode = #tpu.pipeline_mode<synchronous>, transform_indices = @transform_4, window_bounds = array<i64: 192, 1>}, {pipeline_mode = #tpu.pipeline_mode<synchronous>, transform_indices = @transform_5, window_bounds = array<i64: 192, 1>}, {pipeline_mode = #tpu.pipeline_mode<synchronous>, transform_indices = @transform_6, window_bounds = array<i64: 192, 196>}]} {
    %c0 = arith.constant 0 : index
    %c0_0 = arith.constant 0 : index
    %0 = vector.load %arg1[%c0, %c0_0] : memref<1056x196xf32, #tpu.memory_space<vmem>>, vector<1056x196xf32>
    %cst = arith.constant dense<0.000000e+00> : vector<1056xf32>
    %1 = vector.multi_reduction <add>, %0, %cst [1] : vector<1056x196xf32> to vector<1056xf32>
    %2 = vector.shape_cast %1 : vector<1056xf32> to vector<1056x1xf32>
    %3 = arith.mulf %0, %0 : vector<1056x196xf32>
    %cst_1 = arith.constant dense<0.000000e+00> : vector<1056xf32>
    %4 = vector.multi_reduction <add>, %3, %cst_1 [1] : vector<1056x196xf32> to vector<1056xf32>
    %5 = vector.shape_cast %4 : vector<1056xf32> to vector<1056x1xf32>
    %cst_2 = arith.constant 0.00510204071 : f32
    %6 = vector.broadcast %cst_2 : f32 to vector<1056x1xf32>
    %7 = arith.mulf %2, %6 : vector<1056x1xf32>
    %cst_3 = arith.constant 0.00510204071 : f32
    %8 = vector.broadcast %cst_3 : f32 to vector<1056x1xf32>
    %9 = arith.mulf %5, %8 : vector<1056x1xf32>
    %10 = arith.mulf %7, %7 : vector<1056x1xf32>
    %11 = arith.subf %9, %10 : vector<1056x1xf32>
    %cst_4 = arith.constant 9.99999974E-6 : f32
    %12 = vector.broadcast %cst_4 : f32 to vector<1056x1xf32>
    %13 = arith.addf %11, %12 : vector<1056x1xf32>
    %14 = math.rsqrt %13 : vector<1056x1xf32>
    %c0_5 = arith.constant 0 : index
    %c0_6 = arith.constant 0 : index
    %15 = vector.load %arg3[%c0_5, %c0_6] : memref<1056x1xf32, #tpu.memory_space<vmem>>, vector<1056x1xf32>
    %16 = arith.mulf %14, %15 : vector<1056x1xf32>
    %17 = vector.broadcast %7 : vector<1056x1xf32> to vector<1056x196xf32>
    %18 = arith.subf %0, %17 : vector<1056x196xf32>
    %19 = vector.broadcast %16 : vector<1056x1xf32> to vector<1056x196xf32>
    %20 = arith.mulf %18, %19 : vector<1056x196xf32>
    %c0_7 = arith.constant 0 : index
    %c0_8 = arith.constant 0 : index
    %21 = vector.load %arg4[%c0_7, %c0_8] : memref<1056x1xf32, #tpu.memory_space<vmem>>, vector<1056x1xf32>
    %22 = vector.broadcast %21 : vector<1056x1xf32> to vector<1056x196xf32>
    %23 = arith.addf %20, %22 : vector<1056x196xf32>
    %cst_9 = arith.constant 0.000000e+00 : f32
    %24 = vector.broadcast %cst_9 : f32 to vector<1056x196xf32>
    %25 = arith.maximumf %23, %24 : vector<1056x196xf32>
    %c0_10 = arith.constant 0 : index
    %c0_11 = arith.constant 0 : index
    %26 = vector.load %arg2[%c0_10, %c0_11] : memref<192x1056xf32, #tpu.memory_space<vmem>>, vector<192x1056xf32>
    %27 = arith.truncf %26 : vector<192x1056xf32> to vector<192x1056xbf16>
    %28 = arith.truncf %25 : vector<1056x196xf32> to vector<1056x196xbf16>
    %cst_12 = arith.constant dense<0.000000e+00> : vector<192x196xf32>
    %29 = tpu.matmul %27, %28, %cst_12 {dimension_numbers = #tpu.dot_dimension_numbers<[1], [0], [0], [1], [0, 0, 1, 1], [], []>} : vector<192x1056xbf16>, vector<1056x196xbf16>, vector<192x196xf32> -> vector<192x196xf32>
    %cst_13 = arith.constant dense<0.000000e+00> : vector<192xf32>
    %30 = vector.multi_reduction <add>, %29, %cst_13 [1] : vector<192x196xf32> to vector<192xf32>
    %31 = vector.shape_cast %30 : vector<192xf32> to vector<192x1xf32>
    %32 = arith.mulf %29, %29 : vector<192x196xf32>
    %cst_14 = arith.constant dense<0.000000e+00> : vector<192xf32>
    %33 = vector.multi_reduction <add>, %32, %cst_14 [1] : vector<192x196xf32> to vector<192xf32>
    %34 = vector.shape_cast %33 : vector<192xf32> to vector<192x1xf32>
    %cst_15 = arith.constant 0.00510204071 : f32
    %35 = vector.broadcast %cst_15 : f32 to vector<192x1xf32>
    %36 = arith.mulf %31, %35 : vector<192x1xf32>
    %cst_16 = arith.constant 0.00510204071 : f32
    %37 = vector.broadcast %cst_16 : f32 to vector<192x1xf32>
    %38 = arith.mulf %34, %37 : vector<192x1xf32>
    %39 = arith.mulf %36, %36 : vector<192x1xf32>
    %40 = arith.subf %38, %39 : vector<192x1xf32>
    %cst_17 = arith.constant 9.99999974E-6 : f32
    %41 = vector.broadcast %cst_17 : f32 to vector<192x1xf32>
    %42 = arith.addf %40, %41 : vector<192x1xf32>
    %43 = math.rsqrt %42 : vector<192x1xf32>
    %c0_18 = arith.constant 0 : index
    %c0_19 = arith.constant 0 : index
    %44 = vector.load %arg5[%c0_18, %c0_19] : memref<192x1xf32, #tpu.memory_space<vmem>>, vector<192x1xf32>
    %45 = arith.mulf %43, %44 : vector<192x1xf32>
    %46 = vector.broadcast %36 : vector<192x1xf32> to vector<192x196xf32>
    %47 = arith.subf %29, %46 : vector<192x196xf32>
    %48 = vector.broadcast %45 : vector<192x1xf32> to vector<192x196xf32>
    %49 = arith.mulf %47, %48 : vector<192x196xf32>
    %c0_20 = arith.constant 0 : index
    %c0_21 = arith.constant 0 : index
    %50 = vector.load %arg6[%c0_20, %c0_21] : memref<192x1xf32, #tpu.memory_space<vmem>>, vector<192x1xf32>
    %51 = vector.broadcast %50 : vector<192x1xf32> to vector<192x196xf32>
    %52 = arith.addf %49, %51 : vector<192x196xf32>
    %c0_22 = arith.constant 0 : index
    %c0_23 = arith.constant 0 : index
    %53 = vector.load %arg7[%c0_22, %c0_23] : memref<192x196xf32, #tpu.memory_space<vmem>>, vector<192x196xf32>
    tpu.vector_store %arg7[%c0_22, %c0_23], %52 {strides = array<i32>} : memref<192x196xf32, #tpu.memory_space<vmem>>, vector<192x196xf32>,
    return
  }
  func.func @transform_0(%arg0: i32) -> (i32, i32) {
    %c0_i32 = arith.constant 0 : i32
    %c0_i32_0 = arith.constant 0 : i32
    %c0_i32_1 = arith.constant 0 : i32
    return %c0_i32, %c0_i32_0 : i32, i32
  }
  func.func @transform_1(%arg0: i32) -> (i32, i32) {
    %c0_i32 = arith.constant 0 : i32
    %c0_i32_0 = arith.constant 0 : i32
    %c0_i32_1 = arith.constant 0 : i32
    return %c0_i32, %c0_i32_0 : i32, i32
  }
  func.func @transform_2(%arg0: i32) -> (i32, i32) {
    %c0_i32 = arith.constant 0 : i32
    %c0_i32_0 = arith.constant 0 : i32
    %c0_i32_1 = arith.constant 0 : i32
    return %c0_i32, %c0_i32_0 : i32, i32
  }
  func.func @transform_3(%arg0: i32) -> (i32, i32) {
    %c0_i32 = arith.constant 0 : i32
    %c0_i32_0 = arith.constant 0 : i32
    %c0_i32_1 = arith.constant 0 : i32
    return %c0_i32, %c0_i32_0 : i32, i32
  }
  func.func @transform_4(%arg0: i32) -> (i32, i32) {
    %c0_i32 = arith.constant 0 : i32
    %c0_i32_0 = arith.constant 0 : i32
    %c0_i32_1 = arith.constant 0 : i32
    return %c0_i32, %c0_i32_0 : i32, i32
  }
  func.func @transform_5(%arg0: i32) -> (i32, i32) {
    %c0_i32 = arith.constant 0 : i32
    %c0_i32_0 = arith.constant 0 : i32
    %c0_i32_1 = arith.constant 0 : i32
    return %c0_i32, %c0_i32_0 : i32, i32
  }
  func.func @transform_6(%arg0: i32) -> (i32, i32) {
    %c0_i32 = arith.constant 0 : i32
    %c0_i32_0 = arith.constant 0 : i32
    %c0_i32_1 = arith.constant 0 : i32
    return %c0_i32, %c0_i32_0 : i32, i32
  }
}

</mosaic_0001>

<llo_original>
// kernel: bn_relu_conv_bn.1
$region0: #{bn_relu_conv_bn.1}
  #allocation0 [shape = 'u32[]', space=smem, size = 0x4, offset = 0x4, fixed_abs, tag = 'smem constant byte address 0x4 - core index']
  #allocation1 [shape = 'u32[144,128]{1,0:T(1,128)}', space=vmem, size = 0x12000, scoped, tag = 'internal scratch']
  %s0 = inlined_call_operand.vmem [shape: f32[1056,196], index: 0, kind: input, shape index: {}]
  %s1 = inlined_call_operand.vmem [shape: f32[192,1056], index: 1, kind: input, shape index: {}]
  %s2 = inlined_call_operand.vmem [shape: f32[1056,1], index: 2, kind: input, shape index: {}]
  %s3 = inlined_call_operand.vmem [shape: f32[1056,1], index: 3, kind: input, shape index: {}]
  %s4 = inlined_call_operand.vmem [shape: f32[192,1], index: 4, kind: input, shape index: {}]
  %s5 = inlined_call_operand.vmem [shape: f32[192,1], index: 5, kind: input, shape index: {}]
  %s6 = inlined_call_operand.vmem [shape: f32[192,196], index: 6, kind: output, shape index: {}]
  %s7 = sld [smem:[#allocation0]]
  $region34: #{bn_relu_conv_bn.1} parent=0
    _
  %s9 = ssub.s32 1, %s7
  %s10 = scalar_select 0, %s9, %s7
  // Predicated region
  $region2: #{bn_relu_conv_bn.1} parent=0 // pred_check
    _
  $region3: #{bn_relu_conv_bn.1} parent=0 // pred_check_branch
    %12 = sbr.rel (0) target = $region5
  $region4: #{bn_relu_conv_bn.1} parent=0 // pred_region
    _
  $region5: #{bn_relu_conv_bn.1} parent=0 // pred_fallthru
    _
  // Predicated region
  $region6: #{bn_relu_conv_bn.1} parent=0 // pred_check
    _
  $region7: #{bn_relu_conv_bn.1} parent=0 // pred_check_branch
    %14 = sbr.rel (0) target = $region9
  $region8: #{bn_relu_conv_bn.1} parent=0 // pred_region
    _
  $region9: #{bn_relu_conv_bn.1} parent=0 // pred_fallthru
    _
  // Predicated region
  $region10: #{bn_relu_conv_bn.1} parent=0 // pred_check
    _
  $region11: #{bn_relu_conv_bn.1} parent=0 // pred_check_branch
    %16 = sbr.rel (0) target = $region13
  $region12: #{bn_relu_conv_bn.1} parent=0 // pred_region
    _
  $region13: #{bn_relu_conv_bn.1} parent=0 // pred_fallthru
    _
  // Predicated region
  $region14: #{bn_relu_conv_bn.1} parent=0 // pred_check
    _
  $region15: #{bn_relu_conv_bn.1} parent=0 // pred_check_branch
    %18 = sbr.rel (0) target = $region17
  $region16: #{bn_relu_conv_bn.1} parent=0 // pred_region
    _
  $region17: #{bn_relu_conv_bn.1} parent=0 // pred_fallthru
    _
  // Predicated region
  $region18: #{bn_relu_conv_bn.1} parent=0 // pred_check
    _
  $region19: #{bn_relu_conv_bn.1} parent=0 // pred_check_branch
    %20 = sbr.rel (0) target = $region21
  $region20: #{bn_relu_conv_bn.1} parent=0 // pred_region
    _
  $region21: #{bn_relu_conv_bn.1} parent=0 // pred_fallthru
    _
  // Predicated region
  $region22: #{bn_relu_conv_bn.1} parent=0 // pred_check
    _
  $region23: #{bn_relu_conv_bn.1} parent=0 // pred_check_branch
    %22 = sbr.rel (0) target = $region25
  $region24: #{bn_relu_conv_bn.1} parent=0 // pred_region
    _
  $region25: #{bn_relu_conv_bn.1} parent=0 // pred_fallthru
    _
  %v24 = vld [vmem:[%s0] sm:$0xff]
  %v25 = vld [vmem:[%s0 + $0x8] sm:$0xff]
  %v26 = vld [vmem:[%s0 + $0x10] sm:$0xff]
  %v27 = vld [vmem:[%s0 + $0x18] sm:$0xff]
  %v28 = vld [vmem:[%s0 + $0x20] sm:$0xff]
  %v29 = vld [vmem:[%s0 + $0x28] sm:$0xff]
  %v30 = vld [vmem:[%s0 + $0x30] sm:$0xff]
  %v31 = vld [vmem:[%s0 + $0x38] sm:$0xff]
  %v32 = vld [vmem:[%s0 + $0x40] sm:$0xff]
  %v33 = vld [vmem:[%s0 + $0x48] sm:$0xff]
  %v34 = vld [vmem:[%s0 + $0x50] sm:$0xff]
  %v35 = vld [vmem:[%s0 + $0x58] sm:$0xff]
  %v36 = vld [vmem:[%s0 + $0x60] sm:$0xff]
  %v37 = vld [vmem:[%s0 + $0x68] sm:$0xff]
  %v38 = vld [vmem:[%s0 + $0x70] sm:$0xff]
  %v39 = vld [vmem:[%s0 + $0x78] sm:$0xff]
  %v40 = vld [vmem:[%s0 + $0x80] sm:$0xff]
  %v41 = vld [vmem:[%s0 + $0x88] sm:$0xff]
  %v42 = vld [vmem:[%s0 + $0x90] sm:$0xff]
  %v43 = vld [vmem:[%s0 + $0x98] sm:$0xff]
  %v44 = vld [vmem:[%s0 + $0xa0] sm:$0xff]
  %v45 = vld [vmem:[%s0 + $0xa8] sm:$0xff]
  %v46 = vld [vmem:[%s0 + $0xb0] sm:$0xff]
  %v47 = vld [vmem:[%s0 + $0xb8] sm:$0xff]
  %v48 = vld [vmem:[%s0 + $0xc0] sm:$0xff]
  %v49 = vld [vmem:[%s0 + $0xc8] sm:$0xff]
  %v50 = vld [vmem:[%s0 + $0xd0] sm:$0xff]
  %v51 = vld [vmem:[%s0 + $0xd8] sm:$0xff]
  %v52 = vld [vmem:[%s0 + $0xe0] sm:$0xff]
  %v53 = vld [vmem:[%s0 + $0xe8] sm:$0xff]
  %v54 = vld [vmem:[%s0 + $0xf0] sm:$0xff]
  %v55 = vld [vmem:[%s0 + $0xf8] sm:$0xff]
  %v56 = vld [vmem:[%s0 + $0x100] sm:$0xff]
  %v57 = vld [vmem:[%s0 + $0x108] sm:$0xff]
  %v58 = vld [vmem:[%s0 + $0x110] sm:$0xff]
  %v59 = vld [vmem:[%s0 + $0x118] sm:$0xff]
  %v60 = vld [vmem:[%s0 + $0x120] sm:$0xff]
  %v61 = vld [vmem:[%s0 + $0x128] sm:$0xff]
  %v62 = vld [vmem:[%s0 + $0x130] sm:$0xff]
  %v63 = vld [vmem:[%s0 + $0x138] sm:$0xff]
  %v64 = vld [vmem:[%s0 + $0x140] sm:$0xff]
  %v65 = vld [vmem:[%s0 + $0x148] sm:$0xff]
  %v66 = vld [vmem:[%s0 + $0x150] sm:$0xff]
  %v67 = vld [vmem:[%s0 + $0x158] sm:$0xff]
  %v68 = vld [vmem:[%s0 + $0x160] sm:$0xff]
  %v69 = vld [vmem:[%s0 + $0x168] sm:$0xff]
  %v70 = vld [vmem:[%s0 + $0x170] sm:$0xff]
  %v71 = vld [vmem:[%s0 + $0x178] sm:$0xff]
  %v72 = vld [vmem:[%s0 + $0x180] sm:$0xff]
  %v73 = vld [vmem:[%s0 + $0x188] sm:$0xff]
  %v74 = vld [vmem:[%s0 + $0x190] sm:$0xff]
  %v75 = vld [vmem:[%s0 + $0x198] sm:$0xff]
  %v76 = vld [vmem:[%s0 + $0x1a0] sm:$0xff]
  %v77 = vld [vmem:[%s0 + $0x1a8] sm:$0xff]
  %v78 = vld [vmem:[%s0 + $0x1b0] sm:$0xff]
  %v79 = vld [vmem:[%s0 + $0x1b8] sm:$0xff]
  %v80 = vld [vmem:[%s0 + $0x1c0] sm:$0xff]
  %v81 = vld [vmem:[%s0 + $0x1c8] sm:$0xff]
  %v82 = vld [vmem:[%s0 + $0x1d0] sm:$0xff]
  %v83 = vld [vmem:[%s0 + $0x1d8] sm:$0xff]
  %v84 = vld [vmem:[%s0 + $0x1e0] sm:$0xff]
  %v85 = vld [vmem:[%s0 + $0x1e8] sm:$0xff]
  %v86 = vld [vmem:[%s0 + $0x1f0] sm:$0xff]
  %v87 = vld [vmem:[%s0 + $0x1f8] sm:$0xff]
  %v88 = vld [vmem:[%s0 + $0x200] sm:$0xff]
  %v89 = vld [vmem:[%s0 + $0x208] sm:$0xff]
  %v90 = vld [vmem:[%s0 + $0x210] sm:$0xff]
  %v91 = vld [vmem:[%s0 + $0x218] sm:$0xff]
  %v92 = vld [vmem:[%s0 + $0x220] sm:$0xff]
  %v93 = vld [vmem:[%s0 + $0x228] sm:$0xff]
  %v94 = vld [vmem:[%s0 + $0x230] sm:$0xff]
  %v95 = vld [vmem:[%s0 + $0x238] sm:$0xff]
  %v96 = vld [vmem:[%s0 + $0x240] sm:$0xff]
  %v97 = vld [vmem:[%s0 + $0x248] sm:$0xff]
  %v98 = vld [vmem:[%s0 + $0x250] sm:$0xff]
  %v99 = vld [vmem:[%s0 + $0x258] sm:$0xff]
  %v100 = vld [vmem:[%s0 + $0x260] sm:$0xff]
  %v101 = vld [vmem:[%s0 + $0x268] sm:$0xff]
  %v102 = vld [vmem:[%s0 + $0x270] sm:$0xff]
  %v103 = vld [vmem:[%s0 + $0x278] sm:$0xff]
  %v104 = vld [vmem:[%s0 + $0x280] sm:$0xff]
  %v105 = vld [vmem:[%s0 + $0x288] sm:$0xff]
  %v106 = vld [vmem:[%s0 + $0x290] sm:$0xff]
  %v107 = vld [vmem:[%s0 + $0x298] sm:$0xff]
  %v108 = vld [vmem:[%s0 + $0x2a0] sm:$0xff]
  %v109 = vld [vmem:[%s0 + $0x2a8] sm:$0xff]
  %v110 = vld [vmem:[%s0 + $0x2b0] sm:$0xff]
  %v111 = vld [vmem:[%s0 + $0x2b8] sm:$0xff]
  %v112 = vld [vmem:[%s0 + $0x2c0] sm:$0xff]
  %v113 = vld [vmem:[%s0 + $0x2c8] sm:$0xff]
  %v114 = vld [vmem:[%s0 + $0x2d0] sm:$0xff]
  %v115 = vld [vmem:[%s0 + $0x2d8] sm:$0xff]
  %v116 = vld [vmem:[%s0 + $0x2e0] sm:$0xff]
  %v117 = vld [vmem:[%s0 + $0x2e8] sm:$0xff]
  %v118 = vld [vmem:[%s0 + $0x2f0] sm:$0xff]
  %v119 = vld [vmem:[%s0 + $0x2f8] sm:$0xff]
  %v120 = vld [vmem:[%s0 + $0x300] sm:$0xff]
  %v121 = vld [vmem:[%s0 + $0x308] sm:$0xff]
  %v122 = vld [vmem:[%s0 + $0x310] sm:$0xff]
  %v123 = vld [vmem:[%s0 + $0x318] sm:$0xff]
  %v124 = vld [vmem:[%s0 + $0x320] sm:$0xff]
  %v125 = vld [vmem:[%s0 + $0x328] sm:$0xff]
  %v126 = vld [vmem:[%s0 + $0x330] sm:$0xff]
  %v127 = vld [vmem:[%s0 + $0x338] sm:$0xff]
  %v128 = vld [vmem:[%s0 + $0x340] sm:$0xff]
  %v129 = vld [vmem:[%s0 + $0x348] sm:$0xff]
  %v130 = vld [vmem:[%s0 + $0x350] sm:$0xff]
  %v131 = vld [vmem:[%s0 + $0x358] sm:$0xff]
  %v132 = vld [vmem:[%s0 + $0x360] sm:$0xff]
  %v133 = vld [vmem:[%s0 + $0x368] sm:$0xff]
  %v134 = vld [vmem:[%s0 + $0x370] sm:$0xff]
  %v135 = vld [vmem:[%s0 + $0x378] sm:$0xff]
  %v136 = vld [vmem:[%s0 + $0x380] sm:$0xff]
  %v137 = vld [vmem:[%s0 + $0x388] sm:$0xff]
  %v138 = vld [vmem:[%s0 + $0x390] sm:$0xff]
  %v139 = vld [vmem:[%s0 + $0x398] sm:$0xff]
  %v140 = vld [vmem:[%s0 + $0x3a0] sm:$0xff]
  %v141 = vld [vmem:[%s0 + $0x3a8] sm:$0xff]
  %v142 = vld [vmem:[%s0 + $0x3b0] sm:$0xff]
  %v143 = vld [vmem:[%s0 + $0x3b8] sm:$0xff]
  %v144 = vld [vmem:[%s0 + $0x3c0] sm:$0xff]
  %v145 = vld [vmem:[%s0 + $0x3c8] sm:$0xff]
  %v146 = vld [vmem:[%s0 + $0x3d0] sm:$0xff]
  %v147 = vld [vmem:[%s0 + $0x3d8] sm:$0xff]
  %v148 = vld [vmem:[%s0 + $0x3e0] sm:$0xff]
  %v149 = vld [vmem:[%s0 + $0x3e8] sm:$0xff]
  %v150 = vld [vmem:[%s0 + $0x3f0] sm:$0xff]
  %v151 = vld [vmem:[%s0 + $0x3f8] sm:$0xff]
  %v152 = vld [vmem:[%s0 + $0x400] sm:$0xff]
  %v153 = vld [vmem:[%s0 + $0x408] sm:$0xff]
  %v154 = vld [vmem:[%s0 + $0x410] sm:$0xff]
  %v155 = vld [vmem:[%s0 + $0x418] sm:$0xff]
  %v156 = vld [vmem:[%s0 + $0x420] sm:$0xff]
  %v157 = vld [vmem:[%s0 + $0x428] sm:$0xff]
  %v158 = vld [vmem:[%s0 + $0x430] sm:$0xff]
  %v159 = vld [vmem:[%s0 + $0x438] sm:$0xff]
  %v160 = vld [vmem:[%s0 + $0x440] sm:$0xff]
  %v161 = vld [vmem:[%s0 + $0x448] sm:$0xff]
  %v162 = vld [vmem:[%s0 + $0x450] sm:$0xff]
  %v163 = vld [vmem:[%s0 + $0x458] sm:$0xff]
  %v164 = vld [vmem:[%s0 + $0x460] sm:$0xff]
  %v165 = vld [vmem:[%s0 + $0x468] sm:$0xff]
  %v166 = vld [vmem:[%s0 + $0x470] sm:$0xff]
  %v167 = vld [vmem:[%s0 + $0x478] sm:$0xff]
  %v168 = vld [vmem:[%s0 + $0x480] sm:$0xff]
  %v169 = vld [vmem:[%s0 + $0x488] sm:$0xff]
  %v170 = vld [vmem:[%s0 + $0x490] sm:$0xff]
  %v171 = vld [vmem:[%s0 + $0x498] sm:$0xff]
  %v172 = vld [vmem:[%s0 + $0x4a0] sm:$0xff]
  %v173 = vld [vmem:[%s0 + $0x4a8] sm:$0xff]
  %v174 = vld [vmem:[%s0 + $0x4b0] sm:$0xff]
  %v175 = vld [vmem:[%s0 + $0x4b8] sm:$0xff]
  %v176 = vld [vmem:[%s0 + $0x4c0] sm:$0xff]
  %v177 = vld [vmem:[%s0 + $0x4c8] sm:$0xff]
  %v178 = vld [vmem:[%s0 + $0x4d0] sm:$0xff]
  %v179 = vld [vmem:[%s0 + $0x4d8] sm:$0xff]
  %v180 = vld [vmem:[%s0 + $0x4e0] sm:$0xff]
  %v181 = vld [vmem:[%s0 + $0x4e8] sm:$0xff]
  %v182 = vld [vmem:[%s0 + $0x4f0] sm:$0xff]
  %v183 = vld [vmem:[%s0 + $0x4f8] sm:$0xff]
  %v184 = vld [vmem:[%s0 + $0x500] sm:$0xff]
  %v185 = vld [vmem:[%s0 + $0x508] sm:$0xff]
  %v186 = vld [vmem:[%s0 + $0x510] sm:$0xff]
  %v187 = vld [vmem:[%s0 + $0x518] sm:$0xff]
  %v188 = vld [vmem:[%s0 + $0x520] sm:$0xff]
  %v189 = vld [vmem:[%s0 + $0x528] sm:$0xff]
  %v190 = vld [vmem:[%s0 + $0x530] sm:$0xff]
  %v191 = vld [vmem:[%s0 + $0x538] sm:$0xff]
  %v192 = vld [vmem:[%s0 + $0x540] sm:$0xff]
  %v193 = vld [vmem:[%s0 + $0x548] sm:$0xff]
  %v194 = vld [vmem:[%s0 + $0x550] sm:$0xff]
  %v195 = vld [vmem:[%s0 + $0x558] sm:$0xff]
  %v196 = vld [vmem:[%s0 + $0x560] sm:$0xff]
  %v197 = vld [vmem:[%s0 + $0x568] sm:$0xff]
  %v198 = vld [vmem:[%s0 + $0x570] sm:$0xff]
  %v199 = vld [vmem:[%s0 + $0x578] sm:$0xff]
  %v200 = vld [vmem:[%s0 + $0x580] sm:$0xff]
  %v201 = vld [vmem:[%s0 + $0x588] sm:$0xff]
  %v202 = vld [vmem:[%s0 + $0x590] sm:$0xff]
  %v203 = vld [vmem:[%s0 + $0x598] sm:$0xff]
  %v204 = vld [vmem:[%s0 + $0x5a0] sm:$0xff]
  %v205 = vld [vmem:[%s0 + $0x5a8] sm:$0xff]
  %v206 = vld [vmem:[%s0 + $0x5b0] sm:$0xff]
  %v207 = vld [vmem:[%s0 + $0x5b8] sm:$0xff]
  %v208 = vld [vmem:[%s0 + $0x5c0] sm:$0xff]
  %v209 = vld [vmem:[%s0 + $0x5c8] sm:$0xff]
  %v210 = vld [vmem:[%s0 + $0x5d0] sm:$0xff]
  %v211 = vld [vmem:[%s0 + $0x5d8] sm:$0xff]
  %v212 = vld [vmem:[%s0 + $0x5e0] sm:$0xff]
  %v213 = vld [vmem:[%s0 + $0x5e8] sm:$0xff]
  %v214 = vld [vmem:[%s0 + $0x5f0] sm:$0xff]
  %v215 = vld [vmem:[%s0 + $0x5f8] sm:$0xff]
  %v216 = vld [vmem:[%s0 + $0x600] sm:$0xff]
  %v217 = vld [vmem:[%s0 + $0x608] sm:$0xff]
  %v218 = vld [vmem:[%s0 + $0x610] sm:$0xff]
  %v219 = vld [vmem:[%s0 + $0x618] sm:$0xff]
  %v220 = vld [vmem:[%s0 + $0x620] sm:$0xff]
  %v221 = vld [vmem:[%s0 + $0x628] sm:$0xff]
  %v222 = vld [vmem:[%s0 + $0x630] sm:$0xff]
  %v223 = vld [vmem:[%s0 + $0x638] sm:$0xff]
  %v224 = vld [vmem:[%s0 + $0x640] sm:$0xff]
  %v225 = vld [vmem:[%s0 + $0x648] sm:$0xff]
  %v226 = vld [vmem:[%s0 + $0x650] sm:$0xff]
  %v227 = vld [vmem:[%s0 + $0x658] sm:$0xff]
  %v228 = vld [vmem:[%s0 + $0x660] sm:$0xff]
  %v229 = vld [vmem:[%s0 + $0x668] sm:$0xff]
  %v230 = vld [vmem:[%s0 + $0x670] sm:$0xff]
  %v231 = vld [vmem:[%s0 + $0x678] sm:$0xff]
  %v232 = vld [vmem:[%s0 + $0x680] sm:$0xff]
  %v233 = vld [vmem:[%s0 + $0x688] sm:$0xff]
  %v234 = vld [vmem:[%s0 + $0x690] sm:$0xff]
  %v235 = vld [vmem:[%s0 + $0x698] sm:$0xff]
  %v236 = vld [vmem:[%s0 + $0x6a0] sm:$0xff]
  %v237 = vld [vmem:[%s0 + $0x6a8] sm:$0xff]
  %v238 = vld [vmem:[%s0 + $0x6b0] sm:$0xff]
  %v239 = vld [vmem:[%s0 + $0x6b8] sm:$0xff]
  %v240 = vld [vmem:[%s0 + $0x6c0] sm:$0xff]
  %v241 = vld [vmem:[%s0 + $0x6c8] sm:$0xff]
  %v242 = vld [vmem:[%s0 + $0x6d0] sm:$0xff]
  %v243 = vld [vmem:[%s0 + $0x6d8] sm:$0xff]
  %v244 = vld [vmem:[%s0 + $0x6e0] sm:$0xff]
  %v245 = vld [vmem:[%s0 + $0x6e8] sm:$0xff]
  %v246 = vld [vmem:[%s0 + $0x6f0] sm:$0xff]
  %v247 = vld [vmem:[%s0 + $0x6f8] sm:$0xff]
  %v248 = vld [vmem:[%s0 + $0x700] sm:$0xff]
  %v249 = vld [vmem:[%s0 + $0x708] sm:$0xff]
  %v250 = vld [vmem:[%s0 + $0x710] sm:$0xff]
  %v251 = vld [vmem:[%s0 + $0x718] sm:$0xff]
  %v252 = vld [vmem:[%s0 + $0x720] sm:$0xff]
  %v253 = vld [vmem:[%s0 + $0x728] sm:$0xff]
  %v254 = vld [vmem:[%s0 + $0x730] sm:$0xff]
  %v255 = vld [vmem:[%s0 + $0x738] sm:$0xff]
  %v256 = vld [vmem:[%s0 + $0x740] sm:$0xff]
  %v257 = vld [vmem:[%s0 + $0x748] sm:$0xff]
  %v258 = vld [vmem:[%s0 + $0x750] sm:$0xff]
  %v259 = vld [vmem:[%s0 + $0x758] sm:$0xff]
  %v260 = vld [vmem:[%s0 + $0x760] sm:$0xff]
  %v261 = vld [vmem:[%s0 + $0x768] sm:$0xff]
  %v262 = vld [vmem:[%s0 + $0x770] sm:$0xff]
  %v263 = vld [vmem:[%s0 + $0x778] sm:$0xff]
  %v264 = vld [vmem:[%s0 + $0x780] sm:$0xff]
  %v265 = vld [vmem:[%s0 + $0x788] sm:$0xff]
  %v266 = vld [vmem:[%s0 + $0x790] sm:$0xff]
  %v267 = vld [vmem:[%s0 + $0x798] sm:$0xff]
  %v268 = vld [vmem:[%s0 + $0x7a0] sm:$0xff]
  %v269 = vld [vmem:[%s0 + $0x7a8] sm:$0xff]
  %v270 = vld [vmem:[%s0 + $0x7b0] sm:$0xff]
  %v271 = vld [vmem:[%s0 + $0x7b8] sm:$0xff]
  %v272 = vld [vmem:[%s0 + $0x7c0] sm:$0xff]
  %v273 = vld [vmem:[%s0 + $0x7c8] sm:$0xff]
  %v274 = vld [vmem:[%s0 + $0x7d0] sm:$0xff]
  %v275 = vld [vmem:[%s0 + $0x7d8] sm:$0xff]
  %v276 = vld [vmem:[%s0 + $0x7e0] sm:$0xff]
  %v277 = vld [vmem:[%s0 + $0x7e8] sm:$0xff]
  %v278 = vld [vmem:[%s0 + $0x7f0] sm:$0xff]
  %v279 = vld [vmem:[%s0 + $0x7f8] sm:$0xff]
  %v280 = vld [vmem:[%s0 + $0x800] sm:$0xff]
  %v281 = vld [vmem:[%s0 + $0x808] sm:$0xff]
  %v282 = vld [vmem:[%s0 + $0x810] sm:$0xff]
  %v283 = vld [vmem:[%s0 + $0x818] sm:$0xff]
  %v284 = vld [vmem:[%s0 + $0x820] sm:$0xff]
  %v285 = vld [vmem:[%s0 + $0x828] sm:$0xff]
  %v286 = vld [vmem:[%s0 + $0x830] sm:$0xff]
  %v287 = vld [vmem:[%s0 + $0x838] sm:$0xff]
  %vm288 = vcmask 556032
  %v289 = vsel %vm288, %v25, 0.0
  %v290 = vadd.f32 %v24, %v289
  %291 = vadd.xlane.f32.xlu0 %v290
  %v292 = vpop.xlane.xlu0 %291
  %v293 = vsel %vm288, %v27, 0.0
  %v294 = vadd.f32 %v26, %v293
  %295 = vadd.xlane.f32.xlu0 %v294
  %v296 = vpop.xlane.xlu0 %295
  %v297 = vsel %vm288, %v29, 0.0
  %v298 = vadd.f32 %v28, %v297
  %299 = vadd.xlane.f32.xlu0 %v298
  %v300 = vpop.xlane.xlu0 %299
  %v301 = vsel %vm288, %v31, 0.0
  %v302 = vadd.f32 %v30, %v301
  %303 = vadd.xlane.f32.xlu0 %v302
  %v304 = vpop.xlane.xlu0 %303
  %v305 = vsel %vm288, %v33, 0.0
  %v306 = vadd.f32 %v32, %v305
  %307 = vadd.xlane.f32.xlu0 %v306
  %v308 = vpop.xlane.xlu0 %307
  %v309 = vsel %vm288, %v35, 0.0
  %v310 = vadd.f32 %v34, %v309
  %311 = vadd.xlane.f32.xlu0 %v310
  %v312 = vpop.xlane.xlu0 %311
  %v313 = vsel %vm288, %v37, 0.0
  %v314 = vadd.f32 %v36, %v313
  %315 = vadd.xlane.f32.xlu0 %v314
  %v316 = vpop.xlane.xlu0 %315
  %v317 = vsel %vm288, %v39, 0.0
  %v318 = vadd.f32 %v38, %v317
  %319 = vadd.xlane.f32.xlu0 %v318
  %v320 = vpop.xlane.xlu0 %319
  %v321 = vsel %vm288, %v41, 0.0
  %v322 = vadd.f32 %v40, %v321
  %323 = vadd.xlane.f32.xlu0 %v322
  %v324 = vpop.xlane.xlu0 %323
  %v325 = vsel %vm288, %v43, 0.0
  %v326 = vadd.f32 %v42, %v325
  %327 = vadd.xlane.f32.xlu0 %v326
  %v328 = vpop.xlane.xlu0 %327
  %v329 = vsel %vm288, %v45, 0.0
  %v330 = vadd.f32 %v44, %v329
  %331 = vadd.xlane.f32.xlu0 %v330
  %v332 = vpop.xlane.xlu0 %331
  %v333 = vsel %vm288, %v47, 0.0
  %v334 = vadd.f32 %v46, %v333
  %335 = vadd.xlane.f32.xlu0 %v334
  %v336 = vpop.xlane.xlu0 %335
  %v337 = vsel %vm288, %v49, 0.0
  %v338 = vadd.f32 %v48, %v337
  %339 = vadd.xlane.f32.xlu0 %v338
  %v340 = vpop.xlane.xlu0 %339
  %v341 = vsel %vm288, %v51, 0.0
  %v342 = vadd.f32 %v50, %v341
  %343 = vadd.xlane.f32.xlu0 %v342
  %v344 = vpop.xlane.xlu0 %343
  %v345 = vsel %vm288, %v53, 0.0
  %v346 = vadd.f32 %v52, %v345
  %347 = vadd.xlane.f32.xlu0 %v346
  %v348 = vpop.xlane.xlu0 %347
  %v349 = vsel %vm288, %v55, 0.0
  %v350 = vadd.f32 %v54, %v349
  %351 = vadd.xlane.f32.xlu0 %v350
  %v352 = vpop.xlane.xlu0 %351
  %v353 = vsel %vm288, %v57, 0.0
  %v354 = vadd.f32 %v56, %v353
  %355 = vadd.xlane.f32.xlu0 %v354
  %v356 = vpop.xlane.xlu0 %355
  %v357 = vsel %vm288, %v59, 0.0
  %v358 = vadd.f32 %v58, %v357
  %359 = vadd.xlane.f32.xlu0 %v358
  %v360 = vpop.xlane.xlu0 %359
  %v361 = vsel %vm288, %v61, 0.0
  %v362 = vadd.f32 %v60, %v361
  %363 = vadd.xlane.f32.xlu0 %v362
  %v364 = vpop.xlane.xlu0 %363
  %v365 = vsel %vm288, %v63, 0.0
  %v366 = vadd.f32 %v62, %v365
  %367 = vadd.xlane.f32.xlu0 %v366
  %v368 = vpop.xlane.xlu0 %367
  %v369 = vsel %vm288, %v65, 0.0
  %v370 = vadd.f32 %v64, %v369
  %371 = vadd.xlane.f32.xlu0 %v370
  %v372 = vpop.xlane.xlu0 %371
  %v373 = vsel %vm288, %v67, 0.0
  %v374 = vadd.f32 %v66, %v373
  %375 = vadd.xlane.f32.xlu0 %v374
  %v376 = vpop.xlane.xlu0 %375
  %v377 = vsel %vm288, %v69, 0.0
  %v378 = vadd.f32 %v68, %v377
  %379 = vadd.xlane.f32.xlu0 %v378
  %v380 = vpop.xlane.xlu0 %379
  %v381 = vsel %vm288, %v71, 0.0
  %v382 = vadd.f32 %v70, %v381
  %383 = vadd.xlane.f32.xlu0 %v382
  %v384 = vpop.xlane.xlu0 %383
  %v385 = vsel %vm288, %v73, 0.0
  %v386 = vadd.f32 %v72, %v385
  %387 = vadd.xlane.f32.xlu0 %v386
  %v388 = vpop.xlane.xlu0 %387
  %v389 = vsel %vm288, %v75, 0.0
  %v390 = vadd.f32 %v74, %v389
  %391 = vadd.xlane.f32.xlu0 %v390
  %v392 = vpop.xlane.xlu0 %391
  %v393 = vsel %vm288, %v77, 0.0
  %v394 = vadd.f32 %v76, %v393
  %395 = vadd.xlane.f32.xlu0 %v394
  %v396 = vpop.xlane.xlu0 %395
  %v397 = vsel %vm288, %v79, 0.0
  %v398 = vadd.f32 %v78, %v397
  %399 = vadd.xlane.f32.xlu0 %v398
  %v400 = vpop.xlane.xlu0 %399
  %v401 = vsel %vm288, %v81, 0.0
  %v402 = vadd.f32 %v80, %v401
  %403 = vadd.xlane.f32.xlu0 %v402
  %v404 = vpop.xlane.xlu0 %403
  %v405 = vsel %vm288, %v83, 0.0
  %v406 = vadd.f32 %v82, %v405
  %407 = vadd.xlane.f32.xlu0 %v406
  %v408 = vpop.xlane.xlu0 %407
  %v409 = vsel %vm288, %v85, 0.0
  %v410 = vadd.f32 %v84, %v409
  %411 = vadd.xlane.f32.xlu0 %v410
  %v412 = vpop.xlane.xlu0 %411
  %v413 = vsel %vm288, %v87, 0.0
  %v414 = vadd.f32 %v86, %v413
  %415 = vadd.xlane.f32.xlu0 %v414
  %v416 = vpop.xlane.xlu0 %415
  %v417 = vsel %vm288, %v89, 0.0
  %v418 = vadd.f32 %v88, %v417
  %419 = vadd.xlane.f32.xlu0 %v418
  %v420 = vpop.xlane.xlu0 %419
  %v421 = vsel %vm288, %v91, 0.0
  %v422 = vadd.f32 %v90, %v421
  %423 = vadd.xlane.f32.xlu0 %v422
  %v424 = vpop.xlane.xlu0 %423
  %v425 = vsel %vm288, %v93, 0.0
  %v426 = vadd.f32 %v92, %v425
  %427 = vadd.xlane.f32.xlu0 %v426
  %v428 = vpop.xlane.xlu0 %427
  %v429 = vsel %vm288, %v95, 0.0
  %v430 = vadd.f32 %v94, %v429
  %431 = vadd.xlane.f32.xlu0 %v430
  %v432 = vpop.xlane.xlu0 %431
  %v433 = vsel %vm288, %v97, 0.0
  %v434 = vadd.f32 %v96, %v433
  %435 = vadd.xlane.f32.xlu0 %v434
  %v436 = vpop.xlane.xlu0 %435
  %v437 = vsel %vm288, %v99, 0.0
  %v438 = vadd.f32 %v98, %v437
  %439 = vadd.xlane.f32.xlu0 %v438
  %v440 = vpop.xlane.xlu0 %439
  %v441 = vsel %vm288, %v101, 0.0
  %v442 = vadd.f32 %v100, %v441
  %443 = vadd.xlane.f32.xlu0 %v442
  %v444 = vpop.xlane.xlu0 %443
  %v445 = vsel %vm288, %v103, 0.0
  %v446 = vadd.f32 %v102, %v445
  %447 = vadd.xlane.f32.xlu0 %v446
  %v448 = vpop.xlane.xlu0 %447
  %v449 = vsel %vm288, %v105, 0.0
  %v450 = vadd.f32 %v104, %v449
  %451 = vadd.xlane.f32.xlu0 %v450
  %v452 = vpop.xlane.xlu0 %451
  %v453 = vsel %vm288, %v107, 0.0
  %v454 = vadd.f32 %v106, %v453
  %455 = vadd.xlane.f32.xlu0 %v454
  %v456 = vpop.xlane.xlu0 %455
  %v457 = vsel %vm288, %v109, 0.0
  %v458 = vadd.f32 %v108, %v457
  %459 = vadd.xlane.f32.xlu0 %v458
  %v460 = vpop.xlane.xlu0 %459
  %v461 = vsel %vm288, %v111, 0.0
  %v462 = vadd.f32 %v110, %v461
  %463 = vadd.xlane.f32.xlu0 %v462
  %v464 = vpop.xlane.xlu0 %463
  %v465 = vsel %vm288, %v113, 0.0
  %v466 = vadd.f32 %v112, %v465
  %467 = vadd.xlane.f32.xlu0 %v466
  %v468 = vpop.xlane.xlu0 %467
  %v469 = vsel %vm288, %v115, 0.0
  %v470 = vadd.f32 %v114, %v469
  %471 = vadd.xlane.f32.xlu0 %v470
  %v472 = vpop.xlane.xlu0 %471
  %v473 = vsel %vm288, %v117, 0.0
  %v474 = vadd.f32 %v116, %v473
  %475 = vadd.xlane.f32.xlu0 %v474
  %v476 = vpop.xlane.xlu0 %475
  %v477 = vsel %vm288, %v119, 0.0
  %v478 = vadd.f32 %v118, %v477
  %479 = vadd.xlane.f32.xlu0 %v478
  %v480 = vpop.xlane.xlu0 %479
  %v481 = vsel %vm288, %v121, 0.0
  %v482 = vadd.f32 %v120, %v481
  %483 = vadd.xlane.f32.xlu0 %v482
  %v484 = vpop.xlane.xlu0 %483
  %v485 = vsel %vm288, %v123, 0.0
  %v486 = vadd.f32 %v122, %v485
  %487 = vadd.xlane.f32.xlu0 %v486
  %v488 = vpop.xlane.xlu0 %487
  %v489 = vsel %vm288, %v125, 0.0
  %v490 = vadd.f32 %v124, %v489
  %491 = vadd.xlane.f32.xlu0 %v490
  %v492 = vpop.xlane.xlu0 %491
  %v493 = vsel %vm288, %v127, 0.0
  %v494 = vadd.f32 %v126, %v493
  %495 = vadd.xlane.f32.xlu0 %v494
  %v496 = vpop.xlane.xlu0 %495
  %v497 = vsel %vm288, %v129, 0.0
  %v498 = vadd.f32 %v128, %v497
  %499 = vadd.xlane.f32.xlu0 %v498
  %v500 = vpop.xlane.xlu0 %499
  %v501 = vsel %vm288, %v131, 0.0
  %v502 = vadd.f32 %v130, %v501
  %503 = vadd.xlane.f32.xlu0 %v502
  %v504 = vpop.xlane.xlu0 %503
  %v505 = vsel %vm288, %v133, 0.0
  %v506 = vadd.f32 %v132, %v505
  %507 = vadd.xlane.f32.xlu0 %v506
  %v508 = vpop.xlane.xlu0 %507
  %v509 = vsel %vm288, %v135, 0.0
  %v510 = vadd.f32 %v134, %v509
  %511 = vadd.xlane.f32.xlu0 %v510
  %v512 = vpop.xlane.xlu0 %511
  %v513 = vsel %vm288, %v137, 0.0
  %v514 = vadd.f32 %v136, %v513
  %515 = vadd.xlane.f32.xlu0 %v514
  %v516 = vpop.xlane.xlu0 %515
  %v517 = vsel %vm288, %v139, 0.0
  %v518 = vadd.f32 %v138, %v517
  %519 = vadd.xlane.f32.xlu0 %v518
  %v520 = vpop.xlane.xlu0 %519
  %v521 = vsel %vm288, %v141, 0.0
  %v522 = vadd.f32 %v140, %v521
  %523 = vadd.xlane.f32.xlu0 %v522
  %v524 = vpop.xlane.xlu0 %523
  %v525 = vsel %vm288, %v143, 0.0
  %v526 = vadd.f32 %v142, %v525
  %527 = vadd.xlane.f32.xlu0 %v526
  %v528 = vpop.xlane.xlu0 %527
  %v529 = vsel %vm288, %v145, 0.0
  %v530 = vadd.f32 %v144, %v529
  %531 = vadd.xlane.f32.xlu0 %v530
  %v532 = vpop.xlane.xlu0 %531
  %v533 = vsel %vm288, %v147, 0.0
  %v534 = vadd.f32 %v146, %v533
  %535 = vadd.xlane.f32.xlu0 %v534
  %v536 = vpop.xlane.xlu0 %535
  %v537 = vsel %vm288, %v149, 0.0
  %v538 = vadd.f32 %v148, %v537
  %539 = vadd.xlane.f32.xlu0 %v538
  %v540 = vpop.xlane.xlu0 %539
  %v541 = vsel %vm288, %v151, 0.0
  %v542 = vadd.f32 %v150, %v541
  %543 = vadd.xlane.f32.xlu0 %v542
  %v544 = vpop.xlane.xlu0 %543
  %v545 = vsel %vm288, %v153, 0.0
  %v546 = vadd.f32 %v152, %v545
  %547 = vadd.xlane.f32.xlu0 %v546
  %v548 = vpop.xlane.xlu0 %547
  %v549 = vsel %vm288, %v155, 0.0
  %v550 = vadd.f32 %v154, %v549
  %551 = vadd.xlane.f32.xlu0 %v550
  %v552 = vpop.xlane.xlu0 %551
  %v553 = vsel %vm288, %v157, 0.0
  %v554 = vadd.f32 %v156, %v553
  %555 = vadd.xlane.f32.xlu0 %v554
  %v556 = vpop.xlane.xlu0 %555
  %v557 = vsel %vm288, %v159, 0.0
  %v558 = vadd.f32 %v158, %v557
  %559 = vadd.xlane.f32.xlu0 %v558
  %v560 = vpop.xlane.xlu0 %559
  %v561 = vsel %vm288, %v161, 0.0
  %v562 = vadd.f32 %v160, %v561
  %563 = vadd.xlane.f32.xlu0 %v562
  %v564 = vpop.xlane.xlu0 %563
  %v565 = vsel %vm288, %v163, 0.0
  %v566 = vadd.f32 %v162, %v565
  %567 = vadd.xlane.f32.xlu0 %v566
  %v568 = vpop.xlane.xlu0 %567
  %v569 = vsel %vm288, %v165, 0.0
  %v570 = vadd.f32 %v164, %v569
  %571 = vadd.xlane.f32.xlu0 %v570
  %v572 = vpop.xlane.xlu0 %571
  %v573 = vsel %vm288, %v167, 0.0
  %v574 = vadd.f32 %v166, %v573
  %575 = vadd.xlane.f32.xlu0 %v574
  %v576 = vpop.xlane.xlu0 %575
  %v577 = vsel %vm288, %v169, 0.0
  %v578 = vadd.f32 %v168, %v577
  %579 = vadd.xlane.f32.xlu0 %v578
  %v580 = vpop.xlane.xlu0 %579
  %v581 = vsel %vm288, %v171, 0.0
  %v582 = vadd.f32 %v170, %v581
  %583 = vadd.xlane.f32.xlu0 %v582
  %v584 = vpop.xlane.xlu0 %583
  %v585 = vsel %vm288, %v173, 0.0
  %v586 = vadd.f32 %v172, %v585
  %587 = vadd.xlane.f32.xlu0 %v586
  %v588 = vpop.xlane.xlu0 %587
  %v589 = vsel %vm288, %v175, 0.0
  %v590 = vadd.f32 %v174, %v589
  %591 = vadd.xlane.f32.xlu0 %v590
  %v592 = vpop.xlane.xlu0 %591
  %v593 = vsel %vm288, %v177, 0.0
  %v594 = vadd.f32 %v176, %v593
  %595 = vadd.xlane.f32.xlu0 %v594
  %v596 = vpop.xlane.xlu0 %595
  %v597 = vsel %vm288, %v179, 0.0
  %v598 = vadd.f32 %v178, %v597
  %599 = vadd.xlane.f32.xlu0 %v598
  %v600 = vpop.xlane.xlu0 %599
  %v601 = vsel %vm288, %v181, 0.0
  %v602 = vadd.f32 %v180, %v601
  %603 = vadd.xlane.f32.xlu0 %v602
  %v604 = vpop.xlane.xlu0 %603
  %v605 = vsel %vm288, %v183, 0.0
  %v606 = vadd.f32 %v182, %v605
  %607 = vadd.xlane.f32.xlu0 %v606
  %v608 = vpop.xlane.xlu0 %607
  %v609 = vsel %vm288, %v185, 0.0
  %v610 = vadd.f32 %v184, %v609
  %611 = vadd.xlane.f32.xlu0 %v610
  %v612 = vpop.xlane.xlu0 %611
  %v613 = vsel %vm288, %v187, 0.0
  %v614 = vadd.f32 %v186, %v613
  %615 = vadd.xlane.f32.xlu0 %v614
  %v616 = vpop.xlane.xlu0 %615
  %v617 = vsel %vm288, %v189, 0.0
  %v618 = vadd.f32 %v188, %v617
  %619 = vadd.xlane.f32.xlu0 %v618
  %v620 = vpop.xlane.xlu0 %619
  %v621 = vsel %vm288, %v191, 0.0
  %v622 = vadd.f32 %v190, %v621
  %623 = vadd.xlane.f32.xlu0 %v622
  %v624 = vpop.xlane.xlu0 %623
  %v625 = vsel %vm288, %v193, 0.0
  %v626 = vadd.f32 %v192, %v625
  %627 = vadd.xlane.f32.xlu0 %v626
  %v628 = vpop.xlane.xlu0 %627
  %v629 = vsel %vm288, %v195, 0.0
  %v630 = vadd.f32 %v194, %v629
  %631 = vadd.xlane.f32.xlu0 %v630
  %v632 = vpop.xlane.xlu0 %631
  %v633 = vsel %vm288, %v197, 0.0
  %v634 = vadd.f32 %v196, %v633
  %635 = vadd.xlane.f32.xlu0 %v634
  %v636 = vpop.xlane.xlu0 %635
  %v637 = vsel %vm288, %v199, 0.0
  %v638 = vadd.f32 %v198, %v637
  %639 = vadd.xlane.f32.xlu0 %v638
  %v640 = vpop.xlane.xlu0 %639
  %v641 = vsel %vm288, %v201, 0.0
  %v642 = vadd.f32 %v200, %v641
  %643 = vadd.xlane.f32.xlu0 %v642
  %v644 = vpop.xlane.xlu0 %643
  %v645 = vsel %vm288, %v203, 0.0
  %v646 = vadd.f32 %v202, %v645
  %647 = vadd.xlane.f32.xlu0 %v646
  %v648 = vpop.xlane.xlu0 %647
  %v649 = vsel %vm288, %v205, 0.0
  %v650 = vadd.f32 %v204, %v649
  %651 = vadd.xlane.f32.xlu0 %v650
  %v652 = vpop.xlane.xlu0 %651
  %v653 = vsel %vm288, %v207, 0.0
  %v654 = vadd.f32 %v206, %v653
  %655 = vadd.xlane.f32.xlu0 %v654
  %v656 = vpop.xlane.xlu0 %655
  %v657 = vsel %vm288, %v209, 0.0
  %v658 = vadd.f32 %v208, %v657
  %659 = vadd.xlane.f32.xlu0 %v658
  %v660 = vpop.xlane.xlu0 %659
  %v661 = vsel %vm288, %v211, 0.0
  %v662 = vadd.f32 %v210, %v661
  %663 = vadd.xlane.f32.xlu0 %v662
  %v664 = vpop.xlane.xlu0 %663
  %v665 = vsel %vm288, %v213, 0.0
  %v666 = vadd.f32 %v212, %v665
  %667 = vadd.xlane.f32.xlu0 %v666
  %v668 = vpop.xlane.xlu0 %667
  %v669 = vsel %vm288, %v215, 0.0
  %v670 = vadd.f32 %v214, %v669
  %671 = vadd.xlane.f32.xlu0 %v670
  %v672 = vpop.xlane.xlu0 %671
  %v673 = vsel %vm288, %v217, 0.0
  %v674 = vadd.f32 %v216, %v673
  %675 = vadd.xlane.f32.xlu0 %v674
  %v676 = vpop.xlane.xlu0 %675
  %v677 = vsel %vm288, %v219, 0.0
  %v678 = vadd.f32 %v218, %v677
  %679 = vadd.xlane.f32.xlu0 %v678
  %v680 = vpop.xlane.xlu0 %679
  %v681 = vsel %vm288, %v221, 0.0
  %v682 = vadd.f32 %v220, %v681
  %683 = vadd.xlane.f32.xlu0 %v682
  %v684 = vpop.xlane.xlu0 %683
  %v685 = vsel %vm288, %v223, 0.0
  %v686 = vadd.f32 %v222, %v685
  %687 = vadd.xlane.f32.xlu0 %v686
  %v688 = vpop.xlane.xlu0 %687
  %v689 = vsel %vm288, %v225, 0.0
  %v690 = vadd.f32 %v224, %v689
  %691 = vadd.xlane.f32.xlu0 %v690
  %v692 = vpop.xlane.xlu0 %691
  %v693 = vsel %vm288, %v227, 0.0
  %v694 = vadd.f32 %v226, %v693
  %695 = vadd.xlane.f32.xlu0 %v694
  %v696 = vpop.xlane.xlu0 %695
  %v697 = vsel %vm288, %v229, 0.0
  %v698 = vadd.f32 %v228, %v697
  %699 = vadd.xlane.f32.xlu0 %v698
  %v700 = vpop.xlane.xlu0 %699
  %v701 = vsel %vm288, %v231, 0.0
  %v702 = vadd.f32 %v230, %v701
  %703 = vadd.xlane.f32.xlu0 %v702
  %v704 = vpop.xlane.xlu0 %703
  %v705 = vsel %vm288, %v233, 0.0
  %v706 = vadd.f32 %v232, %v705
  %707 = vadd.xlane.f32.xlu0 %v706
  %v708 = vpop.xlane.xlu0 %707
  %v709 = vsel %vm288, %v235, 0.0
  %v710 = vadd.f32 %v234, %v709
  %711 = vadd.xlane.f32.xlu0 %v710
  %v712 = vpop.xlane.xlu0 %711
  %v713 = vsel %vm288, %v237, 0.0
  %v714 = vadd.f32 %v236, %v713
  %715 = vadd.xlane.f32.xlu0 %v714
  %v716 = vpop.xlane.xlu0 %715
  %v717 = vsel %vm288, %v239, 0.0
  %v718 = vadd.f32 %v238, %v717
  %719 = vadd.xlane.f32.xlu0 %v718
  %v720 = vpop.xlane.xlu0 %719
  %v721 = vsel %vm288, %v241, 0.0
  %v722 = vadd.f32 %v240, %v721
  %723 = vadd.xlane.f32.xlu0 %v722
  %v724 = vpop.xlane.xlu0 %723
  %v725 = vsel %vm288, %v243, 0.0
  %v726 = vadd.f32 %v242, %v725
  %727 = vadd.xlane.f32.xlu0 %v726
  %v728 = vpop.xlane.xlu0 %727
  %v729 = vsel %vm288, %v245, 0.0
  %v730 = vadd.f32 %v244, %v729
  %731 = vadd.xlane.f32.xlu0 %v730
  %v732 = vpop.xlane.xlu0 %731
  %v733 = vsel %vm288, %v247, 0.0
  %v734 = vadd.f32 %v246, %v733
  %735 = vadd.xlane.f32.xlu0 %v734
  %v736 = vpop.xlane.xlu0 %735
  %v737 = vsel %vm288, %v249, 0.0
  %v738 = vadd.f32 %v248, %v737
  %739 = vadd.xlane.f32.xlu0 %v738
  %v740 = vpop.xlane.xlu0 %739
  %v741 = vsel %vm288, %v251, 0.0
  %v742 = vadd.f32 %v250, %v741
  %743 = vadd.xlane.f32.xlu0 %v742
  %v744 = vpop.xlane.xlu0 %743
  %v745 = vsel %vm288, %v253, 0.0
  %v746 = vadd.f32 %v252, %v745
  %747 = vadd.xlane.f32.xlu0 %v746
  %v748 = vpop.xlane.xlu0 %747
  %v749 = vsel %vm288, %v255, 0.0
  %v750 = vadd.f32 %v254, %v749
  %751 = vadd.xlane.f32.xlu0 %v750
  %v752 = vpop.xlane.xlu0 %751
  %v753 = vsel %vm288, %v257, 0.0
  %v754 = vadd.f32 %v256, %v753
  %755 = vadd.xlane.f32.xlu0 %v754
  %v756 = vpop.xlane.xlu0 %755
  %v757 = vsel %vm288, %v259, 0.0
  %v758 = vadd.f32 %v258, %v757
  %759 = vadd.xlane.f32.xlu0 %v758
  %v760 = vpop.xlane.xlu0 %759
  %v761 = vsel %vm288, %v261, 0.0
  %v762 = vadd.f32 %v260, %v761
  %763 = vadd.xlane.f32.xlu0 %v762
  %v764 = vpop.xlane.xlu0 %763
  %v765 = vsel %vm288, %v263, 0.0
  %v766 = vadd.f32 %v262, %v765
  %767 = vadd.xlane.f32.xlu0 %v766
  %v768 = vpop.xlane.xlu0 %767
  %v769 = vsel %vm288, %v265, 0.0
  %v770 = vadd.f32 %v264, %v769
  %771 = vadd.xlane.f32.xlu0 %v770
  %v772 = vpop.xlane.xlu0 %771
  %v773 = vsel %vm288, %v267, 0.0
  %v774 = vadd.f32 %v266, %v773
  %775 = vadd.xlane.f32.xlu0 %v774
  %v776 = vpop.xlane.xlu0 %775
  %v777 = vsel %vm288, %v269, 0.0
  %v778 = vadd.f32 %v268, %v777
  %779 = vadd.xlane.f32.xlu0 %v778
  %v780 = vpop.xlane.xlu0 %779
  %v781 = vsel %vm288, %v271, 0.0
  %v782 = vadd.f32 %v270, %v781
  %783 = vadd.xlane.f32.xlu0 %v782
  %v784 = vpop.xlane.xlu0 %783
  %v785 = vsel %vm288, %v273, 0.0
  %v786 = vadd.f32 %v272, %v785
  %787 = vadd.xlane.f32.xlu0 %v786
  %v788 = vpop.xlane.xlu0 %787
  %v789 = vsel %vm288, %v275, 0.0
  %v790 = vadd.f32 %v274, %v789
  %791 = vadd.xlane.f32.xlu0 %v790
  %v792 = vpop.xlane.xlu0 %791
  %v793 = vsel %vm288, %v277, 0.0
  %v794 = vadd.f32 %v276, %v793
  %795 = vadd.xlane.f32.xlu0 %v794
  %v796 = vpop.xlane.xlu0 %795
  %v797 = vsel %vm288, %v279, 0.0
  %v798 = vadd.f32 %v278, %v797
  %799 = vadd.xlane.f32.xlu0 %v798
  %v800 = vpop.xlane.xlu0 %799
  %v801 = vsel %vm288, %v281, 0.0
  %v802 = vadd.f32 %v280, %v801
  %803 = vadd.xlane.f32.xlu0 %v802
  %v804 = vpop.xlane.xlu0 %803
  %v805 = vsel %vm288, %v283, 0.0
  %v806 = vadd.f32 %v282, %v805
  %807 = vadd.xlane.f32.xlu0 %v806
  %v808 = vpop.xlane.xlu0 %807
  %v809 = vsel %vm288, %v285, 0.0
  %v810 = vadd.f32 %v284, %v809
  %811 = vadd.xlane.f32.xlu0 %v810
  %v812 = vpop.xlane.xlu0 %811
  %v813 = vsel %vm288, %v287, 0.0
  %v814 = vadd.f32 %v286, %v813
  %815 = vadd.xlane.f32.xlu0 %v814
  %v816 = vpop.xlane.xlu0 %815
  %v817 = vmul.f32 %v24, %v24
  %v818 = vmul.f32 %v25, %v25
  %v819 = vmul.f32 %v26, %v26
  %v820 = vmul.f32 %v27, %v27
  %v821 = vmul.f32 %v28, %v28
  %v822 = vmul.f32 %v29, %v29
  %v823 = vmul.f32 %v30, %v30
  %v824 = vmul.f32 %v31, %v31
  %v825 = vmul.f32 %v32, %v32
  %v826 = vmul.f32 %v33, %v33
  %v827 = vmul.f32 %v34, %v34
  %v828 = vmul.f32 %v35, %v35
  %v829 = vmul.f32 %v36, %v36
  %v830 = vmul.f32 %v37, %v37
  %v831 = vmul.f32 %v38, %v38
  %v832 = vmul.f32 %v39, %v39
  %v833 = vmul.f32 %v40, %v40
  %v834 = vmul.f32 %v41, %v41
  %v835 = vmul.f32 %v42, %v42
  %v836 = vmul.f32 %v43, %v43
  %v837 = vmul.f32 %v44, %v44
  %v838 = vmul.f32 %v45, %v45
  %v839 = vmul.f32 %v46, %v46
  %v840 = vmul.f32 %v47, %v47
  %v841 = vmul.f32 %v48, %v48
  %v842 = vmul.f32 %v49, %v49
  %v843 = vmul.f32 %v50, %v50
  %v844 = vmul.f32 %v51, %v51
  %v845 = vmul.f32 %v52, %v52
  %v846 = vmul.f32 %v53, %v53
  %v847 = vmul.f32 %v54, %v54
  %v848 = vmul.f32 %v55, %v55
  %v849 = vmul.f32 %v56, %v56
  %v850 = vmul.f32 %v57, %v57
  %v851 = vmul.f32 %v58, %v58
  %v852 = vmul.f32 %v59, %v59
  %v853 = vmul.f32 %v60, %v60
  %v854 = vmul.f32 %v61, %v61
  %v855 = vmul.f32 %v62, %v62
  %v856 = vmul.f32 %v63, %v63
  %v857 = vmul.f32 %v64, %v64
  %v858 = vmul.f32 %v65, %v65
  %v859 = vmul.f32 %v66, %v66
  %v860 = vmul.f32 %v67, %v67
  %v861 = vmul.f32 %v68, %v68
  %v862 = vmul.f32 %v69, %v69
  %v863 = vmul.f32 %v70, %v70
  %v864 = vmul.f32 %v71, %v71
  %v865 = vmul.f32 %v72, %v72
  %v866 = vmul.f32 %v73, %v73
  %v867 = vmul.f32 %v74, %v74
  %v868 = vmul.f32 %v75, %v75
  %v869 = vmul.f32 %v76, %v76
  %v870 = vmul.f32 %v77, %v77
  %v871 = vmul.f32 %v78, %v78
  %v872 = vmul.f32 %v79, %v79
  %v873 = vmul.f32 %v80, %v80
  %v874 = vmul.f32 %v81, %v81
  %v875 = vmul.f32 %v82, %v82
  %v876 = vmul.f32 %v83, %v83
  %v877 = vmul.f32 %v84, %v84
  %v878 = vmul.f32 %v85, %v85
  %v879 = vmul.f32 %v86, %v86
  %v880 = vmul.f32 %v87, %v87
  %v881 = vmul.f32 %v88, %v88
  %v882 = vmul.f32 %v89, %v89
  %v883 = vmul.f32 %v90, %v90
  %v884 = vmul.f32 %v91, %v91
  %v885 = vmul.f32 %v92, %v92
  %v886 = vmul.f32 %v93, %v93
  %v887 = vmul.f32 %v94, %v94
  %v888 = vmul.f32 %v95, %v95
  %v889 = vmul.f32 %v96, %v96
  %v890 = vmul.f32 %v97, %v97
  %v891 = vmul.f32 %v98, %v98
  %v892 = vmul.f32 %v99, %v99
  %v893 = vmul.f32 %v100, %v100
  %v894 = vmul.f32 %v101, %v101
  %v895 = vmul.f32 %v102, %v102
  %v896 = vmul.f32 %v103, %v103
  %v897 = vmul.f32 %v104, %v104
  %v898 = vmul.f32 %v105, %v105
  %v899 = vmul.f32 %v106, %v106
  %v900 = vmul.f32 %v107, %v107
  %v901 = vmul.f32 %v108, %v108
  %v902 = vmul.f32 %v109, %v109
  %v903 = vmul.f32 %v110, %v110
  %v904 = vmul.f32 %v111, %v111
  %v905 = vmul.f32 %v112, %v112
  %v906 = vmul.f32 %v113, %v113
  %v907 = vmul.f32 %v114, %v114
  %v908 = vmul.f32 %v115, %v115
  %v909 = vmul.f32 %v116, %v116
  %v910 = vmul.f32 %v117, %v117
  %v911 = vmul.f32 %v118, %v118
  %v912 = vmul.f32 %v119, %v119
  %v913 = vmul.f32 %v120, %v120
  %v914 = vmul.f32 %v121, %v121
  %v915 = vmul.f32 %v122, %v122
  %v916 = vmul.f32 %v123, %v123
  %v917 = vmul.f32 %v124, %v124
  %v918 = vmul.f32 %v125, %v125
  %v919 = vmul.f32 %v126, %v126
  %v920 = vmul.f32 %v127, %v127
  %v921 = vmul.f32 %v128, %v128
  %v922 = vmul.f32 %v129, %v129
  %v923 = vmul.f32 %v130, %v130
  %v924 = vmul.f32 %v131, %v131
  %v925 = vmul.f32 %v132, %v132
  %v926 = vmul.f32 %v133, %v133
  %v927 = vmul.f32 %v134, %v134
  %v928 = vmul.f32 %v135, %v135
  %v929 = vmul.f32 %v136, %v136
  %v930 = vmul.f32 %v137, %v137
  %v931 = vmul.f32 %v138, %v138
  %v932 = vmul.f32 %v139, %v139
  %v933 = vmul.f32 %v140, %v140
  %v934 = vmul.f32 %v141, %v141
  %v935 = vmul.f32 %v142, %v142
  %v936 = vmul.f32 %v143, %v143
  %v937 = vmul.f32 %v144, %v144
  %v938 = vmul.f32 %v145, %v145
  %v939 = vmul.f32 %v146, %v146
  %v940 = vmul.f32 %v147, %v147
  %v941 = vmul.f32 %v148, %v148
  %v942 = vmul.f32 %v149, %v149
  %v943 = vmul.f32 %v150, %v150
  %v944 = vmul.f32 %v151, %v151
  %v945 = vmul.f32 %v152, %v152
  %v946 = vmul.f32 %v153, %v153
  %v947 = vmul.f32 %v154, %v154
  %v948 = vmul.f32 %v155, %v155
  %v949 = vmul.f32 %v156, %v156
  %v950 = vmul.f32 %v157, %v157
  %v951 = vmul.f32 %v158, %v158
  %v952 = vmul.f32 %v159, %v159
  %v953 = vmul.f32 %v160, %v160
  %v954 = vmul.f32 %v161, %v161
  %v955 = vmul.f32 %v162, %v162
  %v956 = vmul.f32 %v163, %v163
  %v957 = vmul.f32 %v164, %v164
  %v958 = vmul.f32 %v165, %v165
  %v959 = vmul.f32 %v166, %v166
  %v960 = vmul.f32 %v167, %v167
  %v961 = vmul.f32 %v168, %v168
  %v962 = vmul.f32 %v169, %v169
  %v963 = vmul.f32 %v170, %v170
  %v964 = vmul.f32 %v171, %v171
  %v965 = vmul.f32 %v172, %v172
  %v966 = vmul.f32 %v173, %v173
  %v967 = vmul.f32 %v174, %v174
  %v968 = vmul.f32 %v175, %v175
  %v969 = vmul.f32 %v176, %v176
  %v970 = vmul.f32 %v177, %v177
  %v971 = vmul.f32 %v178, %v178
  %v972 = vmul.f32 %v179, %v179
  %v973 = vmul.f32 %v180, %v180
  %v974 = vmul.f32 %v181, %v181
  %v975 = vmul.f32 %v182, %v182
  %v976 = vmul.f32 %v183, %v183
  %v977 = vmul.f32 %v184, %v184
  %v978 = vmul.f32 %v185, %v185
  %v979 = vmul.f32 %v186, %v186
  %v980 = vmul.f32 %v187, %v187
  %v981 = vmul.f32 %v188, %v188
  %v982 = vmul.f32 %v189, %v189
  %v983 = vmul.f32 %v190, %v190
  %v984 = vmul.f32 %v191, %v191
  %v985 = vmul.f32 %v192, %v192
  %v986 = vmul.f32 %v193, %v193
  %v987 = vmul.f32 %v194, %v194
  %v988 = vmul.f32 %v195, %v195
  %v989 = vmul.f32 %v196, %v196
  %v990 = vmul.f32 %v197, %v197
  %v991 = vmul.f32 %v198, %v198
  %v992 = vmul.f32 %v199, %v199
  %v993 = vmul.f32 %v200, %v200
  %v994 = vmul.f32 %v201, %v201
  %v995 = vmul.f32 %v202, %v202
  %v996 = vmul.f32 %v203, %v203
  %v997 = vmul.f32 %v204, %v204
  %v998 = vmul.f32 %v205, %v205
  %v999 = vmul.f32 %v206, %v206
  %v1000 = vmul.f32 %v207, %v207
  %v1001 = vmul.f32 %v208, %v208
  %v1002 = vmul.f32 %v209, %v209
  %v1003 = vmul.f32 %v210, %v210
  %v1004 = vmul.f32 %v211, %v211
  %v1005 = vmul.f32 %v212, %v212
  %v1006 = vmul.f32 %v213, %v213
  %v1007 = vmul.f32 %v214, %v214
  %v1008 = vmul.f32 %v215, %v215
  %v1009 = vmul.f32 %v216, %v216
  %v1010 = vmul.f32 %v217, %v217
  %v1011 = vmul.f32 %v218, %v218
  %v1012 = vmul.f32 %v219, %v219
  %v1013 = vmul.f32 %v220, %v220
  %v1014 = vmul.f32 %v221, %v221
  %v1015 = vmul.f32 %v222, %v222
  %v1016 = vmul.f32 %v223, %v223
  %v1017 = vmul.f32 %v224, %v224
  %v1018 = vmul.f32 %v225, %v225
  %v1019 = vmul.f32 %v226, %v226
  %v1020 = vmul.f32 %v227, %v227
  %v1021 = vmul.f32 %v228, %v228
  %v1022 = vmul.f32 %v229, %v229
  %v1023 = vmul.f32 %v230, %v230
  %v1024 = vmul.f32 %v231, %v231
  %v1025 = vmul.f32 %v232, %v232
  %v1026 = vmul.f32 %v233, %v233
  %v1027 = vmul.f32 %v234, %v234
  %v1028 = vmul.f32 %v235, %v235
  %v1029 = vmul.f32 %v236, %v236
  %v1030 = vmul.f32 %v237, %v237
  %v1031 = vmul.f32 %v238, %v238
  %v1032 = vmul.f32 %v239, %v239
  %v1033 = vmul.f32 %v240, %v240
  %v1034 = vmul.f32 %v241, %v241
  %v1035 = vmul.f32 %v242, %v242
  %v1036 = vmul.f32 %v243, %v243
  %v1037 = vmul.f32 %v244, %v244
  %v1038 = vmul.f32 %v245, %v245
  %v1039 = vmul.f32 %v246, %v246
  %v1040 = vmul.f32 %v247, %v247
  %v1041 = vmul.f32 %v248, %v248
  %v1042 = vmul.f32 %v249, %v249
  %v1043 = vmul.f32 %v250, %v250
  %v1044 = vmul.f32 %v251, %v251
  %v1045 = vmul.f32 %v252, %v252
  %v1046 = vmul.f32 %v253, %v253
  %v1047 = vmul.f32 %v254, %v254
  %v1048 = vmul.f32 %v255, %v255
  %v1049 = vmul.f32 %v256, %v256
  %v1050 = vmul.f32 %v257, %v257
  %v1051 = vmul.f32 %v258, %v258
  %v1052 = vmul.f32 %v259, %v259
  %v1053 = vmul.f32 %v260, %v260
  %v1054 = vmul.f32 %v261, %v261
  %v1055 = vmul.f32 %v262, %v262
  %v1056 = vmul.f32 %v263, %v263
  %v1057 = vmul.f32 %v264, %v264
  %v1058 = vmul.f32 %v265, %v265
  %v1059 = vmul.f32 %v266, %v266
  %v1060 = vmul.f32 %v267, %v267
  %v1061 = vmul.f32 %v268, %v268
  %v1062 = vmul.f32 %v269, %v269
  %v1063 = vmul.f32 %v270, %v270
  %v1064 = vmul.f32 %v271, %v271
  %v1065 = vmul.f32 %v272, %v272
  %v1066 = vmul.f32 %v273, %v273
  %v1067 = vmul.f32 %v274, %v274
  %v1068 = vmul.f32 %v275, %v275
  %v1069 = vmul.f32 %v276, %v276
  %v1070 = vmul.f32 %v277, %v277
  %v1071 = vmul.f32 %v278, %v278
  %v1072 = vmul.f32 %v279, %v279
  %v1073 = vmul.f32 %v280, %v280
  %v1074 = vmul.f32 %v281, %v281
  %v1075 = vmul.f32 %v282, %v282
  %v1076 = vmul.f32 %v283, %v283
  %v1077 = vmul.f32 %v284, %v284
  %v1078 = vmul.f32 %v285, %v285
  %v1079 = vmul.f32 %v286, %v286
  %v1080 = vmul.f32 %v287, %v287
  %v1081 = vsel %vm288, %v818, 0.0
  %v1082 = vadd.f32 %v817, %v1081
  %1083 = vadd.xlane.f32.xlu0 %v1082
  %v1084 = vpop.xlane.xlu0 %1083
  %v1085 = vsel %vm288, %v820, 0.0
  %v1086 = vadd.f32 %v819, %v1085
  %1087 = vadd.xlane.f32.xlu0 %v1086
  %v1088 = vpop.xlane.xlu0 %1087
  %v1089 = vsel %vm288, %v822, 0.0
  %v1090 = vadd.f32 %v821, %v1089
  %1091 = vadd.xlane.f32.xlu0 %v1090
  %v1092 = vpop.xlane.xlu0 %1091
  %v1093 = vsel %vm288, %v824, 0.0
  %v1094 = vadd.f32 %v823, %v1093
  %1095 = vadd.xlane.f32.xlu0 %v1094
  %v1096 = vpop.xlane.xlu0 %1095
  %v1097 = vsel %vm288, %v826, 0.0
  %v1098 = vadd.f32 %v825, %v1097
  %1099 = vadd.xlane.f32.xlu0 %v1098
  %v1100 = vpop.xlane.xlu0 %1099
  %v1101 = vsel %vm288, %v828, 0.0
  %v1102 = vadd.f32 %v827, %v1101
  %1103 = vadd.xlane.f32.xlu0 %v1102
  %v1104 = vpop.xlane.xlu0 %1103
  %v1105 = vsel %vm288, %v830, 0.0
  %v1106 = vadd.f32 %v829, %v1105
  %1107 = vadd.xlane.f32.xlu0 %v1106
  %v1108 = vpop.xlane.xlu0 %1107
  %v1109 = vsel %vm288, %v832, 0.0
  %v1110 = vadd.f32 %v831, %v1109
  %1111 = vadd.xlane.f32.xlu0 %v1110
  %v1112 = vpop.xlane.xlu0 %1111
  %v1113 = vsel %vm288, %v834, 0.0
  %v1114 = vadd.f32 %v833, %v1113
  %1115 = vadd.xlane.f32.xlu0 %v1114
  %v1116 = vpop.xlane.xlu0 %1115
  %v1117 = vsel %vm288, %v836, 0.0
  %v1118 = vadd.f32 %v835, %v1117
  %1119 = vadd.xlane.f32.xlu0 %v1118
  %v1120 = vpop.xlane.xlu0 %1119
  %v1121 = vsel %vm288, %v838, 0.0
  %v1122 = vadd.f32 %v837, %v1121
  %1123 = vadd.xlane.f32.xlu0 %v1122
  %v1124 = vpop.xlane.xlu0 %1123
  %v1125 = vsel %vm288, %v840, 0.0
  %v1126 = vadd.f32 %v839, %v1125
  %1127 = vadd.xlane.f32.xlu0 %v1126
  %v1128 = vpop.xlane.xlu0 %1127
  %v1129 = vsel %vm288, %v842, 0.0
  %v1130 = vadd.f32 %v841, %v1129
  %1131 = vadd.xlane.f32.xlu0 %v1130
  %v1132 = vpop.xlane.xlu0 %1131
  %v1133 = vsel %vm288, %v844, 0.0
  %v1134 = vadd.f32 %v843, %v1133
  %1135 = vadd.xlane.f32.xlu0 %v1134
  %v1136 = vpop.xlane.xlu0 %1135
  %v1137 = vsel %vm288, %v846, 0.0
  %v1138 = vadd.f32 %v845, %v1137
  %1139 = vadd.xlane.f32.xlu0 %v1138
  %v1140 = vpop.xlane.xlu0 %1139
  %v1141 = vsel %vm288, %v848, 0.0
  %v1142 = vadd.f32 %v847, %v1141
  %1143 = vadd.xlane.f32.xlu0 %v1142
  %v1144 = vpop.xlane.xlu0 %1143
  %v1145 = vsel %vm288, %v850, 0.0
  %v1146 = vadd.f32 %v849, %v1145
  %1147 = vadd.xlane.f32.xlu0 %v1146
  %v1148 = vpop.xlane.xlu0 %1147
  %v1149 = vsel %vm288, %v852, 0.0
  %v1150 = vadd.f32 %v851, %v1149
  %1151 = vadd.xlane.f32.xlu0 %v1150
  %v1152 = vpop.xlane.xlu0 %1151
  %v1153 = vsel %vm288, %v854, 0.0
  %v1154 = vadd.f32 %v853, %v1153
  %1155 = vadd.xlane.f32.xlu0 %v1154
  %v1156 = vpop.xlane.xlu0 %1155
  %v1157 = vsel %vm288, %v856, 0.0
  %v1158 = vadd.f32 %v855, %v1157
  %1159 = vadd.xlane.f32.xlu0 %v1158
  %v1160 = vpop.xlane.xlu0 %1159
  %v1161 = vsel %vm288, %v858, 0.0
  %v1162 = vadd.f32 %v857, %v1161
  %1163 = vadd.xlane.f32.xlu0 %v1162
  %v1164 = vpop.xlane.xlu0 %1163
  %v1165 = vsel %vm288, %v860, 0.0
  %v1166 = vadd.f32 %v859, %v1165
  %1167 = vadd.xlane.f32.xlu0 %v1166
  %v1168 = vpop.xlane.xlu0 %1167
  %v1169 = vsel %vm288, %v862, 0.0
  %v1170 = vadd.f32 %v861, %v1169
  %1171 = vadd.xlane.f32.xlu0 %v1170
  %v1172 = vpop.xlane.xlu0 %1171
  %v1173 = vsel %vm288, %v864, 0.0
  %v1174 = vadd.f32 %v863, %v1173
  %1175 = vadd.xlane.f32.xlu0 %v1174
  %v1176 = vpop.xlane.xlu0 %1175
  %v1177 = vsel %vm288, %v866, 0.0
  %v1178 = vadd.f32 %v865, %v1177
  %1179 = vadd.xlane.f32.xlu0 %v1178
  %v1180 = vpop.xlane.xlu0 %1179
  %v1181 = vsel %vm288, %v868, 0.0
  %v1182 = vadd.f32 %v867, %v1181
  %1183 = vadd.xlane.f32.xlu0 %v1182
  %v1184 = vpop.xlane.xlu0 %1183
  %v1185 = vsel %vm288, %v870, 0.0
  %v1186 = vadd.f32 %v869, %v1185
  %1187 = vadd.xlane.f32.xlu0 %v1186
  %v1188 = vpop.xlane.xlu0 %1187
  %v1189 = vsel %vm288, %v872, 0.0
  %v1190 = vadd.f32 %v871, %v1189
  %1191 = vadd.xlane.f32.xlu0 %v1190
  %v1192 = vpop.xlane.xlu0 %1191
  %v1193 = vsel %vm288, %v874, 0.0
  %v1194 = vadd.f32 %v873, %v1193
  %1195 = vadd.xlane.f32.xlu0 %v1194
  %v1196 = vpop.xlane.xlu0 %1195
  %v1197 = vsel %vm288, %v876, 0.0
  %v1198 = vadd.f32 %v875, %v1197
  %1199 = vadd.xlane.f32.xlu0 %v1198
  %v1200 = vpop.xlane.xlu0 %1199
  %v1201 = vsel %vm288, %v878, 0.0
  %v1202 = vadd.f32 %v877, %v1201
  %1203 = vadd.xlane.f32.xlu0 %v1202
  %v1204 = vpop.xlane.xlu0 %1203
  %v1205 = vsel %vm288, %v880, 0.0
  %v1206 = vadd.f32 %v879, %v1205
  %1207 = vadd.xlane.f32.xlu0 %v1206
  %v1208 = vpop.xlane.xlu0 %1207
  %v1209 = vsel %vm288, %v882, 0.0
  %v1210 = vadd.f32 %v881, %v1209
  %1211 = vadd.xlane.f32.xlu0 %v1210
  %v1212 = vpop.xlane.xlu0 %1211
  %v1213 = vsel %vm288, %v884, 0.0
  %v1214 = vadd.f32 %v883, %v1213
  %1215 = vadd.xlane.f32.xlu0 %v1214
  %v1216 = vpop.xlane.xlu0 %1215
  %v1217 = vsel %vm288, %v886, 0.0
  %v1218 = vadd.f32 %v885, %v1217
  %1219 = vadd.xlane.f32.xlu0 %v1218
  %v1220 = vpop.xlane.xlu0 %1219
  %v1221 = vsel %vm288, %v888, 0.0
  %v1222 = vadd.f32 %v887, %v1221
  %1223 = vadd.xlane.f32.xlu0 %v1222
  %v1224 = vpop.xlane.xlu0 %1223
  %v1225 = vsel %vm288, %v890, 0.0
  %v1226 = vadd.f32 %v889, %v1225
  %1227 = vadd.xlane.f32.xlu0 %v1226
  %v1228 = vpop.xlane.xlu0 %1227
  %v1229 = vsel %vm288, %v892, 0.0
  %v1230 = vadd.f32 %v891, %v1229
  %1231 = vadd.xlane.f32.xlu0 %v1230
  %v1232 = vpop.xlane.xlu0 %1231
  %v1233 = vsel %vm288, %v894, 0.0
  %v1234 = vadd.f32 %v893, %v1233
  %1235 = vadd.xlane.f32.xlu0 %v1234
  %v1236 = vpop.xlane.xlu0 %1235
  %v1237 = vsel %vm288, %v896, 0.0
  %v1238 = vadd.f32 %v895, %v1237
  %1239 = vadd.xlane.f32.xlu0 %v1238
  %v1240 = vpop.xlane.xlu0 %1239
  %v1241 = vsel %vm288, %v898, 0.0
  %v1242 = vadd.f32 %v897, %v1241
  %1243 = vadd.xlane.f32.xlu0 %v1242
  %v1244 = vpop.xlane.xlu0 %1243
  %v1245 = vsel %vm288, %v900, 0.0
  %v1246 = vadd.f32 %v899, %v1245
  %1247 = vadd.xlane.f32.xlu0 %v1246
  %v1248 = vpop.xlane.xlu0 %1247
  %v1249 = vsel %vm288, %v902, 0.0
  %v1250 = vadd.f32 %v901, %v1249
  %1251 = vadd.xlane.f32.xlu0 %v1250
  %v1252 = vpop.xlane.xlu0 %1251
  %v1253 = vsel %vm288, %v904, 0.0
  %v1254 = vadd.f32 %v903, %v1253
  %1255 = vadd.xlane.f32.xlu0 %v1254
  %v1256 = vpop.xlane.xlu0 %1255
  %v1257 = vsel %vm288, %v906, 0.0
  %v1258 = vadd.f32 %v905, %v1257
  %1259 = vadd.xlane.f32.xlu0 %v1258
  %v1260 = vpop.xlane.xlu0 %1259
  %v1261 = vsel %vm288, %v908, 0.0
  %v1262 = vadd.f32 %v907, %v1261
  %1263 = vadd.xlane.f32.xlu0 %v1262
  %v1264 = vpop.xlane.xlu0 %1263
  %v1265 = vsel %vm288, %v910, 0.0
  %v1266 = vadd.f32 %v909, %v1265
  %1267 = vadd.xlane.f32.xlu0 %v1266
  %v1268 = vpop.xlane.xlu0 %1267
  %v1269 = vsel %vm288, %v912, 0.0
  %v1270 = vadd.f32 %v911, %v1269
  %1271 = vadd.xlane.f32.xlu0 %v1270
  %v1272 = vpop.xlane.xlu0 %1271
  %v1273 = vsel %vm288, %v914, 0.0
  %v1274 = vadd.f32 %v913, %v1273
  %1275 = vadd.xlane.f32.xlu0 %v1274
  %v1276 = vpop.xlane.xlu0 %1275
  %v1277 = vsel %vm288, %v916, 0.0
  %v1278 = vadd.f32 %v915, %v1277
  %1279 = vadd.xlane.f32.xlu0 %v1278
  %v1280 = vpop.xlane.xlu0 %1279
  %v1281 = vsel %vm288, %v918, 0.0
  %v1282 = vadd.f32 %v917, %v1281
  %1283 = vadd.xlane.f32.xlu0 %v1282
  %v1284 = vpop.xlane.xlu0 %1283
  %v1285 = vsel %vm288, %v920, 0.0
  %v1286 = vadd.f32 %v919, %v1285
  %1287 = vadd.xlane.f32.xlu0 %v1286
  %v1288 = vpop.xlane.xlu0 %1287
  %v1289 = vsel %vm288, %v922, 0.0
  %v1290 = vadd.f32 %v921, %v1289
  %1291 = vadd.xlane.f32.xlu0 %v1290
  %v1292 = vpop.xlane.xlu0 %1291
  %v1293 = vsel %vm288, %v924, 0.0
  %v1294 = vadd.f32 %v923, %v1293
  %1295 = vadd.xlane.f32.xlu0 %v1294
  %v1296 = vpop.xlane.xlu0 %1295
  %v1297 = vsel %vm288, %v926, 0.0
  %v1298 = vadd.f32 %v925, %v1297
  %1299 = vadd.xlane.f32.xlu0 %v1298
  %v1300 = vpop.xlane.xlu0 %1299
  %v1301 = vsel %vm288, %v928, 0.0
  %v1302 = vadd.f32 %v927, %v1301
  %1303 = vadd.xlane.f32.xlu0 %v1302
  %v1304 = vpop.xlane.xlu0 %1303
  %v1305 = vsel %vm288, %v930, 0.0
  %v1306 = vadd.f32 %v929, %v1305
  %1307 = vadd.xlane.f32.xlu0 %v1306
  %v1308 = vpop.xlane.xlu0 %1307
  %v1309 = vsel %vm288, %v932, 0.0
  %v1310 = vadd.f32 %v931, %v1309
  %1311 = vadd.xlane.f32.xlu0 %v1310
  %v1312 = vpop.xlane.xlu0 %1311
  %v1313 = vsel %vm288, %v934, 0.0
  %v1314 = vadd.f32 %v933, %v1313
  %1315 = vadd.xlane.f32.xlu0 %v1314
  %v1316 = vpop.xlane.xlu0 %1315
  %v1317 = vsel %vm288, %v936, 0.0
  %v1318 = vadd.f32 %v935, %v1317
  %1319 = vadd.xlane.f32.xlu0 %v1318
  %v1320 = vpop.xlane.xlu0 %1319
  %v1321 = vsel %vm288, %v938, 0.0
  %v1322 = vadd.f32 %v937, %v1321
  %1323 = vadd.xlane.f32.xlu0 %v1322
  %v1324 = vpop.xlane.xlu0 %1323
  %v1325 = vsel %vm288, %v940, 0.0
  %v1326 = vadd.f32 %v939, %v1325
  %1327 = vadd.xlane.f32.xlu0 %v1326
  %v1328 = vpop.xlane.xlu0 %1327
  %v1329 = vsel %vm288, %v942, 0.0
  %v1330 = vadd.f32 %v941, %v1329
  %1331 = vadd.xlane.f32.xlu0 %v1330
  %v1332 = vpop.xlane.xlu0 %1331
  %v1333 = vsel %vm288, %v944, 0.0
  %v1334 = vadd.f32 %v943, %v1333
  %1335 = vadd.xlane.f32.xlu0 %v1334
  %v1336 = vpop.xlane.xlu0 %1335
  %v1337 = vsel %vm288, %v946, 0.0
  %v1338 = vadd.f32 %v945, %v1337
  %1339 = vadd.xlane.f32.xlu0 %v1338
  %v1340 = vpop.xlane.xlu0 %1339
  %v1341 = vsel %vm288, %v948, 0.0
  %v1342 = vadd.f32 %v947, %v1341
  %1343 = vadd.xlane.f32.xlu0 %v1342
  %v1344 = vpop.xlane.xlu0 %1343
  %v1345 = vsel %vm288, %v950, 0.0
  %v1346 = vadd.f32 %v949, %v1345
  %1347 = vadd.xlane.f32.xlu0 %v1346
  %v1348 = vpop.xlane.xlu0 %1347
  %v1349 = vsel %vm288, %v952, 0.0
  %v1350 = vadd.f32 %v951, %v1349
  %1351 = vadd.xlane.f32.xlu0 %v1350
  %v1352 = vpop.xlane.xlu0 %1351
  %v1353 = vsel %vm288, %v954, 0.0
  %v1354 = vadd.f32 %v953, %v1353
  %1355 = vadd.xlane.f32.xlu0 %v1354
  %v1356 = vpop.xlane.xlu0 %1355
  %v1357 = vsel %vm288, %v956, 0.0
  %v1358 = vadd.f32 %v955, %v1357
  %1359 = vadd.xlane.f32.xlu0 %v1358
  %v1360 = vpop.xlane.xlu0 %1359
  %v1361 = vsel %vm288, %v958, 0.0
  %v1362 = vadd.f32 %v957, %v1361
  %1363 = vadd.xlane.f32.xlu0 %v1362
  %v1364 = vpop.xlane.xlu0 %1363
  %v1365 = vsel %vm288, %v960, 0.0
  %v1366 = vadd.f32 %v959, %v1365
  %1367 = vadd.xlane.f32.xlu0 %v1366
  %v1368 = vpop.xlane.xlu0 %1367
  %v1369 = vsel %vm288, %v962, 0.0
  %v1370 = vadd.f32 %v961, %v1369
  %1371 = vadd.xlane.f32.xlu0 %v1370
  %v1372 = vpop.xlane.xlu0 %1371
  %v1373 = vsel %vm288, %v964, 0.0
  %v1374 = vadd.f32 %v963, %v1373
  %1375 = vadd.xlane.f32.xlu0 %v1374
  %v1376 = vpop.xlane.xlu0 %1375
  %v1377 = vsel %vm288, %v966, 0.0
  %v1378 = vadd.f32 %v965, %v1377
  %1379 = vadd.xlane.f32.xlu0 %v1378
  %v1380 = vpop.xlane.xlu0 %1379
  %v1381 = vsel %vm288, %v968, 0.0
  %v1382 = vadd.f32 %v967, %v1381
  %1383 = vadd.xlane.f32.xlu0 %v1382
  %v1384 = vpop.xlane.xlu0 %1383
  %v1385 = vsel %vm288, %v970, 0.0
  %v1386 = vadd.f32 %v969, %v1385
  %1387 = vadd.xlane.f32.xlu0 %v1386
  %v1388 = vpop.xlane.xlu0 %1387
  %v1389 = vsel %vm288, %v972, 0.0
  %v1390 = vadd.f32 %v971, %v1389
  %1391 = vadd.xlane.f32.xlu0 %v1390
  %v1392 = vpop.xlane.xlu0 %1391
  %v1393 = vsel %vm288, %v974, 0.0
  %v1394 = vadd.f32 %v973, %v1393
  %1395 = vadd.xlane.f32.xlu0 %v1394
  %v1396 = vpop.xlane.xlu0 %1395
  %v1397 = vsel %vm288, %v976, 0.0
  %v1398 = vadd.f32 %v975, %v1397
  %1399 = vadd.xlane.f32.xlu0 %v1398
  %v1400 = vpop.xlane.xlu0 %1399
  %v1401 = vsel %vm288, %v978, 0.0
  %v1402 = vadd.f32 %v977, %v1401
  %1403 = vadd.xlane.f32.xlu0 %v1402
  %v1404 = vpop.xlane.xlu0 %1403
  %v1405 = vsel %vm288, %v980, 0.0
  %v1406 = vadd.f32 %v979, %v1405
  %1407 = vadd.xlane.f32.xlu0 %v1406
  %v1408 = vpop.xlane.xlu0 %1407
  %v1409 = vsel %vm288, %v982, 0.0
  %v1410 = vadd.f32 %v981, %v1409
  %1411 = vadd.xlane.f32.xlu0 %v1410
  %v1412 = vpop.xlane.xlu0 %1411
  %v1413 = vsel %vm288, %v984, 0.0
  %v1414 = vadd.f32 %v983, %v1413
  %1415 = vadd.xlane.f32.xlu0 %v1414
  %v1416 = vpop.xlane.xlu0 %1415
  %v1417 = vsel %vm288, %v986, 0.0
  %v1418 = vadd.f32 %v985, %v1417
  %1419 = vadd.xlane.f32.xlu0 %v1418
  %v1420 = vpop.xlane.xlu0 %1419
  %v1421 = vsel %vm288, %v988, 0.0
  %v1422 = vadd.f32 %v987, %v1421
  %1423 = vadd.xlane.f32.xlu0 %v1422
  %v1424 = vpop.xlane.xlu0 %1423
  %v1425 = vsel %vm288, %v990, 0.0
  %v1426 = vadd.f32 %v989, %v1425
  %1427 = vadd.xlane.f32.xlu0 %v1426
  %v1428 = vpop.xlane.xlu0 %1427
  %v1429 = vsel %vm288, %v992, 0.0
  %v1430 = vadd.f32 %v991, %v1429
  %1431 = vadd.xlane.f32.xlu0 %v1430
  %v1432 = vpop.xlane.xlu0 %1431
  %v1433 = vsel %vm288, %v994, 0.0
  %v1434 = vadd.f32 %v993, %v1433
  %1435 = vadd.xlane.f32.xlu0 %v1434
  %v1436 = vpop.xlane.xlu0 %1435
  %v1437 = vsel %vm288, %v996, 0.0
  %v1438 = vadd.f32 %v995, %v1437
  %1439 = vadd.xlane.f32.xlu0 %v1438
  %v1440 = vpop.xlane.xlu0 %1439
  %v1441 = vsel %vm288, %v998, 0.0
  %v1442 = vadd.f32 %v997, %v1441
  %1443 = vadd.xlane.f32.xlu0 %v1442
  %v1444 = vpop.xlane.xlu0 %1443
  %v1445 = vsel %vm288, %v1000, 0.0
  %v1446 = vadd.f32 %v999, %v1445
  %1447 = vadd.xlane.f32.xlu0 %v1446
  %v1448 = vpop.xlane.xlu0 %1447
  %v1449 = vsel %vm288, %v1002, 0.0
  %v1450 = vadd.f32 %v1001, %v1449
  %1451 = vadd.xlane.f32.xlu0 %v1450
  %v1452 = vpop.xlane.xlu0 %1451
  %v1453 = vsel %vm288, %v1004, 0.0
  %v1454 = vadd.f32 %v1003, %v1453
  %1455 = vadd.xlane.f32.xlu0 %v1454
  %v1456 = vpop.xlane.xlu0 %1455
  %v1457 = vsel %vm288, %v1006, 0.0
  %v1458 = vadd.f32 %v1005, %v1457
  %1459 = vadd.xlane.f32.xlu0 %v1458
  %v1460 = vpop.xlane.xlu0 %1459
  %v1461 = vsel %vm288, %v1008, 0.0
  %v1462 = vadd.f32 %v1007, %v1461
  %1463 = vadd.xlane.f32.xlu0 %v1462
  %v1464 = vpop.xlane.xlu0 %1463
  %v1465 = vsel %vm288, %v1010, 0.0
  %v1466 = vadd.f32 %v1009, %v1465
  %1467 = vadd.xlane.f32.xlu0 %v1466
  %v1468 = vpop.xlane.xlu0 %1467
  %v1469 = vsel %vm288, %v1012, 0.0
  %v1470 = vadd.f32 %v1011, %v1469
  %1471 = vadd.xlane.f32.xlu0 %v1470
  %v1472 = vpop.xlane.xlu0 %1471
  %v1473 = vsel %vm288, %v1014, 0.0
  %v1474 = vadd.f32 %v1013, %v1473
  %1475 = vadd.xlane.f32.xlu0 %v1474
  %v1476 = vpop.xlane.xlu0 %1475
  %v1477 = vsel %vm288, %v1016, 0.0
  %v1478 = vadd.f32 %v1015, %v1477
  %1479 = vadd.xlane.f32.xlu0 %v1478
  %v1480 = vpop.xlane.xlu0 %1479
  %v1481 = vsel %vm288, %v1018, 0.0
  %v1482 = vadd.f32 %v1017, %v1481
  %1483 = vadd.xlane.f32.xlu0 %v1482
  %v1484 = vpop.xlane.xlu0 %1483
  %v1485 = vsel %vm288, %v1020, 0.0
  %v1486 = vadd.f32 %v1019, %v1485
  %1487 = vadd.xlane.f32.xlu0 %v1486
  %v1488 = vpop.xlane.xlu0 %1487
  %v1489 = vsel %vm288, %v1022, 0.0
  %v1490 = vadd.f32 %v1021, %v1489
  %1491 = vadd.xlane.f32.xlu0 %v1490
  %v1492 = vpop.xlane.xlu0 %1491
  %v1493 = vsel %vm288, %v1024, 0.0
  %v1494 = vadd.f32 %v1023, %v1493
  %1495 = vadd.xlane.f32.xlu0 %v1494
  %v1496 = vpop.xlane.xlu0 %1495
  %v1497 = vsel %vm288, %v1026, 0.0
  %v1498 = vadd.f32 %v1025, %v1497
  %1499 = vadd.xlane.f32.xlu0 %v1498
  %v1500 = vpop.xlane.xlu0 %1499
  %v1501 = vsel %vm288, %v1028, 0.0
  %v1502 = vadd.f32 %v1027, %v1501
  %1503 = vadd.xlane.f32.xlu0 %v1502
  %v1504 = vpop.xlane.xlu0 %1503
  %v1505 = vsel %vm288, %v1030, 0.0
  %v1506 = vadd.f32 %v1029, %v1505
  %1507 = vadd.xlane.f32.xlu0 %v1506
  %v1508 = vpop.xlane.xlu0 %1507
  %v1509 = vsel %vm288, %v1032, 0.0
  %v1510 = vadd.f32 %v1031, %v1509
  %1511 = vadd.xlane.f32.xlu0 %v1510
  %v1512 = vpop.xlane.xlu0 %1511
  %v1513 = vsel %vm288, %v1034, 0.0
  %v1514 = vadd.f32 %v1033, %v1513
  %1515 = vadd.xlane.f32.xlu0 %v1514
  %v1516 = vpop.xlane.xlu0 %1515
  %v1517 = vsel %vm288, %v1036, 0.0
  %v1518 = vadd.f32 %v1035, %v1517
  %1519 = vadd.xlane.f32.xlu0 %v1518
  %v1520 = vpop.xlane.xlu0 %1519
  %v1521 = vsel %vm288, %v1038, 0.0
  %v1522 = vadd.f32 %v1037, %v1521
  %1523 = vadd.xlane.f32.xlu0 %v1522
  %v1524 = vpop.xlane.xlu0 %1523
  %v1525 = vsel %vm288, %v1040, 0.0
  %v1526 = vadd.f32 %v1039, %v1525
  %1527 = vadd.xlane.f32.xlu0 %v1526
  %v1528 = vpop.xlane.xlu0 %1527
  %v1529 = vsel %vm288, %v1042, 0.0
  %v1530 = vadd.f32 %v1041, %v1529
  %1531 = vadd.xlane.f32.xlu0 %v1530
  %v1532 = vpop.xlane.xlu0 %1531
  %v1533 = vsel %vm288, %v1044, 0.0
  %v1534 = vadd.f32 %v1043, %v1533
  %1535 = vadd.xlane.f32.xlu0 %v1534
  %v1536 = vpop.xlane.xlu0 %1535
  %v1537 = vsel %vm288, %v1046, 0.0
  %v1538 = vadd.f32 %v1045, %v1537
  %1539 = vadd.xlane.f32.xlu0 %v1538
  %v1540 = vpop.xlane.xlu0 %1539
  %v1541 = vsel %vm288, %v1048, 0.0
  %v1542 = vadd.f32 %v1047, %v1541
  %1543 = vadd.xlane.f32.xlu0 %v1542
  %v1544 = vpop.xlane.xlu0 %1543
  %v1545 = vsel %vm288, %v1050, 0.0
  %v1546 = vadd.f32 %v1049, %v1545
  %1547 = vadd.xlane.f32.xlu0 %v1546
  %v1548 = vpop.xlane.xlu0 %1547
  %v1549 = vsel %vm288, %v1052, 0.0
  %v1550 = vadd.f32 %v1051, %v1549
  %1551 = vadd.xlane.f32.xlu0 %v1550
  %v1552 = vpop.xlane.xlu0 %1551
  %v1553 = vsel %vm288, %v1054, 0.0
  %v1554 = vadd.f32 %v1053, %v1553
  %1555 = vadd.xlane.f32.xlu0 %v1554
  %v1556 = vpop.xlane.xlu0 %1555
  %v1557 = vsel %vm288, %v1056, 0.0
  %v1558 = vadd.f32 %v1055, %v1557
  %1559 = vadd.xlane.f32.xlu0 %v1558
  %v1560 = vpop.xlane.xlu0 %1559
  %v1561 = vsel %vm288, %v1058, 0.0
  %v1562 = vadd.f32 %v1057, %v1561
  %1563 = vadd.xlane.f32.xlu0 %v1562
  %v1564 = vpop.xlane.xlu0 %1563
  %v1565 = vsel %vm288, %v1060, 0.0
  %v1566 = vadd.f32 %v1059, %v1565
  %1567 = vadd.xlane.f32.xlu0 %v1566
  %v1568 = vpop.xlane.xlu0 %1567
  %v1569 = vsel %vm288, %v1062, 0.0
  %v1570 = vadd.f32 %v1061, %v1569
  %1571 = vadd.xlane.f32.xlu0 %v1570
  %v1572 = vpop.xlane.xlu0 %1571
  %v1573 = vsel %vm288, %v1064, 0.0
  %v1574 = vadd.f32 %v1063, %v1573
  %1575 = vadd.xlane.f32.xlu0 %v1574
  %v1576 = vpop.xlane.xlu0 %1575
  %v1577 = vsel %vm288, %v1066, 0.0
  %v1578 = vadd.f32 %v1065, %v1577
  %1579 = vadd.xlane.f32.xlu0 %v1578
  %v1580 = vpop.xlane.xlu0 %1579
  %v1581 = vsel %vm288, %v1068, 0.0
  %v1582 = vadd.f32 %v1067, %v1581
  %1583 = vadd.xlane.f32.xlu0 %v1582
  %v1584 = vpop.xlane.xlu0 %1583
  %v1585 = vsel %vm288, %v1070, 0.0
  %v1586 = vadd.f32 %v1069, %v1585
  %1587 = vadd.xlane.f32.xlu0 %v1586
  %v1588 = vpop.xlane.xlu0 %1587
  %v1589 = vsel %vm288, %v1072, 0.0
  %v1590 = vadd.f32 %v1071, %v1589
  %1591 = vadd.xlane.f32.xlu0 %v1590
  %v1592 = vpop.xlane.xlu0 %1591
  %v1593 = vsel %vm288, %v1074, 0.0
  %v1594 = vadd.f32 %v1073, %v1593
  %1595 = vadd.xlane.f32.xlu0 %v1594
  %v1596 = vpop.xlane.xlu0 %1595
  %v1597 = vsel %vm288, %v1076, 0.0
  %v1598 = vadd.f32 %v1075, %v1597
  %1599 = vadd.xlane.f32.xlu0 %v1598
  %v1600 = vpop.xlane.xlu0 %1599
  %v1601 = vsel %vm288, %v1078, 0.0
  %v1602 = vadd.f32 %v1077, %v1601
  %1603 = vadd.xlane.f32.xlu0 %v1602
  %v1604 = vpop.xlane.xlu0 %1603
  %v1605 = vsel %vm288, %v1080, 0.0
  %v1606 = vadd.f32 %v1079, %v1605
  %1607 = vadd.xlane.f32.xlu0 %v1606
  %v1608 = vpop.xlane.xlu0 %1607
  %v1609 = vmul.f32 %v292, 0.0051020407
  %v1610 = vmul.f32 %v296, 0.0051020407
  %v1611 = vmul.f32 %v300, 0.0051020407
  %v1612 = vmul.f32 %v304, 0.0051020407
  %v1613 = vmul.f32 %v308, 0.0051020407
  %v1614 = vmul.f32 %v312, 0.0051020407
  %v1615 = vmul.f32 %v316, 0.0051020407
  %v1616 = vmul.f32 %v320, 0.0051020407
  %v1617 = vmul.f32 %v324, 0.0051020407
  %v1618 = vmul.f32 %v328, 0.0051020407
  %v1619 = vmul.f32 %v332, 0.0051020407
  %v1620 = vmul.f32 %v336, 0.0051020407
  %v1621 = vmul.f32 %v340, 0.0051020407
  %v1622 = vmul.f32 %v344, 0.0051020407
  %v1623 = vmul.f32 %v348, 0.0051020407
  %v1624 = vmul.f32 %v352, 0.0051020407
  %v1625 = vmul.f32 %v356, 0.0051020407
  %v1626 = vmul.f32 %v360, 0.0051020407
  %v1627 = vmul.f32 %v364, 0.0051020407
  %v1628 = vmul.f32 %v368, 0.0051020407
  %v1629 = vmul.f32 %v372, 0.0051020407
  %v1630 = vmul.f32 %v376, 0.0051020407
  %v1631 = vmul.f32 %v380, 0.0051020407
  %v1632 = vmul.f32 %v384, 0.0051020407
  %v1633 = vmul.f32 %v388, 0.0051020407
  %v1634 = vmul.f32 %v392, 0.0051020407
  %v1635 = vmul.f32 %v396, 0.0051020407
  %v1636 = vmul.f32 %v400, 0.0051020407
  %v1637 = vmul.f32 %v404, 0.0051020407
  %v1638 = vmul.f32 %v408, 0.0051020407
  %v1639 = vmul.f32 %v412, 0.0051020407
  %v1640 = vmul.f32 %v416, 0.0051020407
  %v1641 = vmul.f32 %v420, 0.0051020407
  %v1642 = vmul.f32 %v424, 0.0051020407
  %v1643 = vmul.f32 %v428, 0.0051020407
  %v1644 = vmul.f32 %v432, 0.0051020407
  %v1645 = vmul.f32 %v436, 0.0051020407
  %v1646 = vmul.f32 %v440, 0.0051020407
  %v1647 = vmul.f32 %v444, 0.0051020407
  %v1648 = vmul.f32 %v448, 0.0051020407
  %v1649 = vmul.f32 %v452, 0.0051020407
  %v1650 = vmul.f32 %v456, 0.0051020407
  %v1651 = vmul.f32 %v460, 0.0051020407
  %v1652 = vmul.f32 %v464, 0.0051020407
  %v1653 = vmul.f32 %v468, 0.0051020407
  %v1654 = vmul.f32 %v472, 0.0051020407
  %v1655 = vmul.f32 %v476, 0.0051020407
  %v1656 = vmul.f32 %v480, 0.0051020407
  %v1657 = vmul.f32 %v484, 0.0051020407
  %v1658 = vmul.f32 %v488, 0.0051020407
  %v1659 = vmul.f32 %v492, 0.0051020407
  %v1660 = vmul.f32 %v496, 0.0051020407
  %v1661 = vmul.f32 %v500, 0.0051020407
  %v1662 = vmul.f32 %v504, 0.0051020407
  %v1663 = vmul.f32 %v508, 0.0051020407
  %v1664 = vmul.f32 %v512, 0.0051020407
  %v1665 = vmul.f32 %v516, 0.0051020407
  %v1666 = vmul.f32 %v520, 0.0051020407
  %v1667 = vmul.f32 %v524, 0.0051020407
  %v1668 = vmul.f32 %v528, 0.0051020407
  %v1669 = vmul.f32 %v532, 0.0051020407
  %v1670 = vmul.f32 %v536, 0.0051020407
  %v1671 = vmul.f32 %v540, 0.0051020407
  %v1672 = vmul.f32 %v544, 0.0051020407
  %v1673 = vmul.f32 %v548, 0.0051020407
  %v1674 = vmul.f32 %v552, 0.0051020407
  %v1675 = vmul.f32 %v556, 0.0051020407
  %v1676 = vmul.f32 %v560, 0.0051020407
  %v1677 = vmul.f32 %v564, 0.0051020407
  %v1678 = vmul.f32 %v568, 0.0051020407
  %v1679 = vmul.f32 %v572, 0.0051020407
  %v1680 = vmul.f32 %v576, 0.0051020407
  %v1681 = vmul.f32 %v580, 0.0051020407
  %v1682 = vmul.f32 %v584, 0.0051020407
  %v1683 = vmul.f32 %v588, 0.0051020407
  %v1684 = vmul.f32 %v592, 0.0051020407
  %v1685 = vmul.f32 %v596, 0.0051020407
  %v1686 = vmul.f32 %v600, 0.0051020407
  %v1687 = vmul.f32 %v604, 0.0051020407
  %v1688 = vmul.f32 %v608, 0.0051020407
  %v1689 = vmul.f32 %v612, 0.0051020407
  %v1690 = vmul.f32 %v616, 0.0051020407
  %v1691 = vmul.f32 %v620, 0.0051020407
  %v1692 = vmul.f32 %v624, 0.0051020407
  %v1693 = vmul.f32 %v628, 0.0051020407
  %v1694 = vmul.f32 %v632, 0.0051020407
  %v1695 = vmul.f32 %v636, 0.0051020407
  %v1696 = vmul.f32 %v640, 0.0051020407
  %v1697 = vmul.f32 %v644, 0.0051020407
  %v1698 = vmul.f32 %v648, 0.0051020407
  %v1699 = vmul.f32 %v652, 0.0051020407
  %v1700 = vmul.f32 %v656, 0.0051020407
  %v1701 = vmul.f32 %v660, 0.0051020407
  %v1702 = vmul.f32 %v664, 0.0051020407
  %v1703 = vmul.f32 %v668, 0.0051020407
  %v1704 = vmul.f32 %v672, 0.0051020407
  %v1705 = vmul.f32 %v676, 0.0051020407
  %v1706 = vmul.f32 %v680, 0.0051020407
  %v1707 = vmul.f32 %v684, 0.0051020407
  %v1708 = vmul.f32 %v688, 0.0051020407
  %v1709 = vmul.f32 %v692, 0.0051020407
  %v1710 = vmul.f32 %v696, 0.0051020407
  %v1711 = vmul.f32 %v700, 0.0051020407
  %v1712 = vmul.f32 %v704, 0.0051020407
  %v1713 = vmul.f32 %v708, 0.0051020407
  %v1714 = vmul.f32 %v712, 0.0051020407
  %v1715 = vmul.f32 %v716, 0.0051020407
  %v1716 = vmul.f32 %v720, 0.0051020407
  %v1717 = vmul.f32 %v724, 0.0051020407
  %v1718 = vmul.f32 %v728, 0.0051020407
  %v1719 = vmul.f32 %v732, 0.0051020407
  %v1720 = vmul.f32 %v736, 0.0051020407
  %v1721 = vmul.f32 %v740, 0.0051020407
  %v1722 = vmul.f32 %v744, 0.0051020407
  %v1723 = vmul.f32 %v748, 0.0051020407
  %v1724 = vmul.f32 %v752, 0.0051020407
  %v1725 = vmul.f32 %v756, 0.0051020407
  %v1726 = vmul.f32 %v760, 0.0051020407
  %v1727 = vmul.f32 %v764, 0.0051020407
  %v1728 = vmul.f32 %v768, 0.0051020407
  %v1729 = vmul.f32 %v772, 0.0051020407
  %v1730 = vmul.f32 %v776, 0.0051020407
  %v1731 = vmul.f32 %v780, 0.0051020407
  %v1732 = vmul.f32 %v784, 0.0051020407
  %v1733 = vmul.f32 %v788, 0.0051020407
  %v1734 = vmul.f32 %v792, 0.0051020407
  %v1735 = vmul.f32 %v796, 0.0051020407
  %v1736 = vmul.f32 %v800, 0.0051020407
  %v1737 = vmul.f32 %v804, 0.0051020407
  %v1738 = vmul.f32 %v808, 0.0051020407
  %v1739 = vmul.f32 %v812, 0.0051020407
  %v1740 = vmul.f32 %v816, 0.0051020407
  %v1741 = vmul.f32 %v1084, 0.0051020407
  %v1742 = vmul.f32 %v1088, 0.0051020407
  %v1743 = vmul.f32 %v1092, 0.0051020407
  %v1744 = vmul.f32 %v1096, 0.0051020407
  %v1745 = vmul.f32 %v1100, 0.0051020407
  %v1746 = vmul.f32 %v1104, 0.0051020407
  %v1747 = vmul.f32 %v1108, 0.0051020407
  %v1748 = vmul.f32 %v1112, 0.0051020407
  %v1749 = vmul.f32 %v1116, 0.0051020407
  %v1750 = vmul.f32 %v1120, 0.0051020407
  %v1751 = vmul.f32 %v1124, 0.0051020407
  %v1752 = vmul.f32 %v1128, 0.0051020407
  %v1753 = vmul.f32 %v1132, 0.0051020407
  %v1754 = vmul.f32 %v1136, 0.0051020407
  %v1755 = vmul.f32 %v1140, 0.0051020407
  %v1756 = vmul.f32 %v1144, 0.0051020407
  %v1757 = vmul.f32 %v1148, 0.0051020407
  %v1758 = vmul.f32 %v1152, 0.0051020407
  %v1759 = vmul.f32 %v1156, 0.0051020407
  %v1760 = vmul.f32 %v1160, 0.0051020407
  %v1761 = vmul.f32 %v1164, 0.0051020407
  %v1762 = vmul.f32 %v1168, 0.0051020407
  %v1763 = vmul.f32 %v1172, 0.0051020407
  %v1764 = vmul.f32 %v1176, 0.0051020407
  %v1765 = vmul.f32 %v1180, 0.0051020407
  %v1766 = vmul.f32 %v1184, 0.0051020407
  %v1767 = vmul.f32 %v1188, 0.0051020407
  %v1768 = vmul.f32 %v1192, 0.0051020407
  %v1769 = vmul.f32 %v1196, 0.0051020407
  %v1770 = vmul.f32 %v1200, 0.0051020407
  %v1771 = vmul.f32 %v1204, 0.0051020407
  %v1772 = vmul.f32 %v1208, 0.0051020407
  %v1773 = vmul.f32 %v1212, 0.0051020407
  %v1774 = vmul.f32 %v1216, 0.0051020407
  %v1775 = vmul.f32 %v1220, 0.0051020407
  %v1776 = vmul.f32 %v1224, 0.0051020407
  %v1777 = vmul.f32 %v1228, 0.0051020407
  %v1778 = vmul.f32 %v1232, 0.0051020407
  %v1779 = vmul.f32 %v1236, 0.0051020407
  %v1780 = vmul.f32 %v1240, 0.0051020407
  %v1781 = vmul.f32 %v1244, 0.0051020407
  %v1782 = vmul.f32 %v1248, 0.0051020407
  %v1783 = vmul.f32 %v1252, 0.0051020407
  %v1784 = vmul.f32 %v1256, 0.0051020407
  %v1785 = vmul.f32 %v1260, 0.0051020407
  %v1786 = vmul.f32 %v1264, 0.0051020407
  %v1787 = vmul.f32 %v1268, 0.0051020407
  %v1788 = vmul.f32 %v1272, 0.0051020407
  %v1789 = vmul.f32 %v1276, 0.0051020407
  %v1790 = vmul.f32 %v1280, 0.0051020407
  %v1791 = vmul.f32 %v1284, 0.0051020407
  %v1792 = vmul.f32 %v1288, 0.0051020407
  %v1793 = vmul.f32 %v1292, 0.0051020407
  %v1794 = vmul.f32 %v1296, 0.0051020407
  %v1795 = vmul.f32 %v1300, 0.0051020407
  %v1796 = vmul.f32 %v1304, 0.0051020407
  %v1797 = vmul.f32 %v1308, 0.0051020407
  %v1798 = vmul.f32 %v1312, 0.0051020407
  %v1799 = vmul.f32 %v1316, 0.0051020407
  %v1800 = vmul.f32 %v1320, 0.0051020407
  %v1801 = vmul.f32 %v1324, 0.0051020407
  %v1802 = vmul.f32 %v1328, 0.0051020407
  %v1803 = vmul.f32 %v1332, 0.0051020407
  %v1804 = vmul.f32 %v1336, 0.0051020407
  %v1805 = vmul.f32 %v1340, 0.0051020407
  %v1806 = vmul.f32 %v1344, 0.0051020407
  %v1807 = vmul.f32 %v1348, 0.0051020407
  %v1808 = vmul.f32 %v1352, 0.0051020407
  %v1809 = vmul.f32 %v1356, 0.0051020407
  %v1810 = vmul.f32 %v1360, 0.0051020407
  %v1811 = vmul.f32 %v1364, 0.0051020407
  %v1812 = vmul.f32 %v1368, 0.0051020407
  %v1813 = vmul.f32 %v1372, 0.0051020407
  %v1814 = vmul.f32 %v1376, 0.0051020407
  %v1815 = vmul.f32 %v1380, 0.0051020407
  %v1816 = vmul.f32 %v1384, 0.0051020407
  %v1817 = vmul.f32 %v1388, 0.0051020407
  %v1818 = vmul.f32 %v1392, 0.0051020407
  %v1819 = vmul.f32 %v1396, 0.0051020407
  %v1820 = vmul.f32 %v1400, 0.0051020407
  %v1821 = vmul.f32 %v1404, 0.0051020407
  %v1822 = vmul.f32 %v1408, 0.0051020407
  %v1823 = vmul.f32 %v1412, 0.0051020407
  %v1824 = vmul.f32 %v1416, 0.0051020407
  %v1825 = vmul.f32 %v1420, 0.0051020407
  %v1826 = vmul.f32 %v1424, 0.0051020407
  %v1827 = vmul.f32 %v1428, 0.0051020407
  %v1828 = vmul.f32 %v1432, 0.0051020407
  %v1829 = vmul.f32 %v1436, 0.0051020407
  %v1830 = vmul.f32 %v1440, 0.0051020407
  %v1831 = vmul.f32 %v1444, 0.0051020407
  %v1832 = vmul.f32 %v1448, 0.0051020407
  %v1833 = vmul.f32 %v1452, 0.0051020407
  %v1834 = vmul.f32 %v1456, 0.0051020407
  %v1835 = vmul.f32 %v1460, 0.0051020407
  %v1836 = vmul.f32 %v1464, 0.0051020407
  %v1837 = vmul.f32 %v1468, 0.0051020407
  %v1838 = vmul.f32 %v1472, 0.0051020407
  %v1839 = vmul.f32 %v1476, 0.0051020407
  %v1840 = vmul.f32 %v1480, 0.0051020407
  %v1841 = vmul.f32 %v1484, 0.0051020407
  %v1842 = vmul.f32 %v1488, 0.0051020407
  %v1843 = vmul.f32 %v1492, 0.0051020407
  %v1844 = vmul.f32 %v1496, 0.0051020407
  %v1845 = vmul.f32 %v1500, 0.0051020407
  %v1846 = vmul.f32 %v1504, 0.0051020407
  %v1847 = vmul.f32 %v1508, 0.0051020407
  %v1848 = vmul.f32 %v1512, 0.0051020407
  %v1849 = vmul.f32 %v1516, 0.0051020407
  %v1850 = vmul.f32 %v1520, 0.0051020407
  %v1851 = vmul.f32 %v1524, 0.0051020407
  %v1852 = vmul.f32 %v1528, 0.0051020407
  %v1853 = vmul.f32 %v1532, 0.0051020407
  %v1854 = vmul.f32 %v1536, 0.0051020407
  %v1855 = vmul.f32 %v1540, 0.0051020407
  %v1856 = vmul.f32 %v1544, 0.0051020407
  %v1857 = vmul.f32 %v1548, 0.0051020407
  %v1858 = vmul.f32 %v1552, 0.0051020407
  %v1859 = vmul.f32 %v1556, 0.0051020407
  %v1860 = vmul.f32 %v1560, 0.0051020407
  %v1861 = vmul.f32 %v1564, 0.0051020407
  %v1862 = vmul.f32 %v1568, 0.0051020407
  %v1863 = vmul.f32 %v1572, 0.0051020407
  %v1864 = vmul.f32 %v1576, 0.0051020407
  %v1865 = vmul.f32 %v1580, 0.0051020407
  %v1866 = vmul.f32 %v1584, 0.0051020407
  %v1867 = vmul.f32 %v1588, 0.0051020407
  %v1868 = vmul.f32 %v1592, 0.0051020407
  %v1869 = vmul.f32 %v1596, 0.0051020407
  %v1870 = vmul.f32 %v1600, 0.0051020407
  %v1871 = vmul.f32 %v1604, 0.0051020407
  %v1872 = vmul.f32 %v1608, 0.0051020407
  %v1873 = vmul.f32 %v1609, %v1609
  %v1874 = vmul.f32 %v1610, %v1610
  %v1875 = vmul.f32 %v1611, %v1611
  %v1876 = vmul.f32 %v1612, %v1612
  %v1877 = vmul.f32 %v1613, %v1613
  %v1878 = vmul.f32 %v1614, %v1614
  %v1879 = vmul.f32 %v1615, %v1615
  %v1880 = vmul.f32 %v1616, %v1616
  %v1881 = vmul.f32 %v1617, %v1617
  %v1882 = vmul.f32 %v1618, %v1618
  %v1883 = vmul.f32 %v1619, %v1619
  %v1884 = vmul.f32 %v1620, %v1620
  %v1885 = vmul.f32 %v1621, %v1621
  %v1886 = vmul.f32 %v1622, %v1622
  %v1887 = vmul.f32 %v1623, %v1623
  %v1888 = vmul.f32 %v1624, %v1624
  %v1889 = vmul.f32 %v1625, %v1625
  %v1890 = vmul.f32 %v1626, %v1626
  %v1891 = vmul.f32 %v1627, %v1627
  %v1892 = vmul.f32 %v1628, %v1628
  %v1893 = vmul.f32 %v1629, %v1629
  %v1894 = vmul.f32 %v1630, %v1630
  %v1895 = vmul.f32 %v1631, %v1631
  %v1896 = vmul.f32 %v1632, %v1632
  %v1897 = vmul.f32 %v1633, %v1633
  %v1898 = vmul.f32 %v1634, %v1634
  %v1899 = vmul.f32 %v1635, %v1635
  %v1900 = vmul.f32 %v1636, %v1636
  %v1901 = vmul.f32 %v1637, %v1637
  %v1902 = vmul.f32 %v1638, %v1638
  %v1903 = vmul.f32 %v1639, %v1639
  %v1904 = vmul.f32 %v1640, %v1640
  %v1905 = vmul.f32 %v1641, %v1641
  %v1906 = vmul.f32 %v1642, %v1642
  %v1907 = vmul.f32 %v1643, %v1643
  %v1908 = vmul.f32 %v1644, %v1644
  %v1909 = vmul.f32 %v1645, %v1645
  %v1910 = vmul.f32 %v1646, %v1646
  %v1911 = vmul.f32 %v1647, %v1647
  %v1912 = vmul.f32 %v1648, %v1648
  %v1913 = vmul.f32 %v1649, %v1649
  %v1914 = vmul.f32 %v1650, %v1650
  %v1915 = vmul.f32 %v1651, %v1651
  %v1916 = vmul.f32 %v1652, %v1652
  %v1917 = vmul.f32 %v1653, %v1653
  %v1918 = vmul.f32 %v1654, %v1654
  %v1919 = vmul.f32 %v1655, %v1655
  %v1920 = vmul.f32 %v1656, %v1656
  %v1921 = vmul.f32 %v1657, %v1657
  %v1922 = vmul.f32 %v1658, %v1658
  %v1923 = vmul.f32 %v1659, %v1659
  %v1924 = vmul.f32 %v1660, %v1660
  %v1925 = vmul.f32 %v1661, %v1661
  %v1926 = vmul.f32 %v1662, %v1662
  %v1927 = vmul.f32 %v1663, %v1663
  %v1928 = vmul.f32 %v1664, %v1664
  %v1929 = vmul.f32 %v1665, %v1665
  %v1930 = vmul.f32 %v1666, %v1666
  %v1931 = vmul.f32 %v1667, %v1667
  %v1932 = vmul.f32 %v1668, %v1668
  %v1933 = vmul.f32 %v1669, %v1669
  %v1934 = vmul.f32 %v1670, %v1670
  %v1935 = vmul.f32 %v1671, %v1671
  %v1936 = vmul.f32 %v1672, %v1672
  %v1937 = vmul.f32 %v1673, %v1673
  %v1938 = vmul.f32 %v1674, %v1674
  %v1939 = vmul.f32 %v1675, %v1675
  %v1940 = vmul.f32 %v1676, %v1676
  %v1941 = vmul.f32 %v1677, %v1677
  %v1942 = vmul.f32 %v1678, %v1678
  %v1943 = vmul.f32 %v1679, %v1679
  %v1944 = vmul.f32 %v1680, %v1680
  %v1945 = vmul.f32 %v1681, %v1681
  %v1946 = vmul.f32 %v1682, %v1682
  %v1947 = vmul.f32 %v1683, %v1683
  %v1948 = vmul.f32 %v1684, %v1684
  %v1949 = vmul.f32 %v1685, %v1685
  %v1950 = vmul.f32 %v1686, %v1686
  %v1951 = vmul.f32 %v1687, %v1687
  %v1952 = vmul.f32 %v1688, %v1688
  %v1953 = vmul.f32 %v1689, %v1689
  %v1954 = vmul.f32 %v1690, %v1690
  %v1955 = vmul.f32 %v1691, %v1691
  %v1956 = vmul.f32 %v1692, %v1692
  %v1957 = vmul.f32 %v1693, %v1693
  %v1958 = vmul.f32 %v1694, %v1694
  %v1959 = vmul.f32 %v1695, %v1695
  %v1960 = vmul.f32 %v1696, %v1696
  %v1961 = vmul.f32 %v1697, %v1697
  %v1962 = vmul.f32 %v1698, %v1698
  %v1963 = vmul.f32 %v1699, %v1699
  %v1964 = vmul.f32 %v1700, %v1700
  %v1965 = vmul.f32 %v1701, %v1701
  %v1966 = vmul.f32 %v1702, %v1702
  %v1967 = vmul.f32 %v1703, %v1703
  %v1968 = vmul.f32 %v1704, %v1704
  %v1969 = vmul.f32 %v1705, %v1705
  %v1970 = vmul.f32 %v1706, %v1706
  %v1971 = vmul.f32 %v1707, %v1707
  %v1972 = vmul.f32 %v1708, %v1708
  %v1973 = vmul.f32 %v1709, %v1709
  %v1974 = vmul.f32 %v1710, %v1710
  %v1975 = vmul.f32 %v1711, %v1711
  %v1976 = vmul.f32 %v1712, %v1712
  %v1977 = vmul.f32 %v1713, %v1713
  %v1978 = vmul.f32 %v1714, %v1714
  %v1979 = vmul.f32 %v1715, %v1715
  %v1980 = vmul.f32 %v1716, %v1716
  %v1981 = vmul.f32 %v1717, %v1717
  %v1982 = vmul.f32 %v1718, %v1718
  %v1983 = vmul.f32 %v1719, %v1719
  %v1984 = vmul.f32 %v1720, %v1720
  %v1985 = vmul.f32 %v1721, %v1721
  %v1986 = vmul.f32 %v1722, %v1722
  %v1987 = vmul.f32 %v1723, %v1723
  %v1988 = vmul.f32 %v1724, %v1724
  %v1989 = vmul.f32 %v1725, %v1725
  %v1990 = vmul.f32 %v1726, %v1726
  %v1991 = vmul.f32 %v1727, %v1727
  %v1992 = vmul.f32 %v1728, %v1728
  %v1993 = vmul.f32 %v1729, %v1729
  %v1994 = vmul.f32 %v1730, %v1730
  %v1995 = vmul.f32 %v1731, %v1731
  %v1996 = vmul.f32 %v1732, %v1732
  %v1997 = vmul.f32 %v1733, %v1733
  %v1998 = vmul.f32 %v1734, %v1734
  %v1999 = vmul.f32 %v1735, %v1735
  %v2000 = vmul.f32 %v1736, %v1736
  %v2001 = vmul.f32 %v1737, %v1737
  %v2002 = vmul.f32 %v1738, %v1738
  %v2003 = vmul.f32 %v1739, %v1739
  %v2004 = vmul.f32 %v1740, %v1740
  %v2005 = vsub.f32 %v1741, %v1873
  %v2006 = vsub.f32 %v1742, %v1874
  %v2007 = vsub.f32 %v1743, %v1875
  %v2008 = vsub.f32 %v1744, %v1876
  %v2009 = vsub.f32 %v1745, %v1877
  %v2010 = vsub.f32 %v1746, %v1878
  %v2011 = vsub.f32 %v1747, %v1879
  %v2012 = vsub.f32 %v1748, %v1880
  %v2013 = vsub.f32 %v1749, %v1881
  %v2014 = vsub.f32 %v1750, %v1882
  %v2015 = vsub.f32 %v1751, %v1883
  %v2016 = vsub.f32 %v1752, %v1884
  %v2017 = vsub.f32 %v1753, %v1885
  %v2018 = vsub.f32 %v1754, %v1886
  %v2019 = vsub.f32 %v1755, %v1887
  %v2020 = vsub.f32 %v1756, %v1888
  %v2021 = vsub.f32 %v1757, %v1889
  %v2022 = vsub.f32 %v1758, %v1890
  %v2023 = vsub.f32 %v1759, %v1891
  %v2024 = vsub.f32 %v1760, %v1892
  %v2025 = vsub.f32 %v1761, %v1893
  %v2026 = vsub.f32 %v1762, %v1894
  %v2027 = vsub.f32 %v1763, %v1895
  %v2028 = vsub.f32 %v1764, %v1896
  %v2029 = vsub.f32 %v1765, %v1897
  %v2030 = vsub.f32 %v1766, %v1898
  %v2031 = vsub.f32 %v1767, %v1899
  %v2032 = vsub.f32 %v1768, %v1900
  %v2033 = vsub.f32 %v1769, %v1901
  %v2034 = vsub.f32 %v1770, %v1902
  %v2035 = vsub.f32 %v1771, %v1903
  %v2036 = vsub.f32 %v1772, %v1904
  %v2037 = vsub.f32 %v1773, %v1905
  %v2038 = vsub.f32 %v1774, %v1906
  %v2039 = vsub.f32 %v1775, %v1907
  %v2040 = vsub.f32 %v1776, %v1908
  %v2041 = vsub.f32 %v1777, %v1909
  %v2042 = vsub.f32 %v1778, %v1910
  %v2043 = vsub.f32 %v1779, %v1911
  %v2044 = vsub.f32 %v1780, %v1912
  %v2045 = vsub.f32 %v1781, %v1913
  %v2046 = vsub.f32 %v1782, %v1914
  %v2047 = vsub.f32 %v1783, %v1915
  %v2048 = vsub.f32 %v1784, %v1916
  %v2049 = vsub.f32 %v1785, %v1917
  %v2050 = vsub.f32 %v1786, %v1918
  %v2051 = vsub.f32 %v1787, %v1919
  %v2052 = vsub.f32 %v1788, %v1920
  %v2053 = vsub.f32 %v1789, %v1921
  %v2054 = vsub.f32 %v1790, %v1922
  %v2055 = vsub.f32 %v1791, %v1923
  %v2056 = vsub.f32 %v1792, %v1924
  %v2057 = vsub.f32 %v1793, %v1925
  %v2058 = vsub.f32 %v1794, %v1926
  %v2059 = vsub.f32 %v1795, %v1927
  %v2060 = vsub.f32 %v1796, %v1928
  %v2061 = vsub.f32 %v1797, %v1929
  %v2062 = vsub.f32 %v1798, %v1930
  %v2063 = vsub.f32 %v1799, %v1931
  %v2064 = vsub.f32 %v1800, %v1932
  %v2065 = vsub.f32 %v1801, %v1933
  %v2066 = vsub.f32 %v1802, %v1934
  %v2067 = vsub.f32 %v1803, %v1935
  %v2068 = vsub.f32 %v1804, %v1936
  %v2069 = vsub.f32 %v1805, %v1937
  %v2070 = vsub.f32 %v1806, %v1938
  %v2071 = vsub.f32 %v1807, %v1939
  %v2072 = vsub.f32 %v1808, %v1940
  %v2073 = vsub.f32 %v1809, %v1941
  %v2074 = vsub.f32 %v1810, %v1942
  %v2075 = vsub.f32 %v1811, %v1943
  %v2076 = vsub.f32 %v1812, %v1944
  %v2077 = vsub.f32 %v1813, %v1945
  %v2078 = vsub.f32 %v1814, %v1946
  %v2079 = vsub.f32 %v1815, %v1947
  %v2080 = vsub.f32 %v1816, %v1948
  %v2081 = vsub.f32 %v1817, %v1949
  %v2082 = vsub.f32 %v1818, %v1950
  %v2083 = vsub.f32 %v1819, %v1951
  %v2084 = vsub.f32 %v1820, %v1952
  %v2085 = vsub.f32 %v1821, %v1953
  %v2086 = vsub.f32 %v1822, %v1954
  %v2087 = vsub.f32 %v1823, %v1955
  %v2088 = vsub.f32 %v1824, %v1956
  %v2089 = vsub.f32 %v1825, %v1957
  %v2090 = vsub.f32 %v1826, %v1958
  %v2091 = vsub.f32 %v1827, %v1959
  %v2092 = vsub.f32 %v1828, %v1960
  %v2093 = vsub.f32 %v1829, %v1961
  %v2094 = vsub.f32 %v1830, %v1962
  %v2095 = vsub.f32 %v1831, %v1963
  %v2096 = vsub.f32 %v1832, %v1964
  %v2097 = vsub.f32 %v1833, %v1965
  %v2098 = vsub.f32 %v1834, %v1966
  %v2099 = vsub.f32 %v1835, %v1967
  %v2100 = vsub.f32 %v1836, %v1968
  %v2101 = vsub.f32 %v1837, %v1969
  %v2102 = vsub.f32 %v1838, %v1970
  %v2103 = vsub.f32 %v1839, %v1971
  %v2104 = vsub.f32 %v1840, %v1972
  %v2105 = vsub.f32 %v1841, %v1973
  %v2106 = vsub.f32 %v1842, %v1974
  %v2107 = vsub.f32 %v1843, %v1975
  %v2108 = vsub.f32 %v1844, %v1976
  %v2109 = vsub.f32 %v1845, %v1977
  %v2110 = vsub.f32 %v1846, %v1978
  %v2111 = vsub.f32 %v1847, %v1979
  %v2112 = vsub.f32 %v1848, %v1980
  %v2113 = vsub.f32 %v1849, %v1981
  %v2114 = vsub.f32 %v1850, %v1982
  %v2115 = vsub.f32 %v1851, %v1983
  %v2116 = vsub.f32 %v1852, %v1984
  %v2117 = vsub.f32 %v1853, %v1985
  %v2118 = vsub.f32 %v1854, %v1986
  %v2119 = vsub.f32 %v1855, %v1987
  %v2120 = vsub.f32 %v1856, %v1988
  %v2121 = vsub.f32 %v1857, %v1989
  %v2122 = vsub.f32 %v1858, %v1990
  %v2123 = vsub.f32 %v1859, %v1991
  %v2124 = vsub.f32 %v1860, %v1992
  %v2125 = vsub.f32 %v1861, %v1993
  %v2126 = vsub.f32 %v1862, %v1994
  %v2127 = vsub.f32 %v1863, %v1995
  %v2128 = vsub.f32 %v1864, %v1996
  %v2129 = vsub.f32 %v1865, %v1997
  %v2130 = vsub.f32 %v1866, %v1998
  %v2131 = vsub.f32 %v1867, %v1999
  %v2132 = vsub.f32 %v1868, %v2000
  %v2133 = vsub.f32 %v1869, %v2001
  %v2134 = vsub.f32 %v1870, %v2002
  %v2135 = vsub.f32 %v1871, %v2003
  %v2136 = vsub.f32 %v1872, %v2004
  %v2137 = vadd.f32 %v2005, 1e-05
  %v2138 = vadd.f32 %v2006, 1e-05
  %v2139 = vadd.f32 %v2007, 1e-05
  %v2140 = vadd.f32 %v2008, 1e-05
  %v2141 = vadd.f32 %v2009, 1e-05
  %v2142 = vadd.f32 %v2010, 1e-05
  %v2143 = vadd.f32 %v2011, 1e-05
  %v2144 = vadd.f32 %v2012, 1e-05
  %v2145 = vadd.f32 %v2013, 1e-05
  %v2146 = vadd.f32 %v2014, 1e-05
  %v2147 = vadd.f32 %v2015, 1e-05
  %v2148 = vadd.f32 %v2016, 1e-05
  %v2149 = vadd.f32 %v2017, 1e-05
  %v2150 = vadd.f32 %v2018, 1e-05
  %v2151 = vadd.f32 %v2019, 1e-05
  %v2152 = vadd.f32 %v2020, 1e-05
  %v2153 = vadd.f32 %v2021, 1e-05
  %v2154 = vadd.f32 %v2022, 1e-05
  %v2155 = vadd.f32 %v2023, 1e-05
  %v2156 = vadd.f32 %v2024, 1e-05
  %v2157 = vadd.f32 %v2025, 1e-05
  %v2158 = vadd.f32 %v2026, 1e-05
  %v2159 = vadd.f32 %v2027, 1e-05
  %v2160 = vadd.f32 %v2028, 1e-05
  %v2161 = vadd.f32 %v2029, 1e-05
  %v2162 = vadd.f32 %v2030, 1e-05
  %v2163 = vadd.f32 %v2031, 1e-05
  %v2164 = vadd.f32 %v2032, 1e-05
  %v2165 = vadd.f32 %v2033, 1e-05
  %v2166 = vadd.f32 %v2034, 1e-05
  %v2167 = vadd.f32 %v2035, 1e-05
  %v2168 = vadd.f32 %v2036, 1e-05
  %v2169 = vadd.f32 %v2037, 1e-05
  %v2170 = vadd.f32 %v2038, 1e-05
  %v2171 = vadd.f32 %v2039, 1e-05
  %v2172 = vadd.f32 %v2040, 1e-05
  %v2173 = vadd.f32 %v2041, 1e-05
  %v2174 = vadd.f32 %v2042, 1e-05
  %v2175 = vadd.f32 %v2043, 1e-05
  %v2176 = vadd.f32 %v2044, 1e-05
  %v2177 = vadd.f32 %v2045, 1e-05
  %v2178 = vadd.f32 %v2046, 1e-05
  %v2179 = vadd.f32 %v2047, 1e-05
  %v2180 = vadd.f32 %v2048, 1e-05
  %v2181 = vadd.f32 %v2049, 1e-05
  %v2182 = vadd.f32 %v2050, 1e-05
  %v2183 = vadd.f32 %v2051, 1e-05
  %v2184 = vadd.f32 %v2052, 1e-05
  %v2185 = vadd.f32 %v2053, 1e-05
  %v2186 = vadd.f32 %v2054, 1e-05
  %v2187 = vadd.f32 %v2055, 1e-05
  %v2188 = vadd.f32 %v2056, 1e-05
  %v2189 = vadd.f32 %v2057, 1e-05
  %v2190 = vadd.f32 %v2058, 1e-05
  %v2191 = vadd.f32 %v2059, 1e-05
  %v2192 = vadd.f32 %v2060, 1e-05
  %v2193 = vadd.f32 %v2061, 1e-05
  %v2194 = vadd.f32 %v2062, 1e-05
  %v2195 = vadd.f32 %v2063, 1e-05
  %v2196 = vadd.f32 %v2064, 1e-05
  %v2197 = vadd.f32 %v2065, 1e-05
  %v2198 = vadd.f32 %v2066, 1e-05
  %v2199 = vadd.f32 %v2067, 1e-05
  %v2200 = vadd.f32 %v2068, 1e-05
  %v2201 = vadd.f32 %v2069, 1e-05
  %v2202 = vadd.f32 %v2070, 1e-05
  %v2203 = vadd.f32 %v2071, 1e-05
  %v2204 = vadd.f32 %v2072, 1e-05
  %v2205 = vadd.f32 %v2073, 1e-05
  %v2206 = vadd.f32 %v2074, 1e-05
  %v2207 = vadd.f32 %v2075, 1e-05
  %v2208 = vadd.f32 %v2076, 1e-05
  %v2209 = vadd.f32 %v2077, 1e-05
  %v2210 = vadd.f32 %v2078, 1e-05
  %v2211 = vadd.f32 %v2079, 1e-05
  %v2212 = vadd.f32 %v2080, 1e-05
  %v2213 = vadd.f32 %v2081, 1e-05
  %v2214 = vadd.f32 %v2082, 1e-05
  %v2215 = vadd.f32 %v2083, 1e-05
  %v2216 = vadd.f32 %v2084, 1e-05
  %v2217 = vadd.f32 %v2085, 1e-05
  %v2218 = vadd.f32 %v2086, 1e-05
  %v2219 = vadd.f32 %v2087, 1e-05
  %v2220 = vadd.f32 %v2088, 1e-05
  %v2221 = vadd.f32 %v2089, 1e-05
  %v2222 = vadd.f32 %v2090, 1e-05
  %v2223 = vadd.f32 %v2091, 1e-05
  %v2224 = vadd.f32 %v2092, 1e-05
  %v2225 = vadd.f32 %v2093, 1e-05
  %v2226 = vadd.f32 %v2094, 1e-05
  %v2227 = vadd.f32 %v2095, 1e-05
  %v2228 = vadd.f32 %v2096, 1e-05
  %v2229 = vadd.f32 %v2097, 1e-05
  %v2230 = vadd.f32 %v2098, 1e-05
  %v2231 = vadd.f32 %v2099, 1e-05
  %v2232 = vadd.f32 %v2100, 1e-05
  %v2233 = vadd.f32 %v2101, 1e-05
  %v2234 = vadd.f32 %v2102, 1e-05
  %v2235 = vadd.f32 %v2103, 1e-05
  %v2236 = vadd.f32 %v2104, 1e-05
  %v2237 = vadd.f32 %v2105, 1e-05
  %v2238 = vadd.f32 %v2106, 1e-05
  %v2239 = vadd.f32 %v2107, 1e-05
  %v2240 = vadd.f32 %v2108, 1e-05
  %v2241 = vadd.f32 %v2109, 1e-05
  %v2242 = vadd.f32 %v2110, 1e-05
  %v2243 = vadd.f32 %v2111, 1e-05
  %v2244 = vadd.f32 %v2112, 1e-05
  %v2245 = vadd.f32 %v2113, 1e-05
  %v2246 = vadd.f32 %v2114, 1e-05
  %v2247 = vadd.f32 %v2115, 1e-05
  %v2248 = vadd.f32 %v2116, 1e-05
  %v2249 = vadd.f32 %v2117, 1e-05
  %v2250 = vadd.f32 %v2118, 1e-05
  %v2251 = vadd.f32 %v2119, 1e-05
  %v2252 = vadd.f32 %v2120, 1e-05
  %v2253 = vadd.f32 %v2121, 1e-05
  %v2254 = vadd.f32 %v2122, 1e-05
  %v2255 = vadd.f32 %v2123, 1e-05
  %v2256 = vadd.f32 %v2124, 1e-05
  %v2257 = vadd.f32 %v2125, 1e-05
  %v2258 = vadd.f32 %v2126, 1e-05
  %v2259 = vadd.f32 %v2127, 1e-05
  %v2260 = vadd.f32 %v2128, 1e-05
  %v2261 = vadd.f32 %v2129, 1e-05
  %v2262 = vadd.f32 %v2130, 1e-05
  %v2263 = vadd.f32 %v2131, 1e-05
  %v2264 = vadd.f32 %v2132, 1e-05
  %v2265 = vadd.f32 %v2133, 1e-05
  %v2266 = vadd.f32 %v2134, 1e-05
  %v2267 = vadd.f32 %v2135, 1e-05
  %v2268 = vadd.f32 %v2136, 1e-05
  %v2269 = vrsqrt.pop %v2137
  %v2270 = vrsqrt.pop %v2138
  %v2271 = vrsqrt.pop %v2139
  %v2272 = vrsqrt.pop %v2140
  %v2273 = vrsqrt.pop %v2141
  %v2274 = vrsqrt.pop %v2142
  %v2275 = vrsqrt.pop %v2143
  %v2276 = vrsqrt.pop %v2144
  %v2277 = vrsqrt.pop %v2145
  %v2278 = vrsqrt.pop %v2146
  %v2279 = vrsqrt.pop %v2147
  %v2280 = vrsqrt.pop %v2148
  %v2281 = vrsqrt.pop %v2149
  %v2282 = vrsqrt.pop %v2150
  %v2283 = vrsqrt.pop %v2151
  %v2284 = vrsqrt.pop %v2152
  %v2285 = vrsqrt.pop %v2153
  %v2286 = vrsqrt.pop %v2154
  %v2287 = vrsqrt.pop %v2155
  %v2288 = vrsqrt.pop %v2156
  %v2289 = vrsqrt.pop %v2157
  %v2290 = vrsqrt.pop %v2158
  %v2291 = vrsqrt.pop %v2159
  %v2292 = vrsqrt.pop %v2160
  %v2293 = vrsqrt.pop %v2161
  %v2294 = vrsqrt.pop %v2162
  %v2295 = vrsqrt.pop %v2163
  %v2296 = vrsqrt.pop %v2164
  %v2297 = vrsqrt.pop %v2165
  %v2298 = vrsqrt.pop %v2166
  %v2299 = vrsqrt.pop %v2167
  %v2300 = vrsqrt.pop %v2168
  %v2301 = vrsqrt.pop %v2169
  %v2302 = vrsqrt.pop %v2170
  %v2303 = vrsqrt.pop %v2171
  %v2304 = vrsqrt.pop %v2172
  %v2305 = vrsqrt.pop %v2173
  %v2306 = vrsqrt.pop %v2174
  %v2307 = vrsqrt.pop %v2175
  %v2308 = vrsqrt.pop %v2176
  %v2309 = vrsqrt.pop %v2177
  %v2310 = vrsqrt.pop %v2178
  %v2311 = vrsqrt.pop %v2179
  %v2312 = vrsqrt.pop %v2180
  %v2313 = vrsqrt.pop %v2181
  %v2314 = vrsqrt.pop %v2182
  %v2315 = vrsqrt.pop %v2183
  %v2316 = vrsqrt.pop %v2184
  %v2317 = vrsqrt.pop %v2185
  %v2318 = vrsqrt.pop %v2186
  %v2319 = vrsqrt.pop %v2187
  %v2320 = vrsqrt.pop %v2188
  %v2321 = vrsqrt.pop %v2189
  %v2322 = vrsqrt.pop %v2190
  %v2323 = vrsqrt.pop %v2191
  %v2324 = vrsqrt.pop %v2192
  %v2325 = vrsqrt.pop %v2193
  %v2326 = vrsqrt.pop %v2194
  %v2327 = vrsqrt.pop %v2195
  %v2328 = vrsqrt.pop %v2196
  %v2329 = vrsqrt.pop %v2197
  %v2330 = vrsqrt.pop %v2198
  %v2331 = vrsqrt.pop %v2199
  %v2332 = vrsqrt.pop %v2200
  %v2333 = vrsqrt.pop %v2201
  %v2334 = vrsqrt.pop %v2202
  %v2335 = vrsqrt.pop %v2203
  %v2336 = vrsqrt.pop %v2204
  %v2337 = vrsqrt.pop %v2205
  %v2338 = vrsqrt.pop %v2206
  %v2339 = vrsqrt.pop %v2207
  %v2340 = vrsqrt.pop %v2208
  %v2341 = vrsqrt.pop %v2209
  %v2342 = vrsqrt.pop %v2210
  %v2343 = vrsqrt.pop %v2211
  %v2344 = vrsqrt.pop %v2212
  %v2345 = vrsqrt.pop %v2213
  %v2346 = vrsqrt.pop %v2214
  %v2347 = vrsqrt.pop %v2215
  %v2348 = vrsqrt.pop %v2216
  %v2349 = vrsqrt.pop %v2217
  %v2350 = vrsqrt.pop %v2218
  %v2351 = vrsqrt.pop %v2219
  %v2352 = vrsqrt.pop %v2220
  %v2353 = vrsqrt.pop %v2221
  %v2354 = vrsqrt.pop %v2222
  %v2355 = vrsqrt.pop %v2223
  %v2356 = vrsqrt.pop %v2224
  %v2357 = vrsqrt.pop %v2225
  %v2358 = vrsqrt.pop %v2226
  %v2359 = vrsqrt.pop %v2227
  %v2360 = vrsqrt.pop %v2228
  %v2361 = vrsqrt.pop %v2229
  %v2362 = vrsqrt.pop %v2230
  %v2363 = vrsqrt.pop %v2231
  %v2364 = vrsqrt.pop %v2232
  %v2365 = vrsqrt.pop %v2233
  %v2366 = vrsqrt.pop %v2234
  %v2367 = vrsqrt.pop %v2235
  %v2368 = vrsqrt.pop %v2236
  %v2369 = vrsqrt.pop %v2237
  %v2370 = vrsqrt.pop %v2238
  %v2371 = vrsqrt.pop %v2239
  %v2372 = vrsqrt.pop %v2240
  %v2373 = vrsqrt.pop %v2241
  %v2374 = vrsqrt.pop %v2242
  %v2375 = vrsqrt.pop %v2243
  %v2376 = vrsqrt.pop %v2244
  %v2377 = vrsqrt.pop %v2245
  %v2378 = vrsqrt.pop %v2246
  %v2379 = vrsqrt.pop %v2247
  %v2380 = vrsqrt.pop %v2248
  %v2381 = vrsqrt.pop %v2249
  %v2382 = vrsqrt.pop %v2250
  %v2383 = vrsqrt.pop %v2251
  %v2384 = vrsqrt.pop %v2252
  %v2385 = vrsqrt.pop %v2253
  %v2386 = vrsqrt.pop %v2254
  %v2387 = vrsqrt.pop %v2255
  %v2388 = vrsqrt.pop %v2256
  %v2389 = vrsqrt.pop %v2257
  %v2390 = vrsqrt.pop %v2258
  %v2391 = vrsqrt.pop %v2259
  %v2392 = vrsqrt.pop %v2260
  %v2393 = vrsqrt.pop %v2261
  %v2394 = vrsqrt.pop %v2262
  %v2395 = vrsqrt.pop %v2263
  %v2396 = vrsqrt.pop %v2264
  %v2397 = vrsqrt.pop %v2265
  %v2398 = vrsqrt.pop %v2266
  %v2399 = vrsqrt.pop %v2267
  %v2400 = vrsqrt.pop %v2268
  %v2401 = vld [vmem:[%s2] sm:$0xff]
  %v2402 = vld [vmem:[%s2 + $0x8] sm:$0xff]
  %v2403 = vld [vmem:[%s2 + $0x10] sm:$0xff]
  %v2404 = vld [vmem:[%s2 + $0x18] sm:$0xff]
  %v2405 = vld [vmem:[%s2 + $0x20] sm:$0xff]
  %v2406 = vld [vmem:[%s2 + $0x28] sm:$0xff]
  %v2407 = vld [vmem:[%s2 + $0x30] sm:$0xff]
  %v2408 = vld [vmem:[%s2 + $0x38] sm:$0xff]
  %v2409 = vld [vmem:[%s2 + $0x40] sm:$0xff]
  %v2410 = vld [vmem:[%s2 + $0x48] sm:$0xff]
  %v2411 = vld [vmem:[%s2 + $0x50] sm:$0xff]
  %v2412 = vld [vmem:[%s2 + $0x58] sm:$0xff]
  %v2413 = vld [vmem:[%s2 + $0x60] sm:$0xff]
  %v2414 = vld [vmem:[%s2 + $0x68] sm:$0xff]
  %v2415 = vld [vmem:[%s2 + $0x70] sm:$0xff]
  %v2416 = vld [vmem:[%s2 + $0x78] sm:$0xff]
  %v2417 = vld [vmem:[%s2 + $0x80] sm:$0xff]
  %v2418 = vld [vmem:[%s2 + $0x88] sm:$0xff]
  %v2419 = vld [vmem:[%s2 + $0x90] sm:$0xff]
  %v2420 = vld [vmem:[%s2 + $0x98] sm:$0xff]
  %v2421 = vld [vmem:[%s2 + $0xa0] sm:$0xff]
  %v2422 = vld [vmem:[%s2 + $0xa8] sm:$0xff]
  %v2423 = vld [vmem:[%s2 + $0xb0] sm:$0xff]
  %v2424 = vld [vmem:[%s2 + $0xb8] sm:$0xff]
  %v2425 = vld [vmem:[%s2 + $0xc0] sm:$0xff]
  %v2426 = vld [vmem:[%s2 + $0xc8] sm:$0xff]
  %v2427 = vld [vmem:[%s2 + $0xd0] sm:$0xff]
  %v2428 = vld [vmem:[%s2 + $0xd8] sm:$0xff]
  %v2429 = vld [vmem:[%s2 + $0xe0] sm:$0xff]
  %v2430 = vld [vmem:[%s2 + $0xe8] sm:$0xff]
  %v2431 = vld [vmem:[%s2 + $0xf0] sm:$0xff]
  %v2432 = vld [vmem:[%s2 + $0xf8] sm:$0xff]
  %v2433 = vld [vmem:[%s2 + $0x100] sm:$0xff]
  %v2434 = vld [vmem:[%s2 + $0x108] sm:$0xff]
  %v2435 = vld [vmem:[%s2 + $0x110] sm:$0xff]
  %v2436 = vld [vmem:[%s2 + $0x118] sm:$0xff]
  %v2437 = vld [vmem:[%s2 + $0x120] sm:$0xff]
  %v2438 = vld [vmem:[%s2 + $0x128] sm:$0xff]
  %v2439 = vld [vmem:[%s2 + $0x130] sm:$0xff]
  %v2440 = vld [vmem:[%s2 + $0x138] sm:$0xff]
  %v2441 = vld [vmem:[%s2 + $0x140] sm:$0xff]
  %v2442 = vld [vmem:[%s2 + $0x148] sm:$0xff]
  %v2443 = vld [vmem:[%s2 + $0x150] sm:$0xff]
  %v2444 = vld [vmem:[%s2 + $0x158] sm:$0xff]
  %v2445 = vld [vmem:[%s2 + $0x160] sm:$0xff]
  %v2446 = vld [vmem:[%s2 + $0x168] sm:$0xff]
  %v2447 = vld [vmem:[%s2 + $0x170] sm:$0xff]
  %v2448 = vld [vmem:[%s2 + $0x178] sm:$0xff]
  %v2449 = vld [vmem:[%s2 + $0x180] sm:$0xff]
  %v2450 = vld [vmem:[%s2 + $0x188] sm:$0xff]
  %v2451 = vld [vmem:[%s2 + $0x190] sm:$0xff]
  %v2452 = vld [vmem:[%s2 + $0x198] sm:$0xff]
  %v2453 = vld [vmem:[%s2 + $0x1a0] sm:$0xff]
  %v2454 = vld [vmem:[%s2 + $0x1a8] sm:$0xff]
  %v2455 = vld [vmem:[%s2 + $0x1b0] sm:$0xff]
  %v2456 = vld [vmem:[%s2 + $0x1b8] sm:$0xff]
  %v2457 = vld [vmem:[%s2 + $0x1c0] sm:$0xff]
  %v2458 = vld [vmem:[%s2 + $0x1c8] sm:$0xff]
  %v2459 = vld [vmem:[%s2 + $0x1d0] sm:$0xff]
  %v2460 = vld [vmem:[%s2 + $0x1d8] sm:$0xff]
  %v2461 = vld [vmem:[%s2 + $0x1e0] sm:$0xff]
  %v2462 = vld [vmem:[%s2 + $0x1e8] sm:$0xff]
  %v2463 = vld [vmem:[%s2 + $0x1f0] sm:$0xff]
  %v2464 = vld [vmem:[%s2 + $0x1f8] sm:$0xff]
  %v2465 = vld [vmem:[%s2 + $0x200] sm:$0xff]
  %v2466 = vld [vmem:[%s2 + $0x208] sm:$0xff]
  %v2467 = vld [vmem:[%s2 + $0x210] sm:$0xff]
  %v2468 = vld [vmem:[%s2 + $0x218] sm:$0xff]
  %v2469 = vld [vmem:[%s2 + $0x220] sm:$0xff]
  %v2470 = vld [vmem:[%s2 + $0x228] sm:$0xff]
  %v2471 = vld [vmem:[%s2 + $0x230] sm:$0xff]
  %v2472 = vld [vmem:[%s2 + $0x238] sm:$0xff]
  %v2473 = vld [vmem:[%s2 + $0x240] sm:$0xff]
  %v2474 = vld [vmem:[%s2 + $0x248] sm:$0xff]
  %v2475 = vld [vmem:[%s2 + $0x250] sm:$0xff]
  %v2476 = vld [vmem:[%s2 + $0x258] sm:$0xff]
  %v2477 = vld [vmem:[%s2 + $0x260] sm:$0xff]
  %v2478 = vld [vmem:[%s2 + $0x268] sm:$0xff]
  %v2479 = vld [vmem:[%s2 + $0x270] sm:$0xff]
  %v2480 = vld [vmem:[%s2 + $0x278] sm:$0xff]
  %v2481 = vld [vmem:[%s2 + $0x280] sm:$0xff]
  %v2482 = vld [vmem:[%s2 + $0x288] sm:$0xff]
  %v2483 = vld [vmem:[%s2 + $0x290] sm:$0xff]
  %v2484 = vld [vmem:[%s2 + $0x298] sm:$0xff]
  %v2485 = vld [vmem:[%s2 + $0x2a0] sm:$0xff]
  %v2486 = vld [vmem:[%s2 + $0x2a8] sm:$0xff]
  %v2487 = vld [vmem:[%s2 + $0x2b0] sm:$0xff]
  %v2488 = vld [vmem:[%s2 + $0x2b8] sm:$0xff]
  %v2489 = vld [vmem:[%s2 + $0x2c0] sm:$0xff]
  %v2490 = vld [vmem:[%s2 + $0x2c8] sm:$0xff]
  %v2491 = vld [vmem:[%s2 + $0x2d0] sm:$0xff]
  %v2492 = vld [vmem:[%s2 + $0x2d8] sm:$0xff]
  %v2493 = vld [vmem:[%s2 + $0x2e0] sm:$0xff]
  %v2494 = vld [vmem:[%s2 + $0x2e8] sm:$0xff]
  %v2495 = vld [vmem:[%s2 + $0x2f0] sm:$0xff]
  %v2496 = vld [vmem:[%s2 + $0x2f8] sm:$0xff]
  %v2497 = vld [vmem:[%s2 + $0x300] sm:$0xff]
  %v2498 = vld [vmem:[%s2 + $0x308] sm:$0xff]
  %v2499 = vld [vmem:[%s2 + $0x310] sm:$0xff]
  %v2500 = vld [vmem:[%s2 + $0x318] sm:$0xff]
  %v2501 = vld [vmem:[%s2 + $0x320] sm:$0xff]
  %v2502 = vld [vmem:[%s2 + $0x328] sm:$0xff]
  %v2503 = vld [vmem:[%s2 + $0x330] sm:$0xff]
  %v2504 = vld [vmem:[%s2 + $0x338] sm:$0xff]
  %v2505 = vld [vmem:[%s2 + $0x340] sm:$0xff]
  %v2506 = vld [vmem:[%s2 + $0x348] sm:$0xff]
  %v2507 = vld [vmem:[%s2 + $0x350] sm:$0xff]
  %v2508 = vld [vmem:[%s2 + $0x358] sm:$0xff]
  %v2509 = vld [vmem:[%s2 + $0x360] sm:$0xff]
  %v2510 = vld [vmem:[%s2 + $0x368] sm:$0xff]
  %v2511 = vld [vmem:[%s2 + $0x370] sm:$0xff]
  %v2512 = vld [vmem:[%s2 + $0x378] sm:$0xff]
  %v2513 = vld [vmem:[%s2 + $0x380] sm:$0xff]
  %v2514 = vld [vmem:[%s2 + $0x388] sm:$0xff]
  %v2515 = vld [vmem:[%s2 + $0x390] sm:$0xff]
  %v2516 = vld [vmem:[%s2 + $0x398] sm:$0xff]
  %v2517 = vld [vmem:[%s2 + $0x3a0] sm:$0xff]
  %v2518 = vld [vmem:[%s2 + $0x3a8] sm:$0xff]
  %v2519 = vld [vmem:[%s2 + $0x3b0] sm:$0xff]
  %v2520 = vld [vmem:[%s2 + $0x3b8] sm:$0xff]
  %v2521 = vld [vmem:[%s2 + $0x3c0] sm:$0xff]
  %v2522 = vld [vmem:[%s2 + $0x3c8] sm:$0xff]
  %v2523 = vld [vmem:[%s2 + $0x3d0] sm:$0xff]
  %v2524 = vld [vmem:[%s2 + $0x3d8] sm:$0xff]
  %v2525 = vld [vmem:[%s2 + $0x3e0] sm:$0xff]
  %v2526 = vld [vmem:[%s2 + $0x3e8] sm:$0xff]
  %v2527 = vld [vmem:[%s2 + $0x3f0] sm:$0xff]
  %v2528 = vld [vmem:[%s2 + $0x3f8] sm:$0xff]
  %v2529 = vld [vmem:[%s2 + $0x400] sm:$0xff]
  %v2530 = vld [vmem:[%s2 + $0x408] sm:$0xff]
  %v2531 = vld [vmem:[%s2 + $0x410] sm:$0xff]
  %v2532 = vld [vmem:[%s2 + $0x418] sm:$0xff]
  %v2533 = vmul.f32 %v2269, %v2401
  %v2534 = vmul.f32 %v2270, %v2402
  %v2535 = vmul.f32 %v2271, %v2403
  %v2536 = vmul.f32 %v2272, %v2404
  %v2537 = vmul.f32 %v2273, %v2405
  %v2538 = vmul.f32 %v2274, %v2406
  %v2539 = vmul.f32 %v2275, %v2407
  %v2540 = vmul.f32 %v2276, %v2408
  %v2541 = vmul.f32 %v2277, %v2409
  %v2542 = vmul.f32 %v2278, %v2410
  %v2543 = vmul.f32 %v2279, %v2411
  %v2544 = vmul.f32 %v2280, %v2412
  %v2545 = vmul.f32 %v2281, %v2413
  %v2546 = vmul.f32 %v2282, %v2414
  %v2547 = vmul.f32 %v2283, %v2415
  %v2548 = vmul.f32 %v2284, %v2416
  %v2549 = vmul.f32 %v2285, %v2417
  %v2550 = vmul.f32 %v2286, %v2418
  %v2551 = vmul.f32 %v2287, %v2419
  %v2552 = vmul.f32 %v2288, %v2420
  %v2553 = vmul.f32 %v2289, %v2421
  %v2554 = vmul.f32 %v2290, %v2422
  %v2555 = vmul.f32 %v2291, %v2423
  %v2556 = vmul.f32 %v2292, %v2424
  %v2557 = vmul.f32 %v2293, %v2425
  %v2558 = vmul.f32 %v2294, %v2426
  %v2559 = vmul.f32 %v2295, %v2427
  %v2560 = vmul.f32 %v2296, %v2428
  %v2561 = vmul.f32 %v2297, %v2429
  %v2562 = vmul.f32 %v2298, %v2430
  %v2563 = vmul.f32 %v2299, %v2431
  %v2564 = vmul.f32 %v2300, %v2432
  %v2565 = vmul.f32 %v2301, %v2433
  %v2566 = vmul.f32 %v2302, %v2434
  %v2567 = vmul.f32 %v2303, %v2435
  %v2568 = vmul.f32 %v2304, %v2436
  %v2569 = vmul.f32 %v2305, %v2437
  %v2570 = vmul.f32 %v2306, %v2438
  %v2571 = vmul.f32 %v2307, %v2439
  %v2572 = vmul.f32 %v2308, %v2440
  %v2573 = vmul.f32 %v2309, %v2441
  %v2574 = vmul.f32 %v2310, %v2442
  %v2575 = vmul.f32 %v2311, %v2443
  %v2576 = vmul.f32 %v2312, %v2444
  %v2577 = vmul.f32 %v2313, %v2445
  %v2578 = vmul.f32 %v2314, %v2446
  %v2579 = vmul.f32 %v2315, %v2447
  %v2580 = vmul.f32 %v2316, %v2448
  %v2581 = vmul.f32 %v2317, %v2449
  %v2582 = vmul.f32 %v2318, %v2450
  %v2583 = vmul.f32 %v2319, %v2451
  %v2584 = vmul.f32 %v2320, %v2452
  %v2585 = vmul.f32 %v2321, %v2453
  %v2586 = vmul.f32 %v2322, %v2454
  %v2587 = vmul.f32 %v2323, %v2455
  %v2588 = vmul.f32 %v2324, %v2456
  %v2589 = vmul.f32 %v2325, %v2457
  %v2590 = vmul.f32 %v2326, %v2458
  %v2591 = vmul.f32 %v2327, %v2459
  %v2592 = vmul.f32 %v2328, %v2460
  %v2593 = vmul.f32 %v2329, %v2461
  %v2594 = vmul.f32 %v2330, %v2462
  %v2595 = vmul.f32 %v2331, %v2463
  %v2596 = vmul.f32 %v2332, %v2464
  %v2597 = vmul.f32 %v2333, %v2465
  %v2598 = vmul.f32 %v2334, %v2466
  %v2599 = vmul.f32 %v2335, %v2467
  %v2600 = vmul.f32 %v2336, %v2468
  %v2601 = vmul.f32 %v2337, %v2469
  %v2602 = vmul.f32 %v2338, %v2470
  %v2603 = vmul.f32 %v2339, %v2471
  %v2604 = vmul.f32 %v2340, %v2472
  %v2605 = vmul.f32 %v2341, %v2473
  %v2606 = vmul.f32 %v2342, %v2474
  %v2607 = vmul.f32 %v2343, %v2475
  %v2608 = vmul.f32 %v2344, %v2476
  %v2609 = vmul.f32 %v2345, %v2477
  %v2610 = vmul.f32 %v2346, %v2478
  %v2611 = vmul.f32 %v2347, %v2479
  %v2612 = vmul.f32 %v2348, %v2480
  %v2613 = vmul.f32 %v2349, %v2481
  %v2614 = vmul.f32 %v2350, %v2482
  %v2615 = vmul.f32 %v2351, %v2483
  %v2616 = vmul.f32 %v2352, %v2484
  %v2617 = vmul.f32 %v2353, %v2485
  %v2618 = vmul.f32 %v2354, %v2486
  %v2619 = vmul.f32 %v2355, %v2487
  %v2620 = vmul.f32 %v2356, %v2488
  %v2621 = vmul.f32 %v2357, %v2489
  %v2622 = vmul.f32 %v2358, %v2490
  %v2623 = vmul.f32 %v2359, %v2491
  %v2624 = vmul.f32 %v2360, %v2492
  %v2625 = vmul.f32 %v2361, %v2493
  %v2626 = vmul.f32 %v2362, %v2494
  %v2627 = vmul.f32 %v2363, %v2495
  %v2628 = vmul.f32 %v2364, %v2496
  %v2629 = vmul.f32 %v2365, %v2497
  %v2630 = vmul.f32 %v2366, %v2498
  %v2631 = vmul.f32 %v2367, %v2499
  %v2632 = vmul.f32 %v2368, %v2500
  %v2633 = vmul.f32 %v2369, %v2501
  %v2634 = vmul.f32 %v2370, %v2502
  %v2635 = vmul.f32 %v2371, %v2503
  %v2636 = vmul.f32 %v2372, %v2504
  %v2637 = vmul.f32 %v2373, %v2505
  %v2638 = vmul.f32 %v2374, %v2506
  %v2639 = vmul.f32 %v2375, %v2507
  %v2640 = vmul.f32 %v2376, %v2508
  %v2641 = vmul.f32 %v2377, %v2509
  %v2642 = vmul.f32 %v2378, %v2510
  %v2643 = vmul.f32 %v2379, %v2511
  %v2644 = vmul.f32 %v2380, %v2512
  %v2645 = vmul.f32 %v2381, %v2513
  %v2646 = vmul.f32 %v2382, %v2514
  %v2647 = vmul.f32 %v2383, %v2515
  %v2648 = vmul.f32 %v2384, %v2516
  %v2649 = vmul.f32 %v2385, %v2517
  %v2650 = vmul.f32 %v2386, %v2518
  %v2651 = vmul.f32 %v2387, %v2519
  %v2652 = vmul.f32 %v2388, %v2520
  %v2653 = vmul.f32 %v2389, %v2521
  %v2654 = vmul.f32 %v2390, %v2522
  %v2655 = vmul.f32 %v2391, %v2523
  %v2656 = vmul.f32 %v2392, %v2524
  %v2657 = vmul.f32 %v2393, %v2525
  %v2658 = vmul.f32 %v2394, %v2526
  %v2659 = vmul.f32 %v2395, %v2527
  %v2660 = vmul.f32 %v2396, %v2528
  %v2661 = vmul.f32 %v2397, %v2529
  %v2662 = vmul.f32 %v2398, %v2530
  %v2663 = vmul.f32 %v2399, %v2531
  %v2664 = vmul.f32 %v2400, %v2532
  %v2665 = vsub.f32 %v24, %v1609
  %v2666 = vsub.f32 %v25, %v1609
  %v2667 = vsub.f32 %v26, %v1610
  %v2668 = vsub.f32 %v27, %v1610
  %v2669 = vsub.f32 %v28, %v1611
  %v2670 = vsub.f32 %v29, %v1611
  %v2671 = vsub.f32 %v30, %v1612
  %v2672 = vsub.f32 %v31, %v1612
  %v2673 = vsub.f32 %v32, %v1613
  %v2674 = vsub.f32 %v33, %v1613
  %v2675 = vsub.f32 %v34, %v1614
  %v2676 = vsub.f32 %v35, %v1614
  %v2677 = vsub.f32 %v36, %v1615
  %v2678 = vsub.f32 %v37, %v1615
  %v2679 = vsub.f32 %v38, %v1616
  %v2680 = vsub.f32 %v39, %v1616
  %v2681 = vsub.f32 %v40, %v1617
  %v2682 = vsub.f32 %v41, %v1617
  %v2683 = vsub.f32 %v42, %v1618
  %v2684 = vsub.f32 %v43, %v1618
  %v2685 = vsub.f32 %v44, %v1619
  %v2686 = vsub.f32 %v45, %v1619
  %v2687 = vsub.f32 %v46, %v1620
  %v2688 = vsub.f32 %v47, %v1620
  %v2689 = vsub.f32 %v48, %v1621
  %v2690 = vsub.f32 %v49, %v1621
  %v2691 = vsub.f32 %v50, %v1622
  %v2692 = vsub.f32 %v51, %v1622
  %v2693 = vsub.f32 %v52, %v1623
  %v2694 = vsub.f32 %v53, %v1623
  %v2695 = vsub.f32 %v54, %v1624
  %v2696 = vsub.f32 %v55, %v1624
  %v2697 = vsub.f32 %v56, %v1625
  %v2698 = vsub.f32 %v57, %v1625
  %v2699 = vsub.f32 %v58, %v1626
  %v2700 = vsub.f32 %v59, %v1626
  %v2701 = vsub.f32 %v60, %v1627
  %v2702 = vsub.f32 %v61, %v1627
  %v2703 = vsub.f32 %v62, %v1628
  %v2704 = vsub.f32 %v63, %v1628
  %v2705 = vsub.f32 %v64, %v1629
  %v2706 = vsub.f32 %v65, %v1629
  %v2707 = vsub.f32 %v66, %v1630
  %v2708 = vsub.f32 %v67, %v1630
  %v2709 = vsub.f32 %v68, %v1631
  %v2710 = vsub.f32 %v69, %v1631
  %v2711 = vsub.f32 %v70, %v1632
  %v2712 = vsub.f32 %v71, %v1632
  %v2713 = vsub.f32 %v72, %v1633
  %v2714 = vsub.f32 %v73, %v1633
  %v2715 = vsub.f32 %v74, %v1634
  %v2716 = vsub.f32 %v75, %v1634
  %v2717 = vsub.f32 %v76, %v1635
  %v2718 = vsub.f32 %v77, %v1635
  %v2719 = vsub.f32 %v78, %v1636
  %v2720 = vsub.f32 %v79, %v1636
  %v2721 = vsub.f32 %v80, %v1637
  %v2722 = vsub.f32 %v81, %v1637
  %v2723 = vsub.f32 %v82, %v1638
  %v2724 = vsub.f32 %v83, %v1638
  %v2725 = vsub.f32 %v84, %v1639
  %v2726 = vsub.f32 %v85, %v1639
  %v2727 = vsub.f32 %v86, %v1640
  %v2728 = vsub.f32 %v87, %v1640
  %v2729 = vsub.f32 %v88, %v1641
  %v2730 = vsub.f32 %v89, %v1641
  %v2731 = vsub.f32 %v90, %v1642
  %v2732 = vsub.f32 %v91, %v1642
  %v2733 = vsub.f32 %v92, %v1643
  %v2734 = vsub.f32 %v93, %v1643
  %v2735 = vsub.f32 %v94, %v1644
  %v2736 = vsub.f32 %v95, %v1644
  %v2737 = vsub.f32 %v96, %v1645
  %v2738 = vsub.f32 %v97, %v1645
  %v2739 = vsub.f32 %v98, %v1646
  %v2740 = vsub.f32 %v99, %v1646
  %v2741 = vsub.f32 %v100, %v1647
  %v2742 = vsub.f32 %v101, %v1647
  %v2743 = vsub.f32 %v102, %v1648
  %v2744 = vsub.f32 %v103, %v1648
  %v2745 = vsub.f32 %v104, %v1649
  %v2746 = vsub.f32 %v105, %v1649
  %v2747 = vsub.f32 %v106, %v1650
  %v2748 = vsub.f32 %v107, %v1650
  %v2749 = vsub.f32 %v108, %v1651
  %v2750 = vsub.f32 %v109, %v1651
  %v2751 = vsub.f32 %v110, %v1652
  %v2752 = vsub.f32 %v111, %v1652
  %v2753 = vsub.f32 %v112, %v1653
  %v2754 = vsub.f32 %v113, %v1653
  %v2755 = vsub.f32 %v114, %v1654
  %v2756 = vsub.f32 %v115, %v1654
  %v2757 = vsub.f32 %v116, %v1655
  %v2758 = vsub.f32 %v117, %v1655
  %v2759 = vsub.f32 %v118, %v1656
  %v2760 = vsub.f32 %v119, %v1656
  %v2761 = vsub.f32 %v120, %v1657
  %v2762 = vsub.f32 %v121, %v1657
  %v2763 = vsub.f32 %v122, %v1658
  %v2764 = vsub.f32 %v123, %v1658
  %v2765 = vsub.f32 %v124, %v1659
  %v2766 = vsub.f32 %v125, %v1659
  %v2767 = vsub.f32 %v126, %v1660
  %v2768 = vsub.f32 %v127, %v1660
  %v2769 = vsub.f32 %v128, %v1661
  %v2770 = vsub.f32 %v129, %v1661
  %v2771 = vsub.f32 %v130, %v1662
  %v2772 = vsub.f32 %v131, %v1662
  %v2773 = vsub.f32 %v132, %v1663
  %v2774 = vsub.f32 %v133, %v1663
  %v2775 = vsub.f32 %v134, %v1664
  %v2776 = vsub.f32 %v135, %v1664
  %v2777 = vsub.f32 %v136, %v1665
  %v2778 = vsub.f32 %v137, %v1665
  %v2779 = vsub.f32 %v138, %v1666
  %v2780 = vsub.f32 %v139, %v1666
  %v2781 = vsub.f32 %v140, %v1667
  %v2782 = vsub.f32 %v141, %v1667
  %v2783 = vsub.f32 %v142, %v1668
  %v2784 = vsub.f32 %v143, %v1668
  %v2785 = vsub.f32 %v144, %v1669
  %v2786 = vsub.f32 %v145, %v1669
  %v2787 = vsub.f32 %v146, %v1670
  %v2788 = vsub.f32 %v147, %v1670
  %v2789 = vsub.f32 %v148, %v1671
  %v2790 = vsub.f32 %v149, %v1671
  %v2791 = vsub.f32 %v150, %v1672
  %v2792 = vsub.f32 %v151, %v1672
  %v2793 = vsub.f32 %v152, %v1673
  %v2794 = vsub.f32 %v153, %v1673
  %v2795 = vsub.f32 %v154, %v1674
  %v2796 = vsub.f32 %v155, %v1674
  %v2797 = vsub.f32 %v156, %v1675
  %v2798 = vsub.f32 %v157, %v1675
  %v2799 = vsub.f32 %v158, %v1676
  %v2800 = vsub.f32 %v159, %v1676
  %v2801 = vsub.f32 %v160, %v1677
  %v2802 = vsub.f32 %v161, %v1677
  %v2803 = vsub.f32 %v162, %v1678
  %v2804 = vsub.f32 %v163, %v1678
  %v2805 = vsub.f32 %v164, %v1679
  %v2806 = vsub.f32 %v165, %v1679
  %v2807 = vsub.f32 %v166, %v1680
  %v2808 = vsub.f32 %v167, %v1680
  %v2809 = vsub.f32 %v168, %v1681
  %v2810 = vsub.f32 %v169, %v1681
  %v2811 = vsub.f32 %v170, %v1682
  %v2812 = vsub.f32 %v171, %v1682
  %v2813 = vsub.f32 %v172, %v1683
  %v2814 = vsub.f32 %v173, %v1683
  %v2815 = vsub.f32 %v174, %v1684
  %v2816 = vsub.f32 %v175, %v1684
  %v2817 = vsub.f32 %v176, %v1685
  %v2818 = vsub.f32 %v177, %v1685
  %v2819 = vsub.f32 %v178, %v1686
  %v2820 = vsub.f32 %v179, %v1686
  %v2821 = vsub.f32 %v180, %v1687
  %v2822 = vsub.f32 %v181, %v1687
  %v2823 = vsub.f32 %v182, %v1688
  %v2824 = vsub.f32 %v183, %v1688
  %v2825 = vsub.f32 %v184, %v1689
  %v2826 = vsub.f32 %v185, %v1689
  %v2827 = vsub.f32 %v186, %v1690
  %v2828 = vsub.f32 %v187, %v1690
  %v2829 = vsub.f32 %v188, %v1691
  %v2830 = vsub.f32 %v189, %v1691
  %v2831 = vsub.f32 %v190, %v1692
  %v2832 = vsub.f32 %v191, %v1692
  %v2833 = vsub.f32 %v192, %v1693
  %v2834 = vsub.f32 %v193, %v1693
  %v2835 = vsub.f32 %v194, %v1694
  %v2836 = vsub.f32 %v195, %v1694
  %v2837 = vsub.f32 %v196, %v1695
  %v2838 = vsub.f32 %v197, %v1695
  %v2839 = vsub.f32 %v198, %v1696
  %v2840 = vsub.f32 %v199, %v1696
  %v2841 = vsub.f32 %v200, %v1697
  %v2842 = vsub.f32 %v201, %v1697
  %v2843 = vsub.f32 %v202, %v1698
  %v2844 = vsub.f32 %v203, %v1698
  %v2845 = vsub.f32 %v204, %v1699
  %v2846 = vsub.f32 %v205, %v1699
  %v2847 = vsub.f32 %v206, %v1700
  %v2848 = vsub.f32 %v207, %v1700
  %v2849 = vsub.f32 %v208, %v1701
  %v2850 = vsub.f32 %v209, %v1701
  %v2851 = vsub.f32 %v210, %v1702
  %v2852 = vsub.f32 %v211, %v1702
  %v2853 = vsub.f32 %v212, %v1703
  %v2854 = vsub.f32 %v213, %v1703
  %v2855 = vsub.f32 %v214, %v1704
  %v2856 = vsub.f32 %v215, %v1704
  %v2857 = vsub.f32 %v216, %v1705
  %v2858 = vsub.f32 %v217, %v1705
  %v2859 = vsub.f32 %v218, %v1706
  %v2860 = vsub.f32 %v219, %v1706
  %v2861 = vsub.f32 %v220, %v1707
  %v2862 = vsub.f32 %v221, %v1707
  %v2863 = vsub.f32 %v222, %v1708
  %v2864 = vsub.f32 %v223, %v1708
  %v2865 = vsub.f32 %v224, %v1709
  %v2866 = vsub.f32 %v225, %v1709
  %v2867 = vsub.f32 %v226, %v1710
  %v2868 = vsub.f32 %v227, %v1710
  %v2869 = vsub.f32 %v228, %v1711
  %v2870 = vsub.f32 %v229, %v1711
  %v2871 = vsub.f32 %v230, %v1712
  %v2872 = vsub.f32 %v231, %v1712
  %v2873 = vsub.f32 %v232, %v1713
  %v2874 = vsub.f32 %v233, %v1713
  %v2875 = vsub.f32 %v234, %v1714
  %v2876 = vsub.f32 %v235, %v1714
  %v2877 = vsub.f32 %v236, %v1715
  %v2878 = vsub.f32 %v237, %v1715
  %v2879 = vsub.f32 %v238, %v1716
  %v2880 = vsub.f32 %v239, %v1716
  %v2881 = vsub.f32 %v240, %v1717
  %v2882 = vsub.f32 %v241, %v1717
  %v2883 = vsub.f32 %v242, %v1718
  %v2884 = vsub.f32 %v243, %v1718
  %v2885 = vsub.f32 %v244, %v1719
  %v2886 = vsub.f32 %v245, %v1719
  %v2887 = vsub.f32 %v246, %v1720
  %v2888 = vsub.f32 %v247, %v1720
  %v2889 = vsub.f32 %v248, %v1721
  %v2890 = vsub.f32 %v249, %v1721
  %v2891 = vsub.f32 %v250, %v1722
  %v2892 = vsub.f32 %v251, %v1722
  %v2893 = vsub.f32 %v252, %v1723
  %v2894 = vsub.f32 %v253, %v1723
  %v2895 = vsub.f32 %v254, %v1724
  %v2896 = vsub.f32 %v255, %v1724
  %v2897 = vsub.f32 %v256, %v1725
  %v2898 = vsub.f32 %v257, %v1725
  %v2899 = vsub.f32 %v258, %v1726
  %v2900 = vsub.f32 %v259, %v1726
  %v2901 = vsub.f32 %v260, %v1727
  %v2902 = vsub.f32 %v261, %v1727
  %v2903 = vsub.f32 %v262, %v1728
  %v2904 = vsub.f32 %v263, %v1728
  %v2905 = vsub.f32 %v264, %v1729
  %v2906 = vsub.f32 %v265, %v1729
  %v2907 = vsub.f32 %v266, %v1730
  %v2908 = vsub.f32 %v267, %v1730
  %v2909 = vsub.f32 %v268, %v1731
  %v2910 = vsub.f32 %v269, %v1731
  %v2911 = vsub.f32 %v270, %v1732
  %v2912 = vsub.f32 %v271, %v1732
  %v2913 = vsub.f32 %v272, %v1733
  %v2914 = vsub.f32 %v273, %v1733
  %v2915 = vsub.f32 %v274, %v1734
  %v2916 = vsub.f32 %v275, %v1734
  %v2917 = vsub.f32 %v276, %v1735
  %v2918 = vsub.f32 %v277, %v1735
  %v2919 = vsub.f32 %v278, %v1736
  %v2920 = vsub.f32 %v279, %v1736
  %v2921 = vsub.f32 %v280, %v1737
  %v2922 = vsub.f32 %v281, %v1737
  %v2923 = vsub.f32 %v282, %v1738
  %v2924 = vsub.f32 %v283, %v1738
  %v2925 = vsub.f32 %v284, %v1739
  %v2926 = vsub.f32 %v285, %v1739
  %v2927 = vsub.f32 %v286, %v1740
  %v2928 = vsub.f32 %v287, %v1740
  %2930 = vset.pattern.permute.xlu0 0
  %2931 = vperm.xlu0 %2930, %v2533
  %v2932 = vpop.permute.xlu0 %2931
  %2935 = vset.pattern.permute.xlu0 0
  %2936 = vperm.xlu0 %2935, %v2534
  %v2937 = vpop.permute.xlu0 %2936
  %2940 = vset.pattern.permute.xlu0 0
  %2941 = vperm.xlu0 %2940, %v2535
  %v2942 = vpop.permute.xlu0 %2941
  %2945 = vset.pattern.permute.xlu0 0
  %2946 = vperm.xlu0 %2945, %v2536
  %v2947 = vpop.permute.xlu0 %2946
  %2950 = vset.pattern.permute.xlu0 0
  %2951 = vperm.xlu0 %2950, %v2537
  %v2952 = vpop.permute.xlu0 %2951
  %2955 = vset.pattern.permute.xlu0 0
  %2956 = vperm.xlu0 %2955, %v2538
  %v2957 = vpop.permute.xlu0 %2956
  %2960 = vset.pattern.permute.xlu0 0
  %2961 = vperm.xlu0 %2960, %v2539
  %v2962 = vpop.permute.xlu0 %2961
  %2965 = vset.pattern.permute.xlu0 0
  %2966 = vperm.xlu0 %2965, %v2540
  %v2967 = vpop.permute.xlu0 %2966
  %2970 = vset.pattern.permute.xlu0 0
  %2971 = vperm.xlu0 %2970, %v2541
  %v2972 = vpop.permute.xlu0 %2971
  %2975 = vset.pattern.permute.xlu0 0
  %2976 = vperm.xlu0 %2975, %v2542
  %v2977 = vpop.permute.xlu0 %2976
  %2980 = vset.pattern.permute.xlu0 0
  %2981 = vperm.xlu0 %2980, %v2543
  %v2982 = vpop.permute.xlu0 %2981
  %2985 = vset.pattern.permute.xlu0 0
  %2986 = vperm.xlu0 %2985, %v2544
  %v2987 = vpop.permute.xlu0 %2986
  %2990 = vset.pattern.permute.xlu0 0
  %2991 = vperm.xlu0 %2990, %v2545
  %v2992 = vpop.permute.xlu0 %2991
  %2995 = vset.pattern.permute.xlu0 0
  %2996 = vperm.xlu0 %2995, %v2546
  %v2997 = vpop.permute.xlu0 %2996
  %3000 = vset.pattern.permute.xlu0 0
  %3001 = vperm.xlu0 %3000, %v2547
  %v3002 = vpop.permute.xlu0 %3001
  %3005 = vset.pattern.permute.xlu0 0
  %3006 = vperm.xlu0 %3005, %v2548
  %v3007 = vpop.permute.xlu0 %3006
  %3010 = vset.pattern.permute.xlu0 0
  %3011 = vperm.xlu0 %3010, %v2549
  %v3012 = vpop.permute.xlu0 %3011
  %3015 = vset.pattern.permute.xlu0 0
  %3016 = vperm.xlu0 %3015, %v2550
  %v3017 = vpop.permute.xlu0 %3016
  %3020 = vset.pattern.permute.xlu0 0
  %3021 = vperm.xlu0 %3020, %v2551
  %v3022 = vpop.permute.xlu0 %3021
  %3025 = vset.pattern.permute.xlu0 0
  %3026 = vperm.xlu0 %3025, %v2552
  %v3027 = vpop.permute.xlu0 %3026
  %3030 = vset.pattern.permute.xlu0 0
  %3031 = vperm.xlu0 %3030, %v2553
  %v3032 = vpop.permute.xlu0 %3031
  %3035 = vset.pattern.permute.xlu0 0
  %3036 = vperm.xlu0 %3035, %v2554
  %v3037 = vpop.permute.xlu0 %3036
  %3040 = vset.pattern.permute.xlu0 0
  %3041 = vperm.xlu0 %3040, %v2555
  %v3042 = vpop.permute.xlu0 %3041
  %3045 = vset.pattern.permute.xlu0 0
  %3046 = vperm.xlu0 %3045, %v2556
  %v3047 = vpop.permute.xlu0 %3046
  %3050 = vset.pattern.permute.xlu0 0
  %3051 = vperm.xlu0 %3050, %v2557
  %v3052 = vpop.permute.xlu0 %3051
  %3055 = vset.pattern.permute.xlu0 0
  %3056 = vperm.xlu0 %3055, %v2558
  %v3057 = vpop.permute.xlu0 %3056
  %3060 = vset.pattern.permute.xlu0 0
  %3061 = vperm.xlu0 %3060, %v2559
  %v3062 = vpop.permute.xlu0 %3061
  %3065 = vset.pattern.permute.xlu0 0
  %3066 = vperm.xlu0 %3065, %v2560
  %v3067 = vpop.permute.xlu0 %3066
  %3070 = vset.pattern.permute.xlu0 0
  %3071 = vperm.xlu0 %3070, %v2561
  %v3072 = vpop.permute.xlu0 %3071
  %3075 = vset.pattern.permute.xlu0 0
  %3076 = vperm.xlu0 %3075, %v2562
  %v3077 = vpop.permute.xlu0 %3076
  %3080 = vset.pattern.permute.xlu0 0
  %3081 = vperm.xlu0 %3080, %v2563
  %v3082 = vpop.permute.xlu0 %3081
  %3085 = vset.pattern.permute.xlu0 0
  %3086 = vperm.xlu0 %3085, %v2564
  %v3087 = vpop.permute.xlu0 %3086
  %3090 = vset.pattern.permute.xlu0 0
  %3091 = vperm.xlu0 %3090, %v2565
  %v3092 = vpop.permute.xlu0 %3091
  %3095 = vset.pattern.permute.xlu0 0
  %3096 = vperm.xlu0 %3095, %v2566
  %v3097 = vpop.permute.xlu0 %3096
  %3100 = vset.pattern.permute.xlu0 0
  %3101 = vperm.xlu0 %3100, %v2567
  %v3102 = vpop.permute.xlu0 %3101
  %3105 = vset.pattern.permute.xlu0 0
  %3106 = vperm.xlu0 %3105, %v2568
  %v3107 = vpop.permute.xlu0 %3106
  %3110 = vset.pattern.permute.xlu0 0
  %3111 = vperm.xlu0 %3110, %v2569
  %v3112 = vpop.permute.xlu0 %3111
  %3115 = vset.pattern.permute.xlu0 0
  %3116 = vperm.xlu0 %3115, %v2570
  %v3117 = vpop.permute.xlu0 %3116
  %3120 = vset.pattern.permute.xlu0 0
  %3121 = vperm.xlu0 %3120, %v2571
  %v3122 = vpop.permute.xlu0 %3121
  %3125 = vset.pattern.permute.xlu0 0
  %3126 = vperm.xlu0 %3125, %v2572
  %v3127 = vpop.permute.xlu0 %3126
  %3130 = vset.pattern.permute.xlu0 0
  %3131 = vperm.xlu0 %3130, %v2573
  %v3132 = vpop.permute.xlu0 %3131
  %3135 = vset.pattern.permute.xlu0 0
  %3136 = vperm.xlu0 %3135, %v2574
  %v3137 = vpop.permute.xlu0 %3136
  %3140 = vset.pattern.permute.xlu0 0
  %3141 = vperm.xlu0 %3140, %v2575
  %v3142 = vpop.permute.xlu0 %3141
  %3145 = vset.pattern.permute.xlu0 0
  %3146 = vperm.xlu0 %3145, %v2576
  %v3147 = vpop.permute.xlu0 %3146
  %3150 = vset.pattern.permute.xlu0 0
  %3151 = vperm.xlu0 %3150, %v2577
  %v3152 = vpop.permute.xlu0 %3151
  %3155 = vset.pattern.permute.xlu0 0
  %3156 = vperm.xlu0 %3155, %v2578
  %v3157 = vpop.permute.xlu0 %3156
  %3160 = vset.pattern.permute.xlu0 0
  %3161 = vperm.xlu0 %3160, %v2579
  %v3162 = vpop.permute.xlu0 %3161
  %3165 = vset.pattern.permute.xlu0 0
  %3166 = vperm.xlu0 %3165, %v2580
  %v3167 = vpop.permute.xlu0 %3166
  %3170 = vset.pattern.permute.xlu0 0
  %3171 = vperm.xlu0 %3170, %v2581
  %v3172 = vpop.permute.xlu0 %3171
  %3175 = vset.pattern.permute.xlu0 0
  %3176 = vperm.xlu0 %3175, %v2582
  %v3177 = vpop.permute.xlu0 %3176
  %3180 = vset.pattern.permute.xlu0 0
  %3181 = vperm.xlu0 %3180, %v2583
  %v3182 = vpop.permute.xlu0 %3181
  %3185 = vset.pattern.permute.xlu0 0
  %3186 = vperm.xlu0 %3185, %v2584
  %v3187 = vpop.permute.xlu0 %3186
  %3190 = vset.pattern.permute.xlu0 0
  %3191 = vperm.xlu0 %3190, %v2585
  %v3192 = vpop.permute.xlu0 %3191
  %3195 = vset.pattern.permute.xlu0 0
  %3196 = vperm.xlu0 %3195, %v2586
  %v3197 = vpop.permute.xlu0 %3196
  %3200 = vset.pattern.permute.xlu0 0
  %3201 = vperm.xlu0 %3200, %v2587
  %v3202 = vpop.permute.xlu0 %3201
  %3205 = vset.pattern.permute.xlu0 0
  %3206 = vperm.xlu0 %3205, %v2588
  %v3207 = vpop.permute.xlu0 %3206
  %3210 = vset.pattern.permute.xlu0 0
  %3211 = vperm.xlu0 %3210, %v2589
  %v3212 = vpop.permute.xlu0 %3211
  %3215 = vset.pattern.permute.xlu0 0
  %3216 = vperm.xlu0 %3215, %v2590
  %v3217 = vpop.permute.xlu0 %3216
  %3220 = vset.pattern.permute.xlu0 0
  %3221 = vperm.xlu0 %3220, %v2591
  %v3222 = vpop.permute.xlu0 %3221
  %3225 = vset.pattern.permute.xlu0 0
  %3226 = vperm.xlu0 %3225, %v2592
  %v3227 = vpop.permute.xlu0 %3226
  %3230 = vset.pattern.permute.xlu0 0
  %3231 = vperm.xlu0 %3230, %v2593
  %v3232 = vpop.permute.xlu0 %3231
  %3235 = vset.pattern.permute.xlu0 0
  %3236 = vperm.xlu0 %3235, %v2594
  %v3237 = vpop.permute.xlu0 %3236
  %3240 = vset.pattern.permute.xlu0 0
  %3241 = vperm.xlu0 %3240, %v2595
  %v3242 = vpop.permute.xlu0 %3241
  %3245 = vset.pattern.permute.xlu0 0
  %3246 = vperm.xlu0 %3245, %v2596
  %v3247 = vpop.permute.xlu0 %3246
  %3250 = vset.pattern.permute.xlu0 0
  %3251 = vperm.xlu0 %3250, %v2597
  %v3252 = vpop.permute.xlu0 %3251
  %3255 = vset.pattern.permute.xlu0 0
  %3256 = vperm.xlu0 %3255, %v2598
  %v3257 = vpop.permute.xlu0 %3256
  %3260 = vset.pattern.permute.xlu0 0
  %3261 = vperm.xlu0 %3260, %v2599
  %v3262 = vpop.permute.xlu0 %3261
  %3265 = vset.pattern.permute.xlu0 0
  %3266 = vperm.xlu0 %3265, %v2600
  %v3267 = vpop.permute.xlu0 %3266
  %3270 = vset.pattern.permute.xlu0 0
  %3271 = vperm.xlu0 %3270, %v2601
  %v3272 = vpop.permute.xlu0 %3271
  %3275 = vset.pattern.permute.xlu0 0
  %3276 = vperm.xlu0 %3275, %v2602
  %v3277 = vpop.permute.xlu0 %3276
  %3280 = vset.pattern.permute.xlu0 0
  %3281 = vperm.xlu0 %3280, %v2603
  %v3282 = vpop.permute.xlu0 %3281
  %3285 = vset.pattern.permute.xlu0 0
  %3286 = vperm.xlu0 %3285, %v2604
  %v3287 = vpop.permute.xlu0 %3286
  %3290 = vset.pattern.permute.xlu0 0
  %3291 = vperm.xlu0 %3290, %v2605
  %v3292 = vpop.permute.xlu0 %3291
  %3295 = vset.pattern.permute.xlu0 0
  %3296 = vperm.xlu0 %3295, %v2606
  %v3297 = vpop.permute.xlu0 %3296
  %3300 = vset.pattern.permute.xlu0 0
  %3301 = vperm.xlu0 %3300, %v2607
  %v3302 = vpop.permute.xlu0 %3301
  %3305 = vset.pattern.permute.xlu0 0
  %3306 = vperm.xlu0 %3305, %v2608
  %v3307 = vpop.permute.xlu0 %3306
  %3310 = vset.pattern.permute.xlu0 0
  %3311 = vperm.xlu0 %3310, %v2609
  %v3312 = vpop.permute.xlu0 %3311
  %3315 = vset.pattern.permute.xlu0 0
  %3316 = vperm.xlu0 %3315, %v2610
  %v3317 = vpop.permute.xlu0 %3316
  %3320 = vset.pattern.permute.xlu0 0
  %3321 = vperm.xlu0 %3320, %v2611
  %v3322 = vpop.permute.xlu0 %3321
  %3325 = vset.pattern.permute.xlu0 0
  %3326 = vperm.xlu0 %3325, %v2612
  %v3327 = vpop.permute.xlu0 %3326
  %3330 = vset.pattern.permute.xlu0 0
  %3331 = vperm.xlu0 %3330, %v2613
  %v3332 = vpop.permute.xlu0 %3331
  %3335 = vset.pattern.permute.xlu0 0
  %3336 = vperm.xlu0 %3335, %v2614
  %v3337 = vpop.permute.xlu0 %3336
  %3340 = vset.pattern.permute.xlu0 0
  %3341 = vperm.xlu0 %3340, %v2615
  %v3342 = vpop.permute.xlu0 %3341
  %3345 = vset.pattern.permute.xlu0 0
  %3346 = vperm.xlu0 %3345, %v2616
  %v3347 = vpop.permute.xlu0 %3346
  %3350 = vset.pattern.permute.xlu0 0
  %3351 = vperm.xlu0 %3350, %v2617
  %v3352 = vpop.permute.xlu0 %3351
  %3355 = vset.pattern.permute.xlu0 0
  %3356 = vperm.xlu0 %3355, %v2618
  %v3357 = vpop.permute.xlu0 %3356
  %3360 = vset.pattern.permute.xlu0 0
  %3361 = vperm.xlu0 %3360, %v2619
  %v3362 = vpop.permute.xlu0 %3361
  %3365 = vset.pattern.permute.xlu0 0
  %3366 = vperm.xlu0 %3365, %v2620
  %v3367 = vpop.permute.xlu0 %3366
  %3370 = vset.pattern.permute.xlu0 0
  %3371 = vperm.xlu0 %3370, %v2621
  %v3372 = vpop.permute.xlu0 %3371
  %3375 = vset.pattern.permute.xlu0 0
  %3376 = vperm.xlu0 %3375, %v2622
  %v3377 = vpop.permute.xlu0 %3376
  %3380 = vset.pattern.permute.xlu0 0
  %3381 = vperm.xlu0 %3380, %v2623
  %v3382 = vpop.permute.xlu0 %3381
  %3385 = vset.pattern.permute.xlu0 0
  %3386 = vperm.xlu0 %3385, %v2624
  %v3387 = vpop.permute.xlu0 %3386
  %3390 = vset.pattern.permute.xlu0 0
  %3391 = vperm.xlu0 %3390, %v2625
  %v3392 = vpop.permute.xlu0 %3391
  %3395 = vset.pattern.permute.xlu0 0
  %3396 = vperm.xlu0 %3395, %v2626
  %v3397 = vpop.permute.xlu0 %3396
  %3400 = vset.pattern.permute.xlu0 0
  %3401 = vperm.xlu0 %3400, %v2627
  %v3402 = vpop.permute.xlu0 %3401
  %3405 = vset.pattern.permute.xlu0 0
  %3406 = vperm.xlu0 %3405, %v2628
  %v3407 = vpop.permute.xlu0 %3406
  %3410 = vset.pattern.permute.xlu0 0
  %3411 = vperm.xlu0 %3410, %v2629
  %v3412 = vpop.permute.xlu0 %3411
  %3415 = vset.pattern.permute.xlu0 0
  %3416 = vperm.xlu0 %3415, %v2630
  %v3417 = vpop.permute.xlu0 %3416
  %3420 = vset.pattern.permute.xlu0 0
  %3421 = vperm.xlu0 %3420, %v2631
  %v3422 = vpop.permute.xlu0 %3421
  %3425 = vset.pattern.permute.xlu0 0
  %3426 = vperm.xlu0 %3425, %v2632
  %v3427 = vpop.permute.xlu0 %3426
  %3430 = vset.pattern.permute.xlu0 0
  %3431 = vperm.xlu0 %3430, %v2633
  %v3432 = vpop.permute.xlu0 %3431
  %3435 = vset.pattern.permute.xlu0 0
  %3436 = vperm.xlu0 %3435, %v2634
  %v3437 = vpop.permute.xlu0 %3436
  %3440 = vset.pattern.permute.xlu0 0
  %3441 = vperm.xlu0 %3440, %v2635
  %v3442 = vpop.permute.xlu0 %3441
  %3445 = vset.pattern.permute.xlu0 0
  %3446 = vperm.xlu0 %3445, %v2636
  %v3447 = vpop.permute.xlu0 %3446
  %3450 = vset.pattern.permute.xlu0 0
  %3451 = vperm.xlu0 %3450, %v2637
  %v3452 = vpop.permute.xlu0 %3451
  %3455 = vset.pattern.permute.xlu0 0
  %3456 = vperm.xlu0 %3455, %v2638
  %v3457 = vpop.permute.xlu0 %3456
  %3460 = vset.pattern.permute.xlu0 0
  %3461 = vperm.xlu0 %3460, %v2639
  %v3462 = vpop.permute.xlu0 %3461
  %3465 = vset.pattern.permute.xlu0 0
  %3466 = vperm.xlu0 %3465, %v2640
  %v3467 = vpop.permute.xlu0 %3466
  %3470 = vset.pattern.permute.xlu0 0
  %3471 = vperm.xlu0 %3470, %v2641
  %v3472 = vpop.permute.xlu0 %3471
  %3475 = vset.pattern.permute.xlu0 0
  %3476 = vperm.xlu0 %3475, %v2642
  %v3477 = vpop.permute.xlu0 %3476
  %3480 = vset.pattern.permute.xlu0 0
  %3481 = vperm.xlu0 %3480, %v2643
  %v3482 = vpop.permute.xlu0 %3481
  %3485 = vset.pattern.permute.xlu0 0
  %3486 = vperm.xlu0 %3485, %v2644
  %v3487 = vpop.permute.xlu0 %3486
  %3490 = vset.pattern.permute.xlu0 0
  %3491 = vperm.xlu0 %3490, %v2645
  %v3492 = vpop.permute.xlu0 %3491
  %3495 = vset.pattern.permute.xlu0 0
  %3496 = vperm.xlu0 %3495, %v2646
  %v3497 = vpop.permute.xlu0 %3496
  %3500 = vset.pattern.permute.xlu0 0
  %3501 = vperm.xlu0 %3500, %v2647
  %v3502 = vpop.permute.xlu0 %3501
  %3505 = vset.pattern.permute.xlu0 0
  %3506 = vperm.xlu0 %3505, %v2648
  %v3507 = vpop.permute.xlu0 %3506
  %3510 = vset.pattern.permute.xlu0 0
  %3511 = vperm.xlu0 %3510, %v2649
  %v3512 = vpop.permute.xlu0 %3511
  %3515 = vset.pattern.permute.xlu0 0
  %3516 = vperm.xlu0 %3515, %v2650
  %v3517 = vpop.permute.xlu0 %3516
  %3520 = vset.pattern.permute.xlu0 0
  %3521 = vperm.xlu0 %3520, %v2651
  %v3522 = vpop.permute.xlu0 %3521
  %3525 = vset.pattern.permute.xlu0 0
  %3526 = vperm.xlu0 %3525, %v2652
  %v3527 = vpop.permute.xlu0 %3526
  %3530 = vset.pattern.permute.xlu0 0
  %3531 = vperm.xlu0 %3530, %v2653
  %v3532 = vpop.permute.xlu0 %3531
  %3535 = vset.pattern.permute.xlu0 0
  %3536 = vperm.xlu0 %3535, %v2654
  %v3537 = vpop.permute.xlu0 %3536
  %3540 = vset.pattern.permute.xlu0 0
  %3541 = vperm.xlu0 %3540, %v2655
  %v3542 = vpop.permute.xlu0 %3541
  %3545 = vset.pattern.permute.xlu0 0
  %3546 = vperm.xlu0 %3545, %v2656
  %v3547 = vpop.permute.xlu0 %3546
  %3550 = vset.pattern.permute.xlu0 0
  %3551 = vperm.xlu0 %3550, %v2657
  %v3552 = vpop.permute.xlu0 %3551
  %3555 = vset.pattern.permute.xlu0 0
  %3556 = vperm.xlu0 %3555, %v2658
  %v3557 = vpop.permute.xlu0 %3556
  %3560 = vset.pattern.permute.xlu0 0
  %3561 = vperm.xlu0 %3560, %v2659
  %v3562 = vpop.permute.xlu0 %3561
  %3565 = vset.pattern.permute.xlu0 0
  %3566 = vperm.xlu0 %3565, %v2660
  %v3567 = vpop.permute.xlu0 %3566
  %3570 = vset.pattern.permute.xlu0 0
  %3571 = vperm.xlu0 %3570, %v2661
  %v3572 = vpop.permute.xlu0 %3571
  %3575 = vset.pattern.permute.xlu0 0
  %3576 = vperm.xlu0 %3575, %v2662
  %v3577 = vpop.permute.xlu0 %3576
  %3580 = vset.pattern.permute.xlu0 0
  %3581 = vperm.xlu0 %3580, %v2663
  %v3582 = vpop.permute.xlu0 %3581
  %3585 = vset.pattern.permute.xlu0 0
  %3586 = vperm.xlu0 %3585, %v2664
  %v3587 = vpop.permute.xlu0 %3586
  %v3589 = vmul.f32 %v2665, %v2932
  %v3590 = vmul.f32 %v2666, %v2932
  %v3591 = vmul.f32 %v2667, %v2937
  %v3592 = vmul.f32 %v2668, %v2937
  %v3593 = vmul.f32 %v2669, %v2942
  %v3594 = vmul.f32 %v2670, %v2942
  %v3595 = vmul.f32 %v2671, %v2947
  %v3596 = vmul.f32 %v2672, %v2947
  %v3597 = vmul.f32 %v2673, %v2952
  %v3598 = vmul.f32 %v2674, %v2952
  %v3599 = vmul.f32 %v2675, %v2957
  %v3600 = vmul.f32 %v2676, %v2957
  %v3601 = vmul.f32 %v2677, %v2962
  %v3602 = vmul.f32 %v2678, %v2962
  %v3603 = vmul.f32 %v2679, %v2967
  %v3604 = vmul.f32 %v2680, %v2967
  %v3605 = vmul.f32 %v2681, %v2972
  %v3606 = vmul.f32 %v2682, %v2972
  %v3607 = vmul.f32 %v2683, %v2977
  %v3608 = vmul.f32 %v2684, %v2977
  %v3609 = vmul.f32 %v2685, %v2982
  %v3610 = vmul.f32 %v2686, %v2982
  %v3611 = vmul.f32 %v2687, %v2987
  %v3612 = vmul.f32 %v2688, %v2987
  %v3613 = vmul.f32 %v2689, %v2992
  %v3614 = vmul.f32 %v2690, %v2992
  %v3615 = vmul.f32 %v2691, %v2997
  %v3616 = vmul.f32 %v2692, %v2997
  %v3617 = vmul.f32 %v2693, %v3002
  %v3618 = vmul.f32 %v2694, %v3002
  %v3619 = vmul.f32 %v2695, %v3007
  %v3620 = vmul.f32 %v2696, %v3007
  %v3621 = vmul.f32 %v2697, %v3012
  %v3622 = vmul.f32 %v2698, %v3012
  %v3623 = vmul.f32 %v2699, %v3017
  %v3624 = vmul.f32 %v2700, %v3017
  %v3625 = vmul.f32 %v2701, %v3022
  %v3626 = vmul.f32 %v2702, %v3022
  %v3627 = vmul.f32 %v2703, %v3027
  %v3628 = vmul.f32 %v2704, %v3027
  %v3629 = vmul.f32 %v2705, %v3032
  %v3630 = vmul.f32 %v2706, %v3032
  %v3631 = vmul.f32 %v2707, %v3037
  %v3632 = vmul.f32 %v2708, %v3037
  %v3633 = vmul.f32 %v2709, %v3042
  %v3634 = vmul.f32 %v2710, %v3042
  %v3635 = vmul.f32 %v2711, %v3047
  %v3636 = vmul.f32 %v2712, %v3047
  %v3637 = vmul.f32 %v2713, %v3052
  %v3638 = vmul.f32 %v2714, %v3052
  %v3639 = vmul.f32 %v2715, %v3057
  %v3640 = vmul.f32 %v2716, %v3057
  %v3641 = vmul.f32 %v2717, %v3062
  %v3642 = vmul.f32 %v2718, %v3062
  %v3643 = vmul.f32 %v2719, %v3067
  %v3644 = vmul.f32 %v2720, %v3067
  %v3645 = vmul.f32 %v2721, %v3072
  %v3646 = vmul.f32 %v2722, %v3072
  %v3647 = vmul.f32 %v2723, %v3077
  %v3648 = vmul.f32 %v2724, %v3077
  %v3649 = vmul.f32 %v2725, %v3082
  %v3650 = vmul.f32 %v2726, %v3082
  %v3651 = vmul.f32 %v2727, %v3087
  %v3652 = vmul.f32 %v2728, %v3087
  %v3653 = vmul.f32 %v2729, %v3092
  %v3654 = vmul.f32 %v2730, %v3092
  %v3655 = vmul.f32 %v2731, %v3097
  %v3656 = vmul.f32 %v2732, %v3097
  %v3657 = vmul.f32 %v2733, %v3102
  %v3658 = vmul.f32 %v2734, %v3102
  %v3659 = vmul.f32 %v2735, %v3107
  %v3660 = vmul.f32 %v2736, %v3107
  %v3661 = vmul.f32 %v2737, %v3112
  %v3662 = vmul.f32 %v2738, %v3112
  %v3663 = vmul.f32 %v2739, %v3117
  %v3664 = vmul.f32 %v2740, %v3117
  %v3665 = vmul.f32 %v2741, %v3122
  %v3666 = vmul.f32 %v2742, %v3122
  %v3667 = vmul.f32 %v2743, %v3127
  %v3668 = vmul.f32 %v2744, %v3127
  %v3669 = vmul.f32 %v2745, %v3132
  %v3670 = vmul.f32 %v2746, %v3132
  %v3671 = vmul.f32 %v2747, %v3137
  %v3672 = vmul.f32 %v2748, %v3137
  %v3673 = vmul.f32 %v2749, %v3142
  %v3674 = vmul.f32 %v2750, %v3142
  %v3675 = vmul.f32 %v2751, %v3147
  %v3676 = vmul.f32 %v2752, %v3147
  %v3677 = vmul.f32 %v2753, %v3152
  %v3678 = vmul.f32 %v2754, %v3152
  %v3679 = vmul.f32 %v2755, %v3157
  %v3680 = vmul.f32 %v2756, %v3157
  %v3681 = vmul.f32 %v2757, %v3162
  %v3682 = vmul.f32 %v2758, %v3162
  %v3683 = vmul.f32 %v2759, %v3167
  %v3684 = vmul.f32 %v2760, %v3167
  %v3685 = vmul.f32 %v2761, %v3172
  %v3686 = vmul.f32 %v2762, %v3172
  %v3687 = vmul.f32 %v2763, %v3177
  %v3688 = vmul.f32 %v2764, %v3177
  %v3689 = vmul.f32 %v2765, %v3182
  %v3690 = vmul.f32 %v2766, %v3182
  %v3691 = vmul.f32 %v2767, %v3187
  %v3692 = vmul.f32 %v2768, %v3187
  %v3693 = vmul.f32 %v2769, %v3192
  %v3694 = vmul.f32 %v2770, %v3192
  %v3695 = vmul.f32 %v2771, %v3197
  %v3696 = vmul.f32 %v2772, %v3197
  %v3697 = vmul.f32 %v2773, %v3202
  %v3698 = vmul.f32 %v2774, %v3202
  %v3699 = vmul.f32 %v2775, %v3207
  %v3700 = vmul.f32 %v2776, %v3207
  %v3701 = vmul.f32 %v2777, %v3212
  %v3702 = vmul.f32 %v2778, %v3212
  %v3703 = vmul.f32 %v2779, %v3217
  %v3704 = vmul.f32 %v2780, %v3217
  %v3705 = vmul.f32 %v2781, %v3222
  %v3706 = vmul.f32 %v2782, %v3222
  %v3707 = vmul.f32 %v2783, %v3227
  %v3708 = vmul.f32 %v2784, %v3227
  %v3709 = vmul.f32 %v2785, %v3232
  %v3710 = vmul.f32 %v2786, %v3232
  %v3711 = vmul.f32 %v2787, %v3237
  %v3712 = vmul.f32 %v2788, %v3237
  %v3713 = vmul.f32 %v2789, %v3242
  %v3714 = vmul.f32 %v2790, %v3242
  %v3715 = vmul.f32 %v2791, %v3247
  %v3716 = vmul.f32 %v2792, %v3247
  %v3717 = vmul.f32 %v2793, %v3252
  %v3718 = vmul.f32 %v2794, %v3252
  %v3719 = vmul.f32 %v2795, %v3257
  %v3720 = vmul.f32 %v2796, %v3257
  %v3721 = vmul.f32 %v2797, %v3262
  %v3722 = vmul.f32 %v2798, %v3262
  %v3723 = vmul.f32 %v2799, %v3267
  %v3724 = vmul.f32 %v2800, %v3267
  %v3725 = vmul.f32 %v2801, %v3272
  %v3726 = vmul.f32 %v2802, %v3272
  %v3727 = vmul.f32 %v2803, %v3277
  %v3728 = vmul.f32 %v2804, %v3277
  %v3729 = vmul.f32 %v2805, %v3282
  %v3730 = vmul.f32 %v2806, %v3282
  %v3731 = vmul.f32 %v2807, %v3287
  %v3732 = vmul.f32 %v2808, %v3287
  %v3733 = vmul.f32 %v2809, %v3292
  %v3734 = vmul.f32 %v2810, %v3292
  %v3735 = vmul.f32 %v2811, %v3297
  %v3736 = vmul.f32 %v2812, %v3297
  %v3737 = vmul.f32 %v2813, %v3302
  %v3738 = vmul.f32 %v2814, %v3302
  %v3739 = vmul.f32 %v2815, %v3307
  %v3740 = vmul.f32 %v2816, %v3307
  %v3741 = vmul.f32 %v2817, %v3312
  %v3742 = vmul.f32 %v2818, %v3312
  %v3743 = vmul.f32 %v2819, %v3317
  %v3744 = vmul.f32 %v2820, %v3317
  %v3745 = vmul.f32 %v2821, %v3322
  %v3746 = vmul.f32 %v2822, %v3322
  %v3747 = vmul.f32 %v2823, %v3327
  %v3748 = vmul.f32 %v2824, %v3327
  %v3749 = vmul.f32 %v2825, %v3332
  %v3750 = vmul.f32 %v2826, %v3332
  %v3751 = vmul.f32 %v2827, %v3337
  %v3752 = vmul.f32 %v2828, %v3337
  %v3753 = vmul.f32 %v2829, %v3342
  %v3754 = vmul.f32 %v2830, %v3342
  %v3755 = vmul.f32 %v2831, %v3347
  %v3756 = vmul.f32 %v2832, %v3347
  %v3757 = vmul.f32 %v2833, %v3352
  %v3758 = vmul.f32 %v2834, %v3352
  %v3759 = vmul.f32 %v2835, %v3357
  %v3760 = vmul.f32 %v2836, %v3357
  %v3761 = vmul.f32 %v2837, %v3362
  %v3762 = vmul.f32 %v2838, %v3362
  %v3763 = vmul.f32 %v2839, %v3367
  %v3764 = vmul.f32 %v2840, %v3367
  %v3765 = vmul.f32 %v2841, %v3372
  %v3766 = vmul.f32 %v2842, %v3372
  %v3767 = vmul.f32 %v2843, %v3377
  %v3768 = vmul.f32 %v2844, %v3377
  %v3769 = vmul.f32 %v2845, %v3382
  %v3770 = vmul.f32 %v2846, %v3382
  %v3771 = vmul.f32 %v2847, %v3387
  %v3772 = vmul.f32 %v2848, %v3387
  %v3773 = vmul.f32 %v2849, %v3392
  %v3774 = vmul.f32 %v2850, %v3392
  %v3775 = vmul.f32 %v2851, %v3397
  %v3776 = vmul.f32 %v2852, %v3397
  %v3777 = vmul.f32 %v2853, %v3402
  %v3778 = vmul.f32 %v2854, %v3402
  %v3779 = vmul.f32 %v2855, %v3407
  %v3780 = vmul.f32 %v2856, %v3407
  %v3781 = vmul.f32 %v2857, %v3412
  %v3782 = vmul.f32 %v2858, %v3412
  %v3783 = vmul.f32 %v2859, %v3417
  %v3784 = vmul.f32 %v2860, %v3417
  %v3785 = vmul.f32 %v2861, %v3422
  %v3786 = vmul.f32 %v2862, %v3422
  %v3787 = vmul.f32 %v2863, %v3427
  %v3788 = vmul.f32 %v2864, %v3427
  %v3789 = vmul.f32 %v2865, %v3432
  %v3790 = vmul.f32 %v2866, %v3432
  %v3791 = vmul.f32 %v2867, %v3437
  %v3792 = vmul.f32 %v2868, %v3437
  %v3793 = vmul.f32 %v2869, %v3442
  %v3794 = vmul.f32 %v2870, %v3442
  %v3795 = vmul.f32 %v2871, %v3447
  %v3796 = vmul.f32 %v2872, %v3447
  %v3797 = vmul.f32 %v2873, %v3452
  %v3798 = vmul.f32 %v2874, %v3452
  %v3799 = vmul.f32 %v2875, %v3457
  %v3800 = vmul.f32 %v2876, %v3457
  %v3801 = vmul.f32 %v2877, %v3462
  %v3802 = vmul.f32 %v2878, %v3462
  %v3803 = vmul.f32 %v2879, %v3467
  %v3804 = vmul.f32 %v2880, %v3467
  %v3805 = vmul.f32 %v2881, %v3472
  %v3806 = vmul.f32 %v2882, %v3472
  %v3807 = vmul.f32 %v2883, %v3477
  %v3808 = vmul.f32 %v2884, %v3477
  %v3809 = vmul.f32 %v2885, %v3482
  %v3810 = vmul.f32 %v2886, %v3482
  %v3811 = vmul.f32 %v2887, %v3487
  %v3812 = vmul.f32 %v2888, %v3487
  %v3813 = vmul.f32 %v2889, %v3492
  %v3814 = vmul.f32 %v2890, %v3492
  %v3815 = vmul.f32 %v2891, %v3497
  %v3816 = vmul.f32 %v2892, %v3497
  %v3817 = vmul.f32 %v2893, %v3502
  %v3818 = vmul.f32 %v2894, %v3502
  %v3819 = vmul.f32 %v2895, %v3507
  %v3820 = vmul.f32 %v2896, %v3507
  %v3821 = vmul.f32 %v2897, %v3512
  %v3822 = vmul.f32 %v2898, %v3512
  %v3823 = vmul.f32 %v2899, %v3517
  %v3824 = vmul.f32 %v2900, %v3517
  %v3825 = vmul.f32 %v2901, %v3522
  %v3826 = vmul.f32 %v2902, %v3522
  %v3827 = vmul.f32 %v2903, %v3527
  %v3828 = vmul.f32 %v2904, %v3527
  %v3829 = vmul.f32 %v2905, %v3532
  %v3830 = vmul.f32 %v2906, %v3532
  %v3831 = vmul.f32 %v2907, %v3537
  %v3832 = vmul.f32 %v2908, %v3537
  %v3833 = vmul.f32 %v2909, %v3542
  %v3834 = vmul.f32 %v2910, %v3542
  %v3835 = vmul.f32 %v2911, %v3547
  %v3836 = vmul.f32 %v2912, %v3547
  %v3837 = vmul.f32 %v2913, %v3552
  %v3838 = vmul.f32 %v2914, %v3552
  %v3839 = vmul.f32 %v2915, %v3557
  %v3840 = vmul.f32 %v2916, %v3557
  %v3841 = vmul.f32 %v2917, %v3562
  %v3842 = vmul.f32 %v2918, %v3562
  %v3843 = vmul.f32 %v2919, %v3567
  %v3844 = vmul.f32 %v2920, %v3567
  %v3845 = vmul.f32 %v2921, %v3572
  %v3846 = vmul.f32 %v2922, %v3572
  %v3847 = vmul.f32 %v2923, %v3577
  %v3848 = vmul.f32 %v2924, %v3577
  %v3849 = vmul.f32 %v2925, %v3582
  %v3850 = vmul.f32 %v2926, %v3582
  %v3851 = vmul.f32 %v2927, %v3587
  %v3852 = vmul.f32 %v2928, %v3587
  %v3853 = vld [vmem:[%s3] sm:$0xff]
  %v3854 = vld [vmem:[%s3 + $0x8] sm:$0xff]
  %v3855 = vld [vmem:[%s3 + $0x10] sm:$0xff]
  %v3856 = vld [vmem:[%s3 + $0x18] sm:$0xff]
  %v3857 = vld [vmem:[%s3 + $0x20] sm:$0xff]
  %v3858 = vld [vmem:[%s3 + $0x28] sm:$0xff]
  %v3859 = vld [vmem:[%s3 + $0x30] sm:$0xff]
  %v3860 = vld [vmem:[%s3 + $0x38] sm:$0xff]
  %v3861 = vld [vmem:[%s3 + $0x40] sm:$0xff]
  %v3862 = vld [vmem:[%s3 + $0x48] sm:$0xff]
  %v3863 = vld [vmem:[%s3 + $0x50] sm:$0xff]
  %v3864 = vld [vmem:[%s3 + $0x58] sm:$0xff]
  %v3865 = vld [vmem:[%s3 + $0x60] sm:$0xff]
  %v3866 = vld [vmem:[%s3 + $0x68] sm:$0xff]
  %v3867 = vld [vmem:[%s3 + $0x70] sm:$0xff]
  %v3868 = vld [vmem:[%s3 + $0x78] sm:$0xff]
  %v3869 = vld [vmem:[%s3 + $0x80] sm:$0xff]
  %v3870 = vld [vmem:[%s3 + $0x88] sm:$0xff]
  %v3871 = vld [vmem:[%s3 + $0x90] sm:$0xff]
  %v3872 = vld [vmem:[%s3 + $0x98] sm:$0xff]
  %v3873 = vld [vmem:[%s3 + $0xa0] sm:$0xff]
  %v3874 = vld [vmem:[%s3 + $0xa8] sm:$0xff]
  %v3875 = vld [vmem:[%s3 + $0xb0] sm:$0xff]
  %v3876 = vld [vmem:[%s3 + $0xb8] sm:$0xff]
  %v3877 = vld [vmem:[%s3 + $0xc0] sm:$0xff]
  %v3878 = vld [vmem:[%s3 + $0xc8] sm:$0xff]
  %v3879 = vld [vmem:[%s3 + $0xd0] sm:$0xff]
  %v3880 = vld [vmem:[%s3 + $0xd8] sm:$0xff]
  %v3881 = vld [vmem:[%s3 + $0xe0] sm:$0xff]
  %v3882 = vld [vmem:[%s3 + $0xe8] sm:$0xff]
  %v3883 = vld [vmem:[%s3 + $0xf0] sm:$0xff]
  %v3884 = vld [vmem:[%s3 + $0xf8] sm:$0xff]
  %v3885 = vld [vmem:[%s3 + $0x100] sm:$0xff]
  %v3886 = vld [vmem:[%s3 + $0x108] sm:$0xff]
  %v3887 = vld [vmem:[%s3 + $0x110] sm:$0xff]
  %v3888 = vld [vmem:[%s3 + $0x118] sm:$0xff]
  %v3889 = vld [vmem:[%s3 + $0x120] sm:$0xff]
  %v3890 = vld [vmem:[%s3 + $0x128] sm:$0xff]
  %v3891 = vld [vmem:[%s3 + $0x130] sm:$0xff]
  %v3892 = vld [vmem:[%s3 + $0x138] sm:$0xff]
  %v3893 = vld [vmem:[%s3 + $0x140] sm:$0xff]
  %v3894 = vld [vmem:[%s3 + $0x148] sm:$0xff]
  %v3895 = vld [vmem:[%s3 + $0x150] sm:$0xff]
  %v3896 = vld [vmem:[%s3 + $0x158] sm:$0xff]
  %v3897 = vld [vmem:[%s3 + $0x160] sm:$0xff]
  %v3898 = vld [vmem:[%s3 + $0x168] sm:$0xff]
  %v3899 = vld [vmem:[%s3 + $0x170] sm:$0xff]
  %v3900 = vld [vmem:[%s3 + $0x178] sm:$0xff]
  %v3901 = vld [vmem:[%s3 + $0x180] sm:$0xff]
  %v3902 = vld [vmem:[%s3 + $0x188] sm:$0xff]
  %v3903 = vld [vmem:[%s3 + $0x190] sm:$0xff]
  %v3904 = vld [vmem:[%s3 + $0x198] sm:$0xff]
  %v3905 = vld [vmem:[%s3 + $0x1a0] sm:$0xff]
  %v3906 = vld [vmem:[%s3 + $0x1a8] sm:$0xff]
  %v3907 = vld [vmem:[%s3 + $0x1b0] sm:$0xff]
  %v3908 = vld [vmem:[%s3 + $0x1b8] sm:$0xff]
  %v3909 = vld [vmem:[%s3 + $0x1c0] sm:$0xff]
  %v3910 = vld [vmem:[%s3 + $0x1c8] sm:$0xff]
  %v3911 = vld [vmem:[%s3 + $0x1d0] sm:$0xff]
  %v3912 = vld [vmem:[%s3 + $0x1d8] sm:$0xff]
  %v3913 = vld [vmem:[%s3 + $0x1e0] sm:$0xff]
  %v3914 = vld [vmem:[%s3 + $0x1e8] sm:$0xff]
  %v3915 = vld [vmem:[%s3 + $0x1f0] sm:$0xff]
  %v3916 = vld [vmem:[%s3 + $0x1f8] sm:$0xff]
  %v3917 = vld [vmem:[%s3 + $0x200] sm:$0xff]
  %v3918 = vld [vmem:[%s3 + $0x208] sm:$0xff]
  %v3919 = vld [vmem:[%s3 + $0x210] sm:$0xff]
  %v3920 = vld [vmem:[%s3 + $0x218] sm:$0xff]
  %v3921 = vld [vmem:[%s3 + $0x220] sm:$0xff]
  %v3922 = vld [vmem:[%s3 + $0x228] sm:$0xff]
  %v3923 = vld [vmem:[%s3 + $0x230] sm:$0xff]
  %v3924 = vld [vmem:[%s3 + $0x238] sm:$0xff]
  %v3925 = vld [vmem:[%s3 + $0x240] sm:$0xff]
  %v3926 = vld [vmem:[%s3 + $0x248] sm:$0xff]
  %v3927 = vld [vmem:[%s3 + $0x250] sm:$0xff]
  %v3928 = vld [vmem:[%s3 + $0x258] sm:$0xff]
  %v3929 = vld [vmem:[%s3 + $0x260] sm:$0xff]
  %v3930 = vld [vmem:[%s3 + $0x268] sm:$0xff]
  %v3931 = vld [vmem:[%s3 + $0x270] sm:$0xff]
  %v3932 = vld [vmem:[%s3 + $0x278] sm:$0xff]
  %v3933 = vld [vmem:[%s3 + $0x280] sm:$0xff]
  %v3934 = vld [vmem:[%s3 + $0x288] sm:$0xff]
  %v3935 = vld [vmem:[%s3 + $0x290] sm:$0xff]
  %v3936 = vld [vmem:[%s3 + $0x298] sm:$0xff]
  %v3937 = vld [vmem:[%s3 + $0x2a0] sm:$0xff]
  %v3938 = vld [vmem:[%s3 + $0x2a8] sm:$0xff]
  %v3939 = vld [vmem:[%s3 + $0x2b0] sm:$0xff]
  %v3940 = vld [vmem:[%s3 + $0x2b8] sm:$0xff]
  %v3941 = vld [vmem:[%s3 + $0x2c0] sm:$0xff]
  %v3942 = vld [vmem:[%s3 + $0x2c8] sm:$0xff]
  %v3943 = vld [vmem:[%s3 + $0x2d0] sm:$0xff]
  %v3944 = vld [vmem:[%s3 + $0x2d8] sm:$0xff]
  %v3945 = vld [vmem:[%s3 + $0x2e0] sm:$0xff]
  %v3946 = vld [vmem:[%s3 + $0x2e8] sm:$0xff]
  %v3947 = vld [vmem:[%s3 + $0x2f0] sm:$0xff]
  %v3948 = vld [vmem:[%s3 + $0x2f8] sm:$0xff]
  %v3949 = vld [vmem:[%s3 + $0x300] sm:$0xff]
  %v3950 = vld [vmem:[%s3 + $0x308] sm:$0xff]
  %v3951 = vld [vmem:[%s3 + $0x310] sm:$0xff]
  %v3952 = vld [vmem:[%s3 + $0x318] sm:$0xff]
  %v3953 = vld [vmem:[%s3 + $0x320] sm:$0xff]
  %v3954 = vld [vmem:[%s3 + $0x328] sm:$0xff]
  %v3955 = vld [vmem:[%s3 + $0x330] sm:$0xff]
  %v3956 = vld [vmem:[%s3 + $0x338] sm:$0xff]
  %v3957 = vld [vmem:[%s3 + $0x340] sm:$0xff]
  %v3958 = vld [vmem:[%s3 + $0x348] sm:$0xff]
  %v3959 = vld [vmem:[%s3 + $0x350] sm:$0xff]
  %v3960 = vld [vmem:[%s3 + $0x358] sm:$0xff]
  %v3961 = vld [vmem:[%s3 + $0x360] sm:$0xff]
  %v3962 = vld [vmem:[%s3 + $0x368] sm:$0xff]
  %v3963 = vld [vmem:[%s3 + $0x370] sm:$0xff]
  %v3964 = vld [vmem:[%s3 + $0x378] sm:$0xff]
  %v3965 = vld [vmem:[%s3 + $0x380] sm:$0xff]
  %v3966 = vld [vmem:[%s3 + $0x388] sm:$0xff]
  %v3967 = vld [vmem:[%s3 + $0x390] sm:$0xff]
  %v3968 = vld [vmem:[%s3 + $0x398] sm:$0xff]
  %v3969 = vld [vmem:[%s3 + $0x3a0] sm:$0xff]
  %v3970 = vld [vmem:[%s3 + $0x3a8] sm:$0xff]
  %v3971 = vld [vmem:[%s3 + $0x3b0] sm:$0xff]
  %v3972 = vld [vmem:[%s3 + $0x3b8] sm:$0xff]
  %v3973 = vld [vmem:[%s3 + $0x3c0] sm:$0xff]
  %v3974 = vld [vmem:[%s3 + $0x3c8] sm:$0xff]
  %v3975 = vld [vmem:[%s3 + $0x3d0] sm:$0xff]
  %v3976 = vld [vmem:[%s3 + $0x3d8] sm:$0xff]
  %v3977 = vld [vmem:[%s3 + $0x3e0] sm:$0xff]
  %v3978 = vld [vmem:[%s3 + $0x3e8] sm:$0xff]
  %v3979 = vld [vmem:[%s3 + $0x3f0] sm:$0xff]
  %v3980 = vld [vmem:[%s3 + $0x3f8] sm:$0xff]
  %v3981 = vld [vmem:[%s3 + $0x400] sm:$0xff]
  %v3982 = vld [vmem:[%s3 + $0x408] sm:$0xff]
  %v3983 = vld [vmem:[%s3 + $0x410] sm:$0xff]
  %v3984 = vld [vmem:[%s3 + $0x418] sm:$0xff]
  %3986 = vset.pattern.permute.xlu0 0
  %3987 = vperm.xlu0 %3986, %v3853
  %v3988 = vpop.permute.xlu0 %3987
  %3991 = vset.pattern.permute.xlu0 0
  %3992 = vperm.xlu0 %3991, %v3854
  %v3993 = vpop.permute.xlu0 %3992
  %3996 = vset.pattern.permute.xlu0 0
  %3997 = vperm.xlu0 %3996, %v3855
  %v3998 = vpop.permute.xlu0 %3997
  %4001 = vset.pattern.permute.xlu0 0
  %4002 = vperm.xlu0 %4001, %v3856
  %v4003 = vpop.permute.xlu0 %4002
  %4006 = vset.pattern.permute.xlu0 0
  %4007 = vperm.xlu0 %4006, %v3857
  %v4008 = vpop.permute.xlu0 %4007
  %4011 = vset.pattern.permute.xlu0 0
  %4012 = vperm.xlu0 %4011, %v3858
  %v4013 = vpop.permute.xlu0 %4012
  %4016 = vset.pattern.permute.xlu0 0
  %4017 = vperm.xlu0 %4016, %v3859
  %v4018 = vpop.permute.xlu0 %4017
  %4021 = vset.pattern.permute.xlu0 0
  %4022 = vperm.xlu0 %4021, %v3860
  %v4023 = vpop.permute.xlu0 %4022
  %4026 = vset.pattern.permute.xlu0 0
  %4027 = vperm.xlu0 %4026, %v3861
  %v4028 = vpop.permute.xlu0 %4027
  %4031 = vset.pattern.permute.xlu0 0
  %4032 = vperm.xlu0 %4031, %v3862
  %v4033 = vpop.permute.xlu0 %4032
  %4036 = vset.pattern.permute.xlu0 0
  %4037 = vperm.xlu0 %4036, %v3863
  %v4038 = vpop.permute.xlu0 %4037
  %4041 = vset.pattern.permute.xlu0 0
  %4042 = vperm.xlu0 %4041, %v3864
  %v4043 = vpop.permute.xlu0 %4042
  %4046 = vset.pattern.permute.xlu0 0
  %4047 = vperm.xlu0 %4046, %v3865
  %v4048 = vpop.permute.xlu0 %4047
  %4051 = vset.pattern.permute.xlu0 0
  %4052 = vperm.xlu0 %4051, %v3866
  %v4053 = vpop.permute.xlu0 %4052
  %4056 = vset.pattern.permute.xlu0 0
  %4057 = vperm.xlu0 %4056, %v3867
  %v4058 = vpop.permute.xlu0 %4057
  %4061 = vset.pattern.permute.xlu0 0
  %4062 = vperm.xlu0 %4061, %v3868
  %v4063 = vpop.permute.xlu0 %4062
  %4066 = vset.pattern.permute.xlu0 0
  %4067 = vperm.xlu0 %4066, %v3869
  %v4068 = vpop.permute.xlu0 %4067
  %4071 = vset.pattern.permute.xlu0 0
  %4072 = vperm.xlu0 %4071, %v3870
  %v4073 = vpop.permute.xlu0 %4072
  %4076 = vset.pattern.permute.xlu0 0
  %4077 = vperm.xlu0 %4076, %v3871
  %v4078 = vpop.permute.xlu0 %4077
  %4081 = vset.pattern.permute.xlu0 0
  %4082 = vperm.xlu0 %4081, %v3872
  %v4083 = vpop.permute.xlu0 %4082
  %4086 = vset.pattern.permute.xlu0 0
  %4087 = vperm.xlu0 %4086, %v3873
  %v4088 = vpop.permute.xlu0 %4087
  %4091 = vset.pattern.permute.xlu0 0
  %4092 = vperm.xlu0 %4091, %v3874
  %v4093 = vpop.permute.xlu0 %4092
  %4096 = vset.pattern.permute.xlu0 0
  %4097 = vperm.xlu0 %4096, %v3875
  %v4098 = vpop.permute.xlu0 %4097
  %4101 = vset.pattern.permute.xlu0 0
  %4102 = vperm.xlu0 %4101, %v3876
  %v4103 = vpop.permute.xlu0 %4102
  %4106 = vset.pattern.permute.xlu0 0
  %4107 = vperm.xlu0 %4106, %v3877
  %v4108 = vpop.permute.xlu0 %4107
  %4111 = vset.pattern.permute.xlu0 0
  %4112 = vperm.xlu0 %4111, %v3878
  %v4113 = vpop.permute.xlu0 %4112
  %4116 = vset.pattern.permute.xlu0 0
  %4117 = vperm.xlu0 %4116, %v3879
  %v4118 = vpop.permute.xlu0 %4117
  %4121 = vset.pattern.permute.xlu0 0
  %4122 = vperm.xlu0 %4121, %v3880
  %v4123 = vpop.permute.xlu0 %4122
  %4126 = vset.pattern.permute.xlu0 0
  %4127 = vperm.xlu0 %4126, %v3881
  %v4128 = vpop.permute.xlu0 %4127
  %4131 = vset.pattern.permute.xlu0 0
  %4132 = vperm.xlu0 %4131, %v3882
  %v4133 = vpop.permute.xlu0 %4132
  %4136 = vset.pattern.permute.xlu0 0
  %4137 = vperm.xlu0 %4136, %v3883
  %v4138 = vpop.permute.xlu0 %4137
  %4141 = vset.pattern.permute.xlu0 0
  %4142 = vperm.xlu0 %4141, %v3884
  %v4143 = vpop.permute.xlu0 %4142
  %4146 = vset.pattern.permute.xlu0 0
  %4147 = vperm.xlu0 %4146, %v3885
  %v4148 = vpop.permute.xlu0 %4147
  %4151 = vset.pattern.permute.xlu0 0
  %4152 = vperm.xlu0 %4151, %v3886
  %v4153 = vpop.permute.xlu0 %4152
  %4156 = vset.pattern.permute.xlu0 0
  %4157 = vperm.xlu0 %4156, %v3887
  %v4158 = vpop.permute.xlu0 %4157
  %4161 = vset.pattern.permute.xlu0 0
  %4162 = vperm.xlu0 %4161, %v3888
  %v4163 = vpop.permute.xlu0 %4162
  %4166 = vset.pattern.permute.xlu0 0
  %4167 = vperm.xlu0 %4166, %v3889
  %v4168 = vpop.permute.xlu0 %4167
  %4171 = vset.pattern.permute.xlu0 0
  %4172 = vperm.xlu0 %4171, %v3890
  %v4173 = vpop.permute.xlu0 %4172
  %4176 = vset.pattern.permute.xlu0 0
  %4177 = vperm.xlu0 %4176, %v3891
  %v4178 = vpop.permute.xlu0 %4177
  %4181 = vset.pattern.permute.xlu0 0
  %4182 = vperm.xlu0 %4181, %v3892
  %v4183 = vpop.permute.xlu0 %4182
  %4186 = vset.pattern.permute.xlu0 0
  %4187 = vperm.xlu0 %4186, %v3893
  %v4188 = vpop.permute.xlu0 %4187
  %4191 = vset.pattern.permute.xlu0 0
  %4192 = vperm.xlu0 %4191, %v3894
  %v4193 = vpop.permute.xlu0 %4192
  %4196 = vset.pattern.permute.xlu0 0
  %4197 = vperm.xlu0 %4196, %v3895
  %v4198 = vpop.permute.xlu0 %4197
  %4201 = vset.pattern.permute.xlu0 0
  %4202 = vperm.xlu0 %4201, %v3896
  %v4203 = vpop.permute.xlu0 %4202
  %4206 = vset.pattern.permute.xlu0 0
  %4207 = vperm.xlu0 %4206, %v3897
  %v4208 = vpop.permute.xlu0 %4207
  %4211 = vset.pattern.permute.xlu0 0
  %4212 = vperm.xlu0 %4211, %v3898
  %v4213 = vpop.permute.xlu0 %4212
  %4216 = vset.pattern.permute.xlu0 0
  %4217 = vperm.xlu0 %4216, %v3899
  %v4218 = vpop.permute.xlu0 %4217
  %4221 = vset.pattern.permute.xlu0 0
  %4222 = vperm.xlu0 %4221, %v3900
  %v4223 = vpop.permute.xlu0 %4222
  %4226 = vset.pattern.permute.xlu0 0
  %4227 = vperm.xlu0 %4226, %v3901
  %v4228 = vpop.permute.xlu0 %4227
  %4231 = vset.pattern.permute.xlu0 0
  %4232 = vperm.xlu0 %4231, %v3902
  %v4233 = vpop.permute.xlu0 %4232
  %4236 = vset.pattern.permute.xlu0 0
  %4237 = vperm.xlu0 %4236, %v3903
  %v4238 = vpop.permute.xlu0 %4237
  %4241 = vset.pattern.permute.xlu0 0
  %4242 = vperm.xlu0 %4241, %v3904
  %v4243 = vpop.permute.xlu0 %4242
  %4246 = vset.pattern.permute.xlu0 0
  %4247 = vperm.xlu0 %4246, %v3905
  %v4248 = vpop.permute.xlu0 %4247
  %4251 = vset.pattern.permute.xlu0 0
  %4252 = vperm.xlu0 %4251, %v3906
  %v4253 = vpop.permute.xlu0 %4252
  %4256 = vset.pattern.permute.xlu0 0
  %4257 = vperm.xlu0 %4256, %v3907
  %v4258 = vpop.permute.xlu0 %4257
  %4261 = vset.pattern.permute.xlu0 0
  %4262 = vperm.xlu0 %4261, %v3908
  %v4263 = vpop.permute.xlu0 %4262
  %4266 = vset.pattern.permute.xlu0 0
  %4267 = vperm.xlu0 %4266, %v3909
  %v4268 = vpop.permute.xlu0 %4267
  %4271 = vset.pattern.permute.xlu0 0
  %4272 = vperm.xlu0 %4271, %v3910
  %v4273 = vpop.permute.xlu0 %4272
  %4276 = vset.pattern.permute.xlu0 0
  %4277 = vperm.xlu0 %4276, %v3911
  %v4278 = vpop.permute.xlu0 %4277
  %4281 = vset.pattern.permute.xlu0 0
  %4282 = vperm.xlu0 %4281, %v3912
  %v4283 = vpop.permute.xlu0 %4282
  %4286 = vset.pattern.permute.xlu0 0
  %4287 = vperm.xlu0 %4286, %v3913
  %v4288 = vpop.permute.xlu0 %4287
  %4291 = vset.pattern.permute.xlu0 0
  %4292 = vperm.xlu0 %4291, %v3914
  %v4293 = vpop.permute.xlu0 %4292
  %4296 = vset.pattern.permute.xlu0 0
  %4297 = vperm.xlu0 %4296, %v3915
  %v4298 = vpop.permute.xlu0 %4297
  %4301 = vset.pattern.permute.xlu0 0
  %4302 = vperm.xlu0 %4301, %v3916
  %v4303 = vpop.permute.xlu0 %4302
  %4306 = vset.pattern.permute.xlu0 0
  %4307 = vperm.xlu0 %4306, %v3917
  %v4308 = vpop.permute.xlu0 %4307
  %4311 = vset.pattern.permute.xlu0 0
  %4312 = vperm.xlu0 %4311, %v3918
  %v4313 = vpop.permute.xlu0 %4312
  %4316 = vset.pattern.permute.xlu0 0
  %4317 = vperm.xlu0 %4316, %v3919
  %v4318 = vpop.permute.xlu0 %4317
  %4321 = vset.pattern.permute.xlu0 0
  %4322 = vperm.xlu0 %4321, %v3920
  %v4323 = vpop.permute.xlu0 %4322
  %4326 = vset.pattern.permute.xlu0 0
  %4327 = vperm.xlu0 %4326, %v3921
  %v4328 = vpop.permute.xlu0 %4327
  %4331 = vset.pattern.permute.xlu0 0
  %4332 = vperm.xlu0 %4331, %v3922
  %v4333 = vpop.permute.xlu0 %4332
  %4336 = vset.pattern.permute.xlu0 0
  %4337 = vperm.xlu0 %4336, %v3923
  %v4338 = vpop.permute.xlu0 %4337
  %4341 = vset.pattern.permute.xlu0 0
  %4342 = vperm.xlu0 %4341, %v3924
  %v4343 = vpop.permute.xlu0 %4342
  %4346 = vset.pattern.permute.xlu0 0
  %4347 = vperm.xlu0 %4346, %v3925
  %v4348 = vpop.permute.xlu0 %4347
  %4351 = vset.pattern.permute.xlu0 0
  %4352 = vperm.xlu0 %4351, %v3926
  %v4353 = vpop.permute.xlu0 %4352
  %4356 = vset.pattern.permute.xlu0 0
  %4357 = vperm.xlu0 %4356, %v3927
  %v4358 = vpop.permute.xlu0 %4357
  %4361 = vset.pattern.permute.xlu0 0
  %4362 = vperm.xlu0 %4361, %v3928
  %v4363 = vpop.permute.xlu0 %4362
  %4366 = vset.pattern.permute.xlu0 0
  %4367 = vperm.xlu0 %4366, %v3929
  %v4368 = vpop.permute.xlu0 %4367
  %4371 = vset.pattern.permute.xlu0 0
  %4372 = vperm.xlu0 %4371, %v3930
  %v4373 = vpop.permute.xlu0 %4372
  %4376 = vset.pattern.permute.xlu0 0
  %4377 = vperm.xlu0 %4376, %v3931
  %v4378 = vpop.permute.xlu0 %4377
  %4381 = vset.pattern.permute.xlu0 0
  %4382 = vperm.xlu0 %4381, %v3932
  %v4383 = vpop.permute.xlu0 %4382
  %4386 = vset.pattern.permute.xlu0 0
  %4387 = vperm.xlu0 %4386, %v3933
  %v4388 = vpop.permute.xlu0 %4387
  %4391 = vset.pattern.permute.xlu0 0
  %4392 = vperm.xlu0 %4391, %v3934
  %v4393 = vpop.permute.xlu0 %4392
  %4396 = vset.pattern.permute.xlu0 0
  %4397 = vperm.xlu0 %4396, %v3935
  %v4398 = vpop.permute.xlu0 %4397
  %4401 = vset.pattern.permute.xlu0 0
  %4402 = vperm.xlu0 %4401, %v3936
  %v4403 = vpop.permute.xlu0 %4402
  %4406 = vset.pattern.permute.xlu0 0
  %4407 = vperm.xlu0 %4406, %v3937
  %v4408 = vpop.permute.xlu0 %4407
  %4411 = vset.pattern.permute.xlu0 0
  %4412 = vperm.xlu0 %4411, %v3938
  %v4413 = vpop.permute.xlu0 %4412
  %4416 = vset.pattern.permute.xlu0 0
  %4417 = vperm.xlu0 %4416, %v3939
  %v4418 = vpop.permute.xlu0 %4417
  %4421 = vset.pattern.permute.xlu0 0
  %4422 = vperm.xlu0 %4421, %v3940
  %v4423 = vpop.permute.xlu0 %4422
  %4426 = vset.pattern.permute.xlu0 0
  %4427 = vperm.xlu0 %4426, %v3941
  %v4428 = vpop.permute.xlu0 %4427
  %4431 = vset.pattern.permute.xlu0 0
  %4432 = vperm.xlu0 %4431, %v3942
  %v4433 = vpop.permute.xlu0 %4432
  %4436 = vset.pattern.permute.xlu0 0
  %4437 = vperm.xlu0 %4436, %v3943
  %v4438 = vpop.permute.xlu0 %4437
  %4441 = vset.pattern.permute.xlu0 0
  %4442 = vperm.xlu0 %4441, %v3944
  %v4443 = vpop.permute.xlu0 %4442
  %4446 = vset.pattern.permute.xlu0 0
  %4447 = vperm.xlu0 %4446, %v3945
  %v4448 = vpop.permute.xlu0 %4447
  %4451 = vset.pattern.permute.xlu0 0
  %4452 = vperm.xlu0 %4451, %v3946
  %v4453 = vpop.permute.xlu0 %4452
  %4456 = vset.pattern.permute.xlu0 0
  %4457 = vperm.xlu0 %4456, %v3947
  %v4458 = vpop.permute.xlu0 %4457
  %4461 = vset.pattern.permute.xlu0 0
  %4462 = vperm.xlu0 %4461, %v3948
  %v4463 = vpop.permute.xlu0 %4462
  %4466 = vset.pattern.permute.xlu0 0
  %4467 = vperm.xlu0 %4466, %v3949
  %v4468 = vpop.permute.xlu0 %4467
  %4471 = vset.pattern.permute.xlu0 0
  %4472 = vperm.xlu0 %4471, %v3950
  %v4473 = vpop.permute.xlu0 %4472
  %4476 = vset.pattern.permute.xlu0 0
  %4477 = vperm.xlu0 %4476, %v3951
  %v4478 = vpop.permute.xlu0 %4477
  %4481 = vset.pattern.permute.xlu0 0
  %4482 = vperm.xlu0 %4481, %v3952
  %v4483 = vpop.permute.xlu0 %4482
  %4486 = vset.pattern.permute.xlu0 0
  %4487 = vperm.xlu0 %4486, %v3953
  %v4488 = vpop.permute.xlu0 %4487
  %4491 = vset.pattern.permute.xlu0 0
  %4492 = vperm.xlu0 %4491, %v3954
  %v4493 = vpop.permute.xlu0 %4492
  %4496 = vset.pattern.permute.xlu0 0
  %4497 = vperm.xlu0 %4496, %v3955
  %v4498 = vpop.permute.xlu0 %4497
  %4501 = vset.pattern.permute.xlu0 0
  %4502 = vperm.xlu0 %4501, %v3956
  %v4503 = vpop.permute.xlu0 %4502
  %4506 = vset.pattern.permute.xlu0 0
  %4507 = vperm.xlu0 %4506, %v3957
  %v4508 = vpop.permute.xlu0 %4507
  %4511 = vset.pattern.permute.xlu0 0
  %4512 = vperm.xlu0 %4511, %v3958
  %v4513 = vpop.permute.xlu0 %4512
  %4516 = vset.pattern.permute.xlu0 0
  %4517 = vperm.xlu0 %4516, %v3959
  %v4518 = vpop.permute.xlu0 %4517
  %4521 = vset.pattern.permute.xlu0 0
  %4522 = vperm.xlu0 %4521, %v3960
  %v4523 = vpop.permute.xlu0 %4522
  %4526 = vset.pattern.permute.xlu0 0
  %4527 = vperm.xlu0 %4526, %v3961
  %v4528 = vpop.permute.xlu0 %4527
  %4531 = vset.pattern.permute.xlu0 0
  %4532 = vperm.xlu0 %4531, %v3962
  %v4533 = vpop.permute.xlu0 %4532
  %4536 = vset.pattern.permute.xlu0 0
  %4537 = vperm.xlu0 %4536, %v3963
  %v4538 = vpop.permute.xlu0 %4537
  %4541 = vset.pattern.permute.xlu0 0
  %4542 = vperm.xlu0 %4541, %v3964
  %v4543 = vpop.permute.xlu0 %4542
  %4546 = vset.pattern.permute.xlu0 0
  %4547 = vperm.xlu0 %4546, %v3965
  %v4548 = vpop.permute.xlu0 %4547
  %4551 = vset.pattern.permute.xlu0 0
  %4552 = vperm.xlu0 %4551, %v3966
  %v4553 = vpop.permute.xlu0 %4552
  %4556 = vset.pattern.permute.xlu0 0
  %4557 = vperm.xlu0 %4556, %v3967
  %v4558 = vpop.permute.xlu0 %4557
  %4561 = vset.pattern.permute.xlu0 0
  %4562 = vperm.xlu0 %4561, %v3968
  %v4563 = vpop.permute.xlu0 %4562
  %4566 = vset.pattern.permute.xlu0 0
  %4567 = vperm.xlu0 %4566, %v3969
  %v4568 = vpop.permute.xlu0 %4567
  %4571 = vset.pattern.permute.xlu0 0
  %4572 = vperm.xlu0 %4571, %v3970
  %v4573 = vpop.permute.xlu0 %4572
  %4576 = vset.pattern.permute.xlu0 0
  %4577 = vperm.xlu0 %4576, %v3971
  %v4578 = vpop.permute.xlu0 %4577
  %4581 = vset.pattern.permute.xlu0 0
  %4582 = vperm.xlu0 %4581, %v3972
  %v4583 = vpop.permute.xlu0 %4582
  %4586 = vset.pattern.permute.xlu0 0
  %4587 = vperm.xlu0 %4586, %v3973
  %v4588 = vpop.permute.xlu0 %4587
  %4591 = vset.pattern.permute.xlu0 0
  %4592 = vperm.xlu0 %4591, %v3974
  %v4593 = vpop.permute.xlu0 %4592
  %4596 = vset.pattern.permute.xlu0 0
  %4597 = vperm.xlu0 %4596, %v3975
  %v4598 = vpop.permute.xlu0 %4597
  %4601 = vset.pattern.permute.xlu0 0
  %4602 = vperm.xlu0 %4601, %v3976
  %v4603 = vpop.permute.xlu0 %4602
  %4606 = vset.pattern.permute.xlu0 0
  %4607 = vperm.xlu0 %4606, %v3977
  %v4608 = vpop.permute.xlu0 %4607
  %4611 = vset.pattern.permute.xlu0 0
  %4612 = vperm.xlu0 %4611, %v3978
  %v4613 = vpop.permute.xlu0 %4612
  %4616 = vset.pattern.permute.xlu0 0
  %4617 = vperm.xlu0 %4616, %v3979
  %v4618 = vpop.permute.xlu0 %4617
  %4621 = vset.pattern.permute.xlu0 0
  %4622 = vperm.xlu0 %4621, %v3980
  %v4623 = vpop.permute.xlu0 %4622
  %4626 = vset.pattern.permute.xlu0 0
  %4627 = vperm.xlu0 %4626, %v3981
  %v4628 = vpop.permute.xlu0 %4627
  %4631 = vset.pattern.permute.xlu0 0
  %4632 = vperm.xlu0 %4631, %v3982
  %v4633 = vpop.permute.xlu0 %4632
  %4636 = vset.pattern.permute.xlu0 0
  %4637 = vperm.xlu0 %4636, %v3983
  %v4638 = vpop.permute.xlu0 %4637
  %4641 = vset.pattern.permute.xlu0 0
  %4642 = vperm.xlu0 %4641, %v3984
  %v4643 = vpop.permute.xlu0 %4642
  %v4645 = vadd.f32 %v3589, %v3988
  %v4646 = vadd.f32 %v3590, %v3988
  %v4647 = vadd.f32 %v3591, %v3993
  %v4648 = vadd.f32 %v3592, %v3993
  %v4649 = vadd.f32 %v3593, %v3998
  %v4650 = vadd.f32 %v3594, %v3998
  %v4651 = vadd.f32 %v3595, %v4003
  %v4652 = vadd.f32 %v3596, %v4003
  %v4653 = vadd.f32 %v3597, %v4008
  %v4654 = vadd.f32 %v3598, %v4008
  %v4655 = vadd.f32 %v3599, %v4013
  %v4656 = vadd.f32 %v3600, %v4013
  %v4657 = vadd.f32 %v3601, %v4018
  %v4658 = vadd.f32 %v3602, %v4018
  %v4659 = vadd.f32 %v3603, %v4023
  %v4660 = vadd.f32 %v3604, %v4023
  %v4661 = vadd.f32 %v3605, %v4028
  %v4662 = vadd.f32 %v3606, %v4028
  %v4663 = vadd.f32 %v3607, %v4033
  %v4664 = vadd.f32 %v3608, %v4033
  %v4665 = vadd.f32 %v3609, %v4038
  %v4666 = vadd.f32 %v3610, %v4038
  %v4667 = vadd.f32 %v3611, %v4043
  %v4668 = vadd.f32 %v3612, %v4043
  %v4669 = vadd.f32 %v3613, %v4048
  %v4670 = vadd.f32 %v3614, %v4048
  %v4671 = vadd.f32 %v3615, %v4053
  %v4672 = vadd.f32 %v3616, %v4053
  %v4673 = vadd.f32 %v3617, %v4058
  %v4674 = vadd.f32 %v3618, %v4058
  %v4675 = vadd.f32 %v3619, %v4063
  %v4676 = vadd.f32 %v3620, %v4063
  %v4677 = vadd.f32 %v3621, %v4068
  %v4678 = vadd.f32 %v3622, %v4068
  %v4679 = vadd.f32 %v3623, %v4073
  %v4680 = vadd.f32 %v3624, %v4073
  %v4681 = vadd.f32 %v3625, %v4078
  %v4682 = vadd.f32 %v3626, %v4078
  %v4683 = vadd.f32 %v3627, %v4083
  %v4684 = vadd.f32 %v3628, %v4083
  %v4685 = vadd.f32 %v3629, %v4088
  %v4686 = vadd.f32 %v3630, %v4088
  %v4687 = vadd.f32 %v3631, %v4093
  %v4688 = vadd.f32 %v3632, %v4093
  %v4689 = vadd.f32 %v3633, %v4098
  %v4690 = vadd.f32 %v3634, %v4098
  %v4691 = vadd.f32 %v3635, %v4103
  %v4692 = vadd.f32 %v3636, %v4103
  %v4693 = vadd.f32 %v3637, %v4108
  %v4694 = vadd.f32 %v3638, %v4108
  %v4695 = vadd.f32 %v3639, %v4113
  %v4696 = vadd.f32 %v3640, %v4113
  %v4697 = vadd.f32 %v3641, %v4118
  %v4698 = vadd.f32 %v3642, %v4118
  %v4699 = vadd.f32 %v3643, %v4123
  %v4700 = vadd.f32 %v3644, %v4123
  %v4701 = vadd.f32 %v3645, %v4128
  %v4702 = vadd.f32 %v3646, %v4128
  %v4703 = vadd.f32 %v3647, %v4133
  %v4704 = vadd.f32 %v3648, %v4133
  %v4705 = vadd.f32 %v3649, %v4138
  %v4706 = vadd.f32 %v3650, %v4138
  %v4707 = vadd.f32 %v3651, %v4143
  %v4708 = vadd.f32 %v3652, %v4143
  %v4709 = vadd.f32 %v3653, %v4148
  %v4710 = vadd.f32 %v3654, %v4148
  %v4711 = vadd.f32 %v3655, %v4153
  %v4712 = vadd.f32 %v3656, %v4153
  %v4713 = vadd.f32 %v3657, %v4158
  %v4714 = vadd.f32 %v3658, %v4158
  %v4715 = vadd.f32 %v3659, %v4163
  %v4716 = vadd.f32 %v3660, %v4163
  %v4717 = vadd.f32 %v3661, %v4168
  %v4718 = vadd.f32 %v3662, %v4168
  %v4719 = vadd.f32 %v3663, %v4173
  %v4720 = vadd.f32 %v3664, %v4173
  %v4721 = vadd.f32 %v3665, %v4178
  %v4722 = vadd.f32 %v3666, %v4178
  %v4723 = vadd.f32 %v3667, %v4183
  %v4724 = vadd.f32 %v3668, %v4183
  %v4725 = vadd.f32 %v3669, %v4188
  %v4726 = vadd.f32 %v3670, %v4188
  %v4727 = vadd.f32 %v3671, %v4193
  %v4728 = vadd.f32 %v3672, %v4193
  %v4729 = vadd.f32 %v3673, %v4198
  %v4730 = vadd.f32 %v3674, %v4198
  %v4731 = vadd.f32 %v3675, %v4203
  %v4732 = vadd.f32 %v3676, %v4203
  %v4733 = vadd.f32 %v3677, %v4208
  %v4734 = vadd.f32 %v3678, %v4208
  %v4735 = vadd.f32 %v3679, %v4213
  %v4736 = vadd.f32 %v3680, %v4213
  %v4737 = vadd.f32 %v3681, %v4218
  %v4738 = vadd.f32 %v3682, %v4218
  %v4739 = vadd.f32 %v3683, %v4223
  %v4740 = vadd.f32 %v3684, %v4223
  %v4741 = vadd.f32 %v3685, %v4228
  %v4742 = vadd.f32 %v3686, %v4228
  %v4743 = vadd.f32 %v3687, %v4233
  %v4744 = vadd.f32 %v3688, %v4233
  %v4745 = vadd.f32 %v3689, %v4238
  %v4746 = vadd.f32 %v3690, %v4238
  %v4747 = vadd.f32 %v3691, %v4243
  %v4748 = vadd.f32 %v3692, %v4243
  %v4749 = vadd.f32 %v3693, %v4248
  %v4750 = vadd.f32 %v3694, %v4248
  %v4751 = vadd.f32 %v3695, %v4253
  %v4752 = vadd.f32 %v3696, %v4253
  %v4753 = vadd.f32 %v3697, %v4258
  %v4754 = vadd.f32 %v3698, %v4258
  %v4755 = vadd.f32 %v3699, %v4263
  %v4756 = vadd.f32 %v3700, %v4263
  %v4757 = vadd.f32 %v3701, %v4268
  %v4758 = vadd.f32 %v3702, %v4268
  %v4759 = vadd.f32 %v3703, %v4273
  %v4760 = vadd.f32 %v3704, %v4273
  %v4761 = vadd.f32 %v3705, %v4278
  %v4762 = vadd.f32 %v3706, %v4278
  %v4763 = vadd.f32 %v3707, %v4283
  %v4764 = vadd.f32 %v3708, %v4283
  %v4765 = vadd.f32 %v3709, %v4288
  %v4766 = vadd.f32 %v3710, %v4288
  %v4767 = vadd.f32 %v3711, %v4293
  %v4768 = vadd.f32 %v3712, %v4293
  %v4769 = vadd.f32 %v3713, %v4298
  %v4770 = vadd.f32 %v3714, %v4298
  %v4771 = vadd.f32 %v3715, %v4303
  %v4772 = vadd.f32 %v3716, %v4303
  %v4773 = vadd.f32 %v3717, %v4308
  %v4774 = vadd.f32 %v3718, %v4308
  %v4775 = vadd.f32 %v3719, %v4313
  %v4776 = vadd.f32 %v3720, %v4313
  %v4777 = vadd.f32 %v3721, %v4318
  %v4778 = vadd.f32 %v3722, %v4318
  %v4779 = vadd.f32 %v3723, %v4323
  %v4780 = vadd.f32 %v3724, %v4323
  %v4781 = vadd.f32 %v3725, %v4328
  %v4782 = vadd.f32 %v3726, %v4328
  %v4783 = vadd.f32 %v3727, %v4333
  %v4784 = vadd.f32 %v3728, %v4333
  %v4785 = vadd.f32 %v3729, %v4338
  %v4786 = vadd.f32 %v3730, %v4338
  %v4787 = vadd.f32 %v3731, %v4343
  %v4788 = vadd.f32 %v3732, %v4343
  %v4789 = vadd.f32 %v3733, %v4348
  %v4790 = vadd.f32 %v3734, %v4348
  %v4791 = vadd.f32 %v3735, %v4353
  %v4792 = vadd.f32 %v3736, %v4353
  %v4793 = vadd.f32 %v3737, %v4358
  %v4794 = vadd.f32 %v3738, %v4358
  %v4795 = vadd.f32 %v3739, %v4363
  %v4796 = vadd.f32 %v3740, %v4363
  %v4797 = vadd.f32 %v3741, %v4368
  %v4798 = vadd.f32 %v3742, %v4368
  %v4799 = vadd.f32 %v3743, %v4373
  %v4800 = vadd.f32 %v3744, %v4373
  %v4801 = vadd.f32 %v3745, %v4378
  %v4802 = vadd.f32 %v3746, %v4378
  %v4803 = vadd.f32 %v3747, %v4383
  %v4804 = vadd.f32 %v3748, %v4383
  %v4805 = vadd.f32 %v3749, %v4388
  %v4806 = vadd.f32 %v3750, %v4388
  %v4807 = vadd.f32 %v3751, %v4393
  %v4808 = vadd.f32 %v3752, %v4393
  %v4809 = vadd.f32 %v3753, %v4398
  %v4810 = vadd.f32 %v3754, %v4398
  %v4811 = vadd.f32 %v3755, %v4403
  %v4812 = vadd.f32 %v3756, %v4403
  %v4813 = vadd.f32 %v3757, %v4408
  %v4814 = vadd.f32 %v3758, %v4408
  %v4815 = vadd.f32 %v3759, %v4413
  %v4816 = vadd.f32 %v3760, %v4413
  %v4817 = vadd.f32 %v3761, %v4418
  %v4818 = vadd.f32 %v3762, %v4418
  %v4819 = vadd.f32 %v3763, %v4423
  %v4820 = vadd.f32 %v3764, %v4423
  %v4821 = vadd.f32 %v3765, %v4428
  %v4822 = vadd.f32 %v3766, %v4428
  %v4823 = vadd.f32 %v3767, %v4433
  %v4824 = vadd.f32 %v3768, %v4433
  %v4825 = vadd.f32 %v3769, %v4438
  %v4826 = vadd.f32 %v3770, %v4438
  %v4827 = vadd.f32 %v3771, %v4443
  %v4828 = vadd.f32 %v3772, %v4443
  %v4829 = vadd.f32 %v3773, %v4448
  %v4830 = vadd.f32 %v3774, %v4448
  %v4831 = vadd.f32 %v3775, %v4453
  %v4832 = vadd.f32 %v3776, %v4453
  %v4833 = vadd.f32 %v3777, %v4458
  %v4834 = vadd.f32 %v3778, %v4458
  %v4835 = vadd.f32 %v3779, %v4463
  %v4836 = vadd.f32 %v3780, %v4463
  %v4837 = vadd.f32 %v3781, %v4468
  %v4838 = vadd.f32 %v3782, %v4468
  %v4839 = vadd.f32 %v3783, %v4473
  %v4840 = vadd.f32 %v3784, %v4473
  %v4841 = vadd.f32 %v3785, %v4478
  %v4842 = vadd.f32 %v3786, %v4478
  %v4843 = vadd.f32 %v3787, %v4483
  %v4844 = vadd.f32 %v3788, %v4483
  %v4845 = vadd.f32 %v3789, %v4488
  %v4846 = vadd.f32 %v3790, %v4488
  %v4847 = vadd.f32 %v3791, %v4493
  %v4848 = vadd.f32 %v3792, %v4493
  %v4849 = vadd.f32 %v3793, %v4498
  %v4850 = vadd.f32 %v3794, %v4498
  %v4851 = vadd.f32 %v3795, %v4503
  %v4852 = vadd.f32 %v3796, %v4503
  %v4853 = vadd.f32 %v3797, %v4508
  %v4854 = vadd.f32 %v3798, %v4508
  %v4855 = vadd.f32 %v3799, %v4513
  %v4856 = vadd.f32 %v3800, %v4513
  %v4857 = vadd.f32 %v3801, %v4518
  %v4858 = vadd.f32 %v3802, %v4518
  %v4859 = vadd.f32 %v3803, %v4523
  %v4860 = vadd.f32 %v3804, %v4523
  %v4861 = vadd.f32 %v3805, %v4528
  %v4862 = vadd.f32 %v3806, %v4528
  %v4863 = vadd.f32 %v3807, %v4533
  %v4864 = vadd.f32 %v3808, %v4533
  %v4865 = vadd.f32 %v3809, %v4538
  %v4866 = vadd.f32 %v3810, %v4538
  %v4867 = vadd.f32 %v3811, %v4543
  %v4868 = vadd.f32 %v3812, %v4543
  %v4869 = vadd.f32 %v3813, %v4548
  %v4870 = vadd.f32 %v3814, %v4548
  %v4871 = vadd.f32 %v3815, %v4553
  %v4872 = vadd.f32 %v3816, %v4553
  %v4873 = vadd.f32 %v3817, %v4558
  %v4874 = vadd.f32 %v3818, %v4558
  %v4875 = vadd.f32 %v3819, %v4563
  %v4876 = vadd.f32 %v3820, %v4563
  %v4877 = vadd.f32 %v3821, %v4568
  %v4878 = vadd.f32 %v3822, %v4568
  %v4879 = vadd.f32 %v3823, %v4573
  %v4880 = vadd.f32 %v3824, %v4573
  %v4881 = vadd.f32 %v3825, %v4578
  %v4882 = vadd.f32 %v3826, %v4578
  %v4883 = vadd.f32 %v3827, %v4583
  %v4884 = vadd.f32 %v3828, %v4583
  %v4885 = vadd.f32 %v3829, %v4588
  %v4886 = vadd.f32 %v3830, %v4588
  %v4887 = vadd.f32 %v3831, %v4593
  %v4888 = vadd.f32 %v3832, %v4593
  %v4889 = vadd.f32 %v3833, %v4598
  %v4890 = vadd.f32 %v3834, %v4598
  %v4891 = vadd.f32 %v3835, %v4603
  %v4892 = vadd.f32 %v3836, %v4603
  %v4893 = vadd.f32 %v3837, %v4608
  %v4894 = vadd.f32 %v3838, %v4608
  %v4895 = vadd.f32 %v3839, %v4613
  %v4896 = vadd.f32 %v3840, %v4613
  %v4897 = vadd.f32 %v3841, %v4618
  %v4898 = vadd.f32 %v3842, %v4618
  %v4899 = vadd.f32 %v3843, %v4623
  %v4900 = vadd.f32 %v3844, %v4623
  %v4901 = vadd.f32 %v3845, %v4628
  %v4902 = vadd.f32 %v3846, %v4628
  %v4903 = vadd.f32 %v3847, %v4633
  %v4904 = vadd.f32 %v3848, %v4633
  %v4905 = vadd.f32 %v3849, %v4638
  %v4906 = vadd.f32 %v3850, %v4638
  %v4907 = vadd.f32 %v3851, %v4643
  %v4908 = vadd.f32 %v3852, %v4643
  %v4909 = vmax.f32 %v4645, 0.0
  %v4910 = vmax.f32 %v4646, 0.0
  %v4911 = vmax.f32 %v4647, 0.0
  %v4912 = vmax.f32 %v4648, 0.0
  %v4913 = vmax.f32 %v4649, 0.0
  %v4914 = vmax.f32 %v4650, 0.0
  %v4915 = vmax.f32 %v4651, 0.0
  %v4916 = vmax.f32 %v4652, 0.0
  %v4917 = vmax.f32 %v4653, 0.0
  %v4918 = vmax.f32 %v4654, 0.0
  %v4919 = vmax.f32 %v4655, 0.0
  %v4920 = vmax.f32 %v4656, 0.0
  %v4921 = vmax.f32 %v4657, 0.0
  %v4922 = vmax.f32 %v4658, 0.0
  %v4923 = vmax.f32 %v4659, 0.0
  %v4924 = vmax.f32 %v4660, 0.0
  %v4925 = vmax.f32 %v4661, 0.0
  %v4926 = vmax.f32 %v4662, 0.0
  %v4927 = vmax.f32 %v4663, 0.0
  %v4928 = vmax.f32 %v4664, 0.0
  %v4929 = vmax.f32 %v4665, 0.0
  %v4930 = vmax.f32 %v4666, 0.0
  %v4931 = vmax.f32 %v4667, 0.0
  %v4932 = vmax.f32 %v4668, 0.0
  %v4933 = vmax.f32 %v4669, 0.0
  %v4934 = vmax.f32 %v4670, 0.0
  %v4935 = vmax.f32 %v4671, 0.0
  %v4936 = vmax.f32 %v4672, 0.0
  %v4937 = vmax.f32 %v4673, 0.0
  %v4938 = vmax.f32 %v4674, 0.0
  %v4939 = vmax.f32 %v4675, 0.0
  %v4940 = vmax.f32 %v4676, 0.0
  %v4941 = vmax.f32 %v4677, 0.0
  %v4942 = vmax.f32 %v4678, 0.0
  %v4943 = vmax.f32 %v4679, 0.0
  %v4944 = vmax.f32 %v4680, 0.0
  %v4945 = vmax.f32 %v4681, 0.0
  %v4946 = vmax.f32 %v4682, 0.0
  %v4947 = vmax.f32 %v4683, 0.0
  %v4948 = vmax.f32 %v4684, 0.0
  %v4949 = vmax.f32 %v4685, 0.0
  %v4950 = vmax.f32 %v4686, 0.0
  %v4951 = vmax.f32 %v4687, 0.0
  %v4952 = vmax.f32 %v4688, 0.0
  %v4953 = vmax.f32 %v4689, 0.0
  %v4954 = vmax.f32 %v4690, 0.0
  %v4955 = vmax.f32 %v4691, 0.0
  %v4956 = vmax.f32 %v4692, 0.0
  %v4957 = vmax.f32 %v4693, 0.0
  %v4958 = vmax.f32 %v4694, 0.0
  %v4959 = vmax.f32 %v4695, 0.0
  %v4960 = vmax.f32 %v4696, 0.0
  %v4961 = vmax.f32 %v4697, 0.0
  %v4962 = vmax.f32 %v4698, 0.0
  %v4963 = vmax.f32 %v4699, 0.0
  %v4964 = vmax.f32 %v4700, 0.0
  %v4965 = vmax.f32 %v4701, 0.0
  %v4966 = vmax.f32 %v4702, 0.0
  %v4967 = vmax.f32 %v4703, 0.0
  %v4968 = vmax.f32 %v4704, 0.0
  %v4969 = vmax.f32 %v4705, 0.0
  %v4970 = vmax.f32 %v4706, 0.0
  %v4971 = vmax.f32 %v4707, 0.0
  %v4972 = vmax.f32 %v4708, 0.0
  %v4973 = vmax.f32 %v4709, 0.0
  %v4974 = vmax.f32 %v4710, 0.0
  %v4975 = vmax.f32 %v4711, 0.0
  %v4976 = vmax.f32 %v4712, 0.0
  %v4977 = vmax.f32 %v4713, 0.0
  %v4978 = vmax.f32 %v4714, 0.0
  %v4979 = vmax.f32 %v4715, 0.0
  %v4980 = vmax.f32 %v4716, 0.0
  %v4981 = vmax.f32 %v4717, 0.0
  %v4982 = vmax.f32 %v4718, 0.0
  %v4983 = vmax.f32 %v4719, 0.0
  %v4984 = vmax.f32 %v4720, 0.0
  %v4985 = vmax.f32 %v4721, 0.0
  %v4986 = vmax.f32 %v4722, 0.0
  %v4987 = vmax.f32 %v4723, 0.0
  %v4988 = vmax.f32 %v4724, 0.0
  %v4989 = vmax.f32 %v4725, 0.0
  %v4990 = vmax.f32 %v4726, 0.0
  %v4991 = vmax.f32 %v4727, 0.0
  %v4992 = vmax.f32 %v4728, 0.0
  %v4993 = vmax.f32 %v4729, 0.0
  %v4994 = vmax.f32 %v4730, 0.0
  %v4995 = vmax.f32 %v4731, 0.0
  %v4996 = vmax.f32 %v4732, 0.0
  %v4997 = vmax.f32 %v4733, 0.0
  %v4998 = vmax.f32 %v4734, 0.0
  %v4999 = vmax.f32 %v4735, 0.0
  %v5000 = vmax.f32 %v4736, 0.0
  %v5001 = vmax.f32 %v4737, 0.0
  %v5002 = vmax.f32 %v4738, 0.0
  %v5003 = vmax.f32 %v4739, 0.0
  %v5004 = vmax.f32 %v4740, 0.0
  %v5005 = vmax.f32 %v4741, 0.0
  %v5006 = vmax.f32 %v4742, 0.0
  %v5007 = vmax.f32 %v4743, 0.0
  %v5008 = vmax.f32 %v4744, 0.0
  %v5009 = vmax.f32 %v4745, 0.0
  %v5010 = vmax.f32 %v4746, 0.0
  %v5011 = vmax.f32 %v4747, 0.0
  %v5012 = vmax.f32 %v4748, 0.0
  %v5013 = vmax.f32 %v4749, 0.0
  %v5014 = vmax.f32 %v4750, 0.0
  %v5015 = vmax.f32 %v4751, 0.0
  %v5016 = vmax.f32 %v4752, 0.0
  %v5017 = vmax.f32 %v4753, 0.0
  %v5018 = vmax.f32 %v4754, 0.0
  %v5019 = vmax.f32 %v4755, 0.0
  %v5020 = vmax.f32 %v4756, 0.0
  %v5021 = vmax.f32 %v4757, 0.0
  %v5022 = vmax.f32 %v4758, 0.0
  %v5023 = vmax.f32 %v4759, 0.0
  %v5024 = vmax.f32 %v4760, 0.0
  %v5025 = vmax.f32 %v4761, 0.0
  %v5026 = vmax.f32 %v4762, 0.0
  %v5027 = vmax.f32 %v4763, 0.0
  %v5028 = vmax.f32 %v4764, 0.0
  %v5029 = vmax.f32 %v4765, 0.0
  %v5030 = vmax.f32 %v4766, 0.0
  %v5031 = vmax.f32 %v4767, 0.0
  %v5032 = vmax.f32 %v4768, 0.0
  %v5033 = vmax.f32 %v4769, 0.0
  %v5034 = vmax.f32 %v4770, 0.0
  %v5035 = vmax.f32 %v4771, 0.0
  %v5036 = vmax.f32 %v4772, 0.0
  %v5037 = vmax.f32 %v4773, 0.0
  %v5038 = vmax.f32 %v4774, 0.0
  %v5039 = vmax.f32 %v4775, 0.0
  %v5040 = vmax.f32 %v4776, 0.0
  %v5041 = vmax.f32 %v4777, 0.0
  %v5042 = vmax.f32 %v4778, 0.0
  %v5043 = vmax.f32 %v4779, 0.0
  %v5044 = vmax.f32 %v4780, 0.0
  %v5045 = vmax.f32 %v4781, 0.0
  %v5046 = vmax.f32 %v4782, 0.0
  %v5047 = vmax.f32 %v4783, 0.0
  %v5048 = vmax.f32 %v4784, 0.0
  %v5049 = vmax.f32 %v4785, 0.0
  %v5050 = vmax.f32 %v4786, 0.0
  %v5051 = vmax.f32 %v4787, 0.0
  %v5052 = vmax.f32 %v4788, 0.0
  %v5053 = vmax.f32 %v4789, 0.0
  %v5054 = vmax.f32 %v4790, 0.0
  %v5055 = vmax.f32 %v4791, 0.0
  %v5056 = vmax.f32 %v4792, 0.0
  %v5057 = vmax.f32 %v4793, 0.0
  %v5058 = vmax.f32 %v4794, 0.0
  %v5059 = vmax.f32 %v4795, 0.0
  %v5060 = vmax.f32 %v4796, 0.0
  %v5061 = vmax.f32 %v4797, 0.0
  %v5062 = vmax.f32 %v4798, 0.0
  %v5063 = vmax.f32 %v4799, 0.0
  %v5064 = vmax.f32 %v4800, 0.0
  %v5065 = vmax.f32 %v4801, 0.0
  %v5066 = vmax.f32 %v4802, 0.0
  %v5067 = vmax.f32 %v4803, 0.0
  %v5068 = vmax.f32 %v4804, 0.0
  %v5069 = vmax.f32 %v4805, 0.0
  %v5070 = vmax.f32 %v4806, 0.0
  %v5071 = vmax.f32 %v4807, 0.0
  %v5072 = vmax.f32 %v4808, 0.0
  %v5073 = vmax.f32 %v4809, 0.0
  %v5074 = vmax.f32 %v4810, 0.0
  %v5075 = vmax.f32 %v4811, 0.0
  %v5076 = vmax.f32 %v4812, 0.0
  %v5077 = vmax.f32 %v4813, 0.0
  %v5078 = vmax.f32 %v4814, 0.0
  %v5079 = vmax.f32 %v4815, 0.0
  %v5080 = vmax.f32 %v4816, 0.0
  %v5081 = vmax.f32 %v4817, 0.0
  %v5082 = vmax.f32 %v4818, 0.0
  %v5083 = vmax.f32 %v4819, 0.0
  %v5084 = vmax.f32 %v4820, 0.0
  %v5085 = vmax.f32 %v4821, 0.0
  %v5086 = vmax.f32 %v4822, 0.0
  %v5087 = vmax.f32 %v4823, 0.0
  %v5088 = vmax.f32 %v4824, 0.0
  %v5089 = vmax.f32 %v4825, 0.0
  %v5090 = vmax.f32 %v4826, 0.0
  %v5091 = vmax.f32 %v4827, 0.0
  %v5092 = vmax.f32 %v4828, 0.0
  %v5093 = vmax.f32 %v4829, 0.0
  %v5094 = vmax.f32 %v4830, 0.0
  %v5095 = vmax.f32 %v4831, 0.0
  %v5096 = vmax.f32 %v4832, 0.0
  %v5097 = vmax.f32 %v4833, 0.0
  %v5098 = vmax.f32 %v4834, 0.0
  %v5099 = vmax.f32 %v4835, 0.0
  %v5100 = vmax.f32 %v4836, 0.0
  %v5101 = vmax.f32 %v4837, 0.0
  %v5102 = vmax.f32 %v4838, 0.0
  %v5103 = vmax.f32 %v4839, 0.0
  %v5104 = vmax.f32 %v4840, 0.0
  %v5105 = vmax.f32 %v4841, 0.0
  %v5106 = vmax.f32 %v4842, 0.0
  %v5107 = vmax.f32 %v4843, 0.0
  %v5108 = vmax.f32 %v4844, 0.0
  %v5109 = vmax.f32 %v4845, 0.0
  %v5110 = vmax.f32 %v4846, 0.0
  %v5111 = vmax.f32 %v4847, 0.0
  %v5112 = vmax.f32 %v4848, 0.0
  %v5113 = vmax.f32 %v4849, 0.0
  %v5114 = vmax.f32 %v4850, 0.0
  %v5115 = vmax.f32 %v4851, 0.0
  %v5116 = vmax.f32 %v4852, 0.0
  %v5117 = vmax.f32 %v4853, 0.0
  %v5118 = vmax.f32 %v4854, 0.0
  %v5119 = vmax.f32 %v4855, 0.0
  %v5120 = vmax.f32 %v4856, 0.0
  %v5121 = vmax.f32 %v4857, 0.0
  %v5122 = vmax.f32 %v4858, 0.0
  %v5123 = vmax.f32 %v4859, 0.0
  %v5124 = vmax.f32 %v4860, 0.0
  %v5125 = vmax.f32 %v4861, 0.0
  %v5126 = vmax.f32 %v4862, 0.0
  %v5127 = vmax.f32 %v4863, 0.0
  %v5128 = vmax.f32 %v4864, 0.0
  %v5129 = vmax.f32 %v4865, 0.0
  %v5130 = vmax.f32 %v4866, 0.0
  %v5131 = vmax.f32 %v4867, 0.0
  %v5132 = vmax.f32 %v4868, 0.0
  %v5133 = vmax.f32 %v4869, 0.0
  %v5134 = vmax.f32 %v4870, 0.0
  %v5135 = vmax.f32 %v4871, 0.0
  %v5136 = vmax.f32 %v4872, 0.0
  %v5137 = vmax.f32 %v4873, 0.0
  %v5138 = vmax.f32 %v4874, 0.0
  %v5139 = vmax.f32 %v4875, 0.0
  %v5140 = vmax.f32 %v4876, 0.0
  %v5141 = vmax.f32 %v4877, 0.0
  %v5142 = vmax.f32 %v4878, 0.0
  %v5143 = vmax.f32 %v4879, 0.0
  %v5144 = vmax.f32 %v4880, 0.0
  %v5145 = vmax.f32 %v4881, 0.0
  %v5146 = vmax.f32 %v4882, 0.0
  %v5147 = vmax.f32 %v4883, 0.0
  %v5148 = vmax.f32 %v4884, 0.0
  %v5149 = vmax.f32 %v4885, 0.0
  %v5150 = vmax.f32 %v4886, 0.0
  %v5151 = vmax.f32 %v4887, 0.0
  %v5152 = vmax.f32 %v4888, 0.0
  %v5153 = vmax.f32 %v4889, 0.0
  %v5154 = vmax.f32 %v4890, 0.0
  %v5155 = vmax.f32 %v4891, 0.0
  %v5156 = vmax.f32 %v4892, 0.0
  %v5157 = vmax.f32 %v4893, 0.0
  %v5158 = vmax.f32 %v4894, 0.0
  %v5159 = vmax.f32 %v4895, 0.0
  %v5160 = vmax.f32 %v4896, 0.0
  %v5161 = vmax.f32 %v4897, 0.0
  %v5162 = vmax.f32 %v4898, 0.0
  %v5163 = vmax.f32 %v4899, 0.0
  %v5164 = vmax.f32 %v4900, 0.0
  %v5165 = vmax.f32 %v4901, 0.0
  %v5166 = vmax.f32 %v4902, 0.0
  %v5167 = vmax.f32 %v4903, 0.0
  %v5168 = vmax.f32 %v4904, 0.0
  %v5169 = vmax.f32 %v4905, 0.0
  %v5170 = vmax.f32 %v4906, 0.0
  %v5171 = vmax.f32 %v4907, 0.0
  %v5172 = vmax.f32 %v4908, 0.0
  %v5173 = vld [vmem:[%s1] sm:$0xff]
  %v5174 = vld [vmem:[%s1 + $0x8] sm:$0xff]
  %v5175 = vld [vmem:[%s1 + $0x10] sm:$0xff]
  %v5176 = vld [vmem:[%s1 + $0x18] sm:$0xff]
  %v5177 = vld [vmem:[%s1 + $0x20] sm:$0xff]
  %v5178 = vld [vmem:[%s1 + $0x28] sm:$0xff]
  %v5179 = vld [vmem:[%s1 + $0x30] sm:$0xff]
  %v5180 = vld [vmem:[%s1 + $0x38] sm:$0xff]
  %v5181 = vld [vmem:[%s1 + $0x40] sm:$0xff]
  %v5182 = vld [vmem:[%s1 + $0x48] sm:$0xff]
  %v5183 = vld [vmem:[%s1 + $0x50] sm:$0xff]
  %v5184 = vld [vmem:[%s1 + $0x58] sm:$0xff]
  %v5185 = vld [vmem:[%s1 + $0x60] sm:$0xff]
  %v5186 = vld [vmem:[%s1 + $0x68] sm:$0xff]
  %v5187 = vld [vmem:[%s1 + $0x70] sm:$0xff]
  %v5188 = vld [vmem:[%s1 + $0x78] sm:$0xff]
  %v5189 = vld [vmem:[%s1 + $0x80] sm:$0xff]
  %v5190 = vld [vmem:[%s1 + $0x88] sm:$0xff]
  %v5191 = vld [vmem:[%s1 + $0x90] sm:$0xff]
  %v5192 = vld [vmem:[%s1 + $0x98] sm:$0xff]
  %v5193 = vld [vmem:[%s1 + $0xa0] sm:$0xff]
  %v5194 = vld [vmem:[%s1 + $0xa8] sm:$0xff]
  %v5195 = vld [vmem:[%s1 + $0xb0] sm:$0xff]
  %v5196 = vld [vmem:[%s1 + $0xb8] sm:$0xff]
  %v5197 = vld [vmem:[%s1 + $0xc0] sm:$0xff]
  %v5198 = vld [vmem:[%s1 + $0xc8] sm:$0xff]
  %v5199 = vld [vmem:[%s1 + $0xd0] sm:$0xff]
  %v5200 = vld [vmem:[%s1 + $0xd8] sm:$0xff]
  %v5201 = vld [vmem:[%s1 + $0xe0] sm:$0xff]
  %v5202 = vld [vmem:[%s1 + $0xe8] sm:$0xff]
  %v5203 = vld [vmem:[%s1 + $0xf0] sm:$0xff]
  %v5204 = vld [vmem:[%s1 + $0xf8] sm:$0xff]
  %v5205 = vld [vmem:[%s1 + $0x100] sm:$0xff]
  %v5206 = vld [vmem:[%s1 + $0x108] sm:$0xff]
  %v5207 = vld [vmem:[%s1 + $0x110] sm:$0xff]
  %v5208 = vld [vmem:[%s1 + $0x118] sm:$0xff]
  %v5209 = vld [vmem:[%s1 + $0x120] sm:$0xff]
  %v5210 = vld [vmem:[%s1 + $0x128] sm:$0xff]
  %v5211 = vld [vmem:[%s1 + $0x130] sm:$0xff]
  %v5212 = vld [vmem:[%s1 + $0x138] sm:$0xff]
  %v5213 = vld [vmem:[%s1 + $0x140] sm:$0xff]
  %v5214 = vld [vmem:[%s1 + $0x148] sm:$0xff]
  %v5215 = vld [vmem:[%s1 + $0x150] sm:$0xff]
  %v5216 = vld [vmem:[%s1 + $0x158] sm:$0xff]
  %v5217 = vld [vmem:[%s1 + $0x160] sm:$0xff]
  %v5218 = vld [vmem:[%s1 + $0x168] sm:$0xff]
  %v5219 = vld [vmem:[%s1 + $0x170] sm:$0xff]
  %v5220 = vld [vmem:[%s1 + $0x178] sm:$0xff]
  %v5221 = vld [vmem:[%s1 + $0x180] sm:$0xff]
  %v5222 = vld [vmem:[%s1 + $0x188] sm:$0xff]
  %v5223 = vld [vmem:[%s1 + $0x190] sm:$0xff]
  %v5224 = vld [vmem:[%s1 + $0x198] sm:$0xff]
  %v5225 = vld [vmem:[%s1 + $0x1a0] sm:$0xff]
  %v5226 = vld [vmem:[%s1 + $0x1a8] sm:$0xff]
  %v5227 = vld [vmem:[%s1 + $0x1b0] sm:$0xff]
  %v5228 = vld [vmem:[%s1 + $0x1b8] sm:$0xff]
  %v5229 = vld [vmem:[%s1 + $0x1c0] sm:$0xff]
  %v5230 = vld [vmem:[%s1 + $0x1c8] sm:$0xff]
  %v5231 = vld [vmem:[%s1 + $0x1d0] sm:$0xff]
  %v5232 = vld [vmem:[%s1 + $0x1d8] sm:$0xff]
  %v5233 = vld [vmem:[%s1 + $0x1e0] sm:$0xff]
  %v5234 = vld [vmem:[%s1 + $0x1e8] sm:$0xff]
  %v5235 = vld [vmem:[%s1 + $0x1f0] sm:$0xff]
  %v5236 = vld [vmem:[%s1 + $0x1f8] sm:$0xff]
  %v5237 = vld [vmem:[%s1 + $0x200] sm:$0xff]
  %v5238 = vld [vmem:[%s1 + $0x208] sm:$0xff]
  %v5239 = vld [vmem:[%s1 + $0x210] sm:$0xff]
  %v5240 = vld [vmem:[%s1 + $0x218] sm:$0xff]
  %v5241 = vld [vmem:[%s1 + $0x220] sm:$0xff]
  %v5242 = vld [vmem:[%s1 + $0x228] sm:$0xff]
  %v5243 = vld [vmem:[%s1 + $0x230] sm:$0xff]
  %v5244 = vld [vmem:[%s1 + $0x238] sm:$0xff]
  %v5245 = vld [vmem:[%s1 + $0x240] sm:$0xff]
  %v5246 = vld [vmem:[%s1 + $0x248] sm:$0xff]
  %v5247 = vld [vmem:[%s1 + $0x250] sm:$0xff]
  %v5248 = vld [vmem:[%s1 + $0x258] sm:$0xff]
  %v5249 = vld [vmem:[%s1 + $0x260] sm:$0xff]
  %v5250 = vld [vmem:[%s1 + $0x268] sm:$0xff]
  %v5251 = vld [vmem:[%s1 + $0x270] sm:$0xff]
  %v5252 = vld [vmem:[%s1 + $0x278] sm:$0xff]
  %v5253 = vld [vmem:[%s1 + $0x280] sm:$0xff]
  %v5254 = vld [vmem:[%s1 + $0x288] sm:$0xff]
  %v5255 = vld [vmem:[%s1 + $0x290] sm:$0xff]
  %v5256 = vld [vmem:[%s1 + $0x298] sm:$0xff]
  %v5257 = vld [vmem:[%s1 + $0x2a0] sm:$0xff]
  %v5258 = vld [vmem:[%s1 + $0x2a8] sm:$0xff]
  %v5259 = vld [vmem:[%s1 + $0x2b0] sm:$0xff]
  %v5260 = vld [vmem:[%s1 + $0x2b8] sm:$0xff]
  %v5261 = vld [vmem:[%s1 + $0x2c0] sm:$0xff]
  %v5262 = vld [vmem:[%s1 + $0x2c8] sm:$0xff]
  %v5263 = vld [vmem:[%s1 + $0x2d0] sm:$0xff]
  %v5264 = vld [vmem:[%s1 + $0x2d8] sm:$0xff]
  %v5265 = vld [vmem:[%s1 + $0x2e0] sm:$0xff]
  %v5266 = vld [vmem:[%s1 + $0x2e8] sm:$0xff]
  %v5267 = vld [vmem:[%s1 + $0x2f0] sm:$0xff]
  %v5268 = vld [vmem:[%s1 + $0x2f8] sm:$0xff]
  %v5269 = vld [vmem:[%s1 + $0x300] sm:$0xff]
  %v5270 = vld [vmem:[%s1 + $0x308] sm:$0xff]
  %v5271 = vld [vmem:[%s1 + $0x310] sm:$0xff]
  %v5272 = vld [vmem:[%s1 + $0x318] sm:$0xff]
  %v5273 = vld [vmem:[%s1 + $0x320] sm:$0xff]
  %v5274 = vld [vmem:[%s1 + $0x328] sm:$0xff]
  %v5275 = vld [vmem:[%s1 + $0x330] sm:$0xff]
  %v5276 = vld [vmem:[%s1 + $0x338] sm:$0xff]
  %v5277 = vld [vmem:[%s1 + $0x340] sm:$0xff]
  %v5278 = vld [vmem:[%s1 + $0x348] sm:$0xff]
  %v5279 = vld [vmem:[%s1 + $0x350] sm:$0xff]
  %v5280 = vld [vmem:[%s1 + $0x358] sm:$0xff]
  %v5281 = vld [vmem:[%s1 + $0x360] sm:$0xff]
  %v5282 = vld [vmem:[%s1 + $0x368] sm:$0xff]
  %v5283 = vld [vmem:[%s1 + $0x370] sm:$0xff]
  %v5284 = vld [vmem:[%s1 + $0x378] sm:$0xff]
  %v5285 = vld [vmem:[%s1 + $0x380] sm:$0xff]
  %v5286 = vld [vmem:[%s1 + $0x388] sm:$0xff]
  %v5287 = vld [vmem:[%s1 + $0x390] sm:$0xff]
  %v5288 = vld [vmem:[%s1 + $0x398] sm:$0xff]
  %v5289 = vld [vmem:[%s1 + $0x3a0] sm:$0xff]
  %v5290 = vld [vmem:[%s1 + $0x3a8] sm:$0xff]
  %v5291 = vld [vmem:[%s1 + $0x3b0] sm:$0xff]
  %v5292 = vld [vmem:[%s1 + $0x3b8] sm:$0xff]
  %v5293 = vld [vmem:[%s1 + $0x3c0] sm:$0xff]
  %v5294 = vld [vmem:[%s1 + $0x3c8] sm:$0xff]
  %v5295 = vld [vmem:[%s1 + $0x3d0] sm:$0xff]
  %v5296 = vld [vmem:[%s1 + $0x3d8] sm:$0xff]
  %v5297 = vld [vmem:[%s1 + $0x3e0] sm:$0xff]
  %v5298 = vld [vmem:[%s1 + $0x3e8] sm:$0xff]
  %v5299 = vld [vmem:[%s1 + $0x3f0] sm:$0xff]
  %v5300 = vld [vmem:[%s1 + $0x3f8] sm:$0xff]
  %v5301 = vld [vmem:[%s1 + $0x400] sm:$0xff]
  %v5302 = vld [vmem:[%s1 + $0x408] sm:$0xff]
  %v5303 = vld [vmem:[%s1 + $0x410] sm:$0xff]
  %v5304 = vld [vmem:[%s1 + $0x418] sm:$0xff]
  %v5305 = vld [vmem:[%s1 + $0x420] sm:$0xff]
  %v5306 = vld [vmem:[%s1 + $0x428] sm:$0xff]
  %v5307 = vld [vmem:[%s1 + $0x430] sm:$0xff]
  %v5308 = vld [vmem:[%s1 + $0x438] sm:$0xff]
  %v5309 = vld [vmem:[%s1 + $0x440] sm:$0xff]
  %v5310 = vld [vmem:[%s1 + $0x448] sm:$0xff]
  %v5311 = vld [vmem:[%s1 + $0x450] sm:$0xff]
  %v5312 = vld [vmem:[%s1 + $0x458] sm:$0xff]
  %v5313 = vld [vmem:[%s1 + $0x460] sm:$0xff]
  %v5314 = vld [vmem:[%s1 + $0x468] sm:$0xff]
  %v5315 = vld [vmem:[%s1 + $0x470] sm:$0xff]
  %v5316 = vld [vmem:[%s1 + $0x478] sm:$0xff]
  %v5317 = vld [vmem:[%s1 + $0x480] sm:$0xff]
  %v5318 = vld [vmem:[%s1 + $0x488] sm:$0xff]
  %v5319 = vld [vmem:[%s1 + $0x490] sm:$0xff]
  %v5320 = vld [vmem:[%s1 + $0x498] sm:$0xff]
  %v5321 = vld [vmem:[%s1 + $0x4a0] sm:$0xff]
  %v5322 = vld [vmem:[%s1 + $0x4a8] sm:$0xff]
  %v5323 = vld [vmem:[%s1 + $0x4b0] sm:$0xff]
  %v5324 = vld [vmem:[%s1 + $0x4b8] sm:$0xff]
  %v5325 = vld [vmem:[%s1 + $0x4c0] sm:$0xff]
  %v5326 = vld [vmem:[%s1 + $0x4c8] sm:$0xff]
  %v5327 = vld [vmem:[%s1 + $0x4d0] sm:$0xff]
  %v5328 = vld [vmem:[%s1 + $0x4d8] sm:$0xff]
  %v5329 = vld [vmem:[%s1 + $0x4e0] sm:$0xff]
  %v5330 = vld [vmem:[%s1 + $0x4e8] sm:$0xff]
  %v5331 = vld [vmem:[%s1 + $0x4f0] sm:$0xff]
  %v5332 = vld [vmem:[%s1 + $0x4f8] sm:$0xff]
  %v5333 = vld [vmem:[%s1 + $0x500] sm:$0xff]
  %v5334 = vld [vmem:[%s1 + $0x508] sm:$0xff]
  %v5335 = vld [vmem:[%s1 + $0x510] sm:$0xff]
  %v5336 = vld [vmem:[%s1 + $0x518] sm:$0xff]
  %v5337 = vld [vmem:[%s1 + $0x520] sm:$0xff]
  %v5338 = vld [vmem:[%s1 + $0x528] sm:$0xff]
  %v5339 = vld [vmem:[%s1 + $0x530] sm:$0xff]
  %v5340 = vld [vmem:[%s1 + $0x538] sm:$0xff]
  %v5341 = vld [vmem:[%s1 + $0x540] sm:$0xff]
  %v5342 = vld [vmem:[%s1 + $0x548] sm:$0xff]
  %v5343 = vld [vmem:[%s1 + $0x550] sm:$0xff]
  %v5344 = vld [vmem:[%s1 + $0x558] sm:$0xff]
  %v5345 = vld [vmem:[%s1 + $0x560] sm:$0xff]
  %v5346 = vld [vmem:[%s1 + $0x568] sm:$0xff]
  %v5347 = vld [vmem:[%s1 + $0x570] sm:$0xff]
  %v5348 = vld [vmem:[%s1 + $0x578] sm:$0xff]
  %v5349 = vld [vmem:[%s1 + $0x580] sm:$0xff]
  %v5350 = vld [vmem:[%s1 + $0x588] sm:$0xff]
  %v5351 = vld [vmem:[%s1 + $0x590] sm:$0xff]
  %v5352 = vld [vmem:[%s1 + $0x598] sm:$0xff]
  %v5353 = vld [vmem:[%s1 + $0x5a0] sm:$0xff]
  %v5354 = vld [vmem:[%s1 + $0x5a8] sm:$0xff]
  %v5355 = vld [vmem:[%s1 + $0x5b0] sm:$0xff]
  %v5356 = vld [vmem:[%s1 + $0x5b8] sm:$0xff]
  %v5357 = vld [vmem:[%s1 + $0x5c0] sm:$0xff]
  %v5358 = vld [vmem:[%s1 + $0x5c8] sm:$0xff]
  %v5359 = vld [vmem:[%s1 + $0x5d0] sm:$0xff]
  %v5360 = vld [vmem:[%s1 + $0x5d8] sm:$0xff]
  %v5361 = vld [vmem:[%s1 + $0x5e0] sm:$0xff]
  %v5362 = vld [vmem:[%s1 + $0x5e8] sm:$0xff]
  %v5363 = vld [vmem:[%s1 + $0x5f0] sm:$0xff]
  %v5364 = vld [vmem:[%s1 + $0x5f8] sm:$0xff]
  %v5365 = vld [vmem:[%s1 + $0x600] sm:$0xff]
  %v5366 = vld [vmem:[%s1 + $0x608] sm:$0xff]
  %v5367 = vld [vmem:[%s1 + $0x610] sm:$0xff]
  %v5368 = vld [vmem:[%s1 + $0x618] sm:$0xff]
  %v5369 = vld [vmem:[%s1 + $0x620] sm:$0xff]
  %v5370 = vld [vmem:[%s1 + $0x628] sm:$0xff]
  %v5371 = vld [vmem:[%s1 + $0x630] sm:$0xff]
  %v5372 = vld [vmem:[%s1 + $0x638] sm:$0xff]
  %v5373 = vld [vmem:[%s1 + $0x640] sm:$0xff]
  %v5374 = vld [vmem:[%s1 + $0x648] sm:$0xff]
  %v5375 = vld [vmem:[%s1 + $0x650] sm:$0xff]
  %v5376 = vld [vmem:[%s1 + $0x658] sm:$0xff]
  %v5377 = vld [vmem:[%s1 + $0x660] sm:$0xff]
  %v5378 = vld [vmem:[%s1 + $0x668] sm:$0xff]
  %v5379 = vld [vmem:[%s1 + $0x670] sm:$0xff]
  %v5380 = vld [vmem:[%s1 + $0x678] sm:$0xff]
  %v5381 = vld [vmem:[%s1 + $0x680] sm:$0xff]
  %v5382 = vld [vmem:[%s1 + $0x688] sm:$0xff]
  %v5383 = vld [vmem:[%s1 + $0x690] sm:$0xff]
  %v5384 = vld [vmem:[%s1 + $0x698] sm:$0xff]
  %v5385 = vld [vmem:[%s1 + $0x6a0] sm:$0xff]
  %v5386 = vld [vmem:[%s1 + $0x6a8] sm:$0xff]
  %v5387 = vld [vmem:[%s1 + $0x6b0] sm:$0xff]
  %v5388 = vld [vmem:[%s1 + $0x6b8] sm:$0xff]
  %v5389 = vpack.c.bf16 %v5182, %v5173
  %v5390 = vpack.c.bf16 %v5183, %v5174
  %v5391 = vpack.c.bf16 %v5184, %v5175
  %v5392 = vpack.c.bf16 %v5185, %v5176
  %v5393 = vpack.c.bf16 %v5186, %v5177
  %v5394 = vpack.c.bf16 %v5187, %v5178
  %v5395 = vpack.c.bf16 %v5188, %v5179
  %v5396 = vpack.c.bf16 %v5189, %v5180
  %v5397 = vpack.c.bf16 %v5190, %v5181
  %v5398 = vpack.c.bf16 %v5200, %v5191
  %v5399 = vpack.c.bf16 %v5201, %v5192
  %v5400 = vpack.c.bf16 %v5202, %v5193
  %v5401 = vpack.c.bf16 %v5203, %v5194
  %v5402 = vpack.c.bf16 %v5204, %v5195
  %v5403 = vpack.c.bf16 %v5205, %v5196
  %v5404 = vpack.c.bf16 %v5206, %v5197
  %v5405 = vpack.c.bf16 %v5207, %v5198
  %v5406 = vpack.c.bf16 %v5208, %v5199
  %v5407 = vpack.c.bf16 %v5218, %v5209
  %v5408 = vpack.c.bf16 %v5219, %v5210
  %v5409 = vpack.c.bf16 %v5220, %v5211
  %v5410 = vpack.c.bf16 %v5221, %v5212
  %v5411 = vpack.c.bf16 %v5222, %v5213
  %v5412 = vpack.c.bf16 %v5223, %v5214
  %v5413 = vpack.c.bf16 %v5224, %v5215
  %v5414 = vpack.c.bf16 %v5225, %v5216
  %v5415 = vpack.c.bf16 %v5226, %v5217
  %v5416 = vpack.c.bf16 %v5236, %v5227
  %v5417 = vpack.c.bf16 %v5237, %v5228
  %v5418 = vpack.c.bf16 %v5238, %v5229
  %v5419 = vpack.c.bf16 %v5239, %v5230
  %v5420 = vpack.c.bf16 %v5240, %v5231
  %v5421 = vpack.c.bf16 %v5241, %v5232
  %v5422 = vpack.c.bf16 %v5242, %v5233
  %v5423 = vpack.c.bf16 %v5243, %v5234
  %v5424 = vpack.c.bf16 %v5244, %v5235
  %v5425 = vpack.c.bf16 %v5254, %v5245
  %v5426 = vpack.c.bf16 %v5255, %v5246
  %v5427 = vpack.c.bf16 %v5256, %v5247
  %v5428 = vpack.c.bf16 %v5257, %v5248
  %v5429 = vpack.c.bf16 %v5258, %v5249
  %v5430 = vpack.c.bf16 %v5259, %v5250
  %v5431 = vpack.c.bf16 %v5260, %v5251
  %v5432 = vpack.c.bf16 %v5261, %v5252
  %v5433 = vpack.c.bf16 %v5262, %v5253
  %v5434 = vpack.c.bf16 %v5272, %v5263
  %v5435 = vpack.c.bf16 %v5273, %v5264
  %v5436 = vpack.c.bf16 %v5274, %v5265
  %v5437 = vpack.c.bf16 %v5275, %v5266
  %v5438 = vpack.c.bf16 %v5276, %v5267
  %v5439 = vpack.c.bf16 %v5277, %v5268
  %v5440 = vpack.c.bf16 %v5278, %v5269
  %v5441 = vpack.c.bf16 %v5279, %v5270
  %v5442 = vpack.c.bf16 %v5280, %v5271
  %v5443 = vpack.c.bf16 %v5290, %v5281
  %v5444 = vpack.c.bf16 %v5291, %v5282
  %v5445 = vpack.c.bf16 %v5292, %v5283
  %v5446 = vpack.c.bf16 %v5293, %v5284
  %v5447 = vpack.c.bf16 %v5294, %v5285
  %v5448 = vpack.c.bf16 %v5295, %v5286
  %v5449 = vpack.c.bf16 %v5296, %v5287
  %v5450 = vpack.c.bf16 %v5297, %v5288
  %v5451 = vpack.c.bf16 %v5298, %v5289
  %v5452 = vpack.c.bf16 %v5308, %v5299
  %v5453 = vpack.c.bf16 %v5309, %v5300
  %v5454 = vpack.c.bf16 %v5310, %v5301
  %v5455 = vpack.c.bf16 %v5311, %v5302
  %v5456 = vpack.c.bf16 %v5312, %v5303
  %v5457 = vpack.c.bf16 %v5313, %v5304
  %v5458 = vpack.c.bf16 %v5314, %v5305
  %v5459 = vpack.c.bf16 %v5315, %v5306
  %v5460 = vpack.c.bf16 %v5316, %v5307
  %v5461 = vpack.c.bf16 %v5326, %v5317
  %v5462 = vpack.c.bf16 %v5327, %v5318
  %v5463 = vpack.c.bf16 %v5328, %v5319
  %v5464 = vpack.c.bf16 %v5329, %v5320
  %v5465 = vpack.c.bf16 %v5330, %v5321
  %v5466 = vpack.c.bf16 %v5331, %v5322
  %v5467 = vpack.c.bf16 %v5332, %v5323
  %v5468 = vpack.c.bf16 %v5333, %v5324
  %v5469 = vpack.c.bf16 %v5334, %v5325
  %v5470 = vpack.c.bf16 %v5344, %v5335
  %v5471 = vpack.c.bf16 %v5345, %v5336
  %v5472 = vpack.c.bf16 %v5346, %v5337
  %v5473 = vpack.c.bf16 %v5347, %v5338
  %v5474 = vpack.c.bf16 %v5348, %v5339
  %v5475 = vpack.c.bf16 %v5349, %v5340
  %v5476 = vpack.c.bf16 %v5350, %v5341
  %v5477 = vpack.c.bf16 %v5351, %v5342
  %v5478 = vpack.c.bf16 %v5352, %v5343
  %v5479 = vpack.c.bf16 %v5362, %v5353
  %v5480 = vpack.c.bf16 %v5363, %v5354
  %v5481 = vpack.c.bf16 %v5364, %v5355
  %v5482 = vpack.c.bf16 %v5365, %v5356
  %v5483 = vpack.c.bf16 %v5366, %v5357
  %v5484 = vpack.c.bf16 %v5367, %v5358
  %v5485 = vpack.c.bf16 %v5368, %v5359
  %v5486 = vpack.c.bf16 %v5369, %v5360
  %v5487 = vpack.c.bf16 %v5370, %v5361
  %v5488 = vpack.c.bf16 %v5380, %v5371
  %v5489 = vpack.c.bf16 %v5381, %v5372
  %v5490 = vpack.c.bf16 %v5382, %v5373
  %v5491 = vpack.c.bf16 %v5383, %v5374
  %v5492 = vpack.c.bf16 %v5384, %v5375
  %v5493 = vpack.c.bf16 %v5385, %v5376
  %v5494 = vpack.c.bf16 %v5386, %v5377
  %v5495 = vpack.c.bf16 %v5387, %v5378
  %v5496 = vpack.c.bf16 %v5388, %v5379
  %v5497 = vpack.c.bf16 %v4911, %v4909
  %v5498 = vpack.c.bf16 %v4912, %v4910
  %v5499 = vpack.c.bf16 %v4915, %v4913
  %v5500 = vpack.c.bf16 %v4916, %v4914
  %v5501 = vpack.c.bf16 %v4919, %v4917
  %v5502 = vpack.c.bf16 %v4920, %v4918
  %v5503 = vpack.c.bf16 %v4923, %v4921
  %v5504 = vpack.c.bf16 %v4924, %v4922
  %v5505 = vpack.c.bf16 %v4927, %v4925
  %v5506 = vpack.c.bf16 %v4928, %v4926
  %v5507 = vpack.c.bf16 %v4931, %v4929
  %v5508 = vpack.c.bf16 %v4932, %v4930
  %v5509 = vpack.c.bf16 %v4935, %v4933
  %v5510 = vpack.c.bf16 %v4936, %v4934
  %v5511 = vpack.c.bf16 %v4939, %v4937
  %v5512 = vpack.c.bf16 %v4940, %v4938
  %v5513 = vpack.c.bf16 %v4943, %v4941
  %v5514 = vpack.c.bf16 %v4944, %v4942
  %v5515 = vpack.c.bf16 %v4947, %v4945
  %v5516 = vpack.c.bf16 %v4948, %v4946
  %v5517 = vpack.c.bf16 %v4951, %v4949
  %v5518 = vpack.c.bf16 %v4952, %v4950
  %v5519 = vpack.c.bf16 %v4955, %v4953
  %v5520 = vpack.c.bf16 %v4956, %v4954
  %v5521 = vpack.c.bf16 %v4959, %v4957
  %v5522 = vpack.c.bf16 %v4960, %v4958
  %v5523 = vpack.c.bf16 %v4963, %v4961
  %v5524 = vpack.c.bf16 %v4964, %v4962
  %v5525 = vpack.c.bf16 %v4967, %v4965
  %v5526 = vpack.c.bf16 %v4968, %v4966
  %v5527 = vpack.c.bf16 %v4971, %v4969
  %v5528 = vpack.c.bf16 %v4972, %v4970
  %v5529 = vpack.c.bf16 %v4975, %v4973
  %v5530 = vpack.c.bf16 %v4976, %v4974
  %v5531 = vpack.c.bf16 %v4979, %v4977
  %v5532 = vpack.c.bf16 %v4980, %v4978
  %v5533 = vpack.c.bf16 %v4983, %v4981
  %v5534 = vpack.c.bf16 %v4984, %v4982
  %v5535 = vpack.c.bf16 %v4987, %v4985
  %v5536 = vpack.c.bf16 %v4988, %v4986
  %v5537 = vpack.c.bf16 %v4991, %v4989
  %v5538 = vpack.c.bf16 %v4992, %v4990
  %v5539 = vpack.c.bf16 %v4995, %v4993
  %v5540 = vpack.c.bf16 %v4996, %v4994
  %v5541 = vpack.c.bf16 %v4999, %v4997
  %v5542 = vpack.c.bf16 %v5000, %v4998
  %v5543 = vpack.c.bf16 %v5003, %v5001
  %v5544 = vpack.c.bf16 %v5004, %v5002
  %v5545 = vpack.c.bf16 %v5007, %v5005
  %v5546 = vpack.c.bf16 %v5008, %v5006
  %v5547 = vpack.c.bf16 %v5011, %v5009
  %v5548 = vpack.c.bf16 %v5012, %v5010
  %v5549 = vpack.c.bf16 %v5015, %v5013
  %v5550 = vpack.c.bf16 %v5016, %v5014
  %v5551 = vpack.c.bf16 %v5019, %v5017
  %v5552 = vpack.c.bf16 %v5020, %v5018
  %v5553 = vpack.c.bf16 %v5023, %v5021
  %v5554 = vpack.c.bf16 %v5024, %v5022
  %v5555 = vpack.c.bf16 %v5027, %v5025
  %v5556 = vpack.c.bf16 %v5028, %v5026
  %v5557 = vpack.c.bf16 %v5031, %v5029
  %v5558 = vpack.c.bf16 %v5032, %v5030
  %v5559 = vpack.c.bf16 %v5035, %v5033
  %v5560 = vpack.c.bf16 %v5036, %v5034
  %v5561 = vpack.c.bf16 %v5039, %v5037
  %v5562 = vpack.c.bf16 %v5040, %v5038
  %v5563 = vpack.c.bf16 %v5043, %v5041
  %v5564 = vpack.c.bf16 %v5044, %v5042
  %v5565 = vpack.c.bf16 %v5047, %v5045
  %v5566 = vpack.c.bf16 %v5048, %v5046
  %v5567 = vpack.c.bf16 %v5051, %v5049
  %v5568 = vpack.c.bf16 %v5052, %v5050
  %v5569 = vpack.c.bf16 %v5055, %v5053
  %v5570 = vpack.c.bf16 %v5056, %v5054
  %v5571 = vpack.c.bf16 %v5059, %v5057
  %v5572 = vpack.c.bf16 %v5060, %v5058
  %v5573 = vpack.c.bf16 %v5063, %v5061
  %v5574 = vpack.c.bf16 %v5064, %v5062
  %v5575 = vpack.c.bf16 %v5067, %v5065
  %v5576 = vpack.c.bf16 %v5068, %v5066
  %v5577 = vpack.c.bf16 %v5071, %v5069
  %v5578 = vpack.c.bf16 %v5072, %v5070
  %v5579 = vpack.c.bf16 %v5075, %v5073
  %v5580 = vpack.c.bf16 %v5076, %v5074
  %v5581 = vpack.c.bf16 %v5079, %v5077
  %v5582 = vpack.c.bf16 %v5080, %v5078
  %v5583 = vpack.c.bf16 %v5083, %v5081
  %v5584 = vpack.c.bf16 %v5084, %v5082
  %v5585 = vpack.c.bf16 %v5087, %v5085
  %v5586 = vpack.c.bf16 %v5088, %v5086
  %v5587 = vpack.c.bf16 %v5091, %v5089
  %v5588 = vpack.c.bf16 %v5092, %v5090
  %v5589 = vpack.c.bf16 %v5095, %v5093
  %v5590 = vpack.c.bf16 %v5096, %v5094
  %v5591 = vpack.c.bf16 %v5099, %v5097
  %v5592 = vpack.c.bf16 %v5100, %v5098
  %v5593 = vpack.c.bf16 %v5103, %v5101
  %v5594 = vpack.c.bf16 %v5104, %v5102
  %v5595 = vpack.c.bf16 %v5107, %v5105
  %v5596 = vpack.c.bf16 %v5108, %v5106
  %v5597 = vpack.c.bf16 %v5111, %v5109
  %v5598 = vpack.c.bf16 %v5112, %v5110
  %v5599 = vpack.c.bf16 %v5115, %v5113
  %v5600 = vpack.c.bf16 %v5116, %v5114
  %v5601 = vpack.c.bf16 %v5119, %v5117
  %v5602 = vpack.c.bf16 %v5120, %v5118
  %v5603 = vpack.c.bf16 %v5123, %v5121
  %v5604 = vpack.c.bf16 %v5124, %v5122
  %v5605 = vpack.c.bf16 %v5127, %v5125
  %v5606 = vpack.c.bf16 %v5128, %v5126
  %v5607 = vpack.c.bf16 %v5131, %v5129
  %v5608 = vpack.c.bf16 %v5132, %v5130
  %v5609 = vpack.c.bf16 %v5135, %v5133
  %v5610 = vpack.c.bf16 %v5136, %v5134
  %v5611 = vpack.c.bf16 %v5139, %v5137
  %v5612 = vpack.c.bf16 %v5140, %v5138
  %v5613 = vpack.c.bf16 %v5143, %v5141
  %v5614 = vpack.c.bf16 %v5144, %v5142
  %v5615 = vpack.c.bf16 %v5147, %v5145
  %v5616 = vpack.c.bf16 %v5148, %v5146
  %v5617 = vpack.c.bf16 %v5151, %v5149
  %v5618 = vpack.c.bf16 %v5152, %v5150
  %v5619 = vpack.c.bf16 %v5155, %v5153
  %v5620 = vpack.c.bf16 %v5156, %v5154
  %v5621 = vpack.c.bf16 %v5159, %v5157
  %v5622 = vpack.c.bf16 %v5160, %v5158
  %v5623 = vpack.c.bf16 %v5163, %v5161
  %v5624 = vpack.c.bf16 %v5164, %v5162
  %v5625 = vpack.c.bf16 %v5167, %v5165
  %v5626 = vpack.c.bf16 %v5168, %v5166
  %v5627 = vpack.c.bf16 %v5171, %v5169
  %v5628 = vpack.c.bf16 %v5172, %v5170
  %vm5629 = vcmask 261120
  %v5631 = vsel %vm5629, %v5397, 0
  %v5634 = vsel %vm5629, %v5406, 0
  %v5637 = vsel %vm5629, %v5415, 0
  %v5640 = vsel %vm5629, %v5424, 0
  %v5643 = vsel %vm5629, %v5433, 0
  %v5646 = vsel %vm5629, %v5442, 0
  %v5649 = vsel %vm5629, %v5451, 0
  %v5652 = vsel %vm5629, %v5460, 0
  %v5655 = vsel %vm5629, %v5469, 0
  %v5658 = vsel %vm5629, %v5478, 0
  %v5661 = vsel %vm5629, %v5487, 0
  %v5664 = vsel %vm5629, %v5496, 0
  %5666 = vmatprep.subr.bf16.mxu0 %v5498
  %5667 = vmatpush1.bf16.msra.mxu0 %v5497
  %5668 = vmatprep.subr.bf16.mxu0 %v5500
  %5669 = vmatpush1.bf16.msra.mxu0 %v5499
  %5670 = vmatprep.subr.bf16.mxu0 %v5502
  %5671 = vmatpush1.bf16.msra.mxu0 %v5501
  %5672 = vmatprep.subr.bf16.mxu0 %v5504
  %5673 = vmatpush1.bf16.msra.mxu0 %v5503
  %5674 = vmatprep.subr.bf16.mxu0 %v5506
  %5675 = vmatpush1.bf16.msra.mxu0 %v5505
  %5676 = vmatprep.subr.bf16.mxu0 %v5508
  %5677 = vmatpush1.bf16.msra.mxu0 %v5507
  %5678 = vmatprep.subr.bf16.mxu0 %v5510
  %5679 = vmatpush1.bf16.msra.mxu0 %v5509
  %5680 = vmatprep.subr.bf16.mxu0 %v5512
  %5681 = vmatpush1.bf16.msra.mxu0 %v5511
  %5682 = vmatprep.subr.bf16.mxu0 %v5514
  %5683 = vmatpush1.bf16.msra.mxu0 %v5513
  %5684 = vmatprep.subr.bf16.mxu0 %v5516
  %5685 = vmatpush1.bf16.msra.mxu0 %v5515
  %5686 = vmatprep.subr.bf16.mxu0 %v5518
  %5687 = vmatpush1.bf16.msra.mxu0 %v5517
  %5688 = vmatprep.subr.bf16.mxu0 %v5520
  %5689 = vmatpush1.bf16.msra.mxu0 %v5519
  %5690 = vmatprep.subr.bf16.mxu0 %v5522
  %5691 = vmatpush1.bf16.msra.mxu0 %v5521
  %5692 = vmatprep.subr.bf16.mxu0 %v5524
  %5693 = vmatpush1.bf16.msra.mxu0 %v5523
  %5694 = vmatprep.subr.bf16.mxu0 %v5526
  %5695 = vmatpush1.bf16.msra.mxu0 %v5525
  %5696 = vmatprep.subr.bf16.mxu0 %v5528
  %5697 = vmatpush1.bf16.msra.mxu0 %v5527
  %5698 = vmatprep.mubr.bf16.mxu0 %v5390
  %5699 = vmatmul.mubr.bf16.gmra.mrb[0].mxu0 %v5389
  %v5700 = vpop.f32.mrb[0].mxu0
  %v5701 = vadd.f32 0.0, %v5700
  %v5702 = vpop.f32.mrb[0].mxu0
  %v5703 = vadd.f32 0.0, %v5702
  %v5704 = vpop.f32.mrb[0].mxu0
  %v5705 = vadd.f32 0.0, %v5704
  %v5706 = vpop.f32.mrb[0].mxu0
  %v5707 = vadd.f32 0.0, %v5706
  %5708 = vmatprep.mubr.bf16.mxu0 %v5399
  %5709 = vmatmul.mubr.bf16.gmra.mrb[0].mxu0 %v5398
  %v5710 = vpop.f32.mrb[0].mxu0
  %v5711 = vadd.f32 0.0, %v5710
  %v5712 = vpop.f32.mrb[0].mxu0
  %v5713 = vadd.f32 0.0, %v5712
  %v5714 = vpop.f32.mrb[0].mxu0
  %v5715 = vadd.f32 0.0, %v5714
  %v5716 = vpop.f32.mrb[0].mxu0
  %v5717 = vadd.f32 0.0, %v5716
  %5718 = vmatprep.mubr.bf16.mxu0 %v5408
  %5719 = vmatmul.mubr.bf16.gmra.mrb[0].mxu0 %v5407
  %v5720 = vpop.f32.mrb[0].mxu0
  %v5721 = vadd.f32 0.0, %v5720
  %v5722 = vpop.f32.mrb[0].mxu0
  %v5723 = vadd.f32 0.0, %v5722
  %v5724 = vpop.f32.mrb[0].mxu0
  %v5725 = vadd.f32 0.0, %v5724
  %v5726 = vpop.f32.mrb[0].mxu0
  %v5727 = vadd.f32 0.0, %v5726
  %5728 = vmatprep.mubr.bf16.mxu0 %v5417
  %5729 = vmatmul.mubr.bf16.gmra.mrb[0].mxu0 %v5416
  %v5730 = vpop.f32.mrb[0].mxu0
  %v5731 = vadd.f32 0.0, %v5730
  %v5732 = vpop.f32.mrb[0].mxu0
  %v5733 = vadd.f32 0.0, %v5732
  %v5734 = vpop.f32.mrb[0].mxu0
  %v5735 = vadd.f32 0.0, %v5734
  %v5736 = vpop.f32.mrb[0].mxu0
  %v5737 = vadd.f32 0.0, %v5736
  %5738 = vmatprep.mubr.bf16.mxu0 %v5426
  %5739 = vmatmul.mubr.bf16.gmra.mrb[0].mxu0 %v5425
  %v5740 = vpop.f32.mrb[0].mxu0
  %v5741 = vadd.f32 0.0, %v5740
  %v5742 = vpop.f32.mrb[0].mxu0
  %v5743 = vadd.f32 0.0, %v5742
  %v5744 = vpop.f32.mrb[0].mxu0
  %v5745 = vadd.f32 0.0, %v5744
  %v5746 = vpop.f32.mrb[0].mxu0
  %v5747 = vadd.f32 0.0, %v5746
  %5748 = vmatprep.mubr.bf16.mxu0 %v5435
  %5749 = vmatmul.mubr.bf16.gmra.mrb[0].mxu0 %v5434
  %v5750 = vpop.f32.mrb[0].mxu0
  %v5751 = vadd.f32 0.0, %v5750
  %v5752 = vpop.f32.mrb[0].mxu0
  %v5753 = vadd.f32 0.0, %v5752
  %v5754 = vpop.f32.mrb[0].mxu0
  %v5755 = vadd.f32 0.0, %v5754
  %v5756 = vpop.f32.mrb[0].mxu0
  %v5757 = vadd.f32 0.0, %v5756
  %5758 = vmatprep.mubr.bf16.mxu0 %v5444
  %5759 = vmatmul.mubr.bf16.gmra.mrb[0].mxu0 %v5443
  %v5760 = vpop.f32.mrb[0].mxu0
  %v5761 = vadd.f32 0.0, %v5760
  %v5762 = vpop.f32.mrb[0].mxu0
  %v5763 = vadd.f32 0.0, %v5762
  %v5764 = vpop.f32.mrb[0].mxu0
  %v5765 = vadd.f32 0.0, %v5764
  %v5766 = vpop.f32.mrb[0].mxu0
  %v5767 = vadd.f32 0.0, %v5766
  %5768 = vmatprep.mubr.bf16.mxu0 %v5453
  %5769 = vmatmul.mubr.bf16.gmra.mrb[0].mxu0 %v5452
  %v5770 = vpop.f32.mrb[0].mxu0
  %v5771 = vadd.f32 0.0, %v5770
  %v5772 = vpop.f32.mrb[0].mxu0
  %v5773 = vadd.f32 0.0, %v5772
  %v5774 = vpop.f32.mrb[0].mxu0
  %v5775 = vadd.f32 0.0, %v5774
  %v5776 = vpop.f32.mrb[0].mxu0
  %v5777 = vadd.f32 0.0, %v5776
  %5778 = vmatprep.mubr.bf16.mxu0 %v5462
  %5779 = vmatmul.mubr.bf16.gmra.mrb[0].mxu0 %v5461
  %v5780 = vpop.f32.mrb[0].mxu0
  %v5781 = vadd.f32 0.0, %v5780
  %v5782 = vpop.f32.mrb[0].mxu0
  %v5783 = vadd.f32 0.0, %v5782
  %v5784 = vpop.f32.mrb[0].mxu0
  %v5785 = vadd.f32 0.0, %v5784
  %v5786 = vpop.f32.mrb[0].mxu0
  %v5787 = vadd.f32 0.0, %v5786
  %5788 = vmatprep.mubr.bf16.mxu0 %v5471
  %5789 = vmatmul.mubr.bf16.gmra.mrb[0].mxu0 %v5470
  %v5790 = vpop.f32.mrb[0].mxu0
  %v5791 = vadd.f32 0.0, %v5790
  %v5792 = vpop.f32.mrb[0].mxu0
  %v5793 = vadd.f32 0.0, %v5792
  %v5794 = vpop.f32.mrb[0].mxu0
  %v5795 = vadd.f32 0.0, %v5794
  %v5796 = vpop.f32.mrb[0].mxu0
  %v5797 = vadd.f32 0.0, %v5796
  %5798 = vmatprep.mubr.bf16.mxu0 %v5480
  %5799 = vmatmul.mubr.bf16.gmra.mrb[0].mxu0 %v5479
  %v5800 = vpop.f32.mrb[0].mxu0
  %v5801 = vadd.f32 0.0, %v5800
  %v5802 = vpop.f32.mrb[0].mxu0
  %v5803 = vadd.f32 0.0, %v5802
  %v5804 = vpop.f32.mrb[0].mxu0
  %v5805 = vadd.f32 0.0, %v5804
  %v5806 = vpop.f32.mrb[0].mxu0
  %v5807 = vadd.f32 0.0, %v5806
  %5808 = vmatprep.mubr.bf16.mxu0 %v5489
  %5809 = vmatmul.mubr.bf16.gmra.mrb[0].mxu0 %v5488
  %v5810 = vpop.f32.mrb[0].mxu0
  %v5811 = vadd.f32 0.0, %v5810
  %v5812 = vpop.f32.mrb[0].mxu0
  %v5813 = vadd.f32 0.0, %v5812
  %v5814 = vpop.f32.mrb[0].mxu0
  %v5815 = vadd.f32 0.0, %v5814
  %v5816 = vpop.f32.mrb[0].mxu0
  %v5817 = vadd.f32 0.0, %v5816
  %5818 = vdwg.mxu0
  %5819 = vmatprep.subr.bf16.mxu0 %v5530
  %5820 = vmatpush1.bf16.msra.mxu0 %v5529
  %5821 = vmatprep.subr.bf16.mxu0 %v5532
  %5822 = vmatpush1.bf16.msra.mxu0 %v5531
  %5823 = vmatprep.subr.bf16.mxu0 %v5534
  %5824 = vmatpush1.bf16.msra.mxu0 %v5533
  %5825 = vmatprep.subr.bf16.mxu0 %v5536
  %5826 = vmatpush1.bf16.msra.mxu0 %v5535
  %5827 = vmatprep.subr.bf16.mxu0 %v5538
  %5828 = vmatpush1.bf16.msra.mxu0 %v5537
  %5829 = vmatprep.subr.bf16.mxu0 %v5540
  %5830 = vmatpush1.bf16.msra.mxu0 %v5539
  %5831 = vmatprep.subr.bf16.mxu0 %v5542
  %5832 = vmatpush1.bf16.msra.mxu0 %v5541
  %5833 = vmatprep.subr.bf16.mxu0 %v5544
  %5834 = vmatpush1.bf16.msra.mxu0 %v5543
  %5835 = vmatprep.subr.bf16.mxu0 %v5546
  %5836 = vmatpush1.bf16.msra.mxu0 %v5545
  %5837 = vmatprep.subr.bf16.mxu0 %v5548
  %5838 = vmatpush1.bf16.msra.mxu0 %v5547
  %5839 = vmatprep.subr.bf16.mxu0 %v5550
  %5840 = vmatpush1.bf16.msra.mxu0 %v5549
  %5841 = vmatprep.subr.bf16.mxu0 %v5552
  %5842 = vmatpush1.bf16.msra.mxu0 %v5551
  %5843 = vmatprep.subr.bf16.mxu0 %v5554
  %5844 = vmatpush1.bf16.msra.mxu0 %v5553
  %5845 = vmatprep.subr.bf16.mxu0 %v5556
  %5846 = vmatpush1.bf16.msra.mxu0 %v5555
  %5847 = vmatprep.subr.bf16.mxu0 %v5558
  %5848 = vmatpush1.bf16.msra.mxu0 %v5557
  %5849 = vmatprep.subr.bf16.mxu0 %v5560
  %5850 = vmatpush1.bf16.msra.mxu0 %v5559
  %5851 = vmatprep.mubr.bf16.mxu0 %v5392
  %5852 = vmatmul.mubr.bf16.gmra.mrb[0].mxu0 %v5391
  %v5853 = vpop.f32.mrb[0].mxu0
  %v5854 = vadd.f32 %v5701, %v5853
  %v5855 = vpop.f32.mrb[0].mxu0
  %v5856 = vadd.f32 %v5703, %v5855
  %v5857 = vpop.f32.mrb[0].mxu0
  %v5858 = vadd.f32 %v5705, %v5857
  %v5859 = vpop.f32.mrb[0].mxu0
  %v5860 = vadd.f32 %v5707, %v5859
  %5861 = vmatprep.mubr.bf16.mxu0 %v5401
  %5862 = vmatmul.mubr.bf16.gmra.mrb[0].mxu0 %v5400
  %v5863 = vpop.f32.mrb[0].mxu0
  %v5864 = vadd.f32 %v5711, %v5863
  %v5865 = vpop.f32.mrb[0].mxu0
  %v5866 = vadd.f32 %v5713, %v5865
  %v5867 = vpop.f32.mrb[0].mxu0
  %v5868 = vadd.f32 %v5715, %v5867
  %v5869 = vpop.f32.mrb[0].mxu0
  %v5870 = vadd.f32 %v5717, %v5869
  %5871 = vmatprep.mubr.bf16.mxu0 %v5410
  %5872 = vmatmul.mubr.bf16.gmra.mrb[0].mxu0 %v5409
  %v5873 = vpop.f32.mrb[0].mxu0
  %v5874 = vadd.f32 %v5721, %v5873
  %v5875 = vpop.f32.mrb[0].mxu0
  %v5876 = vadd.f32 %v5723, %v5875
  %v5877 = vpop.f32.mrb[0].mxu0
  %v5878 = vadd.f32 %v5725, %v5877
  %v5879 = vpop.f32.mrb[0].mxu0
  %v5880 = vadd.f32 %v5727, %v5879
  %5881 = vmatprep.mubr.bf16.mxu0 %v5419
  %5882 = vmatmul.mubr.bf16.gmra.mrb[0].mxu0 %v5418
  %v5883 = vpop.f32.mrb[0].mxu0
  %v5884 = vadd.f32 %v5731, %v5883
  %v5885 = vpop.f32.mrb[0].mxu0
  %v5886 = vadd.f32 %v5733, %v5885
  %v5887 = vpop.f32.mrb[0].mxu0
  %v5888 = vadd.f32 %v5735, %v5887
  %v5889 = vpop.f32.mrb[0].mxu0
  %v5890 = vadd.f32 %v5737, %v5889
  %5891 = vmatprep.mubr.bf16.mxu0 %v5428
  %5892 = vmatmul.mubr.bf16.gmra.mrb[0].mxu0 %v5427
  %v5893 = vpop.f32.mrb[0].mxu0
  %v5894 = vadd.f32 %v5741, %v5893
  %v5895 = vpop.f32.mrb[0].mxu0
  %v5896 = vadd.f32 %v5743, %v5895
  %v5897 = vpop.f32.mrb[0].mxu0
  %v5898 = vadd.f32 %v5745, %v5897
  %v5899 = vpop.f32.mrb[0].mxu0
  %v5900 = vadd.f32 %v5747, %v5899
  %5901 = vmatprep.mubr.bf16.mxu0 %v5437
  %5902 = vmatmul.mubr.bf16.gmra.mrb[0].mxu0 %v5436
  %v5903 = vpop.f32.mrb[0].mxu0
  %v5904 = vadd.f32 %v5751, %v5903
  %v5905 = vpop.f32.mrb[0].mxu0
  %v5906 = vadd.f32 %v5753, %v5905
  %v5907 = vpop.f32.mrb[0].mxu0
  %v5908 = vadd.f32 %v5755, %v5907
  %v5909 = vpop.f32.mrb[0].mxu0
  %v5910 = vadd.f32 %v5757, %v5909
  %5911 = vmatprep.mubr.bf16.mxu0 %v5446
  %5912 = vmatmul.mubr.bf16.gmra.mrb[0].mxu0 %v5445
  %v5913 = vpop.f32.mrb[0].mxu0
  %v5914 = vadd.f32 %v5761, %v5913
  %v5915 = vpop.f32.mrb[0].mxu0
  %v5916 = vadd.f32 %v5763, %v5915
  %v5917 = vpop.f32.mrb[0].mxu0
  %v5918 = vadd.f32 %v5765, %v5917
  %v5919 = vpop.f32.mrb[0].mxu0
  %v5920 = vadd.f32 %v5767, %v5919
  %5921 = vmatprep.mubr.bf16.mxu0 %v5455
  %5922 = vmatmul.mubr.bf16.gmra.mrb[0].mxu0 %v5454
  %v5923 = vpop.f32.mrb[0].mxu0
  %v5924 = vadd.f32 %v5771, %v5923
  %v5925 = vpop.f32.mrb[0].mxu0
  %v5926 = vadd.f32 %v5773, %v5925
  %v5927 = vpop.f32.mrb[0].mxu0
  %v5928 = vadd.f32 %v5775, %v5927
  %v5929 = vpop.f32.mrb[0].mxu0
  %v5930 = vadd.f32 %v5777, %v5929
  %5931 = vmatprep.mubr.bf16.mxu0 %v5464
  %5932 = vmatmul.mubr.bf16.gmra.mrb[0].mxu0 %v5463
  %v5933 = vpop.f32.mrb[0].mxu0
  %v5934 = vadd.f32 %v5781, %v5933
  %v5935 = vpop.f32.mrb[0].mxu0
  %v5936 = vadd.f32 %v5783, %v5935
  %v5937 = vpop.f32.mrb[0].mxu0
  %v5938 = vadd.f32 %v5785, %v5937
  %v5939 = vpop.f32.mrb[0].mxu0
  %v5940 = vadd.f32 %v5787, %v5939
  %5941 = vmatprep.mubr.bf16.mxu0 %v5473
  %5942 = vmatmul.mubr.bf16.gmra.mrb[0].mxu0 %v5472
  %v5943 = vpop.f32.mrb[0].mxu0
  %v5944 = vadd.f32 %v5791, %v5943
  %v5945 = vpop.f32.mrb[0].mxu0
  %v5946 = vadd.f32 %v5793, %v5945
  %v5947 = vpop.f32.mrb[0].mxu0
  %v5948 = vadd.f32 %v5795, %v5947
  %v5949 = vpop.f32.mrb[0].mxu0
  %v5950 = vadd.f32 %v5797, %v5949
  %5951 = vmatprep.mubr.bf16.mxu0 %v5482
  %5952 = vmatmul.mubr.bf16.gmra.mrb[0].mxu0 %v5481
  %v5953 = vpop.f32.mrb[0].mxu0
  %v5954 = vadd.f32 %v5801, %v5953
  %v5955 = vpop.f32.mrb[0].mxu0
  %v5956 = vadd.f32 %v5803, %v5955
  %v5957 = vpop.f32.mrb[0].mxu0
  %v5958 = vadd.f32 %v5805, %v5957
  %v5959 = vpop.f32.mrb[0].mxu0
  %v5960 = vadd.f32 %v5807, %v5959
  %5961 = vmatprep.mubr.bf16.mxu0 %v5491
  %5962 = vmatmul.mubr.bf16.gmra.mrb[0].mxu0 %v5490
  %v5963 = vpop.f32.mrb[0].mxu0
  %v5964 = vadd.f32 %v5811, %v5963
  %v5965 = vpop.f32.mrb[0].mxu0
  %v5966 = vadd.f32 %v5813, %v5965
  %v5967 = vpop.f32.mrb[0].mxu0
  %v5968 = vadd.f32 %v5815, %v5967
  %v5969 = vpop.f32.mrb[0].mxu0
  %v5970 = vadd.f32 %v5817, %v5969
  %5971 = vdwg.mxu0
  %5972 = vmatprep.subr.bf16.mxu0 %v5562
  %5973 = vmatpush1.bf16.msra.mxu0 %v5561
  %5974 = vmatprep.subr.bf16.mxu0 %v5564
  %5975 = vmatpush1.bf16.msra.mxu0 %v5563
  %5976 = vmatprep.subr.bf16.mxu0 %v5566
  %5977 = vmatpush1.bf16.msra.mxu0 %v5565
  %5978 = vmatprep.subr.bf16.mxu0 %v5568
  %5979 = vmatpush1.bf16.msra.mxu0 %v5567
  %5980 = vmatprep.subr.bf16.mxu0 %v5570
  %5981 = vmatpush1.bf16.msra.mxu0 %v5569
  %5982 = vmatprep.subr.bf16.mxu0 %v5572
  %5983 = vmatpush1.bf16.msra.mxu0 %v5571
  %5984 = vmatprep.subr.bf16.mxu0 %v5574
  %5985 = vmatpush1.bf16.msra.mxu0 %v5573
  %5986 = vmatprep.subr.bf16.mxu0 %v5576
  %5987 = vmatpush1.bf16.msra.mxu0 %v5575
  %5988 = vmatprep.subr.bf16.mxu0 %v5578
  %5989 = vmatpush1.bf16.msra.mxu0 %v5577
  %5990 = vmatprep.subr.bf16.mxu0 %v5580
  %5991 = vmatpush1.bf16.msra.mxu0 %v5579
  %5992 = vmatprep.subr.bf16.mxu0 %v5582
  %5993 = vmatpush1.bf16.msra.mxu0 %v5581
  %5994 = vmatprep.subr.bf16.mxu0 %v5584
  %5995 = vmatpush1.bf16.msra.mxu0 %v5583
  %5996 = vmatprep.subr.bf16.mxu0 %v5586
  %5997 = vmatpush1.bf16.msra.mxu0 %v5585
  %5998 = vmatprep.subr.bf16.mxu0 %v5588
  %5999 = vmatpush1.bf16.msra.mxu0 %v5587
  %6000 = vmatprep.subr.bf16.mxu0 %v5590
  %6001 = vmatpush1.bf16.msra.mxu0 %v5589
  %6002 = vmatprep.subr.bf16.mxu0 %v5592
  %6003 = vmatpush1.bf16.msra.mxu0 %v5591
  %6004 = vmatprep.mubr.bf16.mxu0 %v5394
  %6005 = vmatmul.mubr.bf16.gmra.mrb[0].mxu0 %v5393
  %v6006 = vpop.f32.mrb[0].mxu0
  %v6007 = vadd.f32 %v5854, %v6006
  %v6008 = vpop.f32.mrb[0].mxu0
  %v6009 = vadd.f32 %v5856, %v6008
  %v6010 = vpop.f32.mrb[0].mxu0
  %v6011 = vadd.f32 %v5858, %v6010
  %v6012 = vpop.f32.mrb[0].mxu0
  %v6013 = vadd.f32 %v5860, %v6012
  %6014 = vmatprep.mubr.bf16.mxu0 %v5403
  %6015 = vmatmul.mubr.bf16.gmra.mrb[0].mxu0 %v5402
  %v6016 = vpop.f32.mrb[0].mxu0
  %v6017 = vadd.f32 %v5864, %v6016
  %v6018 = vpop.f32.mrb[0].mxu0
  %v6019 = vadd.f32 %v5866, %v6018
  %v6020 = vpop.f32.mrb[0].mxu0
  %v6021 = vadd.f32 %v5868, %v6020
  %v6022 = vpop.f32.mrb[0].mxu0
  %v6023 = vadd.f32 %v5870, %v6022
  %6024 = vmatprep.mubr.bf16.mxu0 %v5412
  %6025 = vmatmul.mubr.bf16.gmra.mrb[0].mxu0 %v5411
  %v6026 = vpop.f32.mrb[0].mxu0
  %v6027 = vadd.f32 %v5874, %v6026
  %v6028 = vpop.f32.mrb[0].mxu0
  %v6029 = vadd.f32 %v5876, %v6028
  %v6030 = vpop.f32.mrb[0].mxu0
  %v6031 = vadd.f32 %v5878, %v6030
  %v6032 = vpop.f32.mrb[0].mxu0
  %v6033 = vadd.f32 %v5880, %v6032
  %6034 = vmatprep.mubr.bf16.mxu0 %v5421
  %6035 = vmatmul.mubr.bf16.gmra.mrb[0].mxu0 %v5420
  %v6036 = vpop.f32.mrb[0].mxu0
  %v6037 = vadd.f32 %v5884, %v6036
  %v6038 = vpop.f32.mrb[0].mxu0
  %v6039 = vadd.f32 %v5886, %v6038
  %v6040 = vpop.f32.mrb[0].mxu0
  %v6041 = vadd.f32 %v5888, %v6040
  %v6042 = vpop.f32.mrb[0].mxu0
  %v6043 = vadd.f32 %v5890, %v6042
  %6044 = vmatprep.mubr.bf16.mxu0 %v5430
  %6045 = vmatmul.mubr.bf16.gmra.mrb[0].mxu0 %v5429
  %v6046 = vpop.f32.mrb[0].mxu0
  %v6047 = vadd.f32 %v5894, %v6046
  %v6048 = vpop.f32.mrb[0].mxu0
  %v6049 = vadd.f32 %v5896, %v6048
  %v6050 = vpop.f32.mrb[0].mxu0
  %v6051 = vadd.f32 %v5898, %v6050
  %v6052 = vpop.f32.mrb[0].mxu0
  %v6053 = vadd.f32 %v5900, %v6052
  %6054 = vmatprep.mubr.bf16.mxu0 %v5439
  %6055 = vmatmul.mubr.bf16.gmra.mrb[0].mxu0 %v5438
  %v6056 = vpop.f32.mrb[0].mxu0
  %v6057 = vadd.f32 %v5904, %v6056
  %v6058 = vpop.f32.mrb[0].mxu0
  %v6059 = vadd.f32 %v5906, %v6058
  %v6060 = vpop.f32.mrb[0].mxu0
  %v6061 = vadd.f32 %v5908, %v6060
  %v6062 = vpop.f32.mrb[0].mxu0
  %v6063 = vadd.f32 %v5910, %v6062
  %6064 = vmatprep.mubr.bf16.mxu0 %v5448
  %6065 = vmatmul.mubr.bf16.gmra.mrb[0].mxu0 %v5447
  %v6066 = vpop.f32.mrb[0].mxu0
  %v6067 = vadd.f32 %v5914, %v6066
  %v6068 = vpop.f32.mrb[0].mxu0
  %v6069 = vadd.f32 %v5916, %v6068
  %v6070 = vpop.f32.mrb[0].mxu0
  %v6071 = vadd.f32 %v5918, %v6070
  %v6072 = vpop.f32.mrb[0].mxu0
  %v6073 = vadd.f32 %v5920, %v6072
  %6074 = vmatprep.mubr.bf16.mxu0 %v5457
  %6075 = vmatmul.mubr.bf16.gmra.mrb[0].mxu0 %v5456
  %v6076 = vpop.f32.mrb[0].mxu0
  %v6077 = vadd.f32 %v5924, %v6076
  %v6078 = vpop.f32.mrb[0].mxu0
  %v6079 = vadd.f32 %v5926, %v6078
  %v6080 = vpop.f32.mrb[0].mxu0
  %v6081 = vadd.f32 %v5928, %v6080
  %v6082 = vpop.f32.mrb[0].mxu0
  %v6083 = vadd.f32 %v5930, %v6082
  %6084 = vmatprep.mubr.bf16.mxu0 %v5466
  %6085 = vmatmul.mubr.bf16.gmra.mrb[0].mxu0 %v5465
  %v6086 = vpop.f32.mrb[0].mxu0
  %v6087 = vadd.f32 %v5934, %v6086
  %v6088 = vpop.f32.mrb[0].mxu0
  %v6089 = vadd.f32 %v5936, %v6088
  %v6090 = vpop.f32.mrb[0].mxu0
  %v6091 = vadd.f32 %v5938, %v6090
  %v6092 = vpop.f32.mrb[0].mxu0
  %v6093 = vadd.f32 %v5940, %v6092
  %6094 = vmatprep.mubr.bf16.mxu0 %v5475
  %6095 = vmatmul.mubr.bf16.gmra.mrb[0].mxu0 %v5474
  %v6096 = vpop.f32.mrb[0].mxu0
  %v6097 = vadd.f32 %v5944, %v6096
  %v6098 = vpop.f32.mrb[0].mxu0
  %v6099 = vadd.f32 %v5946, %v6098
  %v6100 = vpop.f32.mrb[0].mxu0
  %v6101 = vadd.f32 %v5948, %v6100
  %v6102 = vpop.f32.mrb[0].mxu0
  %v6103 = vadd.f32 %v5950, %v6102
  %6104 = vmatprep.mubr.bf16.mxu0 %v5484
  %6105 = vmatmul.mubr.bf16.gmra.mrb[0].mxu0 %v5483
  %v6106 = vpop.f32.mrb[0].mxu0
  %v6107 = vadd.f32 %v5954, %v6106
  %v6108 = vpop.f32.mrb[0].mxu0
  %v6109 = vadd.f32 %v5956, %v6108
  %v6110 = vpop.f32.mrb[0].mxu0
  %v6111 = vadd.f32 %v5958, %v6110
  %v6112 = vpop.f32.mrb[0].mxu0
  %v6113 = vadd.f32 %v5960, %v6112
  %6114 = vmatprep.mubr.bf16.mxu0 %v5493
  %6115 = vmatmul.mubr.bf16.gmra.mrb[0].mxu0 %v5492
  %v6116 = vpop.f32.mrb[0].mxu0
  %v6117 = vadd.f32 %v5964, %v6116
  %v6118 = vpop.f32.mrb[0].mxu0
  %v6119 = vadd.f32 %v5966, %v6118
  %v6120 = vpop.f32.mrb[0].mxu0
  %v6121 = vadd.f32 %v5968, %v6120
  %v6122 = vpop.f32.mrb[0].mxu0
  %v6123 = vadd.f32 %v5970, %v6122
  %6124 = vdwg.mxu0
  %6125 = vmatprep.subr.bf16.mxu0 %v5594
  %6126 = vmatpush1.bf16.msra.mxu0 %v5593
  %6127 = vmatprep.subr.bf16.mxu0 %v5596
  %6128 = vmatpush1.bf16.msra.mxu0 %v5595
  %6129 = vmatprep.subr.bf16.mxu0 %v5598
  %6130 = vmatpush1.bf16.msra.mxu0 %v5597
  %6131 = vmatprep.subr.bf16.mxu0 %v5600
  %6132 = vmatpush1.bf16.msra.mxu0 %v5599
  %6133 = vmatprep.subr.bf16.mxu0 %v5602
  %6134 = vmatpush1.bf16.msra.mxu0 %v5601
  %6135 = vmatprep.subr.bf16.mxu0 %v5604
  %6136 = vmatpush1.bf16.msra.mxu0 %v5603
  %6137 = vmatprep.subr.bf16.mxu0 %v5606
  %6138 = vmatpush1.bf16.msra.mxu0 %v5605
  %6139 = vmatprep.subr.bf16.mxu0 %v5608
  %6140 = vmatpush1.bf16.msra.mxu0 %v5607
  %6141 = vmatprep.subr.bf16.mxu0 %v5610
  %6142 = vmatpush1.bf16.msra.mxu0 %v5609
  %6143 = vmatprep.subr.bf16.mxu0 %v5612
  %6144 = vmatpush1.bf16.msra.mxu0 %v5611
  %6145 = vmatprep.subr.bf16.mxu0 %v5614
  %6146 = vmatpush1.bf16.msra.mxu0 %v5613
  %6147 = vmatprep.subr.bf16.mxu0 %v5616
  %6148 = vmatpush1.bf16.msra.mxu0 %v5615
  %6149 = vmatprep.subr.bf16.mxu0 %v5618
  %6150 = vmatpush1.bf16.msra.mxu0 %v5617
  %6151 = vmatprep.subr.bf16.mxu0 %v5620
  %6152 = vmatpush1.bf16.msra.mxu0 %v5619
  %6153 = vmatprep.subr.bf16.mxu0 %v5622
  %6154 = vmatpush1.bf16.msra.mxu0 %v5621
  %6155 = vmatprep.subr.bf16.mxu0 %v5624
  %6156 = vmatpush1.bf16.msra.mxu0 %v5623
  %6157 = vmatprep.mubr.bf16.mxu0 %v5396
  %6158 = vmatmul.mubr.bf16.gmra.mrb[0].mxu0 %v5395
  %v6159 = vpop.f32.mrb[0].mxu0
  %v6160 = vadd.f32 %v6007, %v6159
  %v6161 = vpop.f32.mrb[0].mxu0
  %v6162 = vadd.f32 %v6009, %v6161
  %v6163 = vpop.f32.mrb[0].mxu0
  %v6164 = vadd.f32 %v6011, %v6163
  %v6165 = vpop.f32.mrb[0].mxu0
  %v6166 = vadd.f32 %v6013, %v6165
  %6167 = vmatprep.mubr.bf16.mxu0 %v5405
  %6168 = vmatmul.mubr.bf16.gmra.mrb[0].mxu0 %v5404
  %v6169 = vpop.f32.mrb[0].mxu0
  %v6170 = vadd.f32 %v6017, %v6169
  %v6171 = vpop.f32.mrb[0].mxu0
  %v6172 = vadd.f32 %v6019, %v6171
  %v6173 = vpop.f32.mrb[0].mxu0
  %v6174 = vadd.f32 %v6021, %v6173
  %v6175 = vpop.f32.mrb[0].mxu0
  %v6176 = vadd.f32 %v6023, %v6175
  %6177 = vmatprep.mubr.bf16.mxu0 %v5414
  %6178 = vmatmul.mubr.bf16.gmra.mrb[0].mxu0 %v5413
  %v6179 = vpop.f32.mrb[0].mxu0
  %v6180 = vadd.f32 %v6027, %v6179
  %v6181 = vpop.f32.mrb[0].mxu0
  %v6182 = vadd.f32 %v6029, %v6181
  %v6183 = vpop.f32.mrb[0].mxu0
  %v6184 = vadd.f32 %v6031, %v6183
  %v6185 = vpop.f32.mrb[0].mxu0
  %v6186 = vadd.f32 %v6033, %v6185
  %6187 = vmatprep.mubr.bf16.mxu0 %v5423
  %6188 = vmatmul.mubr.bf16.gmra.mrb[0].mxu0 %v5422
  %v6189 = vpop.f32.mrb[0].mxu0
  %v6190 = vadd.f32 %v6037, %v6189
  %v6191 = vpop.f32.mrb[0].mxu0
  %v6192 = vadd.f32 %v6039, %v6191
  %v6193 = vpop.f32.mrb[0].mxu0
  %v6194 = vadd.f32 %v6041, %v6193
  %v6195 = vpop.f32.mrb[0].mxu0
  %v6196 = vadd.f32 %v6043, %v6195
  %6197 = vmatprep.mubr.bf16.mxu0 %v5432
  %6198 = vmatmul.mubr.bf16.gmra.mrb[0].mxu0 %v5431
  %v6199 = vpop.f32.mrb[0].mxu0
  %v6200 = vadd.f32 %v6047, %v6199
  %v6201 = vpop.f32.mrb[0].mxu0
  %v6202 = vadd.f32 %v6049, %v6201
  %v6203 = vpop.f32.mrb[0].mxu0
  %v6204 = vadd.f32 %v6051, %v6203
  %v6205 = vpop.f32.mrb[0].mxu0
  %v6206 = vadd.f32 %v6053, %v6205
  %6207 = vmatprep.mubr.bf16.mxu0 %v5441
  %6208 = vmatmul.mubr.bf16.gmra.mrb[0].mxu0 %v5440
  %v6209 = vpop.f32.mrb[0].mxu0
  %v6210 = vadd.f32 %v6057, %v6209
  %v6211 = vpop.f32.mrb[0].mxu0
  %v6212 = vadd.f32 %v6059, %v6211
  %v6213 = vpop.f32.mrb[0].mxu0
  %v6214 = vadd.f32 %v6061, %v6213
  %v6215 = vpop.f32.mrb[0].mxu0
  %v6216 = vadd.f32 %v6063, %v6215
  %6217 = vmatprep.mubr.bf16.mxu0 %v5450
  %6218 = vmatmul.mubr.bf16.gmra.mrb[0].mxu0 %v5449
  %v6219 = vpop.f32.mrb[0].mxu0
  %v6220 = vadd.f32 %v6067, %v6219
  %v6221 = vpop.f32.mrb[0].mxu0
  %v6222 = vadd.f32 %v6069, %v6221
  %v6223 = vpop.f32.mrb[0].mxu0
  %v6224 = vadd.f32 %v6071, %v6223
  %v6225 = vpop.f32.mrb[0].mxu0
  %v6226 = vadd.f32 %v6073, %v6225
  %6227 = vmatprep.mubr.bf16.mxu0 %v5459
  %6228 = vmatmul.mubr.bf16.gmra.mrb[0].mxu0 %v5458
  %v6229 = vpop.f32.mrb[0].mxu0
  %v6230 = vadd.f32 %v6077, %v6229
  %v6231 = vpop.f32.mrb[0].mxu0
  %v6232 = vadd.f32 %v6079, %v6231
  %v6233 = vpop.f32.mrb[0].mxu0
  %v6234 = vadd.f32 %v6081, %v6233
  %v6235 = vpop.f32.mrb[0].mxu0
  %v6236 = vadd.f32 %v6083, %v6235
  %6237 = vmatprep.mubr.bf16.mxu0 %v5468
  %6238 = vmatmul.mubr.bf16.gmra.mrb[0].mxu0 %v5467
  %v6239 = vpop.f32.mrb[0].mxu0
  %v6240 = vadd.f32 %v6087, %v6239
  %v6241 = vpop.f32.mrb[0].mxu0
  %v6242 = vadd.f32 %v6089, %v6241
  %v6243 = vpop.f32.mrb[0].mxu0
  %v6244 = vadd.f32 %v6091, %v6243
  %v6245 = vpop.f32.mrb[0].mxu0
  %v6246 = vadd.f32 %v6093, %v6245
  %6247 = vmatprep.mubr.bf16.mxu0 %v5477
  %6248 = vmatmul.mubr.bf16.gmra.mrb[0].mxu0 %v5476
  %v6249 = vpop.f32.mrb[0].mxu0
  %v6250 = vadd.f32 %v6097, %v6249
  %v6251 = vpop.f32.mrb[0].mxu0
  %v6252 = vadd.f32 %v6099, %v6251
  %v6253 = vpop.f32.mrb[0].mxu0
  %v6254 = vadd.f32 %v6101, %v6253
  %v6255 = vpop.f32.mrb[0].mxu0
  %v6256 = vadd.f32 %v6103, %v6255
  %6257 = vmatprep.mubr.bf16.mxu0 %v5486
  %6258 = vmatmul.mubr.bf16.gmra.mrb[0].mxu0 %v5485
  %v6259 = vpop.f32.mrb[0].mxu0
  %v6260 = vadd.f32 %v6107, %v6259
  %v6261 = vpop.f32.mrb[0].mxu0
  %v6262 = vadd.f32 %v6109, %v6261
  %v6263 = vpop.f32.mrb[0].mxu0
  %v6264 = vadd.f32 %v6111, %v6263
  %v6265 = vpop.f32.mrb[0].mxu0
  %v6266 = vadd.f32 %v6113, %v6265
  %6267 = vmatprep.mubr.bf16.mxu0 %v5495
  %6268 = vmatmul.mubr.bf16.gmra.mrb[0].mxu0 %v5494
  %v6269 = vpop.f32.mrb[0].mxu0
  %v6270 = vadd.f32 %v6117, %v6269
  %v6271 = vpop.f32.mrb[0].mxu0
  %v6272 = vadd.f32 %v6119, %v6271
  %v6273 = vpop.f32.mrb[0].mxu0
  %v6274 = vadd.f32 %v6121, %v6273
  %v6275 = vpop.f32.mrb[0].mxu0
  %v6276 = vadd.f32 %v6123, %v6275
  %6277 = vdwg.mxu0
  %6278 = vmatprep.subr.bf16.mxu0 %v5626
  %6279 = vmatpush1.bf16.msra.mxu0 %v5625
  %6280 = vmatprep.subr.bf16.mxu0 %v5628
  %6281 = vmatpush1.bf16.msra.mxu0 %v5627
  %6282 = vmatprep.subr.bf16.mxu0 0
  %6283 = vmatpush1.bf16.msra.mxu0 0
  %6284 = vmatprep.subr.bf16.mxu0 0
  %6285 = vmatpush1.bf16.msra.mxu0 0
  %6286 = vmatprep.subr.bf16.mxu0 0
  %6287 = vmatpush1.bf16.msra.mxu0 0
  %6288 = vmatprep.subr.bf16.mxu0 0
  %6289 = vmatpush1.bf16.msra.mxu0 0
  %6290 = vmatprep.subr.bf16.mxu0 0
  %6291 = vmatpush1.bf16.msra.mxu0 0
  %6292 = vmatprep.subr.bf16.mxu0 0
  %6293 = vmatpush1.bf16.msra.mxu0 0
  %6294 = vmatprep.subr.bf16.mxu0 0
  %6295 = vmatpush1.bf16.msra.mxu0 0
  %6296 = vmatprep.subr.bf16.mxu0 0
  %6297 = vmatpush1.bf16.msra.mxu0 0
  %6298 = vmatprep.subr.bf16.mxu0 0
  %6299 = vmatpush1.bf16.msra.mxu0 0
  %6300 = vmatprep.subr.bf16.mxu0 0
  %6301 = vmatpush1.bf16.msra.mxu0 0
  %6302 = vmatprep.subr.bf16.mxu0 0
  %6303 = vmatpush1.bf16.msra.mxu0 0
  %6304 = vmatprep.subr.bf16.mxu0 0
  %6305 = vmatpush1.bf16.msra.mxu0 0
  %6306 = vmatprep.subr.bf16.mxu0 0
  %6307 = vmatpush1.bf16.msra.mxu0 0
  %6308 = vmatprep.subr.bf16.mxu0 0
  %6309 = vmatpush1.bf16.msra.mxu0 0
  %6310 = vmatprep.mubr.bf16.mxu0 0
  %6311 = vmatmul.mubr.bf16.gmra.mrb[0].mxu0 %v5631
  %v6312 = vpop.f32.mrb[0].mxu0
  %v6313 = vadd.f32 %v6160, %v6312
  %v6314 = vpop.f32.mrb[0].mxu0
  %v6315 = vadd.f32 %v6162, %v6314
  %v6316 = vpop.f32.mrb[0].mxu0
  %v6317 = vadd.f32 %v6164, %v6316
  %v6318 = vpop.f32.mrb[0].mxu0
  %v6319 = vadd.f32 %v6166, %v6318
  %6320 = vmatprep.mubr.bf16.mxu0 0
  %6321 = vmatmul.mubr.bf16.gmra.mrb[0].mxu0 %v5634
  %v6322 = vpop.f32.mrb[0].mxu0
  %v6323 = vadd.f32 %v6170, %v6322
  %v6324 = vpop.f32.mrb[0].mxu0
  %v6325 = vadd.f32 %v6172, %v6324
  %v6326 = vpop.f32.mrb[0].mxu0
  %v6327 = vadd.f32 %v6174, %v6326
  %v6328 = vpop.f32.mrb[0].mxu0
  %v6329 = vadd.f32 %v6176, %v6328
  %6330 = vmatprep.mubr.bf16.mxu0 0
  %6331 = vmatmul.mubr.bf16.gmra.mrb[0].mxu0 %v5637
  %v6332 = vpop.f32.mrb[0].mxu0
  %v6333 = vadd.f32 %v6180, %v6332
  %v6334 = vpop.f32.mrb[0].mxu0
  %v6335 = vadd.f32 %v6182, %v6334
  %v6336 = vpop.f32.mrb[0].mxu0
  %v6337 = vadd.f32 %v6184, %v6336
  %v6338 = vpop.f32.mrb[0].mxu0
  %v6339 = vadd.f32 %v6186, %v6338
  %6340 = vmatprep.mubr.bf16.mxu0 0
  %6341 = vmatmul.mubr.bf16.gmra.mrb[0].mxu0 %v5640
  %v6342 = vpop.f32.mrb[0].mxu0
  %v6343 = vadd.f32 %v6190, %v6342
  %v6344 = vpop.f32.mrb[0].mxu0
  %v6345 = vadd.f32 %v6192, %v6344
  %v6346 = vpop.f32.mrb[0].mxu0
  %v6347 = vadd.f32 %v6194, %v6346
  %v6348 = vpop.f32.mrb[0].mxu0
  %v6349 = vadd.f32 %v6196, %v6348
  %6350 = vmatprep.mubr.bf16.mxu0 0
  %6351 = vmatmul.mubr.bf16.gmra.mrb[0].mxu0 %v5643
  %v6352 = vpop.f32.mrb[0].mxu0
  %v6353 = vadd.f32 %v6200, %v6352
  %v6354 = vpop.f32.mrb[0].mxu0
  %v6355 = vadd.f32 %v6202, %v6354
  %v6356 = vpop.f32.mrb[0].mxu0
  %v6357 = vadd.f32 %v6204, %v6356
  %v6358 = vpop.f32.mrb[0].mxu0
  %v6359 = vadd.f32 %v6206, %v6358
  %6360 = vmatprep.mubr.bf16.mxu0 0
  %6361 = vmatmul.mubr.bf16.gmra.mrb[0].mxu0 %v5646
  %v6362 = vpop.f32.mrb[0].mxu0
  %v6363 = vadd.f32 %v6210, %v6362
  %v6364 = vpop.f32.mrb[0].mxu0
  %v6365 = vadd.f32 %v6212, %v6364
  %v6366 = vpop.f32.mrb[0].mxu0
  %v6367 = vadd.f32 %v6214, %v6366
  %v6368 = vpop.f32.mrb[0].mxu0
  %v6369 = vadd.f32 %v6216, %v6368
  %6370 = vmatprep.mubr.bf16.mxu0 0
  %6371 = vmatmul.mubr.bf16.gmra.mrb[0].mxu0 %v5649
  %v6372 = vpop.f32.mrb[0].mxu0
  %v6373 = vadd.f32 %v6220, %v6372
  %v6374 = vpop.f32.mrb[0].mxu0
  %v6375 = vadd.f32 %v6222, %v6374
  %v6376 = vpop.f32.mrb[0].mxu0
  %v6377 = vadd.f32 %v6224, %v6376
  %v6378 = vpop.f32.mrb[0].mxu0
  %v6379 = vadd.f32 %v6226, %v6378
  %6380 = vmatprep.mubr.bf16.mxu0 0
  %6381 = vmatmul.mubr.bf16.gmra.mrb[0].mxu0 %v5652
  %v6382 = vpop.f32.mrb[0].mxu0
  %v6383 = vadd.f32 %v6230, %v6382
  %v6384 = vpop.f32.mrb[0].mxu0
  %v6385 = vadd.f32 %v6232, %v6384
  %v6386 = vpop.f32.mrb[0].mxu0
  %v6387 = vadd.f32 %v6234, %v6386
  %v6388 = vpop.f32.mrb[0].mxu0
  %v6389 = vadd.f32 %v6236, %v6388
  %6390 = vmatprep.mubr.bf16.mxu0 0
  %6391 = vmatmul.mubr.bf16.gmra.mrb[0].mxu0 %v5655
  %v6392 = vpop.f32.mrb[0].mxu0
  %v6393 = vadd.f32 %v6240, %v6392
  %v6394 = vpop.f32.mrb[0].mxu0
  %v6395 = vadd.f32 %v6242, %v6394
  %v6396 = vpop.f32.mrb[0].mxu0
  %v6397 = vadd.f32 %v6244, %v6396
  %v6398 = vpop.f32.mrb[0].mxu0
  %v6399 = vadd.f32 %v6246, %v6398
  %6400 = vmatprep.mubr.bf16.mxu0 0
  %6401 = vmatmul.mubr.bf16.gmra.mrb[0].mxu0 %v5658
  %v6402 = vpop.f32.mrb[0].mxu0
  %v6403 = vadd.f32 %v6250, %v6402
  %v6404 = vpop.f32.mrb[0].mxu0
  %v6405 = vadd.f32 %v6252, %v6404
  %v6406 = vpop.f32.mrb[0].mxu0
  %v6407 = vadd.f32 %v6254, %v6406
  %v6408 = vpop.f32.mrb[0].mxu0
  %v6409 = vadd.f32 %v6256, %v6408
  %6410 = vmatprep.mubr.bf16.mxu0 0
  %6411 = vmatmul.mubr.bf16.gmra.mrb[0].mxu0 %v5661
  %v6412 = vpop.f32.mrb[0].mxu0
  %v6413 = vadd.f32 %v6260, %v6412
  %v6414 = vpop.f32.mrb[0].mxu0
  %v6415 = vadd.f32 %v6262, %v6414
  %v6416 = vpop.f32.mrb[0].mxu0
  %v6417 = vadd.f32 %v6264, %v6416
  %v6418 = vpop.f32.mrb[0].mxu0
  %v6419 = vadd.f32 %v6266, %v6418
  %6420 = vmatprep.mubr.bf16.mxu0 0
  %6421 = vmatmul.mubr.bf16.gmra.mrb[0].mxu0 %v5664
  %v6422 = vpop.f32.mrb[0].mxu0
  %v6423 = vadd.f32 %v6270, %v6422
  %v6424 = vpop.f32.mrb[0].mxu0
  %v6425 = vadd.f32 %v6272, %v6424
  %v6426 = vpop.f32.mrb[0].mxu0
  %v6427 = vadd.f32 %v6274, %v6426
  %v6428 = vpop.f32.mrb[0].mxu0
  %v6429 = vadd.f32 %v6276, %v6428
  %6430 = vdwg.mxu0
  %v6431 = vsel %vm288, %v6315, 0.0
  %v6432 = vadd.f32 %v6313, %v6431
  %6433 = vadd.xlane.f32.xlu0 %v6432
  %v6434 = vpop.xlane.xlu0 %6433
  %v6435 = vsel %vm288, %v6319, 0.0
  %v6436 = vadd.f32 %v6317, %v6435
  %6437 = vadd.xlane.f32.xlu0 %v6436
  %v6438 = vpop.xlane.xlu0 %6437
  %v6439 = vsel %vm288, %v6325, 0.0
  %v6440 = vadd.f32 %v6323, %v6439
  %6441 = vadd.xlane.f32.xlu0 %v6440
  %v6442 = vpop.xlane.xlu0 %6441
  %v6443 = vsel %vm288, %v6329, 0.0
  %v6444 = vadd.f32 %v6327, %v6443
  %6445 = vadd.xlane.f32.xlu0 %v6444
  %v6446 = vpop.xlane.xlu0 %6445
  %v6447 = vsel %vm288, %v6335, 0.0
  %v6448 = vadd.f32 %v6333, %v6447
  %6449 = vadd.xlane.f32.xlu0 %v6448
  %v6450 = vpop.xlane.xlu0 %6449
  %v6451 = vsel %vm288, %v6339, 0.0
  %v6452 = vadd.f32 %v6337, %v6451
  %6453 = vadd.xlane.f32.xlu0 %v6452
  %v6454 = vpop.xlane.xlu0 %6453
  %v6455 = vsel %vm288, %v6345, 0.0
  %v6456 = vadd.f32 %v6343, %v6455
  %6457 = vadd.xlane.f32.xlu0 %v6456
  %v6458 = vpop.xlane.xlu0 %6457
  %v6459 = vsel %vm288, %v6349, 0.0
  %v6460 = vadd.f32 %v6347, %v6459
  %6461 = vadd.xlane.f32.xlu0 %v6460
  %v6462 = vpop.xlane.xlu0 %6461
  %v6463 = vsel %vm288, %v6355, 0.0
  %v6464 = vadd.f32 %v6353, %v6463
  %6465 = vadd.xlane.f32.xlu0 %v6464
  %v6466 = vpop.xlane.xlu0 %6465
  %v6467 = vsel %vm288, %v6359, 0.0
  %v6468 = vadd.f32 %v6357, %v6467
  %6469 = vadd.xlane.f32.xlu0 %v6468
  %v6470 = vpop.xlane.xlu0 %6469
  %v6471 = vsel %vm288, %v6365, 0.0
  %v6472 = vadd.f32 %v6363, %v6471
  %6473 = vadd.xlane.f32.xlu0 %v6472
  %v6474 = vpop.xlane.xlu0 %6473
  %v6475 = vsel %vm288, %v6369, 0.0
  %v6476 = vadd.f32 %v6367, %v6475
  %6477 = vadd.xlane.f32.xlu0 %v6476
  %v6478 = vpop.xlane.xlu0 %6477
  %v6479 = vsel %vm288, %v6375, 0.0
  %v6480 = vadd.f32 %v6373, %v6479
  %6481 = vadd.xlane.f32.xlu0 %v6480
  %v6482 = vpop.xlane.xlu0 %6481
  %v6483 = vsel %vm288, %v6379, 0.0
  %v6484 = vadd.f32 %v6377, %v6483
  %6485 = vadd.xlane.f32.xlu0 %v6484
  %v6486 = vpop.xlane.xlu0 %6485
  %v6487 = vsel %vm288, %v6385, 0.0
  %v6488 = vadd.f32 %v6383, %v6487
  %6489 = vadd.xlane.f32.xlu0 %v6488
  %v6490 = vpop.xlane.xlu0 %6489
  %v6491 = vsel %vm288, %v6389, 0.0
  %v6492 = vadd.f32 %v6387, %v6491
  %6493 = vadd.xlane.f32.xlu0 %v6492
  %v6494 = vpop.xlane.xlu0 %6493
  %v6495 = vsel %vm288, %v6395, 0.0
  %v6496 = vadd.f32 %v6393, %v6495
  %6497 = vadd.xlane.f32.xlu0 %v6496
  %v6498 = vpop.xlane.xlu0 %6497
  %v6499 = vsel %vm288, %v6399, 0.0
  %v6500 = vadd.f32 %v6397, %v6499
  %6501 = vadd.xlane.f32.xlu0 %v6500
  %v6502 = vpop.xlane.xlu0 %6501
  %v6503 = vsel %vm288, %v6405, 0.0
  %v6504 = vadd.f32 %v6403, %v6503
  %6505 = vadd.xlane.f32.xlu0 %v6504
  %v6506 = vpop.xlane.xlu0 %6505
  %v6507 = vsel %vm288, %v6409, 0.0
  %v6508 = vadd.f32 %v6407, %v6507
  %6509 = vadd.xlane.f32.xlu0 %v6508
  %v6510 = vpop.xlane.xlu0 %6509
  %v6511 = vsel %vm288, %v6415, 0.0
  %v6512 = vadd.f32 %v6413, %v6511
  %6513 = vadd.xlane.f32.xlu0 %v6512
  %v6514 = vpop.xlane.xlu0 %6513
  %v6515 = vsel %vm288, %v6419, 0.0
  %v6516 = vadd.f32 %v6417, %v6515
  %6517 = vadd.xlane.f32.xlu0 %v6516
  %v6518 = vpop.xlane.xlu0 %6517
  %v6519 = vsel %vm288, %v6425, 0.0
  %v6520 = vadd.f32 %v6423, %v6519
  %6521 = vadd.xlane.f32.xlu0 %v6520
  %v6522 = vpop.xlane.xlu0 %6521
  %v6523 = vsel %vm288, %v6429, 0.0
  %v6524 = vadd.f32 %v6427, %v6523
  %6525 = vadd.xlane.f32.xlu0 %v6524
  %v6526 = vpop.xlane.xlu0 %6525
  %v6527 = vmul.f32 %v6313, %v6313
  %v6528 = vmul.f32 %v6315, %v6315
  %v6529 = vmul.f32 %v6317, %v6317
  %v6530 = vmul.f32 %v6319, %v6319
  %v6531 = vmul.f32 %v6323, %v6323
  %v6532 = vmul.f32 %v6325, %v6325
  %v6533 = vmul.f32 %v6327, %v6327
  %v6534 = vmul.f32 %v6329, %v6329
  %v6535 = vmul.f32 %v6333, %v6333
  %v6536 = vmul.f32 %v6335, %v6335
  %v6537 = vmul.f32 %v6337, %v6337
  %v6538 = vmul.f32 %v6339, %v6339
  %v6539 = vmul.f32 %v6343, %v6343
  %v6540 = vmul.f32 %v6345, %v6345
  %v6541 = vmul.f32 %v6347, %v6347
  %v6542 = vmul.f32 %v6349, %v6349
  %v6543 = vmul.f32 %v6353, %v6353
  %v6544 = vmul.f32 %v6355, %v6355
  %v6545 = vmul.f32 %v6357, %v6357
  %v6546 = vmul.f32 %v6359, %v6359
  %v6547 = vmul.f32 %v6363, %v6363
  %v6548 = vmul.f32 %v6365, %v6365
  %v6549 = vmul.f32 %v6367, %v6367
  %v6550 = vmul.f32 %v6369, %v6369
  %v6551 = vmul.f32 %v6373, %v6373
  %v6552 = vmul.f32 %v6375, %v6375
  %v6553 = vmul.f32 %v6377, %v6377
  %v6554 = vmul.f32 %v6379, %v6379
  %v6555 = vmul.f32 %v6383, %v6383
  %v6556 = vmul.f32 %v6385, %v6385
  %v6557 = vmul.f32 %v6387, %v6387
  %v6558 = vmul.f32 %v6389, %v6389
  %v6559 = vmul.f32 %v6393, %v6393
  %v6560 = vmul.f32 %v6395, %v6395
  %v6561 = vmul.f32 %v6397, %v6397
  %v6562 = vmul.f32 %v6399, %v6399
  %v6563 = vmul.f32 %v6403, %v6403
  %v6564 = vmul.f32 %v6405, %v6405
  %v6565 = vmul.f32 %v6407, %v6407
  %v6566 = vmul.f32 %v6409, %v6409
  %v6567 = vmul.f32 %v6413, %v6413
  %v6568 = vmul.f32 %v6415, %v6415
  %v6569 = vmul.f32 %v6417, %v6417
  %v6570 = vmul.f32 %v6419, %v6419
  %v6571 = vmul.f32 %v6423, %v6423
  %v6572 = vmul.f32 %v6425, %v6425
  %v6573 = vmul.f32 %v6427, %v6427
  %v6574 = vmul.f32 %v6429, %v6429
  %v6575 = vsel %vm288, %v6528, 0.0
  %v6576 = vadd.f32 %v6527, %v6575
  %6577 = vadd.xlane.f32.xlu0 %v6576
  %v6578 = vpop.xlane.xlu0 %6577
  %v6579 = vsel %vm288, %v6530, 0.0
  %v6580 = vadd.f32 %v6529, %v6579
  %6581 = vadd.xlane.f32.xlu0 %v6580
  %v6582 = vpop.xlane.xlu0 %6581
  %v6583 = vsel %vm288, %v6532, 0.0
  %v6584 = vadd.f32 %v6531, %v6583
  %6585 = vadd.xlane.f32.xlu0 %v6584
  %v6586 = vpop.xlane.xlu0 %6585
  %v6587 = vsel %vm288, %v6534, 0.0
  %v6588 = vadd.f32 %v6533, %v6587
  %6589 = vadd.xlane.f32.xlu0 %v6588
  %v6590 = vpop.xlane.xlu0 %6589
  %v6591 = vsel %vm288, %v6536, 0.0
  %v6592 = vadd.f32 %v6535, %v6591
  %6593 = vadd.xlane.f32.xlu0 %v6592
  %v6594 = vpop.xlane.xlu0 %6593
  %v6595 = vsel %vm288, %v6538, 0.0
  %v6596 = vadd.f32 %v6537, %v6595
  %6597 = vadd.xlane.f32.xlu0 %v6596
  %v6598 = vpop.xlane.xlu0 %6597
  %v6599 = vsel %vm288, %v6540, 0.0
  %v6600 = vadd.f32 %v6539, %v6599
  %6601 = vadd.xlane.f32.xlu0 %v6600
  %v6602 = vpop.xlane.xlu0 %6601
  %v6603 = vsel %vm288, %v6542, 0.0
  %v6604 = vadd.f32 %v6541, %v6603
  %6605 = vadd.xlane.f32.xlu0 %v6604
  %v6606 = vpop.xlane.xlu0 %6605
  %v6607 = vsel %vm288, %v6544, 0.0
  %v6608 = vadd.f32 %v6543, %v6607
  %6609 = vadd.xlane.f32.xlu0 %v6608
  %v6610 = vpop.xlane.xlu0 %6609
  %v6611 = vsel %vm288, %v6546, 0.0
  %v6612 = vadd.f32 %v6545, %v6611
  %6613 = vadd.xlane.f32.xlu0 %v6612
  %v6614 = vpop.xlane.xlu0 %6613
  %v6615 = vsel %vm288, %v6548, 0.0
  %v6616 = vadd.f32 %v6547, %v6615
  %6617 = vadd.xlane.f32.xlu0 %v6616
  %v6618 = vpop.xlane.xlu0 %6617
  %v6619 = vsel %vm288, %v6550, 0.0
  %v6620 = vadd.f32 %v6549, %v6619
  %6621 = vadd.xlane.f32.xlu0 %v6620
  %v6622 = vpop.xlane.xlu0 %6621
  %v6623 = vsel %vm288, %v6552, 0.0
  %v6624 = vadd.f32 %v6551, %v6623
  %6625 = vadd.xlane.f32.xlu0 %v6624
  %v6626 = vpop.xlane.xlu0 %6625
  %v6627 = vsel %vm288, %v6554, 0.0
  %v6628 = vadd.f32 %v6553, %v6627
  %6629 = vadd.xlane.f32.xlu0 %v6628
  %v6630 = vpop.xlane.xlu0 %6629
  %v6631 = vsel %vm288, %v6556, 0.0
  %v6632 = vadd.f32 %v6555, %v6631
  %6633 = vadd.xlane.f32.xlu0 %v6632
  %v6634 = vpop.xlane.xlu0 %6633
  %v6635 = vsel %vm288, %v6558, 0.0
  %v6636 = vadd.f32 %v6557, %v6635
  %6637 = vadd.xlane.f32.xlu0 %v6636
  %v6638 = vpop.xlane.xlu0 %6637
  %v6639 = vsel %vm288, %v6560, 0.0
  %v6640 = vadd.f32 %v6559, %v6639
  %6641 = vadd.xlane.f32.xlu0 %v6640
  %v6642 = vpop.xlane.xlu0 %6641
  %v6643 = vsel %vm288, %v6562, 0.0
  %v6644 = vadd.f32 %v6561, %v6643
  %6645 = vadd.xlane.f32.xlu0 %v6644
  %v6646 = vpop.xlane.xlu0 %6645
  %v6647 = vsel %vm288, %v6564, 0.0
  %v6648 = vadd.f32 %v6563, %v6647
  %6649 = vadd.xlane.f32.xlu0 %v6648
  %v6650 = vpop.xlane.xlu0 %6649
  %v6651 = vsel %vm288, %v6566, 0.0
  %v6652 = vadd.f32 %v6565, %v6651
  %6653 = vadd.xlane.f32.xlu0 %v6652
  %v6654 = vpop.xlane.xlu0 %6653
  %v6655 = vsel %vm288, %v6568, 0.0
  %v6656 = vadd.f32 %v6567, %v6655
  %6657 = vadd.xlane.f32.xlu0 %v6656
  %v6658 = vpop.xlane.xlu0 %6657
  %v6659 = vsel %vm288, %v6570, 0.0
  %v6660 = vadd.f32 %v6569, %v6659
  %6661 = vadd.xlane.f32.xlu0 %v6660
  %v6662 = vpop.xlane.xlu0 %6661
  %v6663 = vsel %vm288, %v6572, 0.0
  %v6664 = vadd.f32 %v6571, %v6663
  %6665 = vadd.xlane.f32.xlu0 %v6664
  %v6666 = vpop.xlane.xlu0 %6665
  %v6667 = vsel %vm288, %v6574, 0.0
  %v6668 = vadd.f32 %v6573, %v6667
  %6669 = vadd.xlane.f32.xlu0 %v6668
  %v6670 = vpop.xlane.xlu0 %6669
  %v6671 = vmul.f32 %v6434, 0.0051020407
  %v6672 = vmul.f32 %v6438, 0.0051020407
  %v6673 = vmul.f32 %v6442, 0.0051020407
  %v6674 = vmul.f32 %v6446, 0.0051020407
  %v6675 = vmul.f32 %v6450, 0.0051020407
  %v6676 = vmul.f32 %v6454, 0.0051020407
  %v6677 = vmul.f32 %v6458, 0.0051020407
  %v6678 = vmul.f32 %v6462, 0.0051020407
  %v6679 = vmul.f32 %v6466, 0.0051020407
  %v6680 = vmul.f32 %v6470, 0.0051020407
  %v6681 = vmul.f32 %v6474, 0.0051020407
  %v6682 = vmul.f32 %v6478, 0.0051020407
  %v6683 = vmul.f32 %v6482, 0.0051020407
  %v6684 = vmul.f32 %v6486, 0.0051020407
  %v6685 = vmul.f32 %v6490, 0.0051020407
  %v6686 = vmul.f32 %v6494, 0.0051020407
  %v6687 = vmul.f32 %v6498, 0.0051020407
  %v6688 = vmul.f32 %v6502, 0.0051020407
  %v6689 = vmul.f32 %v6506, 0.0051020407
  %v6690 = vmul.f32 %v6510, 0.0051020407
  %v6691 = vmul.f32 %v6514, 0.0051020407
  %v6692 = vmul.f32 %v6518, 0.0051020407
  %v6693 = vmul.f32 %v6522, 0.0051020407
  %v6694 = vmul.f32 %v6526, 0.0051020407
  %v6695 = vmul.f32 %v6578, 0.0051020407
  %v6696 = vmul.f32 %v6582, 0.0051020407
  %v6697 = vmul.f32 %v6586, 0.0051020407
  %v6698 = vmul.f32 %v6590, 0.0051020407
  %v6699 = vmul.f32 %v6594, 0.0051020407
  %v6700 = vmul.f32 %v6598, 0.0051020407
  %v6701 = vmul.f32 %v6602, 0.0051020407
  %v6702 = vmul.f32 %v6606, 0.0051020407
  %v6703 = vmul.f32 %v6610, 0.0051020407
  %v6704 = vmul.f32 %v6614, 0.0051020407
  %v6705 = vmul.f32 %v6618, 0.0051020407
  %v6706 = vmul.f32 %v6622, 0.0051020407
  %v6707 = vmul.f32 %v6626, 0.0051020407
  %v6708 = vmul.f32 %v6630, 0.0051020407
  %v6709 = vmul.f32 %v6634, 0.0051020407
  %v6710 = vmul.f32 %v6638, 0.0051020407
  %v6711 = vmul.f32 %v6642, 0.0051020407
  %v6712 = vmul.f32 %v6646, 0.0051020407
  %v6713 = vmul.f32 %v6650, 0.0051020407
  %v6714 = vmul.f32 %v6654, 0.0051020407
  %v6715 = vmul.f32 %v6658, 0.0051020407
  %v6716 = vmul.f32 %v6662, 0.0051020407
  %v6717 = vmul.f32 %v6666, 0.0051020407
  %v6718 = vmul.f32 %v6670, 0.0051020407
  %v6719 = vmul.f32 %v6671, %v6671
  %v6720 = vmul.f32 %v6672, %v6672
  %v6721 = vmul.f32 %v6673, %v6673
  %v6722 = vmul.f32 %v6674, %v6674
  %v6723 = vmul.f32 %v6675, %v6675
  %v6724 = vmul.f32 %v6676, %v6676
  %v6725 = vmul.f32 %v6677, %v6677
  %v6726 = vmul.f32 %v6678, %v6678
  %v6727 = vmul.f32 %v6679, %v6679
  %v6728 = vmul.f32 %v6680, %v6680
  %v6729 = vmul.f32 %v6681, %v6681
  %v6730 = vmul.f32 %v6682, %v6682
  %v6731 = vmul.f32 %v6683, %v6683
  %v6732 = vmul.f32 %v6684, %v6684
  %v6733 = vmul.f32 %v6685, %v6685
  %v6734 = vmul.f32 %v6686, %v6686
  %v6735 = vmul.f32 %v6687, %v6687
  %v6736 = vmul.f32 %v6688, %v6688
  %v6737 = vmul.f32 %v6689, %v6689
  %v6738 = vmul.f32 %v6690, %v6690
  %v6739 = vmul.f32 %v6691, %v6691
  %v6740 = vmul.f32 %v6692, %v6692
  %v6741 = vmul.f32 %v6693, %v6693
  %v6742 = vmul.f32 %v6694, %v6694
  %v6743 = vsub.f32 %v6695, %v6719
  %v6744 = vsub.f32 %v6696, %v6720
  %v6745 = vsub.f32 %v6697, %v6721
  %v6746 = vsub.f32 %v6698, %v6722
  %v6747 = vsub.f32 %v6699, %v6723
  %v6748 = vsub.f32 %v6700, %v6724
  %v6749 = vsub.f32 %v6701, %v6725
  %v6750 = vsub.f32 %v6702, %v6726
  %v6751 = vsub.f32 %v6703, %v6727
  %v6752 = vsub.f32 %v6704, %v6728
  %v6753 = vsub.f32 %v6705, %v6729
  %v6754 = vsub.f32 %v6706, %v6730
  %v6755 = vsub.f32 %v6707, %v6731
  %v6756 = vsub.f32 %v6708, %v6732
  %v6757 = vsub.f32 %v6709, %v6733
  %v6758 = vsub.f32 %v6710, %v6734
  %v6759 = vsub.f32 %v6711, %v6735
  %v6760 = vsub.f32 %v6712, %v6736
  %v6761 = vsub.f32 %v6713, %v6737
  %v6762 = vsub.f32 %v6714, %v6738
  %v6763 = vsub.f32 %v6715, %v6739
  %v6764 = vsub.f32 %v6716, %v6740
  %v6765 = vsub.f32 %v6717, %v6741
  %v6766 = vsub.f32 %v6718, %v6742
  %v6767 = vadd.f32 %v6743, 1e-05
  %v6768 = vadd.f32 %v6744, 1e-05
  %v6769 = vadd.f32 %v6745, 1e-05
  %v6770 = vadd.f32 %v6746, 1e-05
  %v6771 = vadd.f32 %v6747, 1e-05
  %v6772 = vadd.f32 %v6748, 1e-05
  %v6773 = vadd.f32 %v6749, 1e-05
  %v6774 = vadd.f32 %v6750, 1e-05
  %v6775 = vadd.f32 %v6751, 1e-05
  %v6776 = vadd.f32 %v6752, 1e-05
  %v6777 = vadd.f32 %v6753, 1e-05
  %v6778 = vadd.f32 %v6754, 1e-05
  %v6779 = vadd.f32 %v6755, 1e-05
  %v6780 = vadd.f32 %v6756, 1e-05
  %v6781 = vadd.f32 %v6757, 1e-05
  %v6782 = vadd.f32 %v6758, 1e-05
  %v6783 = vadd.f32 %v6759, 1e-05
  %v6784 = vadd.f32 %v6760, 1e-05
  %v6785 = vadd.f32 %v6761, 1e-05
  %v6786 = vadd.f32 %v6762, 1e-05
  %v6787 = vadd.f32 %v6763, 1e-05
  %v6788 = vadd.f32 %v6764, 1e-05
  %v6789 = vadd.f32 %v6765, 1e-05
  %v6790 = vadd.f32 %v6766, 1e-05
  %v6791 = vrsqrt.pop %v6767
  %v6792 = vrsqrt.pop %v6768
  %v6793 = vrsqrt.pop %v6769
  %v6794 = vrsqrt.pop %v6770
  %v6795 = vrsqrt.pop %v6771
  %v6796 = vrsqrt.pop %v6772
  %v6797 = vrsqrt.pop %v6773
  %v6798 = vrsqrt.pop %v6774
  %v6799 = vrsqrt.pop %v6775
  %v6800 = vrsqrt.pop %v6776
  %v6801 = vrsqrt.pop %v6777
  %v6802 = vrsqrt.pop %v6778
  %v6803 = vrsqrt.pop %v6779
  %v6804 = vrsqrt.pop %v6780
  %v6805 = vrsqrt.pop %v6781
  %v6806 = vrsqrt.pop %v6782
  %v6807 = vrsqrt.pop %v6783
  %v6808 = vrsqrt.pop %v6784
  %v6809 = vrsqrt.pop %v6785
  %v6810 = vrsqrt.pop %v6786
  %v6811 = vrsqrt.pop %v6787
  %v6812 = vrsqrt.pop %v6788
  %v6813 = vrsqrt.pop %v6789
  %v6814 = vrsqrt.pop %v6790
  %v6815 = vld [vmem:[%s4] sm:$0xff]
  %v6816 = vld [vmem:[%s4 + $0x8] sm:$0xff]
  %v6817 = vld [vmem:[%s4 + $0x10] sm:$0xff]
  %v6818 = vld [vmem:[%s4 + $0x18] sm:$0xff]
  %v6819 = vld [vmem:[%s4 + $0x20] sm:$0xff]
  %v6820 = vld [vmem:[%s4 + $0x28] sm:$0xff]
  %v6821 = vld [vmem:[%s4 + $0x30] sm:$0xff]
  %v6822 = vld [vmem:[%s4 + $0x38] sm:$0xff]
  %v6823 = vld [vmem:[%s4 + $0x40] sm:$0xff]
  %v6824 = vld [vmem:[%s4 + $0x48] sm:$0xff]
  %v6825 = vld [vmem:[%s4 + $0x50] sm:$0xff]
  %v6826 = vld [vmem:[%s4 + $0x58] sm:$0xff]
  %v6827 = vld [vmem:[%s4 + $0x60] sm:$0xff]
  %v6828 = vld [vmem:[%s4 + $0x68] sm:$0xff]
  %v6829 = vld [vmem:[%s4 + $0x70] sm:$0xff]
  %v6830 = vld [vmem:[%s4 + $0x78] sm:$0xff]
  %v6831 = vld [vmem:[%s4 + $0x80] sm:$0xff]
  %v6832 = vld [vmem:[%s4 + $0x88] sm:$0xff]
  %v6833 = vld [vmem:[%s4 + $0x90] sm:$0xff]
  %v6834 = vld [vmem:[%s4 + $0x98] sm:$0xff]
  %v6835 = vld [vmem:[%s4 + $0xa0] sm:$0xff]
  %v6836 = vld [vmem:[%s4 + $0xa8] sm:$0xff]
  %v6837 = vld [vmem:[%s4 + $0xb0] sm:$0xff]
  %v6838 = vld [vmem:[%s4 + $0xb8] sm:$0xff]
  %v6839 = vmul.f32 %v6791, %v6815
  %v6840 = vmul.f32 %v6792, %v6816
  %v6841 = vmul.f32 %v6793, %v6817
  %v6842 = vmul.f32 %v6794, %v6818
  %v6843 = vmul.f32 %v6795, %v6819
  %v6844 = vmul.f32 %v6796, %v6820
  %v6845 = vmul.f32 %v6797, %v6821
  %v6846 = vmul.f32 %v6798, %v6822
  %v6847 = vmul.f32 %v6799, %v6823
  %v6848 = vmul.f32 %v6800, %v6824
  %v6849 = vmul.f32 %v6801, %v6825
  %v6850 = vmul.f32 %v6802, %v6826
  %v6851 = vmul.f32 %v6803, %v6827
  %v6852 = vmul.f32 %v6804, %v6828
  %v6853 = vmul.f32 %v6805, %v6829
  %v6854 = vmul.f32 %v6806, %v6830
  %v6855 = vmul.f32 %v6807, %v6831
  %v6856 = vmul.f32 %v6808, %v6832
  %v6857 = vmul.f32 %v6809, %v6833
  %v6858 = vmul.f32 %v6810, %v6834
  %v6859 = vmul.f32 %v6811, %v6835
  %v6860 = vmul.f32 %v6812, %v6836
  %v6861 = vmul.f32 %v6813, %v6837
  %v6862 = vmul.f32 %v6814, %v6838
  %v6863 = vsub.f32 %v6313, %v6671
  %v6864 = vsub.f32 %v6315, %v6671
  %v6865 = vsub.f32 %v6317, %v6672
  %v6866 = vsub.f32 %v6319, %v6672
  %v6867 = vsub.f32 %v6323, %v6673
  %v6868 = vsub.f32 %v6325, %v6673
  %v6869 = vsub.f32 %v6327, %v6674
  %v6870 = vsub.f32 %v6329, %v6674
  %v6871 = vsub.f32 %v6333, %v6675
  %v6872 = vsub.f32 %v6335, %v6675
  %v6873 = vsub.f32 %v6337, %v6676
  %v6874 = vsub.f32 %v6339, %v6676
  %v6875 = vsub.f32 %v6343, %v6677
  %v6876 = vsub.f32 %v6345, %v6677
  %v6877 = vsub.f32 %v6347, %v6678
  %v6878 = vsub.f32 %v6349, %v6678
  %v6879 = vsub.f32 %v6353, %v6679
  %v6880 = vsub.f32 %v6355, %v6679
  %v6881 = vsub.f32 %v6357, %v6680
  %v6882 = vsub.f32 %v6359, %v6680
  %v6883 = vsub.f32 %v6363, %v6681
  %v6884 = vsub.f32 %v6365, %v6681
  %v6885 = vsub.f32 %v6367, %v6682
  %v6886 = vsub.f32 %v6369, %v6682
  %v6887 = vsub.f32 %v6373, %v6683
  %v6888 = vsub.f32 %v6375, %v6683
  %v6889 = vsub.f32 %v6377, %v6684
  %v6890 = vsub.f32 %v6379, %v6684
  %v6891 = vsub.f32 %v6383, %v6685
  %v6892 = vsub.f32 %v6385, %v6685
  %v6893 = vsub.f32 %v6387, %v6686
  %v6894 = vsub.f32 %v6389, %v6686
  %v6895 = vsub.f32 %v6393, %v6687
  %v6896 = vsub.f32 %v6395, %v6687
  %v6897 = vsub.f32 %v6397, %v6688
  %v6898 = vsub.f32 %v6399, %v6688
  %v6899 = vsub.f32 %v6403, %v6689
  %v6900 = vsub.f32 %v6405, %v6689
  %v6901 = vsub.f32 %v6407, %v6690
  %v6902 = vsub.f32 %v6409, %v6690
  %v6903 = vsub.f32 %v6413, %v6691
  %v6904 = vsub.f32 %v6415, %v6691
  %v6905 = vsub.f32 %v6417, %v6692
  %v6906 = vsub.f32 %v6419, %v6692
  %v6907 = vsub.f32 %v6423, %v6693
  %v6908 = vsub.f32 %v6425, %v6693
  %v6909 = vsub.f32 %v6427, %v6694
  %v6910 = vsub.f32 %v6429, %v6694
  %6912 = vset.pattern.permute.xlu0 0
  %6913 = vperm.xlu0 %6912, %v6839
  %v6914 = vpop.permute.xlu0 %6913
  %6917 = vset.pattern.permute.xlu0 0
  %6918 = vperm.xlu0 %6917, %v6840
  %v6919 = vpop.permute.xlu0 %6918
  %6922 = vset.pattern.permute.xlu0 0
  %6923 = vperm.xlu0 %6922, %v6841
  %v6924 = vpop.permute.xlu0 %6923
  %6927 = vset.pattern.permute.xlu0 0
  %6928 = vperm.xlu0 %6927, %v6842
  %v6929 = vpop.permute.xlu0 %6928
  %6932 = vset.pattern.permute.xlu0 0
  %6933 = vperm.xlu0 %6932, %v6843
  %v6934 = vpop.permute.xlu0 %6933
  %6937 = vset.pattern.permute.xlu0 0
  %6938 = vperm.xlu0 %6937, %v6844
  %v6939 = vpop.permute.xlu0 %6938
  %6942 = vset.pattern.permute.xlu0 0
  %6943 = vperm.xlu0 %6942, %v6845
  %v6944 = vpop.permute.xlu0 %6943
  %6947 = vset.pattern.permute.xlu0 0
  %6948 = vperm.xlu0 %6947, %v6846
  %v6949 = vpop.permute.xlu0 %6948
  %6952 = vset.pattern.permute.xlu0 0
  %6953 = vperm.xlu0 %6952, %v6847
  %v6954 = vpop.permute.xlu0 %6953
  %6957 = vset.pattern.permute.xlu0 0
  %6958 = vperm.xlu0 %6957, %v6848
  %v6959 = vpop.permute.xlu0 %6958
  %6962 = vset.pattern.permute.xlu0 0
  %6963 = vperm.xlu0 %6962, %v6849
  %v6964 = vpop.permute.xlu0 %6963
  %6967 = vset.pattern.permute.xlu0 0
  %6968 = vperm.xlu0 %6967, %v6850
  %v6969 = vpop.permute.xlu0 %6968
  %6972 = vset.pattern.permute.xlu0 0
  %6973 = vperm.xlu0 %6972, %v6851
  %v6974 = vpop.permute.xlu0 %6973
  %6977 = vset.pattern.permute.xlu0 0
  %6978 = vperm.xlu0 %6977, %v6852
  %v6979 = vpop.permute.xlu0 %6978
  %6982 = vset.pattern.permute.xlu0 0
  %6983 = vperm.xlu0 %6982, %v6853
  %v6984 = vpop.permute.xlu0 %6983
  %6987 = vset.pattern.permute.xlu0 0
  %6988 = vperm.xlu0 %6987, %v6854
  %v6989 = vpop.permute.xlu0 %6988
  %6992 = vset.pattern.permute.xlu0 0
  %6993 = vperm.xlu0 %6992, %v6855
  %v6994 = vpop.permute.xlu0 %6993
  %6997 = vset.pattern.permute.xlu0 0
  %6998 = vperm.xlu0 %6997, %v6856
  %v6999 = vpop.permute.xlu0 %6998
  %7002 = vset.pattern.permute.xlu0 0
  %7003 = vperm.xlu0 %7002, %v6857
  %v7004 = vpop.permute.xlu0 %7003
  %7007 = vset.pattern.permute.xlu0 0
  %7008 = vperm.xlu0 %7007, %v6858
  %v7009 = vpop.permute.xlu0 %7008
  %7012 = vset.pattern.permute.xlu0 0
  %7013 = vperm.xlu0 %7012, %v6859
  %v7014 = vpop.permute.xlu0 %7013
  %7017 = vset.pattern.permute.xlu0 0
  %7018 = vperm.xlu0 %7017, %v6860
  %v7019 = vpop.permute.xlu0 %7018
  %7022 = vset.pattern.permute.xlu0 0
  %7023 = vperm.xlu0 %7022, %v6861
  %v7024 = vpop.permute.xlu0 %7023
  %7027 = vset.pattern.permute.xlu0 0
  %7028 = vperm.xlu0 %7027, %v6862
  %v7029 = vpop.permute.xlu0 %7028
  %v7031 = vmul.f32 %v6863, %v6914
  %v7032 = vmul.f32 %v6864, %v6914
  %v7033 = vmul.f32 %v6865, %v6919
  %v7034 = vmul.f32 %v6866, %v6919
  %v7035 = vmul.f32 %v6867, %v6924
  %v7036 = vmul.f32 %v6868, %v6924
  %v7037 = vmul.f32 %v6869, %v6929
  %v7038 = vmul.f32 %v6870, %v6929
  %v7039 = vmul.f32 %v6871, %v6934
  %v7040 = vmul.f32 %v6872, %v6934
  %v7041 = vmul.f32 %v6873, %v6939
  %v7042 = vmul.f32 %v6874, %v6939
  %v7043 = vmul.f32 %v6875, %v6944
  %v7044 = vmul.f32 %v6876, %v6944
  %v7045 = vmul.f32 %v6877, %v6949
  %v7046 = vmul.f32 %v6878, %v6949
  %v7047 = vmul.f32 %v6879, %v6954
  %v7048 = vmul.f32 %v6880, %v6954
  %v7049 = vmul.f32 %v6881, %v6959
  %v7050 = vmul.f32 %v6882, %v6959
  %v7051 = vmul.f32 %v6883, %v6964
  %v7052 = vmul.f32 %v6884, %v6964
  %v7053 = vmul.f32 %v6885, %v6969
  %v7054 = vmul.f32 %v6886, %v6969
  %v7055 = vmul.f32 %v6887, %v6974
  %v7056 = vmul.f32 %v6888, %v6974
  %v7057 = vmul.f32 %v6889, %v6979
  %v7058 = vmul.f32 %v6890, %v6979
  %v7059 = vmul.f32 %v6891, %v6984
  %v7060 = vmul.f32 %v6892, %v6984
  %v7061 = vmul.f32 %v6893, %v6989
  %v7062 = vmul.f32 %v6894, %v6989
  %v7063 = vmul.f32 %v6895, %v6994
  %v7064 = vmul.f32 %v6896, %v6994
  %v7065 = vmul.f32 %v6897, %v6999
  %v7066 = vmul.f32 %v6898, %v6999
  %v7067 = vmul.f32 %v6899, %v7004
  %v7068 = vmul.f32 %v6900, %v7004
  %v7069 = vmul.f32 %v6901, %v7009
  %v7070 = vmul.f32 %v6902, %v7009
  %v7071 = vmul.f32 %v6903, %v7014
  %v7072 = vmul.f32 %v6904, %v7014
  %v7073 = vmul.f32 %v6905, %v7019
  %v7074 = vmul.f32 %v6906, %v7019
  %v7075 = vmul.f32 %v6907, %v7024
  %v7076 = vmul.f32 %v6908, %v7024
  %v7077 = vmul.f32 %v6909, %v7029
  %v7078 = vmul.f32 %v6910, %v7029
  %v7079 = vld [vmem:[%s5] sm:$0xff]
  %v7080 = vld [vmem:[%s5 + $0x8] sm:$0xff]
  %v7081 = vld [vmem:[%s5 + $0x10] sm:$0xff]
  %v7082 = vld [vmem:[%s5 + $0x18] sm:$0xff]
  %v7083 = vld [vmem:[%s5 + $0x20] sm:$0xff]
  %v7084 = vld [vmem:[%s5 + $0x28] sm:$0xff]
  %v7085 = vld [vmem:[%s5 + $0x30] sm:$0xff]
  %v7086 = vld [vmem:[%s5 + $0x38] sm:$0xff]
  %v7087 = vld [vmem:[%s5 + $0x40] sm:$0xff]
  %v7088 = vld [vmem:[%s5 + $0x48] sm:$0xff]
  %v7089 = vld [vmem:[%s5 + $0x50] sm:$0xff]
  %v7090 = vld [vmem:[%s5 + $0x58] sm:$0xff]
  %v7091 = vld [vmem:[%s5 + $0x60] sm:$0xff]
  %v7092 = vld [vmem:[%s5 + $0x68] sm:$0xff]
  %v7093 = vld [vmem:[%s5 + $0x70] sm:$0xff]
  %v7094 = vld [vmem:[%s5 + $0x78] sm:$0xff]
  %v7095 = vld [vmem:[%s5 + $0x80] sm:$0xff]
  %v7096 = vld [vmem:[%s5 + $0x88] sm:$0xff]
  %v7097 = vld [vmem:[%s5 + $0x90] sm:$0xff]
  %v7098 = vld [vmem:[%s5 + $0x98] sm:$0xff]
  %v7099 = vld [vmem:[%s5 + $0xa0] sm:$0xff]
  %v7100 = vld [vmem:[%s5 + $0xa8] sm:$0xff]
  %v7101 = vld [vmem:[%s5 + $0xb0] sm:$0xff]
  %v7102 = vld [vmem:[%s5 + $0xb8] sm:$0xff]
  %7104 = vset.pattern.permute.xlu0 0
  %7105 = vperm.xlu0 %7104, %v7079
  %v7106 = vpop.permute.xlu0 %7105
  %7109 = vset.pattern.permute.xlu0 0
  %7110 = vperm.xlu0 %7109, %v7080
  %v7111 = vpop.permute.xlu0 %7110
  %7114 = vset.pattern.permute.xlu0 0
  %7115 = vperm.xlu0 %7114, %v7081
  %v7116 = vpop.permute.xlu0 %7115
  %7119 = vset.pattern.permute.xlu0 0
  %7120 = vperm.xlu0 %7119, %v7082
  %v7121 = vpop.permute.xlu0 %7120
  %7124 = vset.pattern.permute.xlu0 0
  %7125 = vperm.xlu0 %7124, %v7083
  %v7126 = vpop.permute.xlu0 %7125
  %7129 = vset.pattern.permute.xlu0 0
  %7130 = vperm.xlu0 %7129, %v7084
  %v7131 = vpop.permute.xlu0 %7130
  %7134 = vset.pattern.permute.xlu0 0
  %7135 = vperm.xlu0 %7134, %v7085
  %v7136 = vpop.permute.xlu0 %7135
  %7139 = vset.pattern.permute.xlu0 0
  %7140 = vperm.xlu0 %7139, %v7086
  %v7141 = vpop.permute.xlu0 %7140
  %7144 = vset.pattern.permute.xlu0 0
  %7145 = vperm.xlu0 %7144, %v7087
  %v7146 = vpop.permute.xlu0 %7145
  %7149 = vset.pattern.permute.xlu0 0
  %7150 = vperm.xlu0 %7149, %v7088
  %v7151 = vpop.permute.xlu0 %7150
  %7154 = vset.pattern.permute.xlu0 0
  %7155 = vperm.xlu0 %7154, %v7089
  %v7156 = vpop.permute.xlu0 %7155
  %7159 = vset.pattern.permute.xlu0 0
  %7160 = vperm.xlu0 %7159, %v7090
  %v7161 = vpop.permute.xlu0 %7160
  %7164 = vset.pattern.permute.xlu0 0
  %7165 = vperm.xlu0 %7164, %v7091
  %v7166 = vpop.permute.xlu0 %7165
  %7169 = vset.pattern.permute.xlu0 0
  %7170 = vperm.xlu0 %7169, %v7092
  %v7171 = vpop.permute.xlu0 %7170
  %7174 = vset.pattern.permute.xlu0 0
  %7175 = vperm.xlu0 %7174, %v7093
  %v7176 = vpop.permute.xlu0 %7175
  %7179 = vset.pattern.permute.xlu0 0
  %7180 = vperm.xlu0 %7179, %v7094
  %v7181 = vpop.permute.xlu0 %7180
  %7184 = vset.pattern.permute.xlu0 0
  %7185 = vperm.xlu0 %7184, %v7095
  %v7186 = vpop.permute.xlu0 %7185
  %7189 = vset.pattern.permute.xlu0 0
  %7190 = vperm.xlu0 %7189, %v7096
  %v7191 = vpop.permute.xlu0 %7190
  %7194 = vset.pattern.permute.xlu0 0
  %7195 = vperm.xlu0 %7194, %v7097
  %v7196 = vpop.permute.xlu0 %7195
  %7199 = vset.pattern.permute.xlu0 0
  %7200 = vperm.xlu0 %7199, %v7098
  %v7201 = vpop.permute.xlu0 %7200
  %7204 = vset.pattern.permute.xlu0 0
  %7205 = vperm.xlu0 %7204, %v7099
  %v7206 = vpop.permute.xlu0 %7205
  %7209 = vset.pattern.permute.xlu0 0
  %7210 = vperm.xlu0 %7209, %v7100
  %v7211 = vpop.permute.xlu0 %7210
  %7214 = vset.pattern.permute.xlu0 0
  %7215 = vperm.xlu0 %7214, %v7101
  %v7216 = vpop.permute.xlu0 %7215
  %7219 = vset.pattern.permute.xlu0 0
  %7220 = vperm.xlu0 %7219, %v7102
  %v7221 = vpop.permute.xlu0 %7220
  %v7223 = vadd.f32 %v7031, %v7106
  %v7224 = vadd.f32 %v7032, %v7106
  %v7225 = vadd.f32 %v7033, %v7111
  %v7226 = vadd.f32 %v7034, %v7111
  %v7227 = vadd.f32 %v7035, %v7116
  %v7228 = vadd.f32 %v7036, %v7116
  %v7229 = vadd.f32 %v7037, %v7121
  %v7230 = vadd.f32 %v7038, %v7121
  %v7231 = vadd.f32 %v7039, %v7126
  %v7232 = vadd.f32 %v7040, %v7126
  %v7233 = vadd.f32 %v7041, %v7131
  %v7234 = vadd.f32 %v7042, %v7131
  %v7235 = vadd.f32 %v7043, %v7136
  %v7236 = vadd.f32 %v7044, %v7136
  %v7237 = vadd.f32 %v7045, %v7141
  %v7238 = vadd.f32 %v7046, %v7141
  %v7239 = vadd.f32 %v7047, %v7146
  %v7240 = vadd.f32 %v7048, %v7146
  %v7241 = vadd.f32 %v7049, %v7151
  %v7242 = vadd.f32 %v7050, %v7151
  %v7243 = vadd.f32 %v7051, %v7156
  %v7244 = vadd.f32 %v7052, %v7156
  %v7245 = vadd.f32 %v7053, %v7161
  %v7246 = vadd.f32 %v7054, %v7161
  %v7247 = vadd.f32 %v7055, %v7166
  %v7248 = vadd.f32 %v7056, %v7166
  %v7249 = vadd.f32 %v7057, %v7171
  %v7250 = vadd.f32 %v7058, %v7171
  %v7251 = vadd.f32 %v7059, %v7176
  %v7252 = vadd.f32 %v7060, %v7176
  %v7253 = vadd.f32 %v7061, %v7181
  %v7254 = vadd.f32 %v7062, %v7181
  %v7255 = vadd.f32 %v7063, %v7186
  %v7256 = vadd.f32 %v7064, %v7186
  %v7257 = vadd.f32 %v7065, %v7191
  %v7258 = vadd.f32 %v7066, %v7191
  %v7259 = vadd.f32 %v7067, %v7196
  %v7260 = vadd.f32 %v7068, %v7196
  %v7261 = vadd.f32 %v7069, %v7201
  %v7262 = vadd.f32 %v7070, %v7201
  %v7263 = vadd.f32 %v7071, %v7206
  %v7264 = vadd.f32 %v7072, %v7206
  %v7265 = vadd.f32 %v7073, %v7211
  %v7266 = vadd.f32 %v7074, %v7211
  %v7267 = vadd.f32 %v7075, %v7216
  %v7268 = vadd.f32 %v7076, %v7216
  %v7269 = vadd.f32 %v7077, %v7221
  %v7270 = vadd.f32 %v7078, %v7221
  %7271 = vst [vmem:[%s6] sm:$0xff] %v7223
  %7272 = vst.msk [vmem:[%s6 + $0x8] sm:$0xff] %vm288, %v7224
  %7273 = vst [vmem:[%s6 + $0x10] sm:$0xff] %v7225
  %7274 = vst.msk [vmem:[%s6 + $0x18] sm:$0xff] %vm288, %v7226
  %7275 = vst [vmem:[%s6 + $0x20] sm:$0xff] %v7227
  %7276 = vst.msk [vmem:[%s6 + $0x28] sm:$0xff] %vm288, %v7228
  %7277 = vst [vmem:[%s6 + $0x30] sm:$0xff] %v7229
  %7278 = vst.msk [vmem:[%s6 + $0x38] sm:$0xff] %vm288, %v7230
  %7279 = vst [vmem:[%s6 + $0x40] sm:$0xff] %v7231
  %7280 = vst.msk [vmem:[%s6 + $0x48] sm:$0xff] %vm288, %v7232
  %7281 = vst [vmem:[%s6 + $0x50] sm:$0xff] %v7233
  %7282 = vst.msk [vmem:[%s6 + $0x58] sm:$0xff] %vm288, %v7234
  %7283 = vst [vmem:[%s6 + $0x60] sm:$0xff] %v7235
  %7284 = vst.msk [vmem:[%s6 + $0x68] sm:$0xff] %vm288, %v7236
  %7285 = vst [vmem:[%s6 + $0x70] sm:$0xff] %v7237
  %7286 = vst.msk [vmem:[%s6 + $0x78] sm:$0xff] %vm288, %v7238
  %7287 = vst [vmem:[%s6 + $0x80] sm:$0xff] %v7239
  %7288 = vst.msk [vmem:[%s6 + $0x88] sm:$0xff] %vm288, %v7240
  %7289 = vst [vmem:[%s6 + $0x90] sm:$0xff] %v7241
  %7290 = vst.msk [vmem:[%s6 + $0x98] sm:$0xff] %vm288, %v7242
  %7291 = vst [vmem:[%s6 + $0xa0] sm:$0xff] %v7243
  %7292 = vst.msk [vmem:[%s6 + $0xa8] sm:$0xff] %vm288, %v7244
  %7293 = vst [vmem:[%s6 + $0xb0] sm:$0xff] %v7245
  %7294 = vst.msk [vmem:[%s6 + $0xb8] sm:$0xff] %vm288, %v7246
  %7295 = vst [vmem:[%s6 + $0xc0] sm:$0xff] %v7247
  %7296 = vst.msk [vmem:[%s6 + $0xc8] sm:$0xff] %vm288, %v7248
  %7297 = vst [vmem:[%s6 + $0xd0] sm:$0xff] %v7249
  %7298 = vst.msk [vmem:[%s6 + $0xd8] sm:$0xff] %vm288, %v7250
  %7299 = vst [vmem:[%s6 + $0xe0] sm:$0xff] %v7251
  %7300 = vst.msk [vmem:[%s6 + $0xe8] sm:$0xff] %vm288, %v7252
  %7301 = vst [vmem:[%s6 + $0xf0] sm:$0xff] %v7253
  %7302 = vst.msk [vmem:[%s6 + $0xf8] sm:$0xff] %vm288, %v7254
  %7303 = vst [vmem:[%s6 + $0x100] sm:$0xff] %v7255
  %7304 = vst.msk [vmem:[%s6 + $0x108] sm:$0xff] %vm288, %v7256
  %7305 = vst [vmem:[%s6 + $0x110] sm:$0xff] %v7257
  %7306 = vst.msk [vmem:[%s6 + $0x118] sm:$0xff] %vm288, %v7258
  %7307 = vst [vmem:[%s6 + $0x120] sm:$0xff] %v7259
  %7308 = vst.msk [vmem:[%s6 + $0x128] sm:$0xff] %vm288, %v7260
  %7309 = vst [vmem:[%s6 + $0x130] sm:$0xff] %v7261
  %7310 = vst.msk [vmem:[%s6 + $0x138] sm:$0xff] %vm288, %v7262
  %7311 = vst [vmem:[%s6 + $0x140] sm:$0xff] %v7263
  %7312 = vst.msk [vmem:[%s6 + $0x148] sm:$0xff] %vm288, %v7264
  %7313 = vst [vmem:[%s6 + $0x150] sm:$0xff] %v7265
  %7314 = vst.msk [vmem:[%s6 + $0x158] sm:$0xff] %vm288, %v7266
  %7315 = vst [vmem:[%s6 + $0x160] sm:$0xff] %v7267
  %7316 = vst.msk [vmem:[%s6 + $0x168] sm:$0xff] %vm288, %v7268
  %7317 = vst [vmem:[%s6 + $0x170] sm:$0xff] %v7269
  %7318 = vst.msk [vmem:[%s6 + $0x178] sm:$0xff] %vm288, %v7270
  // Predicated region
  $region26: #{bn_relu_conv_bn.1} parent=0 // pred_check
    _
  $region27: #{bn_relu_conv_bn.1} parent=0 // pred_check_branch
    %7320 = sbr.rel (0) target = $region29
  $region28: #{bn_relu_conv_bn.1} parent=0 // pred_region
    _
  $region29: #{bn_relu_conv_bn.1} parent=0 // pred_fallthru
    _
  // Predicated region
  $region30: #{bn_relu_conv_bn.1} parent=0 // pred_check
    _
  $region31: #{bn_relu_conv_bn.1} parent=0 // pred_check_branch
    %7322 = sbr.rel (0) target = $region33
  $region32: #{bn_relu_conv_bn.1} parent=0 // pred_region
    _
  $region33: #{bn_relu_conv_bn.1} parent=0 // pred_fallthru
    _

</llo_original>
